<compile_context>
chip_gen: v7x
topology: tpu7x:2x2x1
jax: 0.10.0
libtpu: 0.0.40
codegen_flags: <defaults>
</compile_context>

<pallas_src>
import jax
import jax.numpy as jnp
import numpy as np
from jax.experimental import pallas as pl
from jax.experimental.pallas import tpu as pltpu

GN_GROUPS = 32
GN_EPS = 1e-5


# ----------------------------------------------------------------------------
# In-kernel helpers (traced inside the Pallas kernel).
# ----------------------------------------------------------------------------
def _gn_silu(x_f32, m_scaled, mt, gamma, beta):
    """GroupNorm(32) + SiLU on a flat (H*W, C) f32 block (per-sample stats).

    m_scaled: (C, G) one-hot channel->group matrix PRE-SCALED by 1/count.
    mt:       (G, C) un-scaled transpose.
    Two-pass (centered) variance for numerical stability.
    """
    ssum = jnp.sum(x_f32, axis=0, keepdims=True)                        # (1, C)
    mean_g = jnp.dot(ssum, m_scaled, preferred_element_type=jnp.float32)
    mean_c = jnp.dot(mean_g, mt, preferred_element_type=jnp.float32)    # (1, C)

    xc = x_f32 - mean_c
    ssq = jnp.sum(xc * xc, axis=0, keepdims=True)                       # (1, C)
    var_g = jnp.dot(ssq, m_scaled, preferred_element_type=jnp.float32)  # (1, G)
    inv_c = jnp.dot(jax.lax.rsqrt(var_g + GN_EPS), mt,
                    preferred_element_type=jnp.float32)                 # (1, C)

    y = xc * (inv_c * gamma) + beta
    return y * jax.nn.sigmoid(y)                                        # SiLU


def _fat_halo(y_f32, H, W):
    """Build the fat-K conv activation from a flat (H*W, C) f32 block.

    Returns ((H+2)*W, 3*C) bf16: the three kw-shifted copies lane-concatenated
    so a 3x3 conv becomes 3 fat-K matmuls (one per kh) over aligned row slices.
      * H halo: one zero row-block above/below (aligned major-dim concat).
      * W halo: pltpu.roll by +/-1 row on the flattened axis + boundary-column
        mask (no sublane-misaligned slices; roll uses the idle XLU slot).
      Rolls/mask stay in f32; a single f32->bf16 cast at the end.
    """
    HW, C = y_f32.shape
    n_rows = (H + 2) * W

    zrow = jnp.zeros((W, C), jnp.float32)
    ypad = jnp.concatenate([zrow, y_f32, zrow], axis=0)          # ((H+2)*W, C)
    col = jax.lax.broadcasted_iota(jnp.int32, (n_rows, 1), 0) % W

    parts = []
    for kw in range(3):
        d = kw - 1                                               # W offset
        if d == 0:
            parts.append(ypad)
        else:
            # shifted[p] = ypad[p + d]   (roll semantics: res[i] = x[i-shift])
            s = pltpu.roll(ypad, shift=(-d) % n_rows, axis=0)
            bad_col = 0 if d < 0 else W - 1                      # wrapped col
            parts.append(jnp.where(col != bad_col, s, 0.0))
    return jnp.concatenate(parts, axis=-1).astype(jnp.bfloat16)  # ((H+2)W,3C)


def _conv_from_fat(a_bf16, w_ref, H, W):
    """3x3 conv as 3 fat-K MXU matmuls.

    a_bf16: ((H+2)*W, 3*Cin) bf16 fat activation.
    w_ref : (3, 3*Cin, Cout) bf16 weight (row index = kw*Cin + ci).
    """
    HW = H * W
    Cout = w_ref.shape[-1]
    acc = jnp.zeros((HW, Cout), jnp.float32)
    for kh in range(3):
        acc = acc + jnp.dot(a_bf16[kh * W: kh * W + HW, :], w_ref[kh],
                            preferred_element_type=jnp.float32)
    return acc


def _stage1_to_scratch(x_ref, g1_ref, b1_ref, m1_ref, mt1_ref, w1_ref, cb1_ref,
                       g2_ref, b2_ref, m2_ref, mt2_ref, a2_ref, H, W):
    """GN1+SiLU+conv1 -> h (f32, in registers) -> GN2+SiLU -> fat-K scratch."""
    Cin = x_ref.shape[-1]
    x = x_ref[...].astype(jnp.float32).reshape(H * W, Cin)
    y1 = _gn_silu(x, m1_ref[...], mt1_ref[...], g1_ref[...], b1_ref[...])
    h = _conv_from_fat(_fat_halo(y1, H, W), w1_ref, H, W) + cb1_ref[...]
    y2 = _gn_silu(h, m2_ref[...], mt2_ref[...], g2_ref[...], b2_ref[...])
    a2_ref[...] = _fat_halo(y2, H, W)


# ----------------------------------------------------------------------------
# Fused kernels.  grid = (N, Cout_tiles); front half runs only at tile 0 and
# its fat-K activation is kept in a VMEM scratch reused by all Cout tiles.
# ----------------------------------------------------------------------------
def rb_fused_skip_kernel(x_ref, g1_ref, b1_ref, m1_ref, mt1_ref, w1_ref,
                         cb1_ref, g2_ref, b2_ref, m2_ref, mt2_ref,
                         w2_ref, ws_ref, cb_ref, o_ref, a2_ref):
    _, H, W, Cin = x_ref.shape
    HW = H * W
    tC = o_ref.shape[-1]

    @pl.when(pl.program_id(1) == 0)
    def _():
        _stage1_to_scratch(x_ref, g1_ref, b1_ref, m1_ref, mt1_ref, w1_ref,
                           cb1_ref, g2_ref, b2_ref, m2_ref, mt2_ref,
                           a2_ref, H, W)

    acc = _conv_from_fat(a2_ref[...], w2_ref, H, W)
    # skip path: 1x1 conv of the block input, fused residual add
    xs = x_ref[...].astype(jnp.bfloat16).reshape(HW, Cin)
    acc = acc + jnp.dot(xs, ws_ref[...], preferred_element_type=jnp.float32)
    acc = acc + cb_ref[...]            # conv2 bias + skip bias (folded on host)
    o_ref[...] = acc.reshape(1, H, W, tC).astype(o_ref.dtype)


def rb_fused_ident_kernel(x_ref, xt_ref, g1_ref, b1_ref, m1_ref, mt1_ref,
                          w1_ref, cb1_ref, g2_ref, b2_ref, m2_ref, mt2_ref,
                          w2_ref, cb_ref, o_ref, a2_ref):
    _, H, W, _ = x_ref.shape
    HW = H * W
    tC = o_ref.shape[-1]

    @pl.when(pl.program_id(1) == 0)
    def _():
        _stage1_to_scratch(x_ref, g1_ref, b1_ref, m1_ref, mt1_ref, w1_ref,
                           cb1_ref, g2_ref, b2_ref, m2_ref, mt2_ref,
                           a2_ref, H, W)

    acc = _conv_from_fat(a2_ref[...], w2_ref, H, W)
    acc = acc + cb_ref[...]
    # identity skip: exact f32 residual add of the input channel tile
    acc = acc + xt_ref[...].astype(jnp.float32).reshape(HW, tC)
    o_ref[...] = acc.reshape(1, H, W, tC).astype(o_ref.dtype)


# ----------------------------------------------------------------------------
# NHWC core (no layout transposes).  Channels sit on the TPU lane axis.
# ----------------------------------------------------------------------------
def rb_forward_pallas_nhwc(x, params, *, cout_tile=128, out_dtype=jnp.float32):
    x = x.astype(jnp.float32)
    N, H, W, Cin = x.shape
    Cout = params["conv1_w"].shape[0]
    has_skip_conv = "skip_w" in params
    if not has_skip_conv:
        assert Cin == Cout, "identity skip requires Cin == Cout"
    assert W % 16 == 0, "W must be a multiple of 16 (bf16 sublane tiling)"
    assert Cin % GN_GROUPS == 0 and Cout % GN_GROUPS == 0

    tC = min(cout_tile, Cout)
    assert Cout % tC == 0 and tC % 128 == 0, "Cout tile must be lane-dense"
    T = Cout // tC

    # hoisted one-hot channel->group matrices, pre-scaled by 1/count
    def group_mats(C):
        gs = C // GN_GROUPS
        m = (np.arange(C)[:, None] // gs ==
             np.arange(GN_GROUPS)[None, :]).astype(np.float32)
        return jnp.asarray(m / float(H * W * gs)), jnp.asarray(m.T)

    M1s, MT1 = group_mats(Cin)
    M2s, MT2 = group_mats(Cout)

    # OIHW -> HWIO -> (kh, kw*Cin + ci, Cout), bf16 for the MXU
    def fat_weight(w_oihw):
        w = jnp.transpose(w_oihw, (2, 3, 1, 0))
        kh, kw, ci, co = w.shape
        return w.reshape(kh, kw * ci, co).astype(jnp.bfloat16)

    w1 = fat_weight(params["conv1_w"])                    # (3, 3*Cin,  Cout)
    w2 = fat_weight(params["conv2_w"])                    # (3, 3*Cout, Cout)

    g1 = params["gn1_w"].reshape(1, Cin).astype(jnp.float32)
    b1 = params["gn1_b"].reshape(1, Cin).astype(jnp.float32)
    cb1 = params["conv1_b"].reshape(1, Cout).astype(jnp.float32)
    g2 = params["gn2_w"].reshape(1, Cout).astype(jnp.float32)
    b2 = params["gn2_b"].reshape(1, Cout).astype(jnp.float32)
    cb2 = params["conv2_b"].reshape(1, Cout).astype(jnp.float32)

    def bcast(shape):
        nd = len(shape)
        return pl.BlockSpec(shape, lambda n, t: (0,) * nd)

    x_spec = pl.BlockSpec((1, H, W, Cin), lambda n, t: (n, 0, 0, 0))
    o_spec = pl.BlockSpec((1, H, W, tC), lambda n, t: (n, 0, 0, t))
    w2_spec = pl.BlockSpec((3, 3 * Cout, tC), lambda n, t: (0, 0, t))
    cb_spec = pl.BlockSpec((1, tC), lambda n, t: (0, t))

    common_specs = [bcast((1, Cin)), bcast((1, Cin)),
                    bcast((Cin, GN_GROUPS)), bcast((GN_GROUPS, Cin)),
                    bcast((3, 3 * Cin, Cout)), bcast((1, Cout)),
                    bcast((1, Cout)), bcast((1, Cout)),
                    bcast((Cout, GN_GROUPS)), bcast((GN_GROUPS, Cout))]

    cparams = pltpu.CompilerParams(
        dimension_semantics=("parallel", "arbitrary"),
        vmem_limit_bytes=48 * 1024 * 1024,
    )
    scratch = [pltpu.VMEM(((H + 2) * W, 3 * Cout), jnp.bfloat16)]
    out_shape = jax.ShapeDtypeStruct((N, H, W, Cout), out_dtype)

    if has_skip_conv:
        ws = jnp.transpose(params["skip_w"][:, :, 0, 0], (1, 0)).astype(jnp.bfloat16)
        cbsb = cb2 + params["skip_b"].reshape(1, Cout).astype(jnp.float32)
        ws_spec = pl.BlockSpec((Cin, tC), lambda n, t: (0, t))
        return pl.pallas_call(
            rb_fused_skip_kernel,
            out_shape=out_shape,
            grid=(N, T),
            in_specs=[x_spec] + common_specs + [w2_spec, ws_spec, cb_spec],
            out_specs=o_spec,
            scratch_shapes=scratch,
            compiler_params=cparams,
        )(x, g1, b1, M1s, MT1, w1, cb1, g2, b2, M2s, MT2, w2, ws, cbsb)
    else:
        xt_spec = pl.BlockSpec((1, H, W, tC), lambda n, t: (n, 0, 0, t))
        return pl.pallas_call(
            rb_fused_ident_kernel,
            out_shape=out_shape,
            grid=(N, T),
            in_specs=[x_spec, xt_spec] + common_specs + [w2_spec, cb_spec],
            out_specs=o_spec,
            scratch_shapes=scratch,
            compiler_params=cparams,
        )(x, x, g1, b1, M1s, MT1, w1, cb1, g2, b2, M2s, MT2, w2, cb2)


def rb_forward_pallas(x_nchw, params, **kw):
    """PyTorch-compatible NCHW interface.  If the surrounding graph is NHWC,
    call rb_forward_pallas_nhwc directly and skip both transposes."""
    x = jnp.transpose(x_nchw, (0, 2, 3, 1))
    out = rb_forward_pallas_nhwc(x, params, **kw)
    return jnp.transpose(out, (0, 3, 1, 2))


# ----------------------------------------------------------------------------
# Pure-JAX f32 reference (mirrors the PyTorch module exactly).
# ----------------------------------------------------------------------------
def _gn_ref(x, gamma, beta, groups=GN_GROUPS, eps=GN_EPS):
    N, C, H, W = x.shape
    xg = x.reshape(N, groups, -1)
    mean = xg.mean(axis=-1, keepdims=True)
    var = xg.var(axis=-1, keepdims=True)
    xn = ((xg - mean) * jax.lax.rsqrt(var + eps)).reshape(N, C, H, W)
    return xn * gamma[None, :, None, None] + beta[None, :, None, None]


def _silu_ref(x):
    return x * jax.nn.sigmoid(x)


def _conv_ref(x, w, b, pad):
    y = jax.lax.conv_general_dilated(
        x, w, window_strides=(1, 1), padding=[(pad, pad), (pad, pad)],
        dimension_numbers=("NCHW", "OIHW", "NCHW"))
    return y + b[None, :, None, None]


def rb_forward_ref(x, p):
    h = _conv_ref(_silu_ref(_gn_ref(x, p["gn1_w"], p["gn1_b"])),
                  p["conv1_w"], p["conv1_b"], 1)
    h = _conv_ref(_silu_ref(_gn_ref(h, p["gn2_w"], p["gn2_b"])),
                  p["conv2_w"], p["conv2_b"], 1)
    skip = _conv_ref(x, p["skip_w"], p["skip_b"], 0) if "skip_w" in p else x
    return h + skip


# ----------------------------------------------------------------------------
if __name__ == "__main__":
    key = jax.random.PRNGKey(0)

    def make_params(keys, c_in, c_out, with_skip):
        p = {
            "gn1_w": 1.0 + 0.1 * jax.random.normal(keys[0], (c_in,), jnp.float32),
            "gn1_b": 0.1 * jax.random.normal(keys[1], (c_in,), jnp.float32),
            "conv1_w": 0.1 * jax.random.normal(keys[2], (c_out, c_in, 3, 3), jnp.float32),
            "conv1_b": 0.1 * jax.random.normal(keys[3], (c_out,), jnp.float32),
            "gn2_w": 1.0 + 0.1 * jax.random.normal(keys[4], (c_out,), jnp.float32),
            "gn2_b": 0.1 * jax.random.normal(keys[5], (c_out,), jnp.float32),
            "conv2_w": 0.1 * jax.random.normal(keys[6], (c_out, c_out, 3, 3), jnp.float32),
            "conv2_b": 0.1 * jax.random.normal(keys[7], (c_out,), jnp.float32),
        }
        if with_skip:
            p["skip_w"] = 0.1 * jax.random.normal(keys[8], (c_out, c_in, 1, 1), jnp.float32)
            p["skip_b"] = 0.1 * jax.random.normal(keys[9], (c_out,), jnp.float32)
        return p

    # ---- case 1: Cin != Cout (1x1 conv skip), 2 Cout tiles -> grid (2, 2) ---
    N, C_IN, C_OUT, H, W = 2, 64, 256, 16, 16
    ks = jax.random.split(key, 11)
    params = make_params(ks, C_IN, C_OUT, with_skip=True)
    x = jax.random.normal(ks[10], (N, C_IN, H, W), jnp.float32)

    out = jax.block_until_ready(rb_forward_pallas(x, params))
    ref = jax.block_until_ready(rb_forward_ref(x, params))
    assert out.shape == (N, C_OUT, H, W), out.shape
    # bf16 MXU inputs with f32 accumulation; tolerance sized for that.
    np.testing.assert_allclose(np.asarray(out), np.asarray(ref),
                               rtol=5e-2, atol=1e-1)

    # ---- case 2: Cin == Cout (identity skip, exact f32 residual add) --------
    N2, C2 = 2, 128
    ks2 = jax.random.split(jax.random.PRNGKey(1), 11)
    params2 = make_params(ks2, C2, C2, with_skip=False)
    x2 = jax.random.normal(ks2[10], (N2, C2, H, W), jnp.float32)

    out2 = jax.block_until_ready(rb_forward_pallas(x2, params2))
    ref2 = jax.block_until_ready(rb_forward_ref(x2, params2))
    assert out2.shape == (N2, C2, H, W), out2.shape
    np.testing.assert_allclose(np.asarray(out2), np.asarray(ref2),
                               rtol=5e-2, atol=1e-1)

    print("KERNEL_OK")
</pallas_src>

<mosaic_0001>
module attributes {stable_mosaic.version = 11 : i64} {
  func.func @rb_fused_skip_kernel(%arg0: i32, %arg1: i32, %arg2: memref<1x16x16x64xf32, #tpu.memory_space<vmem>>, %arg3: memref<1x64xf32, #tpu.memory_space<vmem>>, %arg4: memref<1x64xf32, #tpu.memory_space<vmem>>, %arg5: memref<64x32xf32, #tpu.memory_space<vmem>>, %arg6: memref<32x64xf32, #tpu.memory_space<vmem>>, %arg7: memref<3x192x256xbf16, #tpu.memory_space<vmem>>, %arg8: memref<1x256xf32, #tpu.memory_space<vmem>>, %arg9: memref<1x256xf32, #tpu.memory_space<vmem>>, %arg10: memref<1x256xf32, #tpu.memory_space<vmem>>, %arg11: memref<256x32xf32, #tpu.memory_space<vmem>>, %arg12: memref<32x256xf32, #tpu.memory_space<vmem>>, %arg13: memref<3x768x128xbf16, #tpu.memory_space<vmem>>, %arg14: memref<64x128xbf16, #tpu.memory_space<vmem>>, %arg15: memref<1x128xf32, #tpu.memory_space<vmem>>, %arg16: memref<1x16x16x128xf32, #tpu.memory_space<vmem>>, %arg17: memref<288x768xbf16, #tpu.memory_space<vmem>>) attributes {dimension_semantics = [#tpu.dimension_semantics<parallel>, #tpu.dimension_semantics<arbitrary>], iteration_bounds = array<i64: 2, 2>, scalar_prefetch = 0 : i64, scratch_operands = 1 : i64, tpu.core_type = #tpu.core_type<tc>, window_params = [{transform_indices = @transform_0, window_bounds = array<i64: 1, 16, 16, 64>}, {pipeline_mode = #tpu.pipeline_mode<synchronous>, transform_indices = @transform_1, window_bounds = array<i64: 1, 64>}, {pipeline_mode = #tpu.pipeline_mode<synchronous>, transform_indices = @transform_2, window_bounds = array<i64: 1, 64>}, {pipeline_mode = #tpu.pipeline_mode<synchronous>, transform_indices = @transform_3, window_bounds = array<i64: 64, 32>}, {pipeline_mode = #tpu.pipeline_mode<synchronous>, transform_indices = @transform_4, window_bounds = array<i64: 32, 64>}, {pipeline_mode = #tpu.pipeline_mode<synchronous>, transform_indices = @transform_5, window_bounds = array<i64: 3, 192, 256>}, {pipeline_mode = #tpu.pipeline_mode<synchronous>, transform_indices = @transform_6, window_bounds = array<i64: 1, 256>}, {pipeline_mode = #tpu.pipeline_mode<synchronous>, transform_indices = @transform_7, window_bounds = array<i64: 1, 256>}, {pipeline_mode = #tpu.pipeline_mode<synchronous>, transform_indices = @transform_8, window_bounds = array<i64: 1, 256>}, {pipeline_mode = #tpu.pipeline_mode<synchronous>, transform_indices = @transform_9, window_bounds = array<i64: 256, 32>}, {pipeline_mode = #tpu.pipeline_mode<synchronous>, transform_indices = @transform_10, window_bounds = array<i64: 32, 256>}, {transform_indices = @transform_11, window_bounds = array<i64: 3, 768, 128>}, {transform_indices = @transform_12, window_bounds = array<i64: 64, 128>}, {transform_indices = @transform_13, window_bounds = array<i64: 1, 128>}, {transform_indices = @transform_14, window_bounds = array<i64: 1, 16, 16, 128>}]} {
    %c0_i32 = arith.constant 0 : i32
    %0 = arith.cmpi eq, %arg1, %c0_i32 : i32
    %1 = arith.extui %0 : i1 to i32
    %c0_i32_0 = arith.constant 0 : i32
    %2 = arith.cmpi ne, %1, %c0_i32_0 : i32
    scf.if %2 {
      %c0_25 = arith.constant 0 : index
      %c0_26 = arith.constant 0 : index
      %c0_27 = arith.constant 0 : index
      %c0_28 = arith.constant 0 : index
      %31 = vector.load %arg2[%c0_25, %c0_26, %c0_27, %c0_28] : memref<1x16x16x64xf32, #tpu.memory_space<vmem>>, vector<1x16x16x64xf32>
      %32 = vector.shape_cast %31 : vector<1x16x16x64xf32> to vector<256x64xf32>
      %c0_29 = arith.constant 0 : index
      %c0_30 = arith.constant 0 : index
      %33 = vector.load %arg5[%c0_29, %c0_30] : memref<64x32xf32, #tpu.memory_space<vmem>>, vector<64x32xf32>
      %c0_31 = arith.constant 0 : index
      %c0_32 = arith.constant 0 : index
      %34 = vector.load %arg6[%c0_31, %c0_32] : memref<32x64xf32, #tpu.memory_space<vmem>>, vector<32x64xf32>
      %c0_33 = arith.constant 0 : index
      %c0_34 = arith.constant 0 : index
      %35 = vector.load %arg3[%c0_33, %c0_34] : memref<1x64xf32, #tpu.memory_space<vmem>>, vector<1x64xf32>
      %c0_35 = arith.constant 0 : index
      %c0_36 = arith.constant 0 : index
      %36 = vector.load %arg4[%c0_35, %c0_36] : memref<1x64xf32, #tpu.memory_space<vmem>>, vector<1x64xf32>
      %cst_37 = arith.constant dense<0.000000e+00> : vector<64xf32>
      %37 = vector.multi_reduction <add>, %32, %cst_37 [0] : vector<256x64xf32> to vector<64xf32>
      %38 = vector.shape_cast %37 : vector<64xf32> to vector<1x64xf32>
      %cst_38 = arith.constant dense<0.000000e+00> : vector<1x32xf32>
      %39 = tpu.matmul %38, %33, %cst_38 {dimension_numbers = #tpu.dot_dimension_numbers<[1], [0], [0], [1], [0, 0, 1, 1], [], []>} : vector<1x64xf32>, vector<64x32xf32>, vector<1x32xf32> -> vector<1x32xf32>
      %cst_39 = arith.constant dense<0.000000e+00> : vector<1x64xf32>
      %40 = tpu.matmul %39, %34, %cst_39 {dimension_numbers = #tpu.dot_dimension_numbers<[1], [0], [0], [1], [0, 0, 1, 1], [], []>} : vector<1x32xf32>, vector<32x64xf32>, vector<1x64xf32> -> vector<1x64xf32>
      %41 = vector.broadcast %40 : vector<1x64xf32> to vector<256x64xf32>
      %42 = arith.subf %32, %41 : vector<256x64xf32>
      %43 = arith.mulf %42, %42 : vector<256x64xf32>
      %cst_40 = arith.constant dense<0.000000e+00> : vector<64xf32>
      %44 = vector.multi_reduction <add>, %43, %cst_40 [0] : vector<256x64xf32> to vector<64xf32>
      %45 = vector.shape_cast %44 : vector<64xf32> to vector<1x64xf32>
      %cst_41 = arith.constant dense<0.000000e+00> : vector<1x32xf32>
      %46 = tpu.matmul %45, %33, %cst_41 {dimension_numbers = #tpu.dot_dimension_numbers<[1], [0], [0], [1], [0, 0, 1, 1], [], []>} : vector<1x64xf32>, vector<64x32xf32>, vector<1x32xf32> -> vector<1x32xf32>
      %cst_42 = arith.constant 9.99999974E-6 : f32
      %47 = vector.broadcast %cst_42 : f32 to vector<1x32xf32>
      %48 = arith.addf %46, %47 : vector<1x32xf32>
      %49 = math.rsqrt %48 : vector<1x32xf32>
      %cst_43 = arith.constant dense<0.000000e+00> : vector<1x64xf32>
      %50 = tpu.matmul %49, %34, %cst_43 {dimension_numbers = #tpu.dot_dimension_numbers<[1], [0], [0], [1], [0, 0, 1, 1], [], []>} : vector<1x32xf32>, vector<32x64xf32>, vector<1x64xf32> -> vector<1x64xf32>
      %51 = arith.mulf %50, %35 : vector<1x64xf32>
      %52 = vector.broadcast %51 : vector<1x64xf32> to vector<256x64xf32>
      %53 = arith.mulf %42, %52 : vector<256x64xf32>
      %54 = vector.broadcast %36 : vector<1x64xf32> to vector<256x64xf32>
      %55 = arith.addf %53, %54 : vector<256x64xf32>
      %56 = arith.negf %55 : vector<256x64xf32>
      %57 = math.exp %56 : vector<256x64xf32>
      %cst_44 = arith.constant 1.000000e+00 : f32
      %58 = vector.broadcast %cst_44 : f32 to vector<256x64xf32>
      %59 = arith.addf %58, %57 : vector<256x64xf32>
      %60 = arith.divf %58, %59 : vector<256x64xf32>
      %61 = arith.mulf %55, %60 : vector<256x64xf32>
      %cst_45 = arith.constant 0.000000e+00 : f32
      %62 = vector.broadcast %cst_45 : f32 to vector<16x64xf32>
      %63 = tpu.concatenate %62, %61, %62 in 0 : vector<16x64xf32>, vector<256x64xf32>, vector<16x64xf32> -> vector<288x64xf32>
      %64 = tpu.iota {dimensions = array<i32: 0>} : vector<288x1xi32>
      %c16_i32 = arith.constant 16 : i32
      %c0_i32_46 = arith.constant 0 : i32
      %65 = arith.cmpi eq, %c16_i32, %c0_i32_46 : i32
      %c1_i32 = arith.constant 1 : i32
      %66 = arith.select %65, %c1_i32, %c16_i32 : i32
      %67 = vector.broadcast %66 : i32 to vector<288x1xi32>
      %68 = arith.remsi %64, %67 : vector<288x1xi32>
      %c0_i32_47 = arith.constant 0 : i32
      %69 = vector.broadcast %c0_i32_47 : i32 to vector<288x1xi32>
      %70 = arith.cmpi ne, %68, %69 : vector<288x1xi32>
      %c0_i32_48 = arith.constant 0 : i32
      %71 = vector.broadcast %c0_i32_48 : i32 to vector<288x1xi32>
      %72 = arith.cmpi slt, %68, %71 : vector<288x1xi32>
      %c0_i32_49 = arith.constant 0 : i32
      %73 = arith.cmpi slt, %66, %c0_i32_49 : i32
      %74 = vector.broadcast %73 : i1 to vector<288x1xi1>
      %75 = vector.broadcast %74 : vector<288x1xi1> to vector<288x1xi1>
      %76 = arith.xori %72, %75 : vector<288x1xi1>
      %77 = arith.andi %76, %70 : vector<288x1xi1>
      %78 = vector.broadcast %66 : i32 to vector<288x1xi32>
      %79 = arith.addi %68, %78 : vector<288x1xi32>
      %80 = arith.select %77, %79, %68 : vector<288x1xi1>, vector<288x1xi32>
      %c1_i32_50 = arith.constant 1 : i32
      %81 = tpu.dynamic_rotate %63 by %c1_i32_50 dim 0 : vector<288x64xf32>, i32 -> vector<288x64xf32>
      %c0_i32_51 = arith.constant 0 : i32
      %82 = vector.broadcast %c0_i32_51 : i32 to vector<288x1xi32>
      %83 = arith.cmpi ne, %80, %82 : vector<288x1xi32>
      %cst_52 = arith.constant 0.000000e+00 : f32
      %84 = vector.shape_cast %83 : vector<288x1xi1> to vector<288x1xi1>
      %85 = vector.broadcast %84 : vector<288x1xi1> to vector<288x64xi1>
      %86 = vector.broadcast %cst_52 : f32 to vector<288x64xf32>
      %87 = arith.select %85, %81, %86 : vector<288x64xi1>, vector<288x64xf32>
      %c287_i32 = arith.constant 287 : i32
      %88 = tpu.dynamic_rotate %63 by %c287_i32 dim 0 : vector<288x64xf32>, i32 -> vector<288x64xf32>
      %c15_i32 = arith.constant 15 : i32
      %89 = vector.broadcast %c15_i32 : i32 to vector<288x1xi32>
      %90 = arith.cmpi ne, %80, %89 : vector<288x1xi32>
      %cst_53 = arith.constant 0.000000e+00 : f32
      %91 = vector.shape_cast %90 : vector<288x1xi1> to vector<288x1xi1>
      %92 = vector.broadcast %91 : vector<288x1xi1> to vector<288x64xi1>
      %93 = vector.broadcast %cst_53 : f32 to vector<288x64xf32>
      %94 = arith.select %92, %88, %93 : vector<288x64xi1>, vector<288x64xf32>
      %95 = tpu.concatenate %87, %63, %94 in 1 : vector<288x64xf32>, vector<288x64xf32>, vector<288x64xf32> -> vector<288x192xf32>
      %96 = arith.truncf %95 : vector<288x192xf32> to vector<288x192xbf16>
      %cst_54 = arith.constant 0.000000e+00 : f32
      %97 = vector.broadcast %cst_54 : f32 to vector<256x256xf32>
      %98 = vector.extract_strided_slice %96 {offsets = [0, 0], sizes = [256, 192], strides = [1, 1]} : vector<288x192xbf16> to vector<256x192xbf16>
      %c0_55 = arith.constant 0 : index
      %c0_56 = arith.constant 0 : index
      %c0_57 = arith.constant 0 : index
      %99 = vector.load %arg7[%c0_55, %c0_56, %c0_57] : memref<3x192x256xbf16, #tpu.memory_space<vmem>>, vector<1x192x256xbf16>
      %100 = vector.shape_cast %99 : vector<1x192x256xbf16> to vector<192x256xbf16>
      %cst_58 = arith.constant dense<0.000000e+00> : vector<256x256xf32>
      %101 = tpu.matmul %98, %100, %cst_58 {dimension_numbers = #tpu.dot_dimension_numbers<[1], [0], [0], [1], [0, 0, 1, 1], [], []>} : vector<256x192xbf16>, vector<192x256xbf16>, vector<256x256xf32> -> vector<256x256xf32>
      %102 = arith.addf %97, %101 : vector<256x256xf32>
      %103 = vector.extract_strided_slice %96 {offsets = [16, 0], sizes = [256, 192], strides = [1, 1]} : vector<288x192xbf16> to vector<256x192xbf16>
      %c1_59 = arith.constant 1 : index
      %c0_60 = arith.constant 0 : index
      %c0_61 = arith.constant 0 : index
      %104 = vector.load %arg7[%c1_59, %c0_60, %c0_61] : memref<3x192x256xbf16, #tpu.memory_space<vmem>>, vector<1x192x256xbf16>
      %105 = vector.shape_cast %104 : vector<1x192x256xbf16> to vector<192x256xbf16>
      %cst_62 = arith.constant dense<0.000000e+00> : vector<256x256xf32>
      %106 = tpu.matmul %103, %105, %cst_62 {dimension_numbers = #tpu.dot_dimension_numbers<[1], [0], [0], [1], [0, 0, 1, 1], [], []>} : vector<256x192xbf16>, vector<192x256xbf16>, vector<256x256xf32> -> vector<256x256xf32>
      %107 = arith.addf %102, %106 : vector<256x256xf32>
      %108 = vector.extract_strided_slice %96 {offsets = [32, 0], sizes = [256, 192], strides = [1, 1]} : vector<288x192xbf16> to vector<256x192xbf16>
      %c2_63 = arith.constant 2 : index
      %c0_64 = arith.constant 0 : index
      %c0_65 = arith.constant 0 : index
      %109 = vector.load %arg7[%c2_63, %c0_64, %c0_65] : memref<3x192x256xbf16, #tpu.memory_space<vmem>>, vector<1x192x256xbf16>
      %110 = vector.shape_cast %109 : vector<1x192x256xbf16> to vector<192x256xbf16>
      %cst_66 = arith.constant dense<0.000000e+00> : vector<256x256xf32>
      %111 = tpu.matmul %108, %110, %cst_66 {dimension_numbers = #tpu.dot_dimension_numbers<[1], [0], [0], [1], [0, 0, 1, 1], [], []>} : vector<256x192xbf16>, vector<192x256xbf16>, vector<256x256xf32> -> vector<256x256xf32>
      %112 = arith.addf %107, %111 : vector<256x256xf32>
      %c0_67 = arith.constant 0 : index
      %c0_68 = arith.constant 0 : index
      %113 = vector.load %arg8[%c0_67, %c0_68] : memref<1x256xf32, #tpu.memory_space<vmem>>, vector<1x256xf32>
      %114 = vector.broadcast %113 : vector<1x256xf32> to vector<256x256xf32>
      %115 = arith.addf %112, %114 : vector<256x256xf32>
      %c0_69 = arith.constant 0 : index
      %c0_70 = arith.constant 0 : index
      %116 = vector.load %arg11[%c0_69, %c0_70] : memref<256x32xf32, #tpu.memory_space<vmem>>, vector<256x32xf32>
      %c0_71 = arith.constant 0 : index
      %c0_72 = arith.constant 0 : index
      %117 = vector.load %arg12[%c0_71, %c0_72] : memref<32x256xf32, #tpu.memory_space<vmem>>, vector<32x256xf32>
      %c0_73 = arith.constant 0 : index
      %c0_74 = arith.constant 0 : index
      %118 = vector.load %arg9[%c0_73, %c0_74] : memref<1x256xf32, #tpu.memory_space<vmem>>, vector<1x256xf32>
      %c0_75 = arith.constant 0 : index
      %c0_76 = arith.constant 0 : index
      %119 = vector.load %arg10[%c0_75, %c0_76] : memref<1x256xf32, #tpu.memory_space<vmem>>, vector<1x256xf32>
      %cst_77 = arith.constant dense<0.000000e+00> : vector<256xf32>
      %120 = vector.multi_reduction <add>, %115, %cst_77 [0] : vector<256x256xf32> to vector<256xf32>
      %121 = vector.shape_cast %120 : vector<256xf32> to vector<1x256xf32>
      %cst_78 = arith.constant dense<0.000000e+00> : vector<1x32xf32>
      %122 = tpu.matmul %121, %116, %cst_78 {dimension_numbers = #tpu.dot_dimension_numbers<[1], [0], [0], [1], [0, 0, 1, 1], [], []>} : vector<1x256xf32>, vector<256x32xf32>, vector<1x32xf32> -> vector<1x32xf32>
      %cst_79 = arith.constant dense<0.000000e+00> : vector<1x256xf32>
      %123 = tpu.matmul %122, %117, %cst_79 {dimension_numbers = #tpu.dot_dimension_numbers<[1], [0], [0], [1], [0, 0, 1, 1], [], []>} : vector<1x32xf32>, vector<32x256xf32>, vector<1x256xf32> -> vector<1x256xf32>
      %124 = vector.broadcast %123 : vector<1x256xf32> to vector<256x256xf32>
      %125 = arith.subf %115, %124 : vector<256x256xf32>
      %126 = arith.mulf %125, %125 : vector<256x256xf32>
      %cst_80 = arith.constant dense<0.000000e+00> : vector<256xf32>
      %127 = vector.multi_reduction <add>, %126, %cst_80 [0] : vector<256x256xf32> to vector<256xf32>
      %128 = vector.shape_cast %127 : vector<256xf32> to vector<1x256xf32>
      %cst_81 = arith.constant dense<0.000000e+00> : vector<1x32xf32>
      %129 = tpu.matmul %128, %116, %cst_81 {dimension_numbers = #tpu.dot_dimension_numbers<[1], [0], [0], [1], [0, 0, 1, 1], [], []>} : vector<1x256xf32>, vector<256x32xf32>, vector<1x32xf32> -> vector<1x32xf32>
      %cst_82 = arith.constant 9.99999974E-6 : f32
      %130 = vector.broadcast %cst_82 : f32 to vector<1x32xf32>
      %131 = arith.addf %129, %130 : vector<1x32xf32>
      %132 = math.rsqrt %131 : vector<1x32xf32>
      %cst_83 = arith.constant dense<0.000000e+00> : vector<1x256xf32>
      %133 = tpu.matmul %132, %117, %cst_83 {dimension_numbers = #tpu.dot_dimension_numbers<[1], [0], [0], [1], [0, 0, 1, 1], [], []>} : vector<1x32xf32>, vector<32x256xf32>, vector<1x256xf32> -> vector<1x256xf32>
      %134 = arith.mulf %133, %118 : vector<1x256xf32>
      %135 = vector.broadcast %134 : vector<1x256xf32> to vector<256x256xf32>
      %136 = arith.mulf %125, %135 : vector<256x256xf32>
      %137 = vector.broadcast %119 : vector<1x256xf32> to vector<256x256xf32>
      %138 = arith.addf %136, %137 : vector<256x256xf32>
      %139 = arith.negf %138 : vector<256x256xf32>
      %140 = math.exp %139 : vector<256x256xf32>
      %cst_84 = arith.constant 1.000000e+00 : f32
      %141 = vector.broadcast %cst_84 : f32 to vector<256x256xf32>
      %142 = arith.addf %141, %140 : vector<256x256xf32>
      %143 = arith.divf %141, %142 : vector<256x256xf32>
      %144 = arith.mulf %138, %143 : vector<256x256xf32>
      %cst_85 = arith.constant 0.000000e+00 : f32
      %145 = vector.broadcast %cst_85 : f32 to vector<16x256xf32>
      %146 = tpu.concatenate %145, %144, %145 in 0 : vector<16x256xf32>, vector<256x256xf32>, vector<16x256xf32> -> vector<288x256xf32>
      %147 = tpu.iota {dimensions = array<i32: 0>} : vector<288x1xi32>
      %c16_i32_86 = arith.constant 16 : i32
      %c0_i32_87 = arith.constant 0 : i32
      %148 = arith.cmpi eq, %c16_i32_86, %c0_i32_87 : i32
      %c1_i32_88 = arith.constant 1 : i32
      %149 = arith.select %148, %c1_i32_88, %c16_i32_86 : i32
      %150 = vector.broadcast %149 : i32 to vector<288x1xi32>
      %151 = arith.remsi %147, %150 : vector<288x1xi32>
      %c0_i32_89 = arith.constant 0 : i32
      %152 = vector.broadcast %c0_i32_89 : i32 to vector<288x1xi32>
      %153 = arith.cmpi ne, %151, %152 : vector<288x1xi32>
      %c0_i32_90 = arith.constant 0 : i32
      %154 = vector.broadcast %c0_i32_90 : i32 to vector<288x1xi32>
      %155 = arith.cmpi slt, %151, %154 : vector<288x1xi32>
      %c0_i32_91 = arith.constant 0 : i32
      %156 = arith.cmpi slt, %149, %c0_i32_91 : i32
      %157 = vector.broadcast %156 : i1 to vector<288x1xi1>
      %158 = vector.broadcast %157 : vector<288x1xi1> to vector<288x1xi1>
      %159 = arith.xori %155, %158 : vector<288x1xi1>
      %160 = arith.andi %159, %153 : vector<288x1xi1>
      %161 = vector.broadcast %149 : i32 to vector<288x1xi32>
      %162 = arith.addi %151, %161 : vector<288x1xi32>
      %163 = arith.select %160, %162, %151 : vector<288x1xi1>, vector<288x1xi32>
      %c1_i32_92 = arith.constant 1 : i32
      %164 = tpu.dynamic_rotate %146 by %c1_i32_92 dim 0 : vector<288x256xf32>, i32 -> vector<288x256xf32>
      %c0_i32_93 = arith.constant 0 : i32
      %165 = vector.broadcast %c0_i32_93 : i32 to vector<288x1xi32>
      %166 = arith.cmpi ne, %163, %165 : vector<288x1xi32>
      %cst_94 = arith.constant 0.000000e+00 : f32
      %167 = vector.shape_cast %166 : vector<288x1xi1> to vector<288x1xi1>
      %168 = vector.broadcast %167 : vector<288x1xi1> to vector<288x256xi1>
      %169 = vector.broadcast %cst_94 : f32 to vector<288x256xf32>
      %170 = arith.select %168, %164, %169 : vector<288x256xi1>, vector<288x256xf32>
      %c287_i32_95 = arith.constant 287 : i32
      %171 = tpu.dynamic_rotate %146 by %c287_i32_95 dim 0 : vector<288x256xf32>, i32 -> vector<288x256xf32>
      %c15_i32_96 = arith.constant 15 : i32
      %172 = vector.broadcast %c15_i32_96 : i32 to vector<288x1xi32>
      %173 = arith.cmpi ne, %163, %172 : vector<288x1xi32>
      %cst_97 = arith.constant 0.000000e+00 : f32
      %174 = vector.shape_cast %173 : vector<288x1xi1> to vector<288x1xi1>
      %175 = vector.broadcast %174 : vector<288x1xi1> to vector<288x256xi1>
      %176 = vector.broadcast %cst_97 : f32 to vector<288x256xf32>
      %177 = arith.select %175, %171, %176 : vector<288x256xi1>, vector<288x256xf32>
      %178 = tpu.concatenate %170, %146, %177 in 1 : vector<288x256xf32>, vector<288x256xf32>, vector<288x256xf32> -> vector<288x768xf32>
      %179 = arith.truncf %178 : vector<288x768xf32> to vector<288x768xbf16>
      %c0_98 = arith.constant 0 : index
      %c0_99 = arith.constant 0 : index
      %180 = vector.load %arg17[%c0_98, %c0_99] : memref<288x768xbf16, #tpu.memory_space<vmem>>, vector<288x768xbf16>
      tpu.vector_store %arg17[%c0_98, %c0_99], %179 {strides = array<i32>} : memref<288x768xbf16, #tpu.memory_space<vmem>>, vector<288x768xbf16>,
    } else {
    }
    %c0 = arith.constant 0 : index
    %c0_1 = arith.constant 0 : index
    %3 = vector.load %arg17[%c0, %c0_1] : memref<288x768xbf16, #tpu.memory_space<vmem>>, vector<288x768xbf16>
    %cst = arith.constant 0.000000e+00 : f32
    %4 = vector.broadcast %cst : f32 to vector<256x128xf32>
    %5 = vector.extract_strided_slice %3 {offsets = [0, 0], sizes = [256, 768], strides = [1, 1]} : vector<288x768xbf16> to vector<256x768xbf16>
    %c0_2 = arith.constant 0 : index
    %c0_3 = arith.constant 0 : index
    %c0_4 = arith.constant 0 : index
    %6 = vector.load %arg13[%c0_2, %c0_3, %c0_4] : memref<3x768x128xbf16, #tpu.memory_space<vmem>>, vector<1x768x128xbf16>
    %7 = vector.shape_cast %6 : vector<1x768x128xbf16> to vector<768x128xbf16>
    %cst_5 = arith.constant dense<0.000000e+00> : vector<256x128xf32>
    %8 = tpu.matmul %5, %7, %cst_5 {dimension_numbers = #tpu.dot_dimension_numbers<[1], [0], [0], [1], [0, 0, 1, 1], [], []>} : vector<256x768xbf16>, vector<768x128xbf16>, vector<256x128xf32> -> vector<256x128xf32>
    %9 = arith.addf %4, %8 : vector<256x128xf32>
    %10 = vector.extract_strided_slice %3 {offsets = [16, 0], sizes = [256, 768], strides = [1, 1]} : vector<288x768xbf16> to vector<256x768xbf16>
    %c1 = arith.constant 1 : index
    %c0_6 = arith.constant 0 : index
    %c0_7 = arith.constant 0 : index
    %11 = vector.load %arg13[%c1, %c0_6, %c0_7] : memref<3x768x128xbf16, #tpu.memory_space<vmem>>, vector<1x768x128xbf16>
    %12 = vector.shape_cast %11 : vector<1x768x128xbf16> to vector<768x128xbf16>
    %cst_8 = arith.constant dense<0.000000e+00> : vector<256x128xf32>
    %13 = tpu.matmul %10, %12, %cst_8 {dimension_numbers = #tpu.dot_dimension_numbers<[1], [0], [0], [1], [0, 0, 1, 1], [], []>} : vector<256x768xbf16>, vector<768x128xbf16>, vector<256x128xf32> -> vector<256x128xf32>
    %14 = arith.addf %9, %13 : vector<256x128xf32>
    %15 = vector.extract_strided_slice %3 {offsets = [32, 0], sizes = [256, 768], strides = [1, 1]} : vector<288x768xbf16> to vector<256x768xbf16>
    %c2 = arith.constant 2 : index
    %c0_9 = arith.constant 0 : index
    %c0_10 = arith.constant 0 : index
    %16 = vector.load %arg13[%c2, %c0_9, %c0_10] : memref<3x768x128xbf16, #tpu.memory_space<vmem>>, vector<1x768x128xbf16>
    %17 = vector.shape_cast %16 : vector<1x768x128xbf16> to vector<768x128xbf16>
    %cst_11 = arith.constant dense<0.000000e+00> : vector<256x128xf32>
    %18 = tpu.matmul %15, %17, %cst_11 {dimension_numbers = #tpu.dot_dimension_numbers<[1], [0], [0], [1], [0, 0, 1, 1], [], []>} : vector<256x768xbf16>, vector<768x128xbf16>, vector<256x128xf32> -> vector<256x128xf32>
    %19 = arith.addf %14, %18 : vector<256x128xf32>
    %c0_12 = arith.constant 0 : index
    %c0_13 = arith.constant 0 : index
    %c0_14 = arith.constant 0 : index
    %c0_15 = arith.constant 0 : index
    %20 = vector.load %arg2[%c0_12, %c0_13, %c0_14, %c0_15] : memref<1x16x16x64xf32, #tpu.memory_space<vmem>>, vector<1x16x16x64xf32>
    %21 = arith.truncf %20 : vector<1x16x16x64xf32> to vector<1x16x16x64xbf16>
    %22 = vector.shape_cast %21 : vector<1x16x16x64xbf16> to vector<256x64xbf16>
    %c0_16 = arith.constant 0 : index
    %c0_17 = arith.constant 0 : index
    %23 = vector.load %arg14[%c0_16, %c0_17] : memref<64x128xbf16, #tpu.memory_space<vmem>>, vector<64x128xbf16>
    %cst_18 = arith.constant dense<0.000000e+00> : vector<256x128xf32>
    %24 = tpu.matmul %22, %23, %cst_18 {dimension_numbers = #tpu.dot_dimension_numbers<[1], [0], [0], [1], [0, 0, 1, 1], [], []>} : vector<256x64xbf16>, vector<64x128xbf16>, vector<256x128xf32> -> vector<256x128xf32>
    %25 = arith.addf %19, %24 : vector<256x128xf32>
    %c0_19 = arith.constant 0 : index
    %c0_20 = arith.constant 0 : index
    %26 = vector.load %arg15[%c0_19, %c0_20] : memref<1x128xf32, #tpu.memory_space<vmem>>, vector<1x128xf32>
    %27 = vector.broadcast %26 : vector<1x128xf32> to vector<256x128xf32>
    %28 = arith.addf %25, %27 : vector<256x128xf32>
    %29 = vector.shape_cast %28 : vector<256x128xf32> to vector<1x16x16x128xf32>
    %c0_21 = arith.constant 0 : index
    %c0_22 = arith.constant 0 : index
    %c0_23 = arith.constant 0 : index
    %c0_24 = arith.constant 0 : index
    %30 = vector.load %arg16[%c0_21, %c0_22, %c0_23, %c0_24] : memref<1x16x16x128xf32, #tpu.memory_space<vmem>>, vector<1x16x16x128xf32>
    tpu.vector_store %arg16[%c0_21, %c0_22, %c0_23, %c0_24], %29 {strides = array<i32>} : memref<1x16x16x128xf32, #tpu.memory_space<vmem>>, vector<1x16x16x128xf32>,
    return
  }
  func.func @transform_0(%arg0: i32, %arg1: i32) -> (i32, i32, i32, i32) {
    %c0_i32 = arith.constant 0 : i32
    %c0_i32_0 = arith.constant 0 : i32
    %c0_i32_1 = arith.constant 0 : i32
    %c0_i32_2 = arith.constant 0 : i32
    return %arg0, %c0_i32, %c0_i32_0, %c0_i32_1 : i32, i32, i32, i32
  }
  func.func @transform_1(%arg0: i32, %arg1: i32) -> (i32, i32) {
    %c0_i32 = arith.constant 0 : i32
    %c0_i32_0 = arith.constant 0 : i32
    %c0_i32_1 = arith.constant 0 : i32
    return %c0_i32, %c0_i32_0 : i32, i32
  }
  func.func @transform_2(%arg0: i32, %arg1: i32) -> (i32, i32) {
    %c0_i32 = arith.constant 0 : i32
    %c0_i32_0 = arith.constant 0 : i32
    %c0_i32_1 = arith.constant 0 : i32
    return %c0_i32, %c0_i32_0 : i32, i32
  }
  func.func @transform_3(%arg0: i32, %arg1: i32) -> (i32, i32) {
    %c0_i32 = arith.constant 0 : i32
    %c0_i32_0 = arith.constant 0 : i32
    %c0_i32_1 = arith.constant 0 : i32
    return %c0_i32, %c0_i32_0 : i32, i32
  }
  func.func @transform_4(%arg0: i32, %arg1: i32) -> (i32, i32) {
    %c0_i32 = arith.constant 0 : i32
    %c0_i32_0 = arith.constant 0 : i32
    %c0_i32_1 = arith.constant 0 : i32
    return %c0_i32, %c0_i32_0 : i32, i32
  }
  func.func @transform_5(%arg0: i32, %arg1: i32) -> (i32, i32, i32) {
    %c0_i32 = arith.constant 0 : i32
    %c0_i32_0 = arith.constant 0 : i32
    %c0_i32_1 = arith.constant 0 : i32
    %c0_i32_2 = arith.constant 0 : i32
    return %c0_i32, %c0_i32_0, %c0_i32_1 : i32, i32, i32
  }
  func.func @transform_6(%arg0: i32, %arg1: i32) -> (i32, i32) {
    %c0_i32 = arith.constant 0 : i32
    %c0_i32_0 = arith.constant 0 : i32
    %c0_i32_1 = arith.constant 0 : i32
    return %c0_i32, %c0_i32_0 : i32, i32
  }
  func.func @transform_7(%arg0: i32, %arg1: i32) -> (i32, i32) {
    %c0_i32 = arith.constant 0 : i32
    %c0_i32_0 = arith.constant 0 : i32
    %c0_i32_1 = arith.constant 0 : i32
    return %c0_i32, %c0_i32_0 : i32, i32
  }
  func.func @transform_8(%arg0: i32, %arg1: i32) -> (i32, i32) {
    %c0_i32 = arith.constant 0 : i32
    %c0_i32_0 = arith.constant 0 : i32
    %c0_i32_1 = arith.constant 0 : i32
    return %c0_i32, %c0_i32_0 : i32, i32
  }
  func.func @transform_9(%arg0: i32, %arg1: i32) -> (i32, i32) {
    %c0_i32 = arith.constant 0 : i32
    %c0_i32_0 = arith.constant 0 : i32
    %c0_i32_1 = arith.constant 0 : i32
    return %c0_i32, %c0_i32_0 : i32, i32
  }
  func.func @transform_10(%arg0: i32, %arg1: i32) -> (i32, i32) {
    %c0_i32 = arith.constant 0 : i32
    %c0_i32_0 = arith.constant 0 : i32
    %c0_i32_1 = arith.constant 0 : i32
    return %c0_i32, %c0_i32_0 : i32, i32
  }
  func.func @transform_11(%arg0: i32, %arg1: i32) -> (i32, i32, i32) {
    %c0_i32 = arith.constant 0 : i32
    %c0_i32_0 = arith.constant 0 : i32
    %c0_i32_1 = arith.constant 0 : i32
    return %c0_i32, %c0_i32_0, %arg1 : i32, i32, i32
  }
  func.func @transform_12(%arg0: i32, %arg1: i32) -> (i32, i32) {
    %c0_i32 = arith.constant 0 : i32
    %c0_i32_0 = arith.constant 0 : i32
    return %c0_i32, %arg1 : i32, i32
  }
  func.func @transform_13(%arg0: i32, %arg1: i32) -> (i32, i32) {
    %c0_i32 = arith.constant 0 : i32
    %c0_i32_0 = arith.constant 0 : i32
    return %c0_i32, %arg1 : i32, i32
  }
  func.func @transform_14(%arg0: i32, %arg1: i32) -> (i32, i32, i32, i32) {
    %c0_i32 = arith.constant 0 : i32
    %c0_i32_0 = arith.constant 0 : i32
    %c0_i32_1 = arith.constant 0 : i32
    return %arg0, %c0_i32, %c0_i32_0, %arg1 : i32, i32, i32, i32
  }
}

</mosaic_0001>

<llo_original>
// kernel: tpu_custom_call.1
$region0: #{tpu_custom_call.1}
  #allocation0 [shape = 'u32[]', space=smem, size = 0x4, offset = 0x4, fixed_abs, tag = 'smem constant byte address 0x4 - core index']
  #allocation1 [shape = 'u32[144,128]{1,0:T(1,128)}', space=vmem, size = 0x12000, scoped, tag = 'internal scratch']
  #allocation2 [shape = 'bf16[288,768]{1,0:T(16,128)(2,1)}', space=vmem, size = 0x6c000, scoped, tag = 'scratch operand']
  %s0 = inlined_call_operand.hbm [shape: f32[2,16,16,64], index: 0, kind: input, shape index: {}]
  %s1 = inlined_call_operand.hbm [shape: f32[1,64], index: 1, kind: input, shape index: {}]
  %s2 = inlined_call_operand.hbm [shape: f32[1,64], index: 2, kind: input, shape index: {}]
  %s3 = inlined_call_operand.vmem [shape: f32[64,32], index: 3, kind: input, shape index: {}]
  %s4 = inlined_call_operand.hbm [shape: f32[32,64], index: 4, kind: input, shape index: {}]
  %s5 = inlined_call_operand.hbm [shape: bf16[3,192,256], index: 5, kind: input, shape index: {}]
  %s6 = inlined_call_operand.hbm [shape: f32[1,256], index: 6, kind: input, shape index: {}]
  %s7 = inlined_call_operand.hbm [shape: f32[1,256], index: 7, kind: input, shape index: {}]
  %s8 = inlined_call_operand.hbm [shape: f32[1,256], index: 8, kind: input, shape index: {}]
  %s9 = inlined_call_operand.vmem [shape: f32[256,32], index: 9, kind: input, shape index: {}]
  %s10 = inlined_call_operand.hbm [shape: f32[32,256], index: 10, kind: input, shape index: {}]
  %s11 = inlined_call_operand.hbm [shape: bf16[3,768,256], index: 11, kind: input, shape index: {}]
  %s12 = inlined_call_operand.hbm [shape: bf16[64,256], index: 12, kind: input, shape index: {}]
  %s13 = inlined_call_operand.hbm [shape: f32[1,256], index: 13, kind: input, shape index: {}]
  %s14 = inlined_call_operand.hbm [shape: f32[2,16,16,256], index: 14, kind: output, shape index: {}]
  %s15 = sld [smem:[#allocation0]]
  $region141: #{tpu_custom_call.1} parent=0
    _
  %s17 = ssub.s32 1, %s15
  %s18 = scalar_select 0, %s17, %s15
  $region1: #{tpu_custom_call.1} parent=0
    #allocation3 [shape = 'u8[262144]{0}', space=vmem, size = 0x40000, scoped, tag = 'input window, operand 0']
    #allocation4 [shape = 's32[2]{0}', space=sflag, size = 0x8, scoped, tag = 'scoped memory for tpu_custom_call.1']
    #allocation5 [shape = 's32[2]{0}', space=sflag, size = 0x8, scoped, tag = 'scoped memory for tpu_custom_call.1']
    #allocation6 [shape = 'u8[512]{0}', space=vmem, size = 0x400, scoped, tag = 'input window, operand 1, single buffered']
    #allocation7 [shape = 's32[1]{0}', space=sflag, size = 0x4, scoped, tag = 'scoped memory for tpu_custom_call.1']
    #allocation8 [shape = 'u8[512]{0}', space=vmem, size = 0x400, scoped, tag = 'input window, operand 2, single buffered']
    #allocation9 [shape = 'u8[16384]{0}', space=vmem, size = 0x4000, scoped, tag = 'input window, operand 4, single buffered']
    #allocation10 [shape = 's32[1]{0}', space=sflag, size = 0x4, scoped, tag = 'scoped memory for tpu_custom_call.1']
    #allocation11 [shape = 'u8[294912]{0}', space=vmem, size = 0x48000, scoped, tag = 'input window, operand 5, single buffered']
    #allocation12 [shape = 'u8[1024]{0}', space=vmem, size = 0x400, scoped, tag = 'input window, operand 6, single buffered']
    #allocation13 [shape = 's32[1]{0}', space=sflag, size = 0x4, scoped, tag = 'scoped memory for tpu_custom_call.1']
    #allocation14 [shape = 'u8[1024]{0}', space=vmem, size = 0x400, scoped, tag = 'input window, operand 7, single buffered']
    #allocation15 [shape = 'u8[1024]{0}', space=vmem, size = 0x400, scoped, tag = 'input window, operand 8, single buffered']
    #allocation16 [shape = 's32[1]{0}', space=sflag, size = 0x4, scoped, tag = 'scoped memory for tpu_custom_call.1']
    #allocation17 [shape = 'u8[32768]{0}', space=vmem, size = 0x8000, scoped, tag = 'input window, operand 10, single buffered']
    #allocation18 [shape = 'u8[1179648]{0}', space=vmem, size = 0x120000, scoped, tag = 'input window, operand 11']
    #allocation19 [shape = 's32[2]{0}', space=sflag, size = 0x8, scoped, tag = 'scoped memory for tpu_custom_call.1']
    #allocation20 [shape = 'u8[32768]{0}', space=vmem, size = 0x8000, scoped, tag = 'input window, operand 12']
    #allocation21 [shape = 'u8[1024]{0}', space=vmem, size = 0x400, scoped, tag = 'input window, operand 13']
    #allocation22 [shape = 's32[2]{0}', space=sflag, size = 0x8, scoped, tag = 'scoped memory for tpu_custom_call.1']
    #allocation23 [shape = 'u8[262144]{0}', space=vmem, size = 0x40000, scoped, tag = 'output window, operand 0']
    %19 = vsyncpa [#allocation4], 0
    %s20 = scalar_lea.sflag [#allocation4], 1
    %21 = vsyncpa %s20, 0
    %22 = vsyncpa [#allocation7], 0
    %23 = vsyncpa [#allocation10], 0
    %24 = vsyncpa [#allocation13], 0
    %25 = vsyncpa [#allocation16], 0
    %26 = vsyncpa [#allocation19], 0
    %s27 = scalar_lea.sflag [#allocation19], 1
    %28 = vsyncpa %s27, 0
    %29 = vsyncpa [#allocation22], 0
    %s30 = scalar_lea.sflag [#allocation22], 1
    %31 = vsyncpa %s30, 0
    %32 = vsyncpa [#allocation5], 0
    %s33 = scalar_lea.sflag [#allocation5], 1
    %34 = vsyncpa %s33, 0
    loop: start=0, step=1, limit=6
    $region2: #{tpu_custom_call.1} parent=1 // loop_pre_header
      _
    $region3: #{tpu_custom_call.1} parent=1 // loop_header
      %s36 = sphi 0, %s40
      %p37 = scmp.ge.s32.totalorder %s36, 6
      %s43 = sphi 0, %s55
      %s44 = sphi 0, %s51
      %s45 = sphi 0, %s43
      %s46 = sphi 0, %s44
      %s47 = sphi 0, %s45
      %s48 = sphi 0, %s46
      %s58 = sphi 0, %s60
      %s61 = sphi 0, %s58
      %s62 = sphi 0, %s61
      %s78 = sphi 0, %s62
      %s82 = sphi 0, %s82
      %s84 = sphi 0, %s82
      %s85 = sphi 0, %s84
      %s99 = sphi 0, %s85
      %s103 = sphi 0, %s103
      %s105 = sphi 0, %s103
      %s106 = sphi 0, %s105
      %s120 = sphi 0, %s106
      %s124 = sphi 0, %s124
      %s126 = sphi 0, %s124
      %s127 = sphi 0, %s126
      %s141 = sphi 0, %s127
      %s145 = sphi 0, %s145
      %s147 = sphi 0, %s145
      %s148 = sphi 0, %s147
      %s162 = sphi 0, %s148
      %s166 = sphi 0, %s166
      %s168 = sphi 0, %s166
      %s169 = sphi 0, %s168
      %s183 = sphi 0, %s169
      %s187 = sphi 0, %s187
      %s189 = sphi 0, %s187
      %s190 = sphi 0, %s189
      %s204 = sphi 0, %s190
      %s208 = sphi 0, %s208
      %s210 = sphi 0, %s208
      %s211 = sphi 0, %s210
      %s225 = sphi 0, %s211
      %s229 = sphi 0, %s229
      %s231 = sphi 0, %s229
      %s232 = sphi 0, %s231
      %s246 = sphi 0, %s232
      %s250 = sphi 0, %s250
      %s252 = sphi 0, %s250
      %s253 = sphi 0, %s252
      %s267 = sphi 0, %s253
      %s271 = sphi 0, %s271
      %s273 = sphi 0, %s271
      %s274 = sphi 0, %s273
      %s288 = sphi 0, %s274
      %s294 = sphi 0, %s296
      %s297 = sphi 0, %s294
      %s298 = sphi 0, %s297
      %s314 = sphi 0, %s298
      %s320 = sphi 0, %s322
      %s323 = sphi 0, %s320
      %s324 = sphi 0, %s323
      %s340 = sphi 0, %s324
      %s346 = sphi 0, %s348
      %s349 = sphi 0, %s346
      %s350 = sphi 0, %s349
      %s366 = sphi 0, %s350
      %s374 = sphi 0, %s376
      %s377 = sphi 0, %s374
      %s378 = sphi 0, %s377
      %s394 = sphi 0, %s378
    $region4: #{tpu_custom_call.1} parent=1 // loop_header_branch
      %39 = sbr.rel (%p37) target = $region8
    $region5: #{tpu_custom_call.1} parent=1 // loop_body
      %s41 = ssub.s32 %s36, 1
      %s42 = ssub.s32 %s36, 2
      %s49 = sadd.s32 1, %s44
      %p50 = scmp.ge.s32.totalorder %s49, 2
      %s51 = scalar_select %p50, 0, %s49
      %s52 = sadd.s32 1, %s43
      %s53 = scalar_select %p50, %s52, %s43
      %p54 = scmp.ge.s32.totalorder %s53, 2
      %s55 = scalar_select %p54, 0, %s53
      %s56 = ssub.s32 %s43, %s55
      %p57 = scmp.eq.s32.totalorder %s56, 0
      %s59 = sadd.s32 %s58, 1
      %s60 = scalar_select %p57, %s58, %s59
      %p63 = pneg %p57
      %p64 = scmp.eq.s32.totalorder %s36, 3
      %p65 = por %p63, %p64
      %p66 = scmp.ne.s32.totalorder %s58, %s61
      %p67 = scmp.eq.s32.totalorder %s36, 0
      %p68 = por %p66, %p67
      %p69 = scmp.ne.s32.totalorder %s58, %s61
      %p70 = scmp.eq.s32.totalorder %s41, 3
      %p71 = por %p69, %p70
      %p72 = scmp.ne.s32.totalorder %s61, %s62
      %p73 = scmp.eq.s32.totalorder %s41, 0
      %p74 = por %p72, %p73
      %p75 = scmp.ne.s32.totalorder %s61, %s62
      %p76 = scmp.eq.s32.totalorder %s42, 3
      %p77 = por %p75, %p76
      %p79 = scmp.ne.s32.totalorder %s62, %s78
      %p80 = scmp.eq.s32.totalorder %s42, 0
      %p81 = por %p79, %p80
      %s83 = sadd.s32 %s82, 1
      %p86 = scmp.eq.s32.totalorder %s36, 3
      %p87 = scmp.ne.s32.totalorder %s82, %s84
      %p88 = scmp.eq.s32.totalorder %s36, 0
      %p89 = por %p87, %p88
      %p90 = scmp.ne.s32.totalorder %s82, %s84
      %p91 = scmp.eq.s32.totalorder %s41, 3
      %p92 = por %p90, %p91
      %p93 = scmp.ne.s32.totalorder %s84, %s85
      %p94 = scmp.eq.s32.totalorder %s41, 0
      %p95 = por %p93, %p94
      %p96 = scmp.ne.s32.totalorder %s84, %s85
      %p97 = scmp.eq.s32.totalorder %s42, 3
      %p98 = por %p96, %p97
      %p100 = scmp.ne.s32.totalorder %s85, %s99
      %p101 = scmp.eq.s32.totalorder %s42, 0
      %p102 = por %p100, %p101
      %s104 = sadd.s32 %s103, 1
      %p107 = scmp.eq.s32.totalorder %s36, 3
      %p108 = scmp.ne.s32.totalorder %s103, %s105
      %p109 = scmp.eq.s32.totalorder %s36, 0
      %p110 = por %p108, %p109
      %p111 = scmp.ne.s32.totalorder %s103, %s105
      %p112 = scmp.eq.s32.totalorder %s41, 3
      %p113 = por %p111, %p112
      %p114 = scmp.ne.s32.totalorder %s105, %s106
      %p115 = scmp.eq.s32.totalorder %s41, 0
      %p116 = por %p114, %p115
      %p117 = scmp.ne.s32.totalorder %s105, %s106
      %p118 = scmp.eq.s32.totalorder %s42, 3
      %p119 = por %p117, %p118
      %p121 = scmp.ne.s32.totalorder %s106, %s120
      %p122 = scmp.eq.s32.totalorder %s42, 0
      %p123 = por %p121, %p122
      %s125 = sadd.s32 %s124, 1
      %p128 = scmp.eq.s32.totalorder %s36, 3
      %p129 = scmp.ne.s32.totalorder %s124, %s126
      %p130 = scmp.eq.s32.totalorder %s36, 0
      %p131 = por %p129, %p130
      %p132 = scmp.ne.s32.totalorder %s124, %s126
      %p133 = scmp.eq.s32.totalorder %s41, 3
      %p134 = por %p132, %p133
      %p135 = scmp.ne.s32.totalorder %s126, %s127
      %p136 = scmp.eq.s32.totalorder %s41, 0
      %p137 = por %p135, %p136
      %p138 = scmp.ne.s32.totalorder %s126, %s127
      %p139 = scmp.eq.s32.totalorder %s42, 3
      %p140 = por %p138, %p139
      %p142 = scmp.ne.s32.totalorder %s127, %s141
      %p143 = scmp.eq.s32.totalorder %s42, 0
      %p144 = por %p142, %p143
      %s146 = sadd.s32 %s145, 1
      %p149 = scmp.eq.s32.totalorder %s36, 3
      %p150 = scmp.ne.s32.totalorder %s145, %s147
      %p151 = scmp.eq.s32.totalorder %s36, 0
      %p152 = por %p150, %p151
      %p153 = scmp.ne.s32.totalorder %s145, %s147
      %p154 = scmp.eq.s32.totalorder %s41, 3
      %p155 = por %p153, %p154
      %p156 = scmp.ne.s32.totalorder %s147, %s148
      %p157 = scmp.eq.s32.totalorder %s41, 0
      %p158 = por %p156, %p157
      %p159 = scmp.ne.s32.totalorder %s147, %s148
      %p160 = scmp.eq.s32.totalorder %s42, 3
      %p161 = por %p159, %p160
      %p163 = scmp.ne.s32.totalorder %s148, %s162
      %p164 = scmp.eq.s32.totalorder %s42, 0
      %p165 = por %p163, %p164
      %s167 = sadd.s32 %s166, 1
      %p170 = scmp.eq.s32.totalorder %s36, 3
      %p171 = scmp.ne.s32.totalorder %s166, %s168
      %p172 = scmp.eq.s32.totalorder %s36, 0
      %p173 = por %p171, %p172
      %p174 = scmp.ne.s32.totalorder %s166, %s168
      %p175 = scmp.eq.s32.totalorder %s41, 3
      %p176 = por %p174, %p175
      %p177 = scmp.ne.s32.totalorder %s168, %s169
      %p178 = scmp.eq.s32.totalorder %s41, 0
      %p179 = por %p177, %p178
      %p180 = scmp.ne.s32.totalorder %s168, %s169
      %p181 = scmp.eq.s32.totalorder %s42, 3
      %p182 = por %p180, %p181
      %p184 = scmp.ne.s32.totalorder %s169, %s183
      %p185 = scmp.eq.s32.totalorder %s42, 0
      %p186 = por %p184, %p185
      %s188 = sadd.s32 %s187, 1
      %p191 = scmp.eq.s32.totalorder %s36, 3
      %p192 = scmp.ne.s32.totalorder %s187, %s189
      %p193 = scmp.eq.s32.totalorder %s36, 0
      %p194 = por %p192, %p193
      %p195 = scmp.ne.s32.totalorder %s187, %s189
      %p196 = scmp.eq.s32.totalorder %s41, 3
      %p197 = por %p195, %p196
      %p198 = scmp.ne.s32.totalorder %s189, %s190
      %p199 = scmp.eq.s32.totalorder %s41, 0
      %p200 = por %p198, %p199
      %p201 = scmp.ne.s32.totalorder %s189, %s190
      %p202 = scmp.eq.s32.totalorder %s42, 3
      %p203 = por %p201, %p202
      %p205 = scmp.ne.s32.totalorder %s190, %s204
      %p206 = scmp.eq.s32.totalorder %s42, 0
      %p207 = por %p205, %p206
      %s209 = sadd.s32 %s208, 1
      %p212 = scmp.eq.s32.totalorder %s36, 3
      %p213 = scmp.ne.s32.totalorder %s208, %s210
      %p214 = scmp.eq.s32.totalorder %s36, 0
      %p215 = por %p213, %p214
      %p216 = scmp.ne.s32.totalorder %s208, %s210
      %p217 = scmp.eq.s32.totalorder %s41, 3
      %p218 = por %p216, %p217
      %p219 = scmp.ne.s32.totalorder %s210, %s211
      %p220 = scmp.eq.s32.totalorder %s41, 0
      %p221 = por %p219, %p220
      %p222 = scmp.ne.s32.totalorder %s210, %s211
      %p223 = scmp.eq.s32.totalorder %s42, 3
      %p224 = por %p222, %p223
      %p226 = scmp.ne.s32.totalorder %s211, %s225
      %p227 = scmp.eq.s32.totalorder %s42, 0
      %p228 = por %p226, %p227
      %s230 = sadd.s32 %s229, 1
      %p233 = scmp.eq.s32.totalorder %s36, 3
      %p234 = scmp.ne.s32.totalorder %s229, %s231
      %p235 = scmp.eq.s32.totalorder %s36, 0
      %p236 = por %p234, %p235
      %p237 = scmp.ne.s32.totalorder %s229, %s231
      %p238 = scmp.eq.s32.totalorder %s41, 3
      %p239 = por %p237, %p238
      %p240 = scmp.ne.s32.totalorder %s231, %s232
      %p241 = scmp.eq.s32.totalorder %s41, 0
      %p242 = por %p240, %p241
      %p243 = scmp.ne.s32.totalorder %s231, %s232
      %p244 = scmp.eq.s32.totalorder %s42, 3
      %p245 = por %p243, %p244
      %p247 = scmp.ne.s32.totalorder %s232, %s246
      %p248 = scmp.eq.s32.totalorder %s42, 0
      %p249 = por %p247, %p248
      %s251 = sadd.s32 %s250, 1
      %p254 = scmp.eq.s32.totalorder %s36, 3
      %p255 = scmp.ne.s32.totalorder %s250, %s252
      %p256 = scmp.eq.s32.totalorder %s36, 0
      %p257 = por %p255, %p256
      %p258 = scmp.ne.s32.totalorder %s250, %s252
      %p259 = scmp.eq.s32.totalorder %s41, 3
      %p260 = por %p258, %p259
      %p261 = scmp.ne.s32.totalorder %s252, %s253
      %p262 = scmp.eq.s32.totalorder %s41, 0
      %p263 = por %p261, %p262
      %p264 = scmp.ne.s32.totalorder %s252, %s253
      %p265 = scmp.eq.s32.totalorder %s42, 3
      %p266 = por %p264, %p265
      %p268 = scmp.ne.s32.totalorder %s253, %s267
      %p269 = scmp.eq.s32.totalorder %s42, 0
      %p270 = por %p268, %p269
      %s272 = sadd.s32 %s271, 1
      %p275 = scmp.eq.s32.totalorder %s36, 3
      %p276 = scmp.ne.s32.totalorder %s271, %s273
      %p277 = scmp.eq.s32.totalorder %s36, 0
      %p278 = por %p276, %p277
      %p279 = scmp.ne.s32.totalorder %s271, %s273
      %p280 = scmp.eq.s32.totalorder %s41, 3
      %p281 = por %p279, %p280
      %p282 = scmp.ne.s32.totalorder %s273, %s274
      %p283 = scmp.eq.s32.totalorder %s41, 0
      %p284 = por %p282, %p283
      %p285 = scmp.ne.s32.totalorder %s273, %s274
      %p286 = scmp.eq.s32.totalorder %s42, 3
      %p287 = por %p285, %p286
      %p289 = scmp.ne.s32.totalorder %s274, %s288
      %p290 = scmp.eq.s32.totalorder %s42, 0
      %p291 = por %p289, %p290
      %s292 = ssub.s32 %s44, %s51
      %p293 = scmp.eq.s32.totalorder %s292, 0
      %s295 = sadd.s32 %s294, 1
      %s296 = scalar_select %p293, %s294, %s295
      %p299 = pneg %p293
      %p300 = scmp.eq.s32.totalorder %s36, 3
      %p301 = por %p299, %p300
      %p302 = scmp.ne.s32.totalorder %s294, %s297
      %p303 = scmp.eq.s32.totalorder %s36, 0
      %p304 = por %p302, %p303
      %p305 = scmp.ne.s32.totalorder %s294, %s297
      %p306 = scmp.eq.s32.totalorder %s41, 3
      %p307 = por %p305, %p306
      %p308 = scmp.ne.s32.totalorder %s297, %s298
      %p309 = scmp.eq.s32.totalorder %s41, 0
      %p310 = por %p308, %p309
      %p311 = scmp.ne.s32.totalorder %s297, %s298
      %p312 = scmp.eq.s32.totalorder %s42, 3
      %p313 = por %p311, %p312
      %p315 = scmp.ne.s32.totalorder %s298, %s314
      %p316 = scmp.eq.s32.totalorder %s42, 0
      %p317 = por %p315, %p316
      %s318 = ssub.s32 %s44, %s51
      %p319 = scmp.eq.s32.totalorder %s318, 0
      %s321 = sadd.s32 %s320, 1
      %s322 = scalar_select %p319, %s320, %s321
      %p325 = pneg %p319
      %p326 = scmp.eq.s32.totalorder %s36, 3
      %p327 = por %p325, %p326
      %p328 = scmp.ne.s32.totalorder %s320, %s323
      %p329 = scmp.eq.s32.totalorder %s36, 0
      %p330 = por %p328, %p329
      %p331 = scmp.ne.s32.totalorder %s320, %s323
      %p332 = scmp.eq.s32.totalorder %s41, 3
      %p333 = por %p331, %p332
      %p334 = scmp.ne.s32.totalorder %s323, %s324
      %p335 = scmp.eq.s32.totalorder %s41, 0
      %p336 = por %p334, %p335
      %p337 = scmp.ne.s32.totalorder %s323, %s324
      %p338 = scmp.eq.s32.totalorder %s42, 3
      %p339 = por %p337, %p338
      %p341 = scmp.ne.s32.totalorder %s324, %s340
      %p342 = scmp.eq.s32.totalorder %s42, 0
      %p343 = por %p341, %p342
      %s344 = ssub.s32 %s44, %s51
      %p345 = scmp.eq.s32.totalorder %s344, 0
      %s347 = sadd.s32 %s346, 1
      %s348 = scalar_select %p345, %s346, %s347
      %p351 = pneg %p345
      %p352 = scmp.eq.s32.totalorder %s36, 3
      %p353 = por %p351, %p352
      %p354 = scmp.ne.s32.totalorder %s346, %s349
      %p355 = scmp.eq.s32.totalorder %s36, 0
      %p356 = por %p354, %p355
      %p357 = scmp.ne.s32.totalorder %s346, %s349
      %p358 = scmp.eq.s32.totalorder %s41, 3
      %p359 = por %p357, %p358
      %p360 = scmp.ne.s32.totalorder %s349, %s350
      %p361 = scmp.eq.s32.totalorder %s41, 0
      %p362 = por %p360, %p361
      %p363 = scmp.ne.s32.totalorder %s349, %s350
      %p364 = scmp.eq.s32.totalorder %s42, 3
      %p365 = por %p363, %p364
      %p367 = scmp.ne.s32.totalorder %s350, %s366
      %p368 = scmp.eq.s32.totalorder %s42, 0
      %p369 = por %p367, %p368
      %s370 = ssub.s32 %s43, %s55
      %s371 = ssub.s32 %s44, %s51
      %s372 = sor.u32 %s370, %s371
      %p373 = scmp.eq.s32.totalorder %s372, 0
      %s375 = sadd.s32 %s374, 1
      %s376 = scalar_select %p373, %s374, %s375
      %p379 = pneg %p373
      %p380 = scmp.eq.s32.totalorder %s36, 3
      %p381 = por %p379, %p380
      %p382 = scmp.ne.s32.totalorder %s374, %s377
      %p383 = scmp.eq.s32.totalorder %s36, 0
      %p384 = por %p382, %p383
      %p385 = scmp.ne.s32.totalorder %s374, %s377
      %p386 = scmp.eq.s32.totalorder %s41, 3
      %p387 = por %p385, %p386
      %p388 = scmp.ne.s32.totalorder %s377, %s378
      %p389 = scmp.eq.s32.totalorder %s41, 0
      %p390 = por %p388, %p389
      %p391 = scmp.ne.s32.totalorder %s377, %s378
      %p392 = scmp.eq.s32.totalorder %s42, 3
      %p393 = por %p391, %p392
      %p395 = scmp.ne.s32.totalorder %s378, %s394
      %p396 = scmp.eq.s32.totalorder %s42, 0
      %p397 = por %p395, %p396
      %p398 = scmp.le.s32.totalorder 1, %s36
      %p399 = scmp.lt.s32.totalorder %s36, 5
      %p400 = pnand %p398, %p399
      %p401 = pneg %p400
      // Predicated region
      $region9: #{tpu_custom_call.1} parent=5 // pred_check
        _
      $region10: #{tpu_custom_call.1} parent=5 // pred_check_branch
        %403 = sbr.rel (%p400) target = $region12
      $region11: #{tpu_custom_call.1} parent=5 // pred_region
        %s404 = ssub.s32 %s36, 1
        // Predicated region
        $region13: #{tpu_custom_call.1} parent=11 // pred_check
          %p405 = pneg %p95
        $region14: #{tpu_custom_call.1} parent=11 // pred_check_branch
          %407 = sbr.rel (%p405) target = $region16
        $region15: #{tpu_custom_call.1} parent=11 // pred_region
          %s409 = ssub.s32 16, 16
          %410 = vsyncadd [#allocation7], %s409
          %s412 = sshll.u32 [#allocation6], 4
          %s413 = int_to_ptr.vmem [resolvable:$true] %s412
          %415 = dma.hbm_to_vmem [thread:$0]  %s1, 16, %s413, [#allocation7]
        $region16: #{tpu_custom_call.1} parent=11 // pred_fallthru
          _
        // Predicated region
        $region17: #{tpu_custom_call.1} parent=11 // pred_check
          %p416 = pneg %p116
        $region18: #{tpu_custom_call.1} parent=11 // pred_check_branch
          %418 = sbr.rel (%p416) target = $region20
        $region19: #{tpu_custom_call.1} parent=11 // pred_region
          %s420 = ssub.s32 16, 16
          %421 = vsyncadd [#allocation7], %s420
          %s423 = sshll.u32 [#allocation8], 4
          %s424 = int_to_ptr.vmem [resolvable:$true] %s423
          %426 = dma.hbm_to_vmem [thread:$0]  %s2, 16, %s424, [#allocation7]
        $region20: #{tpu_custom_call.1} parent=11 // pred_fallthru
          _
        // Predicated region
        $region21: #{tpu_custom_call.1} parent=11 // pred_check
          %p427 = pneg %p137
        $region22: #{tpu_custom_call.1} parent=11 // pred_check_branch
          %429 = sbr.rel (%p427) target = $region24
        $region23: #{tpu_custom_call.1} parent=11 // pred_region
          _
        $region24: #{tpu_custom_call.1} parent=11 // pred_fallthru
          _
        // Predicated region
        $region25: #{tpu_custom_call.1} parent=11 // pred_check
          %p430 = pneg %p158
        $region26: #{tpu_custom_call.1} parent=11 // pred_check_branch
          %432 = sbr.rel (%p430) target = $region28
        $region27: #{tpu_custom_call.1} parent=11 // pred_region
          %s434 = ssub.s32 512, 512
          %435 = vsyncadd [#allocation10], %s434
          %s436 = sshll.u32 [#allocation9], 4
          %s437 = int_to_ptr.vmem [resolvable:$true] %s436
          %442 = dma.hbm_to_vmem [thread:$0]  %s4, 512, %s437, [#allocation10], 128, 128, 8
        $region28: #{tpu_custom_call.1} parent=11 // pred_fallthru
          _
        // Predicated region
        $region29: #{tpu_custom_call.1} parent=11 // pred_check
          %p443 = pneg %p179
        $region30: #{tpu_custom_call.1} parent=11 // pred_check_branch
          %445 = sbr.rel (%p443) target = $region32
        $region31: #{tpu_custom_call.1} parent=11 // pred_region
          %s447 = ssub.s32 9216, 9216
          %448 = vsyncadd [#allocation10], %s447
          %s449 = sshll.u32 [#allocation11], 4
          %s450 = int_to_ptr.vmem [resolvable:$true] %s449
          %455 = dma.hbm_to_vmem [thread:$0]  %s5, 9216, %s450, [#allocation10], 128, 128, 8
        $region32: #{tpu_custom_call.1} parent=11 // pred_fallthru
          _
        // Predicated region
        $region33: #{tpu_custom_call.1} parent=11 // pred_check
          %p456 = pneg %p200
        $region34: #{tpu_custom_call.1} parent=11 // pred_check_branch
          %458 = sbr.rel (%p456) target = $region36
        $region35: #{tpu_custom_call.1} parent=11 // pred_region
          %s460 = ssub.s32 32, 32
          %461 = vsyncadd [#allocation13], %s460
          %s463 = sshll.u32 [#allocation12], 4
          %s464 = int_to_ptr.vmem [resolvable:$true] %s463
          %466 = dma.hbm_to_vmem [thread:$0]  %s6, 32, %s464, [#allocation13]
        $region36: #{tpu_custom_call.1} parent=11 // pred_fallthru
          _
        // Predicated region
        $region37: #{tpu_custom_call.1} parent=11 // pred_check
          %p467 = pneg %p221
        $region38: #{tpu_custom_call.1} parent=11 // pred_check_branch
          %469 = sbr.rel (%p467) target = $region40
        $region39: #{tpu_custom_call.1} parent=11 // pred_region
          %s471 = ssub.s32 32, 32
          %472 = vsyncadd [#allocation13], %s471
          %s474 = sshll.u32 [#allocation14], 4
          %s475 = int_to_ptr.vmem [resolvable:$true] %s474
          %477 = dma.hbm_to_vmem [thread:$0]  %s7, 32, %s475, [#allocation13]
        $region40: #{tpu_custom_call.1} parent=11 // pred_fallthru
          _
        // Predicated region
        $region41: #{tpu_custom_call.1} parent=11 // pred_check
          %p478 = pneg %p242
        $region42: #{tpu_custom_call.1} parent=11 // pred_check_branch
          %480 = sbr.rel (%p478) target = $region44
        $region43: #{tpu_custom_call.1} parent=11 // pred_region
          %s482 = ssub.s32 32, 32
          %483 = vsyncadd [#allocation16], %s482
          %s485 = sshll.u32 [#allocation15], 4
          %s486 = int_to_ptr.vmem [resolvable:$true] %s485
          %488 = dma.hbm_to_vmem [thread:$0]  %s8, 32, %s486, [#allocation16]
        $region44: #{tpu_custom_call.1} parent=11 // pred_fallthru
          _
        // Predicated region
        $region45: #{tpu_custom_call.1} parent=11 // pred_check
          %p489 = pneg %p263
        $region46: #{tpu_custom_call.1} parent=11 // pred_check_branch
          %491 = sbr.rel (%p489) target = $region48
        $region47: #{tpu_custom_call.1} parent=11 // pred_region
          _
        $region48: #{tpu_custom_call.1} parent=11 // pred_fallthru
          _
        // Predicated region
        $region49: #{tpu_custom_call.1} parent=11 // pred_check
          %p492 = pneg %p284
        $region50: #{tpu_custom_call.1} parent=11 // pred_check_branch
          %494 = sbr.rel (%p492) target = $region52
        $region51: #{tpu_custom_call.1} parent=11 // pred_region
          %s496 = ssub.s32 1024, 1024
          %497 = vsyncadd [#allocation16], %s496
          %s498 = sshll.u32 [#allocation17], 4
          %s499 = int_to_ptr.vmem [resolvable:$true] %s498
          %504 = dma.hbm_to_vmem [thread:$0]  %s10, 1024, %s499, [#allocation16], 256, 256, 16
        $region52: #{tpu_custom_call.1} parent=11 // pred_fallthru
          _
      $region12: #{tpu_custom_call.1} parent=5 // pred_fallthru
        _
      %p505 = scmp.lt.s32.totalorder %s36, 4
      // Predicated region
      $region53: #{tpu_custom_call.1} parent=5 // pred_check
        %p506 = pneg %p505
      $region54: #{tpu_custom_call.1} parent=5 // pred_check_branch
        %508 = sbr.rel (%p506) target = $region56
      $region55: #{tpu_custom_call.1} parent=5 // pred_region
        // Predicated region
        $region57: #{tpu_custom_call.1} parent=55 // pred_check
          %p509 = pneg %p68
        $region58: #{tpu_custom_call.1} parent=55 // pred_check_branch
          %511 = sbr.rel (%p509) target = $region60
        $region59: #{tpu_custom_call.1} parent=55 // pred_region
          %s512 = sand.u32 %s58, 1
          %s513 = scalar_lea.sflag [#allocation4], %s512
          %s514 = sand.u32 %s58, 1
          %s515 = smul.addr %s514, 256
          %s516 = scalar_lea.vmem [#allocation3], %s515
          %s518 = ssub.s32 4096, 4096
          %519 = vsyncadd %s513, %s518
          %s520 = smul.addr %s43, 32
          %s521 = smul.addr %s520, 128
          %s522 = scalar_lea.hbm %s0, %s521
          %s523 = sshll.u32 %s516, 4
          %s524 = int_to_ptr.vmem [resolvable:$true] %s523
          %529 = dma.hbm_to_vmem [thread:$0]  %s522, 4096, %s524, %s513, 128, 128, 8
        $region60: #{tpu_custom_call.1} parent=55 // pred_fallthru
          _
        // Predicated region
        $region61: #{tpu_custom_call.1} parent=55 // pred_check
          %p530 = pneg %p304
        $region62: #{tpu_custom_call.1} parent=55 // pred_check_branch
          %532 = sbr.rel (%p530) target = $region64
        $region63: #{tpu_custom_call.1} parent=55 // pred_region
          %s533 = sand.u32 %s36, 1
          %s534 = scalar_lea.sflag [#allocation19], %s533
          %s535 = sand.u32 %s294, 1
          %s536 = smul.addr %s535, 1152
          %s537 = scalar_lea.vmem [#allocation18], %s536
          %s539 = ssub.s32 18432, 18432
          %540 = vsyncadd %s534, %s539
          %s541 = smul.addr %s44, 64
          %s542 = scalar_lea.hbm %s11, %s541
          %s543 = sshll.u32 %s537, 4
          %s544 = int_to_ptr.vmem [resolvable:$true] %s543
          %549 = dma.hbm_to_vmem [thread:$0]  %s542, 18432, %s544, %s534, 128, 64, 4
        $region64: #{tpu_custom_call.1} parent=55 // pred_fallthru
          _
        // Predicated region
        $region65: #{tpu_custom_call.1} parent=55 // pred_check
          %p550 = pneg %p330
        $region66: #{tpu_custom_call.1} parent=55 // pred_check_branch
          %552 = sbr.rel (%p550) target = $region68
        $region67: #{tpu_custom_call.1} parent=55 // pred_region
          %s553 = sand.u32 %s36, 1
          %s554 = scalar_lea.sflag [#allocation19], %s553
          %s555 = sand.u32 %s320, 1
          %s556 = smul.addr %s555, 32
          %s557 = scalar_lea.vmem [#allocation20], %s556
          %s559 = ssub.s32 512, 512
          %560 = vsyncadd %s554, %s559
          %s561 = smul.addr %s44, 64
          %s562 = scalar_lea.hbm %s12, %s561
          %s563 = sshll.u32 %s557, 4
          %s564 = int_to_ptr.vmem [resolvable:$true] %s563
          %569 = dma.hbm_to_vmem [thread:$0]  %s562, 512, %s564, %s554, 128, 64, 4
        $region68: #{tpu_custom_call.1} parent=55 // pred_fallthru
          _
        // Predicated region
        $region69: #{tpu_custom_call.1} parent=55 // pred_check
          %p570 = pneg %p356
        $region70: #{tpu_custom_call.1} parent=55 // pred_check_branch
          %572 = sbr.rel (%p570) target = $region72
        $region71: #{tpu_custom_call.1} parent=55 // pred_region
          %s573 = sand.u32 %s346, 1
          %s574 = scalar_lea.sflag [#allocation22], %s573
          %s575 = sand.u32 %s346, 1
          %s576 = scalar_lea.vmem [#allocation21], %s575
          %s578 = ssub.s32 16, 16
          %579 = vsyncadd %s574, %s578
          %s580 = smul.addr %s44, 16
          %s581 = scalar_lea.hbm %s13, %s580
          %s583 = sshll.u32 %s576, 4
          %s584 = int_to_ptr.vmem [resolvable:$true] %s583
          %586 = dma.hbm_to_vmem [thread:$0]  %s581, 16, %s584, %s574
        $region72: #{tpu_custom_call.1} parent=55 // pred_fallthru
          _
      $region56: #{tpu_custom_call.1} parent=5 // pred_fallthru
        _
      %p587 = scmp.le.s32.totalorder 1, %s36
      %p588 = scmp.lt.s32.totalorder %s36, 5
      %p589 = pnand %p587, %p588
      %p590 = pneg %p589
      // Predicated region
      $region73: #{tpu_custom_call.1} parent=5 // pred_check
        _
      $region74: #{tpu_custom_call.1} parent=5 // pred_check_branch
        %592 = sbr.rel (%p589) target = $region76
      $region75: #{tpu_custom_call.1} parent=5 // pred_region
        %s593 = ssub.s32 %s36, 1
        %s594 = sand.u32 %s61, 1
        %s595 = scalar_lea.sflag [#allocation4], %s594
        %s596 = sand.u32 %s61, 1
        %s597 = smul.addr %s596, 256
        %s598 = scalar_lea.vmem [#allocation3], %s597
        // Predicated region
        $region77: #{tpu_custom_call.1} parent=75 // pred_check
          %p599 = pneg %p74
        $region78: #{tpu_custom_call.1} parent=75 // pred_check_branch
          %601 = sbr.rel (%p599) target = $region80
        $region79: #{tpu_custom_call.1} parent=75 // pred_region
          %602 = dma.done %s595, 4096
        $region80: #{tpu_custom_call.1} parent=75 // pred_fallthru
          _
        // Predicated region
        $region81: #{tpu_custom_call.1} parent=75 // pred_check
          %p603 = pneg %p95
        $region82: #{tpu_custom_call.1} parent=75 // pred_check_branch
          %605 = sbr.rel (%p603) target = $region84
        $region83: #{tpu_custom_call.1} parent=75 // pred_region
          %606 = dma.done [#allocation7], 16
        $region84: #{tpu_custom_call.1} parent=75 // pred_fallthru
          _
        // Predicated region
        $region85: #{tpu_custom_call.1} parent=75 // pred_check
          %p607 = pneg %p116
        $region86: #{tpu_custom_call.1} parent=75 // pred_check_branch
          %609 = sbr.rel (%p607) target = $region88
        $region87: #{tpu_custom_call.1} parent=75 // pred_region
          %610 = dma.done [#allocation7], 16
        $region88: #{tpu_custom_call.1} parent=75 // pred_fallthru
          _
        // Predicated region
        $region89: #{tpu_custom_call.1} parent=75 // pred_check
          %p611 = pneg %p158
        $region90: #{tpu_custom_call.1} parent=75 // pred_check_branch
          %613 = sbr.rel (%p611) target = $region92
        $region91: #{tpu_custom_call.1} parent=75 // pred_region
          %614 = dma.done [#allocation10], 512
        $region92: #{tpu_custom_call.1} parent=75 // pred_fallthru
          _
        // Predicated region
        $region93: #{tpu_custom_call.1} parent=75 // pred_check
          %p615 = pneg %p179
        $region94: #{tpu_custom_call.1} parent=75 // pred_check_branch
          %617 = sbr.rel (%p615) target = $region96
        $region95: #{tpu_custom_call.1} parent=75 // pred_region
          %618 = dma.done [#allocation10], 9216
        $region96: #{tpu_custom_call.1} parent=75 // pred_fallthru
          _
        // Predicated region
        $region97: #{tpu_custom_call.1} parent=75 // pred_check
          %p619 = pneg %p200
        $region98: #{tpu_custom_call.1} parent=75 // pred_check_branch
          %621 = sbr.rel (%p619) target = $region100
        $region99: #{tpu_custom_call.1} parent=75 // pred_region
          %622 = dma.done [#allocation13], 32
        $region100: #{tpu_custom_call.1} parent=75 // pred_fallthru
          _
        // Predicated region
        $region101: #{tpu_custom_call.1} parent=75 // pred_check
          %p623 = pneg %p221
        $region102: #{tpu_custom_call.1} parent=75 // pred_check_branch
          %625 = sbr.rel (%p623) target = $region104
        $region103: #{tpu_custom_call.1} parent=75 // pred_region
          %626 = dma.done [#allocation13], 32
        $region104: #{tpu_custom_call.1} parent=75 // pred_fallthru
          _
        // Predicated region
        $region105: #{tpu_custom_call.1} parent=75 // pred_check
          %p627 = pneg %p242
        $region106: #{tpu_custom_call.1} parent=75 // pred_check_branch
          %629 = sbr.rel (%p627) target = $region108
        $region107: #{tpu_custom_call.1} parent=75 // pred_region
          %630 = dma.done [#allocation16], 32
        $region108: #{tpu_custom_call.1} parent=75 // pred_fallthru
          _
        // Predicated region
        $region109: #{tpu_custom_call.1} parent=75 // pred_check
          %p631 = pneg %p284
        $region110: #{tpu_custom_call.1} parent=75 // pred_check_branch
          %633 = sbr.rel (%p631) target = $region112
        $region111: #{tpu_custom_call.1} parent=75 // pred_region
          %634 = dma.done [#allocation16], 1024
        $region112: #{tpu_custom_call.1} parent=75 // pred_fallthru
          _
        %s635 = sand.u32 %s41, 1
        %s636 = scalar_lea.sflag [#allocation19], %s635
        %s637 = sand.u32 %s297, 1
        %s638 = smul.addr %s637, 1152
        %s639 = scalar_lea.vmem [#allocation18], %s638
        // Predicated region
        $region113: #{tpu_custom_call.1} parent=75 // pred_check
          %p640 = pneg %p310
        $region114: #{tpu_custom_call.1} parent=75 // pred_check_branch
          %642 = sbr.rel (%p640) target = $region116
        $region115: #{tpu_custom_call.1} parent=75 // pred_region
          %643 = dma.done %s636, 18432
        $region116: #{tpu_custom_call.1} parent=75 // pred_fallthru
          _
        %s644 = sand.u32 %s41, 1
        %s645 = scalar_lea.sflag [#allocation19], %s644
        %s646 = sand.u32 %s323, 1
        %s647 = smul.addr %s646, 32
        %s648 = scalar_lea.vmem [#allocation20], %s647
        // Predicated region
        $region117: #{tpu_custom_call.1} parent=75 // pred_check
          %p649 = pneg %p336
        $region118: #{tpu_custom_call.1} parent=75 // pred_check_branch
          %651 = sbr.rel (%p649) target = $region120
        $region119: #{tpu_custom_call.1} parent=75 // pred_region
          %652 = dma.done %s645, 512
        $region120: #{tpu_custom_call.1} parent=75 // pred_fallthru
          _
        %s653 = sand.u32 %s349, 1
        %s654 = scalar_lea.sflag [#allocation22], %s653
        %s655 = sand.u32 %s349, 1
        %s656 = scalar_lea.vmem [#allocation21], %s655
        // Predicated region
        $region121: #{tpu_custom_call.1} parent=75 // pred_check
          %p657 = pneg %p362
        $region122: #{tpu_custom_call.1} parent=75 // pred_check_branch
          %659 = sbr.rel (%p657) target = $region124
        $region123: #{tpu_custom_call.1} parent=75 // pred_region
          %660 = dma.done %s654, 16
        $region124: #{tpu_custom_call.1} parent=75 // pred_fallthru
          _
        %s661 = sand.u32 %s61, 1
        %s662 = scalar_lea.sflag [#allocation4], %s661
        %s663 = sand.u32 %s61, 1
        %s664 = smul.addr %s663, 256
        %s665 = scalar_lea.vmem [#allocation3], %s664
        %p666 = pneg %p74
        %p667 = pneg %p71
        %p668 = pneg %p95
        %p669 = pneg %p92
        %p670 = pneg %p116
        %p671 = pneg %p113
        %p672 = pneg %p137
        %p673 = pneg %p134
        %p674 = pneg %p158
        %p675 = pneg %p155
        %p676 = pneg %p179
        %p677 = pneg %p176
        %p678 = pneg %p200
        %p679 = pneg %p197
        %p680 = pneg %p221
        %p681 = pneg %p218
        %p682 = pneg %p242
        %p683 = pneg %p239
        %p684 = pneg %p263
        %p685 = pneg %p260
        %p686 = pneg %p284
        %p687 = pneg %p281
        %s688 = sand.u32 %s41, 1
        %s689 = scalar_lea.sflag [#allocation19], %s688
        %s690 = sand.u32 %s297, 1
        %s691 = smul.addr %s690, 1152
        %s692 = scalar_lea.vmem [#allocation18], %s691
        %p693 = pneg %p310
        %p694 = pneg %p307
        %s695 = sand.u32 %s41, 1
        %s696 = scalar_lea.sflag [#allocation19], %s695
        %s697 = sand.u32 %s323, 1
        %s698 = smul.addr %s697, 32
        %s699 = scalar_lea.vmem [#allocation20], %s698
        %p700 = pneg %p336
        %p701 = pneg %p333
        %s702 = sand.u32 %s349, 1
        %s703 = scalar_lea.sflag [#allocation22], %s702
        %s704 = sand.u32 %s349, 1
        %s705 = scalar_lea.vmem [#allocation21], %s704
        %p706 = pneg %p362
        %p707 = pneg %p359
        %p708 = pneg %p390
        %p709 = pneg %p387
        %s710 = sand.u32 %s377, 1
        %s711 = scalar_lea.sflag [#allocation5], %s710
        %s712 = sand.u32 %s377, 1
        %s713 = smul.addr %s712, 256
        %s714 = scalar_lea.vmem [#allocation23], %s713
        %p716 = scmp.eq.s32.totalorder %s46, 0
        // Predicated region
        $region125: #{tpu_custom_call.1} parent=75 // pred_check
          %p717 = pneg %p716
        $region126: #{tpu_custom_call.1} parent=75 // pred_check_branch
          %719 = sbr.rel (%p717) target = $region128
        $region127: #{tpu_custom_call.1} parent=75 // pred_region
          %v720 = vld [vmem:[%s598] sm:$0xff]
          %v721 = vld [vmem:[%s598 + $0x8] sm:$0xff]
          %v722 = vld [vmem:[%s598 + $0x10] sm:$0xff]
          %v723 = vld [vmem:[%s598 + $0x18] sm:$0xff]
          %v724 = vld [vmem:[%s598 + $0x20] sm:$0xff]
          %v725 = vld [vmem:[%s598 + $0x28] sm:$0xff]
          %v726 = vld [vmem:[%s598 + $0x30] sm:$0xff]
          %v727 = vld [vmem:[%s598 + $0x38] sm:$0xff]
          %v728 = vld [vmem:[%s598 + $0x40] sm:$0xff]
          %v729 = vld [vmem:[%s598 + $0x48] sm:$0xff]
          %v730 = vld [vmem:[%s598 + $0x50] sm:$0xff]
          %v731 = vld [vmem:[%s598 + $0x58] sm:$0xff]
          %v732 = vld [vmem:[%s598 + $0x60] sm:$0xff]
          %v733 = vld [vmem:[%s598 + $0x68] sm:$0xff]
          %v734 = vld [vmem:[%s598 + $0x70] sm:$0xff]
          %v735 = vld [vmem:[%s598 + $0x78] sm:$0xff]
          %v736 = vld [vmem:[%s598 + $0x80] sm:$0xff]
          %v737 = vld [vmem:[%s598 + $0x88] sm:$0xff]
          %v738 = vld [vmem:[%s598 + $0x90] sm:$0xff]
          %v739 = vld [vmem:[%s598 + $0x98] sm:$0xff]
          %v740 = vld [vmem:[%s598 + $0xa0] sm:$0xff]
          %v741 = vld [vmem:[%s598 + $0xa8] sm:$0xff]
          %v742 = vld [vmem:[%s598 + $0xb0] sm:$0xff]
          %v743 = vld [vmem:[%s598 + $0xb8] sm:$0xff]
          %v744 = vld [vmem:[%s598 + $0xc0] sm:$0xff]
          %v745 = vld [vmem:[%s598 + $0xc8] sm:$0xff]
          %v746 = vld [vmem:[%s598 + $0xd0] sm:$0xff]
          %v747 = vld [vmem:[%s598 + $0xd8] sm:$0xff]
          %v748 = vld [vmem:[%s598 + $0xe0] sm:$0xff]
          %v749 = vld [vmem:[%s598 + $0xe8] sm:$0xff]
          %v750 = vld [vmem:[%s598 + $0xf0] sm:$0xff]
          %v751 = vld [vmem:[%s598 + $0xf8] sm:$0xff]
          %v752 = vld [vmem:[%s3] sm:$0xff]
          %v753 = vld [vmem:[%s3 + $0x8] sm:$0xff]
          %v754 = vld [vmem:[%s3 + $0x10] sm:$0xff]
          %v755 = vld [vmem:[%s3 + $0x18] sm:$0xff]
          %v756 = vld [vmem:[%s3 + $0x20] sm:$0xff]
          %v757 = vld [vmem:[%s3 + $0x28] sm:$0xff]
          %v758 = vld [vmem:[%s3 + $0x30] sm:$0xff]
          %v759 = vld [vmem:[%s3 + $0x38] sm:$0xff]
          %v760 = vld [vmem:[#allocation9] sm:$0xff]
          %v761 = vld [vmem:[#allocation9 + $0x8] sm:$0xff]
          %v762 = vld [vmem:[#allocation9 + $0x10] sm:$0xff]
          %v763 = vld [vmem:[#allocation9 + $0x18] sm:$0xff]
          %v764 = vld [vmem:[#allocation6] sm:$0x1]
          %v765 = vld [vmem:[#allocation8] sm:$0x1]
          %vm766 = vcmask 523264
          %v767 = vsel %vm766, %v720, 0.0
          %v768 = vsel %vm766, %v721, 0.0
          %v769 = vadd.f32 %v767, %v768
          %v770 = vsel %vm766, %v722, 0.0
          %v771 = vadd.f32 %v769, %v770
          %v772 = vsel %vm766, %v723, 0.0
          %v773 = vadd.f32 %v771, %v772
          %v774 = vsel %vm766, %v724, 0.0
          %v775 = vadd.f32 %v773, %v774
          %v776 = vsel %vm766, %v725, 0.0
          %v777 = vadd.f32 %v775, %v776
          %v778 = vsel %vm766, %v726, 0.0
          %v779 = vadd.f32 %v777, %v778
          %v780 = vsel %vm766, %v727, 0.0
          %v781 = vadd.f32 %v779, %v780
          %v782 = vsel %vm766, %v728, 0.0
          %v783 = vadd.f32 %v781, %v782
          %v784 = vsel %vm766, %v729, 0.0
          %v785 = vadd.f32 %v783, %v784
          %v786 = vsel %vm766, %v730, 0.0
          %v787 = vadd.f32 %v785, %v786
          %v788 = vsel %vm766, %v731, 0.0
          %v789 = vadd.f32 %v787, %v788
          %v790 = vsel %vm766, %v732, 0.0
          %v791 = vadd.f32 %v789, %v790
          %v792 = vsel %vm766, %v733, 0.0
          %v793 = vadd.f32 %v791, %v792
          %v794 = vsel %vm766, %v734, 0.0
          %v795 = vadd.f32 %v793, %v794
          %v796 = vsel %vm766, %v735, 0.0
          %v797 = vadd.f32 %v795, %v796
          %v798 = vsel %vm766, %v736, 0.0
          %v799 = vadd.f32 %v797, %v798
          %v800 = vsel %vm766, %v737, 0.0
          %v801 = vadd.f32 %v799, %v800
          %v802 = vsel %vm766, %v738, 0.0
          %v803 = vadd.f32 %v801, %v802
          %v804 = vsel %vm766, %v739, 0.0
          %v805 = vadd.f32 %v803, %v804
          %v806 = vsel %vm766, %v740, 0.0
          %v807 = vadd.f32 %v805, %v806
          %v808 = vsel %vm766, %v741, 0.0
          %v809 = vadd.f32 %v807, %v808
          %v810 = vsel %vm766, %v742, 0.0
          %v811 = vadd.f32 %v809, %v810
          %v812 = vsel %vm766, %v743, 0.0
          %v813 = vadd.f32 %v811, %v812
          %v814 = vsel %vm766, %v744, 0.0
          %v815 = vadd.f32 %v813, %v814
          %v816 = vsel %vm766, %v745, 0.0
          %v817 = vadd.f32 %v815, %v816
          %v818 = vsel %vm766, %v746, 0.0
          %v819 = vadd.f32 %v817, %v818
          %v820 = vsel %vm766, %v747, 0.0
          %v821 = vadd.f32 %v819, %v820
          %v822 = vsel %vm766, %v748, 0.0
          %v823 = vadd.f32 %v821, %v822
          %v824 = vsel %vm766, %v749, 0.0
          %v825 = vadd.f32 %v823, %v824
          %v826 = vsel %vm766, %v750, 0.0
          %v827 = vadd.f32 %v825, %v826
          %v828 = vsel %vm766, %v751, 0.0
          %v829 = vadd.f32 %v827, %v828
          %v830 = vrot.slane %v829, 4
          %v831 = vadd.f32 %v829, %v830
          %v832 = vrot.slane %v831, 2
          %v833 = vadd.f32 %v831, %v832
          %v834 = vrot.slane %v833, 1
          %v835 = vadd.f32 %v833, %v834
          %v837 = vsel %vm766, %v835, 0
          %839 = vmatprep.subr.mxu0 0.0
          %840 = vmatpush1.msra.mxu0 %v752
          %841 = vmatprep.subr.mxu0 0.0
          %842 = vmatpush1.msra.mxu0 %v753
          %843 = vmatprep.subr.mxu0 0.0
          %844 = vmatpush1.msra.mxu0 %v754
          %845 = vmatprep.subr.mxu0 0.0
          %846 = vmatpush1.msra.mxu0 %v755
          %847 = vmatprep.subr.mxu0 0.0
          %848 = vmatpush1.msra.mxu0 %v756
          %849 = vmatprep.subr.mxu0 0.0
          %850 = vmatpush1.msra.mxu0 %v757
          %851 = vmatprep.subr.mxu0 0.0
          %852 = vmatpush1.msra.mxu0 %v758
          %853 = vmatprep.subr.mxu0 0.0
          %854 = vmatpush1.msra.mxu0 %v759
          %855 = vmatprep.subr.mxu0 0.0
          %856 = vmatpush1.msra.mxu0 0.0
          %857 = vmatprep.subr.mxu0 0.0
          %858 = vmatpush1.msra.mxu0 0.0
          %859 = vmatprep.subr.mxu0 0.0
          %860 = vmatpush1.msra.mxu0 0.0
          %861 = vmatprep.subr.mxu0 0.0
          %862 = vmatpush1.msra.mxu0 0.0
          %863 = vmatprep.subr.mxu0 0.0
          %864 = vmatpush1.msra.mxu0 0.0
          %865 = vmatprep.subr.mxu0 0.0
          %866 = vmatpush1.msra.mxu0 0.0
          %867 = vmatprep.subr.mxu0 0.0
          %868 = vmatpush1.msra.mxu0 0.0
          %869 = vmatprep.subr.mxu0 0.0
          %870 = vmatpush1.msra.mxu0 0.0
          %871 = vmatprep.subr.mxu0 0.0
          %872 = vmatpush1.msra.mxu0 0.0
          %873 = vmatprep.subr.mxu0 0.0
          %874 = vmatpush1.msra.mxu0 0.0
          %875 = vmatprep.subr.mxu0 0.0
          %876 = vmatpush1.msra.mxu0 0.0
          %877 = vmatprep.subr.mxu0 0.0
          %878 = vmatpush1.msra.mxu0 0.0
          %879 = vmatprep.subr.mxu0 0.0
          %880 = vmatpush1.msra.mxu0 0.0
          %881 = vmatprep.subr.mxu0 0.0
          %882 = vmatpush1.msra.mxu0 0.0
          %883 = vmatprep.subr.mxu0 0.0
          %884 = vmatpush1.msra.mxu0 0.0
          %885 = vmatprep.subr.mxu0 0.0
          %886 = vmatpush1.msra.mxu0 0.0
          %887 = vmatprep.subr.mxu0 0.0
          %888 = vmatpush1.msra.mxu0 0.0
          %889 = vmatprep.subr.mxu0 0.0
          %890 = vmatpush1.msra.mxu0 0.0
          %891 = vmatprep.subr.mxu0 0.0
          %892 = vmatpush1.msra.mxu0 0.0
          %893 = vmatprep.subr.mxu0 0.0
          %894 = vmatpush1.msra.mxu0 0.0
          %895 = vmatprep.subr.mxu0 0.0
          %896 = vmatpush1.msra.mxu0 0.0
          %897 = vmatprep.subr.mxu0 0.0
          %898 = vmatpush1.msra.mxu0 0.0
          %899 = vmatprep.subr.mxu0 0.0
          %900 = vmatpush1.msra.mxu0 0.0
          %901 = vmatprep.subr.mxu0 0.0
          %902 = vmatpush1.msra.mxu0 0.0
          %903 = vmatprep.mubr.f32.mxu0 0.0
          %904 = vmatmul.mubr.f32.gmra.mrb[0].mxu0 %v837
          %v905 = vpop.f32.mrb[0].mxu0
          %v906 = vadd.f32 0.0, %v905
          %v907 = vpop.f32.mrb[0].mxu0
          %908 = vdwg.mxu0
          %vm909 = vcmask 261120
          %v911 = vsel %vm909, %v906, 0
          %913 = vmatprep.subr.mxu0 0.0
          %914 = vmatpush1.msra.mxu0 %v760
          %915 = vmatprep.subr.mxu0 0.0
          %916 = vmatpush1.msra.mxu0 %v761
          %917 = vmatprep.subr.mxu0 0.0
          %918 = vmatpush1.msra.mxu0 %v762
          %919 = vmatprep.subr.mxu0 0.0
          %920 = vmatpush1.msra.mxu0 %v763
          %921 = vmatprep.subr.mxu0 0.0
          %922 = vmatpush1.msra.mxu0 0.0
          %923 = vmatprep.subr.mxu0 0.0
          %924 = vmatpush1.msra.mxu0 0.0
          %925 = vmatprep.subr.mxu0 0.0
          %926 = vmatpush1.msra.mxu0 0.0
          %927 = vmatprep.subr.mxu0 0.0
          %928 = vmatpush1.msra.mxu0 0.0
          %929 = vmatprep.subr.mxu0 0.0
          %930 = vmatpush1.msra.mxu0 0.0
          %931 = vmatprep.subr.mxu0 0.0
          %932 = vmatpush1.msra.mxu0 0.0
          %933 = vmatprep.subr.mxu0 0.0
          %934 = vmatpush1.msra.mxu0 0.0
          %935 = vmatprep.subr.mxu0 0.0
          %936 = vmatpush1.msra.mxu0 0.0
          %937 = vmatprep.subr.mxu0 0.0
          %938 = vmatpush1.msra.mxu0 0.0
          %939 = vmatprep.subr.mxu0 0.0
          %940 = vmatpush1.msra.mxu0 0.0
          %941 = vmatprep.subr.mxu0 0.0
          %942 = vmatpush1.msra.mxu0 0.0
          %943 = vmatprep.subr.mxu0 0.0
          %944 = vmatpush1.msra.mxu0 0.0
          %945 = vmatprep.subr.mxu0 0.0
          %946 = vmatpush1.msra.mxu0 0.0
          %947 = vmatprep.subr.mxu0 0.0
          %948 = vmatpush1.msra.mxu0 0.0
          %949 = vmatprep.subr.mxu0 0.0
          %950 = vmatpush1.msra.mxu0 0.0
          %951 = vmatprep.subr.mxu0 0.0
          %952 = vmatpush1.msra.mxu0 0.0
          %953 = vmatprep.subr.mxu0 0.0
          %954 = vmatpush1.msra.mxu0 0.0
          %955 = vmatprep.subr.mxu0 0.0
          %956 = vmatpush1.msra.mxu0 0.0
          %957 = vmatprep.subr.mxu0 0.0
          %958 = vmatpush1.msra.mxu0 0.0
          %959 = vmatprep.subr.mxu0 0.0
          %960 = vmatpush1.msra.mxu0 0.0
          %961 = vmatprep.subr.mxu0 0.0
          %962 = vmatpush1.msra.mxu0 0.0
          %963 = vmatprep.subr.mxu0 0.0
          %964 = vmatpush1.msra.mxu0 0.0
          %965 = vmatprep.subr.mxu0 0.0
          %966 = vmatpush1.msra.mxu0 0.0
          %967 = vmatprep.subr.mxu0 0.0
          %968 = vmatpush1.msra.mxu0 0.0
          %969 = vmatprep.subr.mxu0 0.0
          %970 = vmatpush1.msra.mxu0 0.0
          %971 = vmatprep.subr.mxu0 0.0
          %972 = vmatpush1.msra.mxu0 0.0
          %973 = vmatprep.subr.mxu0 0.0
          %974 = vmatpush1.msra.mxu0 0.0
          %975 = vmatprep.subr.mxu0 0.0
          %976 = vmatpush1.msra.mxu0 0.0
          %977 = vmatprep.mubr.f32.mxu0 0.0
          %978 = vmatmul.mubr.f32.gmra.mrb[0].mxu0 %v911
          %v979 = vpop.f32.mrb[0].mxu0
          %v980 = vadd.f32 0.0, %v979
          %v981 = vpop.f32.mrb[0].mxu0
          %982 = vdwg.mxu0
          %v983 = vlaneseq
          %v984 = vshrl.u32 %v983, 7
          %v985 = vsub.s32 0, %v984
          %v986 = vrot.slane %v980, %v985
          %v987 = vsub.f32 %v720, %v986
          %v988 = vsub.f32 %v721, %v986
          %v989 = vsub.f32 %v722, %v986
          %v990 = vsub.f32 %v723, %v986
          %v991 = vsub.f32 %v724, %v986
          %v992 = vsub.f32 %v725, %v986
          %v993 = vsub.f32 %v726, %v986
          %v994 = vsub.f32 %v727, %v986
          %v995 = vsub.f32 %v728, %v986
          %v996 = vsub.f32 %v729, %v986
          %v997 = vsub.f32 %v730, %v986
          %v998 = vsub.f32 %v731, %v986
          %v999 = vsub.f32 %v732, %v986
          %v1000 = vsub.f32 %v733, %v986
          %v1001 = vsub.f32 %v734, %v986
          %v1002 = vsub.f32 %v735, %v986
          %v1003 = vsub.f32 %v736, %v986
          %v1004 = vsub.f32 %v737, %v986
          %v1005 = vsub.f32 %v738, %v986
          %v1006 = vsub.f32 %v739, %v986
          %v1007 = vsub.f32 %v740, %v986
          %v1008 = vsub.f32 %v741, %v986
          %v1009 = vsub.f32 %v742, %v986
          %v1010 = vsub.f32 %v743, %v986
          %v1011 = vsub.f32 %v744, %v986
          %v1012 = vsub.f32 %v745, %v986
          %v1013 = vsub.f32 %v746, %v986
          %v1014 = vsub.f32 %v747, %v986
          %v1015 = vsub.f32 %v748, %v986
          %v1016 = vsub.f32 %v749, %v986
          %v1017 = vsub.f32 %v750, %v986
          %v1018 = vsub.f32 %v751, %v986
          %v1019 = vmul.f32 %v987, %v987
          %v1020 = vmul.f32 %v988, %v988
          %v1021 = vmul.f32 %v989, %v989
          %v1022 = vmul.f32 %v990, %v990
          %v1023 = vmul.f32 %v991, %v991
          %v1024 = vmul.f32 %v992, %v992
          %v1025 = vmul.f32 %v993, %v993
          %v1026 = vmul.f32 %v994, %v994
          %v1027 = vmul.f32 %v995, %v995
          %v1028 = vmul.f32 %v996, %v996
          %v1029 = vmul.f32 %v997, %v997
          %v1030 = vmul.f32 %v998, %v998
          %v1031 = vmul.f32 %v999, %v999
          %v1032 = vmul.f32 %v1000, %v1000
          %v1033 = vmul.f32 %v1001, %v1001
          %v1034 = vmul.f32 %v1002, %v1002
          %v1035 = vmul.f32 %v1003, %v1003
          %v1036 = vmul.f32 %v1004, %v1004
          %v1037 = vmul.f32 %v1005, %v1005
          %v1038 = vmul.f32 %v1006, %v1006
          %v1039 = vmul.f32 %v1007, %v1007
          %v1040 = vmul.f32 %v1008, %v1008
          %v1041 = vmul.f32 %v1009, %v1009
          %v1042 = vmul.f32 %v1010, %v1010
          %v1043 = vmul.f32 %v1011, %v1011
          %v1044 = vmul.f32 %v1012, %v1012
          %v1045 = vmul.f32 %v1013, %v1013
          %v1046 = vmul.f32 %v1014, %v1014
          %v1047 = vmul.f32 %v1015, %v1015
          %v1048 = vmul.f32 %v1016, %v1016
          %v1049 = vmul.f32 %v1017, %v1017
          %v1050 = vmul.f32 %v1018, %v1018
          %v1051 = vsel %vm766, %v1019, 0.0
          %v1052 = vsel %vm766, %v1020, 0.0
          %v1053 = vadd.f32 %v1051, %v1052
          %v1054 = vsel %vm766, %v1021, 0.0
          %v1055 = vadd.f32 %v1053, %v1054
          %v1056 = vsel %vm766, %v1022, 0.0
          %v1057 = vadd.f32 %v1055, %v1056
          %v1058 = vsel %vm766, %v1023, 0.0
          %v1059 = vadd.f32 %v1057, %v1058
          %v1060 = vsel %vm766, %v1024, 0.0
          %v1061 = vadd.f32 %v1059, %v1060
          %v1062 = vsel %vm766, %v1025, 0.0
          %v1063 = vadd.f32 %v1061, %v1062
          %v1064 = vsel %vm766, %v1026, 0.0
          %v1065 = vadd.f32 %v1063, %v1064
          %v1066 = vsel %vm766, %v1027, 0.0
          %v1067 = vadd.f32 %v1065, %v1066
          %v1068 = vsel %vm766, %v1028, 0.0
          %v1069 = vadd.f32 %v1067, %v1068
          %v1070 = vsel %vm766, %v1029, 0.0
          %v1071 = vadd.f32 %v1069, %v1070
          %v1072 = vsel %vm766, %v1030, 0.0
          %v1073 = vadd.f32 %v1071, %v1072
          %v1074 = vsel %vm766, %v1031, 0.0
          %v1075 = vadd.f32 %v1073, %v1074
          %v1076 = vsel %vm766, %v1032, 0.0
          %v1077 = vadd.f32 %v1075, %v1076
          %v1078 = vsel %vm766, %v1033, 0.0
          %v1079 = vadd.f32 %v1077, %v1078
          %v1080 = vsel %vm766, %v1034, 0.0
          %v1081 = vadd.f32 %v1079, %v1080
          %v1082 = vsel %vm766, %v1035, 0.0
          %v1083 = vadd.f32 %v1081, %v1082
          %v1084 = vsel %vm766, %v1036, 0.0
          %v1085 = vadd.f32 %v1083, %v1084
          %v1086 = vsel %vm766, %v1037, 0.0
          %v1087 = vadd.f32 %v1085, %v1086
          %v1088 = vsel %vm766, %v1038, 0.0
          %v1089 = vadd.f32 %v1087, %v1088
          %v1090 = vsel %vm766, %v1039, 0.0
          %v1091 = vadd.f32 %v1089, %v1090
          %v1092 = vsel %vm766, %v1040, 0.0
          %v1093 = vadd.f32 %v1091, %v1092
          %v1094 = vsel %vm766, %v1041, 0.0
          %v1095 = vadd.f32 %v1093, %v1094
          %v1096 = vsel %vm766, %v1042, 0.0
          %v1097 = vadd.f32 %v1095, %v1096
          %v1098 = vsel %vm766, %v1043, 0.0
          %v1099 = vadd.f32 %v1097, %v1098
          %v1100 = vsel %vm766, %v1044, 0.0
          %v1101 = vadd.f32 %v1099, %v1100
          %v1102 = vsel %vm766, %v1045, 0.0
          %v1103 = vadd.f32 %v1101, %v1102
          %v1104 = vsel %vm766, %v1046, 0.0
          %v1105 = vadd.f32 %v1103, %v1104
          %v1106 = vsel %vm766, %v1047, 0.0
          %v1107 = vadd.f32 %v1105, %v1106
          %v1108 = vsel %vm766, %v1048, 0.0
          %v1109 = vadd.f32 %v1107, %v1108
          %v1110 = vsel %vm766, %v1049, 0.0
          %v1111 = vadd.f32 %v1109, %v1110
          %v1112 = vsel %vm766, %v1050, 0.0
          %v1113 = vadd.f32 %v1111, %v1112
          %v1114 = vrot.slane %v1113, 4
          %v1115 = vadd.f32 %v1113, %v1114
          %v1116 = vrot.slane %v1115, 2
          %v1117 = vadd.f32 %v1115, %v1116
          %v1118 = vrot.slane %v1117, 1
          %v1119 = vadd.f32 %v1117, %v1118
          %v1121 = vsel %vm766, %v1119, 0
          %1123 = vmatprep.subr.mxu0 0.0
          %1124 = vmatpush1.msra.mxu0 %v752
          %1125 = vmatprep.subr.mxu0 0.0
          %1126 = vmatpush1.msra.mxu0 %v753
          %1127 = vmatprep.subr.mxu0 0.0
          %1128 = vmatpush1.msra.mxu0 %v754
          %1129 = vmatprep.subr.mxu0 0.0
          %1130 = vmatpush1.msra.mxu0 %v755
          %1131 = vmatprep.subr.mxu0 0.0
          %1132 = vmatpush1.msra.mxu0 %v756
          %1133 = vmatprep.subr.mxu0 0.0
          %1134 = vmatpush1.msra.mxu0 %v757
          %1135 = vmatprep.subr.mxu0 0.0
          %1136 = vmatpush1.msra.mxu0 %v758
          %1137 = vmatprep.subr.mxu0 0.0
          %1138 = vmatpush1.msra.mxu0 %v759
          %1139 = vmatprep.subr.mxu0 0.0
          %1140 = vmatpush1.msra.mxu0 0.0
          %1141 = vmatprep.subr.mxu0 0.0
          %1142 = vmatpush1.msra.mxu0 0.0
          %1143 = vmatprep.subr.mxu0 0.0
          %1144 = vmatpush1.msra.mxu0 0.0
          %1145 = vmatprep.subr.mxu0 0.0
          %1146 = vmatpush1.msra.mxu0 0.0
          %1147 = vmatprep.subr.mxu0 0.0
          %1148 = vmatpush1.msra.mxu0 0.0
          %1149 = vmatprep.subr.mxu0 0.0
          %1150 = vmatpush1.msra.mxu0 0.0
          %1151 = vmatprep.subr.mxu0 0.0
          %1152 = vmatpush1.msra.mxu0 0.0
          %1153 = vmatprep.subr.mxu0 0.0
          %1154 = vmatpush1.msra.mxu0 0.0
          %1155 = vmatprep.subr.mxu0 0.0
          %1156 = vmatpush1.msra.mxu0 0.0
          %1157 = vmatprep.subr.mxu0 0.0
          %1158 = vmatpush1.msra.mxu0 0.0
          %1159 = vmatprep.subr.mxu0 0.0
          %1160 = vmatpush1.msra.mxu0 0.0
          %1161 = vmatprep.subr.mxu0 0.0
          %1162 = vmatpush1.msra.mxu0 0.0
          %1163 = vmatprep.subr.mxu0 0.0
          %1164 = vmatpush1.msra.mxu0 0.0
          %1165 = vmatprep.subr.mxu0 0.0
          %1166 = vmatpush1.msra.mxu0 0.0
          %1167 = vmatprep.subr.mxu0 0.0
          %1168 = vmatpush1.msra.mxu0 0.0
          %1169 = vmatprep.subr.mxu0 0.0
          %1170 = vmatpush1.msra.mxu0 0.0
          %1171 = vmatprep.subr.mxu0 0.0
          %1172 = vmatpush1.msra.mxu0 0.0
          %1173 = vmatprep.subr.mxu0 0.0
          %1174 = vmatpush1.msra.mxu0 0.0
          %1175 = vmatprep.subr.mxu0 0.0
          %1176 = vmatpush1.msra.mxu0 0.0
          %1177 = vmatprep.subr.mxu0 0.0
          %1178 = vmatpush1.msra.mxu0 0.0
          %1179 = vmatprep.subr.mxu0 0.0
          %1180 = vmatpush1.msra.mxu0 0.0
          %1181 = vmatprep.subr.mxu0 0.0
          %1182 = vmatpush1.msra.mxu0 0.0
          %1183 = vmatprep.subr.mxu0 0.0
          %1184 = vmatpush1.msra.mxu0 0.0
          %1185 = vmatprep.subr.mxu0 0.0
          %1186 = vmatpush1.msra.mxu0 0.0
          %1187 = vmatprep.mubr.f32.mxu0 0.0
          %1188 = vmatmul.mubr.f32.gmra.mrb[0].mxu0 %v1121
          %v1189 = vpop.f32.mrb[0].mxu0
          %v1190 = vadd.f32 1e-05, %v1189
          %v1191 = vpop.f32.mrb[0].mxu0
          %1192 = vdwg.mxu0
          %v1193 = vrsqrt.pop %v1190
          %v1195 = vsel %vm909, %v1193, 0
          %1197 = vmatprep.subr.mxu0 0.0
          %1198 = vmatpush1.msra.mxu0 %v760
          %1199 = vmatprep.subr.mxu0 0.0
          %1200 = vmatpush1.msra.mxu0 %v761
          %1201 = vmatprep.subr.mxu0 0.0
          %1202 = vmatpush1.msra.mxu0 %v762
          %1203 = vmatprep.subr.mxu0 0.0
          %1204 = vmatpush1.msra.mxu0 %v763
          %1205 = vmatprep.subr.mxu0 0.0
          %1206 = vmatpush1.msra.mxu0 0.0
          %1207 = vmatprep.subr.mxu0 0.0
          %1208 = vmatpush1.msra.mxu0 0.0
          %1209 = vmatprep.subr.mxu0 0.0
          %1210 = vmatpush1.msra.mxu0 0.0
          %1211 = vmatprep.subr.mxu0 0.0
          %1212 = vmatpush1.msra.mxu0 0.0
          %1213 = vmatprep.subr.mxu0 0.0
          %1214 = vmatpush1.msra.mxu0 0.0
          %1215 = vmatprep.subr.mxu0 0.0
          %1216 = vmatpush1.msra.mxu0 0.0
          %1217 = vmatprep.subr.mxu0 0.0
          %1218 = vmatpush1.msra.mxu0 0.0
          %1219 = vmatprep.subr.mxu0 0.0
          %1220 = vmatpush1.msra.mxu0 0.0
          %1221 = vmatprep.subr.mxu0 0.0
          %1222 = vmatpush1.msra.mxu0 0.0
          %1223 = vmatprep.subr.mxu0 0.0
          %1224 = vmatpush1.msra.mxu0 0.0
          %1225 = vmatprep.subr.mxu0 0.0
          %1226 = vmatpush1.msra.mxu0 0.0
          %1227 = vmatprep.subr.mxu0 0.0
          %1228 = vmatpush1.msra.mxu0 0.0
          %1229 = vmatprep.subr.mxu0 0.0
          %1230 = vmatpush1.msra.mxu0 0.0
          %1231 = vmatprep.subr.mxu0 0.0
          %1232 = vmatpush1.msra.mxu0 0.0
          %1233 = vmatprep.subr.mxu0 0.0
          %1234 = vmatpush1.msra.mxu0 0.0
          %1235 = vmatprep.subr.mxu0 0.0
          %1236 = vmatpush1.msra.mxu0 0.0
          %1237 = vmatprep.subr.mxu0 0.0
          %1238 = vmatpush1.msra.mxu0 0.0
          %1239 = vmatprep.subr.mxu0 0.0
          %1240 = vmatpush1.msra.mxu0 0.0
          %1241 = vmatprep.subr.mxu0 0.0
          %1242 = vmatpush1.msra.mxu0 0.0
          %1243 = vmatprep.subr.mxu0 0.0
          %1244 = vmatpush1.msra.mxu0 0.0
          %1245 = vmatprep.subr.mxu0 0.0
          %1246 = vmatpush1.msra.mxu0 0.0
          %1247 = vmatprep.subr.mxu0 0.0
          %1248 = vmatpush1.msra.mxu0 0.0
          %1249 = vmatprep.subr.mxu0 0.0
          %1250 = vmatpush1.msra.mxu0 0.0
          %1251 = vmatprep.subr.mxu0 0.0
          %1252 = vmatpush1.msra.mxu0 0.0
          %1253 = vmatprep.subr.mxu0 0.0
          %1254 = vmatpush1.msra.mxu0 0.0
          %1255 = vmatprep.subr.mxu0 0.0
          %1256 = vmatpush1.msra.mxu0 0.0
          %1257 = vmatprep.subr.mxu0 0.0
          %1258 = vmatpush1.msra.mxu0 0.0
          %1259 = vmatprep.subr.mxu0 0.0
          %1260 = vmatpush1.msra.mxu0 0.0
          %1261 = vmatprep.mubr.f32.mxu0 0.0
          %1262 = vmatmul.mubr.f32.gmra.mrb[0].mxu0 %v1195
          %v1263 = vpop.f32.mrb[0].mxu0
          %v1264 = vadd.f32 0.0, %v1263
          %v1265 = vpop.f32.mrb[0].mxu0
          %1266 = vdwg.mxu0
          %v1267 = vmul.f32 %v1264, %v764
          %v1268 = vlaneseq
          %v1269 = vshrl.u32 %v1268, 7
          %v1270 = vsub.s32 0, %v1269
          %v1271 = vrot.slane %v1267, %v1270
          %v1272 = vmul.f32 %v987, %v1271
          %v1273 = vmul.f32 %v988, %v1271
          %v1274 = vmul.f32 %v989, %v1271
          %v1275 = vmul.f32 %v990, %v1271
          %v1276 = vmul.f32 %v991, %v1271
          %v1277 = vmul.f32 %v992, %v1271
          %v1278 = vmul.f32 %v993, %v1271
          %v1279 = vmul.f32 %v994, %v1271
          %v1280 = vmul.f32 %v995, %v1271
          %v1281 = vmul.f32 %v996, %v1271
          %v1282 = vmul.f32 %v997, %v1271
          %v1283 = vmul.f32 %v998, %v1271
          %v1284 = vmul.f32 %v999, %v1271
          %v1285 = vmul.f32 %v1000, %v1271
          %v1286 = vmul.f32 %v1001, %v1271
          %v1287 = vmul.f32 %v1002, %v1271
          %v1288 = vmul.f32 %v1003, %v1271
          %v1289 = vmul.f32 %v1004, %v1271
          %v1290 = vmul.f32 %v1005, %v1271
          %v1291 = vmul.f32 %v1006, %v1271
          %v1292 = vmul.f32 %v1007, %v1271
          %v1293 = vmul.f32 %v1008, %v1271
          %v1294 = vmul.f32 %v1009, %v1271
          %v1295 = vmul.f32 %v1010, %v1271
          %v1296 = vmul.f32 %v1011, %v1271
          %v1297 = vmul.f32 %v1012, %v1271
          %v1298 = vmul.f32 %v1013, %v1271
          %v1299 = vmul.f32 %v1014, %v1271
          %v1300 = vmul.f32 %v1015, %v1271
          %v1301 = vmul.f32 %v1016, %v1271
          %v1302 = vmul.f32 %v1017, %v1271
          %v1303 = vmul.f32 %v1018, %v1271
          %v1305 = vlaneseq
          %v1306 = vshrl.u32 %v1305, 7
          %v1307 = vsub.s32 0, %v1306
          %v1308 = vrot.slane %v765, %v1307
          %v1310 = vadd.f32 %v1272, %v1308
          %v1311 = vadd.f32 %v1273, %v1308
          %v1312 = vadd.f32 %v1274, %v1308
          %v1313 = vadd.f32 %v1275, %v1308
          %v1314 = vadd.f32 %v1276, %v1308
          %v1315 = vadd.f32 %v1277, %v1308
          %v1316 = vadd.f32 %v1278, %v1308
          %v1317 = vadd.f32 %v1279, %v1308
          %v1318 = vadd.f32 %v1280, %v1308
          %v1319 = vadd.f32 %v1281, %v1308
          %v1320 = vadd.f32 %v1282, %v1308
          %v1321 = vadd.f32 %v1283, %v1308
          %v1322 = vadd.f32 %v1284, %v1308
          %v1323 = vadd.f32 %v1285, %v1308
          %v1324 = vadd.f32 %v1286, %v1308
          %v1325 = vadd.f32 %v1287, %v1308
          %v1326 = vadd.f32 %v1288, %v1308
          %v1327 = vadd.f32 %v1289, %v1308
          %v1328 = vadd.f32 %v1290, %v1308
          %v1329 = vadd.f32 %v1291, %v1308
          %v1330 = vadd.f32 %v1292, %v1308
          %v1331 = vadd.f32 %v1293, %v1308
          %v1332 = vadd.f32 %v1294, %v1308
          %v1333 = vadd.f32 %v1295, %v1308
          %v1334 = vadd.f32 %v1296, %v1308
          %v1335 = vadd.f32 %v1297, %v1308
          %v1336 = vadd.f32 %v1298, %v1308
          %v1337 = vadd.f32 %v1299, %v1308
          %v1338 = vadd.f32 %v1300, %v1308
          %v1339 = vadd.f32 %v1301, %v1308
          %v1340 = vadd.f32 %v1302, %v1308
          %v1341 = vadd.f32 %v1303, %v1308
          %v1342 = vxor.u32 %v1310, 2147483648
          %v1343 = vxor.u32 %v1311, 2147483648
          %v1344 = vxor.u32 %v1312, 2147483648
          %v1345 = vxor.u32 %v1313, 2147483648
          %v1346 = vxor.u32 %v1314, 2147483648
          %v1347 = vxor.u32 %v1315, 2147483648
          %v1348 = vxor.u32 %v1316, 2147483648
          %v1349 = vxor.u32 %v1317, 2147483648
          %v1350 = vxor.u32 %v1318, 2147483648
          %v1351 = vxor.u32 %v1319, 2147483648
          %v1352 = vxor.u32 %v1320, 2147483648
          %v1353 = vxor.u32 %v1321, 2147483648
          %v1354 = vxor.u32 %v1322, 2147483648
          %v1355 = vxor.u32 %v1323, 2147483648
          %v1356 = vxor.u32 %v1324, 2147483648
          %v1357 = vxor.u32 %v1325, 2147483648
          %v1358 = vxor.u32 %v1326, 2147483648
          %v1359 = vxor.u32 %v1327, 2147483648
          %v1360 = vxor.u32 %v1328, 2147483648
          %v1361 = vxor.u32 %v1329, 2147483648
          %v1362 = vxor.u32 %v1330, 2147483648
          %v1363 = vxor.u32 %v1331, 2147483648
          %v1364 = vxor.u32 %v1332, 2147483648
          %v1365 = vxor.u32 %v1333, 2147483648
          %v1366 = vxor.u32 %v1334, 2147483648
          %v1367 = vxor.u32 %v1335, 2147483648
          %v1368 = vxor.u32 %v1336, 2147483648
          %v1369 = vxor.u32 %v1337, 2147483648
          %v1370 = vxor.u32 %v1338, 2147483648
          %v1371 = vxor.u32 %v1339, 2147483648
          %v1372 = vxor.u32 %v1340, 2147483648
          %v1373 = vxor.u32 %v1341, 2147483648
          %v1374 = vmul.f32 %v1342, 1.442695
          %v1375 = vpow.pop %v1374
          %v1376 = vmul.f32 %v1343, 1.442695
          %v1377 = vpow.pop %v1376
          %v1378 = vmul.f32 %v1344, 1.442695
          %v1379 = vpow.pop %v1378
          %v1380 = vmul.f32 %v1345, 1.442695
          %v1381 = vpow.pop %v1380
          %v1382 = vmul.f32 %v1346, 1.442695
          %v1383 = vpow.pop %v1382
          %v1384 = vmul.f32 %v1347, 1.442695
          %v1385 = vpow.pop %v1384
          %v1386 = vmul.f32 %v1348, 1.442695
          %v1387 = vpow.pop %v1386
          %v1388 = vmul.f32 %v1349, 1.442695
          %v1389 = vpow.pop %v1388
          %v1390 = vmul.f32 %v1350, 1.442695
          %v1391 = vpow.pop %v1390
          %v1392 = vmul.f32 %v1351, 1.442695
          %v1393 = vpow.pop %v1392
          %v1394 = vmul.f32 %v1352, 1.442695
          %v1395 = vpow.pop %v1394
          %v1396 = vmul.f32 %v1353, 1.442695
          %v1397 = vpow.pop %v1396
          %v1398 = vmul.f32 %v1354, 1.442695
          %v1399 = vpow.pop %v1398
          %v1400 = vmul.f32 %v1355, 1.442695
          %v1401 = vpow.pop %v1400
          %v1402 = vmul.f32 %v1356, 1.442695
          %v1403 = vpow.pop %v1402
          %v1404 = vmul.f32 %v1357, 1.442695
          %v1405 = vpow.pop %v1404
          %v1406 = vmul.f32 %v1358, 1.442695
          %v1407 = vpow.pop %v1406
          %v1408 = vmul.f32 %v1359, 1.442695
          %v1409 = vpow.pop %v1408
          %v1410 = vmul.f32 %v1360, 1.442695
          %v1411 = vpow.pop %v1410
          %v1412 = vmul.f32 %v1361, 1.442695
          %v1413 = vpow.pop %v1412
          %v1414 = vmul.f32 %v1362, 1.442695
          %v1415 = vpow.pop %v1414
          %v1416 = vmul.f32 %v1363, 1.442695
          %v1417 = vpow.pop %v1416
          %v1418 = vmul.f32 %v1364, 1.442695
          %v1419 = vpow.pop %v1418
          %v1420 = vmul.f32 %v1365, 1.442695
          %v1421 = vpow.pop %v1420
          %v1422 = vmul.f32 %v1366, 1.442695
          %v1423 = vpow.pop %v1422
          %v1424 = vmul.f32 %v1367, 1.442695
          %v1425 = vpow.pop %v1424
          %v1426 = vmul.f32 %v1368, 1.442695
          %v1427 = vpow.pop %v1426
          %v1428 = vmul.f32 %v1369, 1.442695
          %v1429 = vpow.pop %v1428
          %v1430 = vmul.f32 %v1370, 1.442695
          %v1431 = vpow.pop %v1430
          %v1432 = vmul.f32 %v1371, 1.442695
          %v1433 = vpow.pop %v1432
          %v1434 = vmul.f32 %v1372, 1.442695
          %v1435 = vpow.pop %v1434
          %v1436 = vmul.f32 %v1373, 1.442695
          %v1437 = vpow.pop %v1436
          %v1438 = vadd.f32 %v1375, 1.0
          %v1439 = vadd.f32 %v1377, 1.0
          %v1440 = vadd.f32 %v1379, 1.0
          %v1441 = vadd.f32 %v1381, 1.0
          %v1442 = vadd.f32 %v1383, 1.0
          %v1443 = vadd.f32 %v1385, 1.0
          %v1444 = vadd.f32 %v1387, 1.0
          %v1445 = vadd.f32 %v1389, 1.0
          %v1446 = vadd.f32 %v1391, 1.0
          %v1447 = vadd.f32 %v1393, 1.0
          %v1448 = vadd.f32 %v1395, 1.0
          %v1449 = vadd.f32 %v1397, 1.0
          %v1450 = vadd.f32 %v1399, 1.0
          %v1451 = vadd.f32 %v1401, 1.0
          %v1452 = vadd.f32 %v1403, 1.0
          %v1453 = vadd.f32 %v1405, 1.0
          %v1454 = vadd.f32 %v1407, 1.0
          %v1455 = vadd.f32 %v1409, 1.0
          %v1456 = vadd.f32 %v1411, 1.0
          %v1457 = vadd.f32 %v1413, 1.0
          %v1458 = vadd.f32 %v1415, 1.0
          %v1459 = vadd.f32 %v1417, 1.0
          %v1460 = vadd.f32 %v1419, 1.0
          %v1461 = vadd.f32 %v1421, 1.0
          %v1462 = vadd.f32 %v1423, 1.0
          %v1463 = vadd.f32 %v1425, 1.0
          %v1464 = vadd.f32 %v1427, 1.0
          %v1465 = vadd.f32 %v1429, 1.0
          %v1466 = vadd.f32 %v1431, 1.0
          %v1467 = vadd.f32 %v1433, 1.0
          %v1468 = vadd.f32 %v1435, 1.0
          %v1469 = vadd.f32 %v1437, 1.0
          %v1470 = vrcp.pop %v1438
          %v1471 = vmul.f32 1.0, %v1470
          %v1472 = vrcp.pop %v1439
          %v1473 = vmul.f32 1.0, %v1472
          %v1474 = vrcp.pop %v1440
          %v1475 = vmul.f32 1.0, %v1474
          %v1476 = vrcp.pop %v1441
          %v1477 = vmul.f32 1.0, %v1476
          %v1478 = vrcp.pop %v1442
          %v1479 = vmul.f32 1.0, %v1478
          %v1480 = vrcp.pop %v1443
          %v1481 = vmul.f32 1.0, %v1480
          %v1482 = vrcp.pop %v1444
          %v1483 = vmul.f32 1.0, %v1482
          %v1484 = vrcp.pop %v1445
          %v1485 = vmul.f32 1.0, %v1484
          %v1486 = vrcp.pop %v1446
          %v1487 = vmul.f32 1.0, %v1486
          %v1488 = vrcp.pop %v1447
          %v1489 = vmul.f32 1.0, %v1488
          %v1490 = vrcp.pop %v1448
          %v1491 = vmul.f32 1.0, %v1490
          %v1492 = vrcp.pop %v1449
          %v1493 = vmul.f32 1.0, %v1492
          %v1494 = vrcp.pop %v1450
          %v1495 = vmul.f32 1.0, %v1494
          %v1496 = vrcp.pop %v1451
          %v1497 = vmul.f32 1.0, %v1496
          %v1498 = vrcp.pop %v1452
          %v1499 = vmul.f32 1.0, %v1498
          %v1500 = vrcp.pop %v1453
          %v1501 = vmul.f32 1.0, %v1500
          %v1502 = vrcp.pop %v1454
          %v1503 = vmul.f32 1.0, %v1502
          %v1504 = vrcp.pop %v1455
          %v1505 = vmul.f32 1.0, %v1504
          %v1506 = vrcp.pop %v1456
          %v1507 = vmul.f32 1.0, %v1506
          %v1508 = vrcp.pop %v1457
          %v1509 = vmul.f32 1.0, %v1508
          %v1510 = vrcp.pop %v1458
          %v1511 = vmul.f32 1.0, %v1510
          %v1512 = vrcp.pop %v1459
          %v1513 = vmul.f32 1.0, %v1512
          %v1514 = vrcp.pop %v1460
          %v1515 = vmul.f32 1.0, %v1514
          %v1516 = vrcp.pop %v1461
          %v1517 = vmul.f32 1.0, %v1516
          %v1518 = vrcp.pop %v1462
          %v1519 = vmul.f32 1.0, %v1518
          %v1520 = vrcp.pop %v1463
          %v1521 = vmul.f32 1.0, %v1520
          %v1522 = vrcp.pop %v1464
          %v1523 = vmul.f32 1.0, %v1522
          %v1524 = vrcp.pop %v1465
          %v1525 = vmul.f32 1.0, %v1524
          %v1526 = vrcp.pop %v1466
          %v1527 = vmul.f32 1.0, %v1526
          %v1528 = vrcp.pop %v1467
          %v1529 = vmul.f32 1.0, %v1528
          %v1530 = vrcp.pop %v1468
          %v1531 = vmul.f32 1.0, %v1530
          %v1532 = vrcp.pop %v1469
          %v1533 = vmul.f32 1.0, %v1532
          %v1534 = vmul.f32 %v1310, %v1471
          %v1535 = vmul.f32 %v1311, %v1473
          %v1536 = vmul.f32 %v1312, %v1475
          %v1537 = vmul.f32 %v1313, %v1477
          %v1538 = vmul.f32 %v1314, %v1479
          %v1539 = vmul.f32 %v1315, %v1481
          %v1540 = vmul.f32 %v1316, %v1483
          %v1541 = vmul.f32 %v1317, %v1485
          %v1542 = vmul.f32 %v1318, %v1487
          %v1543 = vmul.f32 %v1319, %v1489
          %v1544 = vmul.f32 %v1320, %v1491
          %v1545 = vmul.f32 %v1321, %v1493
          %v1546 = vmul.f32 %v1322, %v1495
          %v1547 = vmul.f32 %v1323, %v1497
          %v1548 = vmul.f32 %v1324, %v1499
          %v1549 = vmul.f32 %v1325, %v1501
          %v1550 = vmul.f32 %v1326, %v1503
          %v1551 = vmul.f32 %v1327, %v1505
          %v1552 = vmul.f32 %v1328, %v1507
          %v1553 = vmul.f32 %v1329, %v1509
          %v1554 = vmul.f32 %v1330, %v1511
          %v1555 = vmul.f32 %v1331, %v1513
          %v1556 = vmul.f32 %v1332, %v1515
          %v1557 = vmul.f32 %v1333, %v1517
          %v1558 = vmul.f32 %v1334, %v1519
          %v1559 = vmul.f32 %v1335, %v1521
          %v1560 = vmul.f32 %v1336, %v1523
          %v1561 = vmul.f32 %v1337, %v1525
          %v1562 = vmul.f32 %v1338, %v1527
          %v1563 = vmul.f32 %v1339, %v1529
          %v1564 = vmul.f32 %v1340, %v1531
          %v1565 = vmul.f32 %v1341, %v1533
          %v1566 = vlaneseq
          %v1567 = vshrl.u32 %v1566, 7
          %v1568 = vadd.s32 %v1567, 8
          %v1569 = vadd.s32 %v1567, 16
          %v1570 = vadd.s32 %v1567, 24
          %v1571 = vadd.s32 %v1567, 32
          %v1572 = vadd.s32 %v1567, 40
          %v1573 = vadd.s32 %v1567, 48
          %v1574 = vadd.s32 %v1567, 56
          %v1575 = vadd.s32 %v1567, 64
          %v1576 = vadd.s32 %v1567, 72
          %v1577 = vadd.s32 %v1567, 80
          %v1578 = vadd.s32 %v1567, 88
          %v1579 = vadd.s32 %v1567, 96
          %v1580 = vadd.s32 %v1567, 104
          %v1581 = vadd.s32 %v1567, 112
          %v1582 = vadd.s32 %v1567, 120
          %v1583 = vadd.s32 %v1567, 128
          %v1584 = vadd.s32 %v1567, 136
          %v1585 = vadd.s32 %v1567, 144
          %v1586 = vadd.s32 %v1567, 152
          %v1587 = vadd.s32 %v1567, 160
          %v1588 = vadd.s32 %v1567, 168
          %v1589 = vadd.s32 %v1567, 176
          %v1590 = vadd.s32 %v1567, 184
          %v1591 = vadd.s32 %v1567, 192
          %v1592 = vadd.s32 %v1567, 200
          %v1593 = vadd.s32 %v1567, 208
          %v1594 = vadd.s32 %v1567, 216
          %v1595 = vadd.s32 %v1567, 224
          %v1596 = vadd.s32 %v1567, 232
          %v1597 = vadd.s32 %v1567, 240
          %v1598 = vadd.s32 %v1567, 248
          %v1599 = vadd.s32 %v1567, 256
          %v1600 = vadd.s32 %v1567, 264
          %v1601 = vadd.s32 %v1567, 272
          %v1602 = vadd.s32 %v1567, 280
          %vm1603 = vcmp.lt.s32.totalorder %v1567, 0
          %v1604 = vsub.s32 0, %v1567
          %v1605 = vsel %vm1603, %v1604, %v1567
          %v1606 = vshrl.u32 %v1605, 4
          %v1607 = vand.u32 %v1605, 15
          %v1608 = vsub.s32 0, %v1607
          %v1609 = vsel %vm1603, %v1608, %v1607
          %vm1610 = vcmp.lt.s32.totalorder %v1568, 0
          %v1611 = vsub.s32 0, %v1568
          %v1612 = vsel %vm1610, %v1611, %v1568
          %v1613 = vshrl.u32 %v1612, 4
          %v1614 = vand.u32 %v1612, 15
          %v1615 = vsub.s32 0, %v1614
          %v1616 = vsel %vm1610, %v1615, %v1614
          %vm1617 = vcmp.lt.s32.totalorder %v1569, 0
          %v1618 = vsub.s32 0, %v1569
          %v1619 = vsel %vm1617, %v1618, %v1569
          %v1620 = vshrl.u32 %v1619, 4
          %v1621 = vand.u32 %v1619, 15
          %v1622 = vsub.s32 0, %v1621
          %v1623 = vsel %vm1617, %v1622, %v1621
          %vm1624 = vcmp.lt.s32.totalorder %v1570, 0
          %v1625 = vsub.s32 0, %v1570
          %v1626 = vsel %vm1624, %v1625, %v1570
          %v1627 = vshrl.u32 %v1626, 4
          %v1628 = vand.u32 %v1626, 15
          %v1629 = vsub.s32 0, %v1628
          %v1630 = vsel %vm1624, %v1629, %v1628
          %vm1631 = vcmp.lt.s32.totalorder %v1571, 0
          %v1632 = vsub.s32 0, %v1571
          %v1633 = vsel %vm1631, %v1632, %v1571
          %v1634 = vshrl.u32 %v1633, 4
          %v1635 = vand.u32 %v1633, 15
          %v1636 = vsub.s32 0, %v1635
          %v1637 = vsel %vm1631, %v1636, %v1635
          %vm1638 = vcmp.lt.s32.totalorder %v1572, 0
          %v1639 = vsub.s32 0, %v1572
          %v1640 = vsel %vm1638, %v1639, %v1572
          %v1641 = vshrl.u32 %v1640, 4
          %v1642 = vand.u32 %v1640, 15
          %v1643 = vsub.s32 0, %v1642
          %v1644 = vsel %vm1638, %v1643, %v1642
          %vm1645 = vcmp.lt.s32.totalorder %v1573, 0
          %v1646 = vsub.s32 0, %v1573
          %v1647 = vsel %vm1645, %v1646, %v1573
          %v1648 = vshrl.u32 %v1647, 4
          %v1649 = vand.u32 %v1647, 15
          %v1650 = vsub.s32 0, %v1649
          %v1651 = vsel %vm1645, %v1650, %v1649
          %vm1652 = vcmp.lt.s32.totalorder %v1574, 0
          %v1653 = vsub.s32 0, %v1574
          %v1654 = vsel %vm1652, %v1653, %v1574
          %v1655 = vshrl.u32 %v1654, 4
          %v1656 = vand.u32 %v1654, 15
          %v1657 = vsub.s32 0, %v1656
          %v1658 = vsel %vm1652, %v1657, %v1656
          %vm1659 = vcmp.lt.s32.totalorder %v1575, 0
          %v1660 = vsub.s32 0, %v1575
          %v1661 = vsel %vm1659, %v1660, %v1575
          %v1662 = vshrl.u32 %v1661, 4
          %v1663 = vand.u32 %v1661, 15
          %v1664 = vsub.s32 0, %v1663
          %v1665 = vsel %vm1659, %v1664, %v1663
          %vm1666 = vcmp.lt.s32.totalorder %v1576, 0
          %v1667 = vsub.s32 0, %v1576
          %v1668 = vsel %vm1666, %v1667, %v1576
          %v1669 = vshrl.u32 %v1668, 4
          %v1670 = vand.u32 %v1668, 15
          %v1671 = vsub.s32 0, %v1670
          %v1672 = vsel %vm1666, %v1671, %v1670
          %vm1673 = vcmp.lt.s32.totalorder %v1577, 0
          %v1674 = vsub.s32 0, %v1577
          %v1675 = vsel %vm1673, %v1674, %v1577
          %v1676 = vshrl.u32 %v1675, 4
          %v1677 = vand.u32 %v1675, 15
          %v1678 = vsub.s32 0, %v1677
          %v1679 = vsel %vm1673, %v1678, %v1677
          %vm1680 = vcmp.lt.s32.totalorder %v1578, 0
          %v1681 = vsub.s32 0, %v1578
          %v1682 = vsel %vm1680, %v1681, %v1578
          %v1683 = vshrl.u32 %v1682, 4
          %v1684 = vand.u32 %v1682, 15
          %v1685 = vsub.s32 0, %v1684
          %v1686 = vsel %vm1680, %v1685, %v1684
          %vm1687 = vcmp.lt.s32.totalorder %v1579, 0
          %v1688 = vsub.s32 0, %v1579
          %v1689 = vsel %vm1687, %v1688, %v1579
          %v1690 = vshrl.u32 %v1689, 4
          %v1691 = vand.u32 %v1689, 15
          %v1692 = vsub.s32 0, %v1691
          %v1693 = vsel %vm1687, %v1692, %v1691
          %vm1694 = vcmp.lt.s32.totalorder %v1580, 0
          %v1695 = vsub.s32 0, %v1580
          %v1696 = vsel %vm1694, %v1695, %v1580
          %v1697 = vshrl.u32 %v1696, 4
          %v1698 = vand.u32 %v1696, 15
          %v1699 = vsub.s32 0, %v1698
          %v1700 = vsel %vm1694, %v1699, %v1698
          %vm1701 = vcmp.lt.s32.totalorder %v1581, 0
          %v1702 = vsub.s32 0, %v1581
          %v1703 = vsel %vm1701, %v1702, %v1581
          %v1704 = vshrl.u32 %v1703, 4
          %v1705 = vand.u32 %v1703, 15
          %v1706 = vsub.s32 0, %v1705
          %v1707 = vsel %vm1701, %v1706, %v1705
          %vm1708 = vcmp.lt.s32.totalorder %v1582, 0
          %v1709 = vsub.s32 0, %v1582
          %v1710 = vsel %vm1708, %v1709, %v1582
          %v1711 = vshrl.u32 %v1710, 4
          %v1712 = vand.u32 %v1710, 15
          %v1713 = vsub.s32 0, %v1712
          %v1714 = vsel %vm1708, %v1713, %v1712
          %vm1715 = vcmp.lt.s32.totalorder %v1583, 0
          %v1716 = vsub.s32 0, %v1583
          %v1717 = vsel %vm1715, %v1716, %v1583
          %v1718 = vshrl.u32 %v1717, 4
          %v1719 = vand.u32 %v1717, 15
          %v1720 = vsub.s32 0, %v1719
          %v1721 = vsel %vm1715, %v1720, %v1719
          %vm1722 = vcmp.lt.s32.totalorder %v1584, 0
          %v1723 = vsub.s32 0, %v1584
          %v1724 = vsel %vm1722, %v1723, %v1584
          %v1725 = vshrl.u32 %v1724, 4
          %v1726 = vand.u32 %v1724, 15
          %v1727 = vsub.s32 0, %v1726
          %v1728 = vsel %vm1722, %v1727, %v1726
          %vm1729 = vcmp.lt.s32.totalorder %v1585, 0
          %v1730 = vsub.s32 0, %v1585
          %v1731 = vsel %vm1729, %v1730, %v1585
          %v1732 = vshrl.u32 %v1731, 4
          %v1733 = vand.u32 %v1731, 15
          %v1734 = vsub.s32 0, %v1733
          %v1735 = vsel %vm1729, %v1734, %v1733
          %vm1736 = vcmp.lt.s32.totalorder %v1586, 0
          %v1737 = vsub.s32 0, %v1586
          %v1738 = vsel %vm1736, %v1737, %v1586
          %v1739 = vshrl.u32 %v1738, 4
          %v1740 = vand.u32 %v1738, 15
          %v1741 = vsub.s32 0, %v1740
          %v1742 = vsel %vm1736, %v1741, %v1740
          %vm1743 = vcmp.lt.s32.totalorder %v1587, 0
          %v1744 = vsub.s32 0, %v1587
          %v1745 = vsel %vm1743, %v1744, %v1587
          %v1746 = vshrl.u32 %v1745, 4
          %v1747 = vand.u32 %v1745, 15
          %v1748 = vsub.s32 0, %v1747
          %v1749 = vsel %vm1743, %v1748, %v1747
          %vm1750 = vcmp.lt.s32.totalorder %v1588, 0
          %v1751 = vsub.s32 0, %v1588
          %v1752 = vsel %vm1750, %v1751, %v1588
          %v1753 = vshrl.u32 %v1752, 4
          %v1754 = vand.u32 %v1752, 15
          %v1755 = vsub.s32 0, %v1754
          %v1756 = vsel %vm1750, %v1755, %v1754
          %vm1757 = vcmp.lt.s32.totalorder %v1589, 0
          %v1758 = vsub.s32 0, %v1589
          %v1759 = vsel %vm1757, %v1758, %v1589
          %v1760 = vshrl.u32 %v1759, 4
          %v1761 = vand.u32 %v1759, 15
          %v1762 = vsub.s32 0, %v1761
          %v1763 = vsel %vm1757, %v1762, %v1761
          %vm1764 = vcmp.lt.s32.totalorder %v1590, 0
          %v1765 = vsub.s32 0, %v1590
          %v1766 = vsel %vm1764, %v1765, %v1590
          %v1767 = vshrl.u32 %v1766, 4
          %v1768 = vand.u32 %v1766, 15
          %v1769 = vsub.s32 0, %v1768
          %v1770 = vsel %vm1764, %v1769, %v1768
          %vm1771 = vcmp.lt.s32.totalorder %v1591, 0
          %v1772 = vsub.s32 0, %v1591
          %v1773 = vsel %vm1771, %v1772, %v1591
          %v1774 = vshrl.u32 %v1773, 4
          %v1775 = vand.u32 %v1773, 15
          %v1776 = vsub.s32 0, %v1775
          %v1777 = vsel %vm1771, %v1776, %v1775
          %vm1778 = vcmp.lt.s32.totalorder %v1592, 0
          %v1779 = vsub.s32 0, %v1592
          %v1780 = vsel %vm1778, %v1779, %v1592
          %v1781 = vshrl.u32 %v1780, 4
          %v1782 = vand.u32 %v1780, 15
          %v1783 = vsub.s32 0, %v1782
          %v1784 = vsel %vm1778, %v1783, %v1782
          %vm1785 = vcmp.lt.s32.totalorder %v1593, 0
          %v1786 = vsub.s32 0, %v1593
          %v1787 = vsel %vm1785, %v1786, %v1593
          %v1788 = vshrl.u32 %v1787, 4
          %v1789 = vand.u32 %v1787, 15
          %v1790 = vsub.s32 0, %v1789
          %v1791 = vsel %vm1785, %v1790, %v1789
          %vm1792 = vcmp.lt.s32.totalorder %v1594, 0
          %v1793 = vsub.s32 0, %v1594
          %v1794 = vsel %vm1792, %v1793, %v1594
          %v1795 = vshrl.u32 %v1794, 4
          %v1796 = vand.u32 %v1794, 15
          %v1797 = vsub.s32 0, %v1796
          %v1798 = vsel %vm1792, %v1797, %v1796
          %vm1799 = vcmp.lt.s32.totalorder %v1595, 0
          %v1800 = vsub.s32 0, %v1595
          %v1801 = vsel %vm1799, %v1800, %v1595
          %v1802 = vshrl.u32 %v1801, 4
          %v1803 = vand.u32 %v1801, 15
          %v1804 = vsub.s32 0, %v1803
          %v1805 = vsel %vm1799, %v1804, %v1803
          %vm1806 = vcmp.lt.s32.totalorder %v1596, 0
          %v1807 = vsub.s32 0, %v1596
          %v1808 = vsel %vm1806, %v1807, %v1596
          %v1809 = vshrl.u32 %v1808, 4
          %v1810 = vand.u32 %v1808, 15
          %v1811 = vsub.s32 0, %v1810
          %v1812 = vsel %vm1806, %v1811, %v1810
          %vm1813 = vcmp.lt.s32.totalorder %v1597, 0
          %v1814 = vsub.s32 0, %v1597
          %v1815 = vsel %vm1813, %v1814, %v1597
          %v1816 = vshrl.u32 %v1815, 4
          %v1817 = vand.u32 %v1815, 15
          %v1818 = vsub.s32 0, %v1817
          %v1819 = vsel %vm1813, %v1818, %v1817
          %vm1820 = vcmp.lt.s32.totalorder %v1598, 0
          %v1821 = vsub.s32 0, %v1598
          %v1822 = vsel %vm1820, %v1821, %v1598
          %v1823 = vshrl.u32 %v1822, 4
          %v1824 = vand.u32 %v1822, 15
          %v1825 = vsub.s32 0, %v1824
          %v1826 = vsel %vm1820, %v1825, %v1824
          %vm1827 = vcmp.lt.s32.totalorder %v1599, 0
          %v1828 = vsub.s32 0, %v1599
          %v1829 = vsel %vm1827, %v1828, %v1599
          %v1830 = vshrl.u32 %v1829, 4
          %v1831 = vand.u32 %v1829, 15
          %v1832 = vsub.s32 0, %v1831
          %v1833 = vsel %vm1827, %v1832, %v1831
          %vm1834 = vcmp.lt.s32.totalorder %v1600, 0
          %v1835 = vsub.s32 0, %v1600
          %v1836 = vsel %vm1834, %v1835, %v1600
          %v1837 = vshrl.u32 %v1836, 4
          %v1838 = vand.u32 %v1836, 15
          %v1839 = vsub.s32 0, %v1838
          %v1840 = vsel %vm1834, %v1839, %v1838
          %vm1841 = vcmp.lt.s32.totalorder %v1601, 0
          %v1842 = vsub.s32 0, %v1601
          %v1843 = vsel %vm1841, %v1842, %v1601
          %v1844 = vshrl.u32 %v1843, 4
          %v1845 = vand.u32 %v1843, 15
          %v1846 = vsub.s32 0, %v1845
          %v1847 = vsel %vm1841, %v1846, %v1845
          %vm1848 = vcmp.lt.s32.totalorder %v1602, 0
          %v1849 = vsub.s32 0, %v1602
          %v1850 = vsel %vm1848, %v1849, %v1602
          %v1851 = vshrl.u32 %v1850, 4
          %v1852 = vand.u32 %v1850, 15
          %v1853 = vsub.s32 0, %v1852
          %v1854 = vsel %vm1848, %v1853, %v1852
          %vm1855 = vcmp.ne.s32.totalorder %v1609, 0
          %vm1856 = vcmp.ne.s32.totalorder %v1616, 0
          %vm1857 = vcmp.ne.s32.totalorder %v1623, 0
          %vm1858 = vcmp.ne.s32.totalorder %v1630, 0
          %vm1859 = vcmp.ne.s32.totalorder %v1637, 0
          %vm1860 = vcmp.ne.s32.totalorder %v1644, 0
          %vm1861 = vcmp.ne.s32.totalorder %v1651, 0
          %vm1862 = vcmp.ne.s32.totalorder %v1658, 0
          %vm1863 = vcmp.ne.s32.totalorder %v1665, 0
          %vm1864 = vcmp.ne.s32.totalorder %v1672, 0
          %vm1865 = vcmp.ne.s32.totalorder %v1679, 0
          %vm1866 = vcmp.ne.s32.totalorder %v1686, 0
          %vm1867 = vcmp.ne.s32.totalorder %v1693, 0
          %vm1868 = vcmp.ne.s32.totalorder %v1700, 0
          %vm1869 = vcmp.ne.s32.totalorder %v1707, 0
          %vm1870 = vcmp.ne.s32.totalorder %v1714, 0
          %vm1871 = vcmp.ne.s32.totalorder %v1721, 0
          %vm1872 = vcmp.ne.s32.totalorder %v1728, 0
          %vm1873 = vcmp.ne.s32.totalorder %v1735, 0
          %vm1874 = vcmp.ne.s32.totalorder %v1742, 0
          %vm1875 = vcmp.ne.s32.totalorder %v1749, 0
          %vm1876 = vcmp.ne.s32.totalorder %v1756, 0
          %vm1877 = vcmp.ne.s32.totalorder %v1763, 0
          %vm1878 = vcmp.ne.s32.totalorder %v1770, 0
          %vm1879 = vcmp.ne.s32.totalorder %v1777, 0
          %vm1880 = vcmp.ne.s32.totalorder %v1784, 0
          %vm1881 = vcmp.ne.s32.totalorder %v1791, 0
          %vm1882 = vcmp.ne.s32.totalorder %v1798, 0
          %vm1883 = vcmp.ne.s32.totalorder %v1805, 0
          %vm1884 = vcmp.ne.s32.totalorder %v1812, 0
          %vm1885 = vcmp.ne.s32.totalorder %v1819, 0
          %vm1886 = vcmp.ne.s32.totalorder %v1826, 0
          %vm1887 = vcmp.ne.s32.totalorder %v1833, 0
          %vm1888 = vcmp.ne.s32.totalorder %v1840, 0
          %vm1889 = vcmp.ne.s32.totalorder %v1847, 0
          %vm1890 = vcmp.ne.s32.totalorder %v1854, 0
          %vm1891 = vcmp.lt.s32.totalorder %v1609, 0
          %vm1892 = vcmp.lt.s32.totalorder %v1616, 0
          %vm1893 = vcmp.lt.s32.totalorder %v1623, 0
          %vm1894 = vcmp.lt.s32.totalorder %v1630, 0
          %vm1895 = vcmp.lt.s32.totalorder %v1637, 0
          %vm1896 = vcmp.lt.s32.totalorder %v1644, 0
          %vm1897 = vcmp.lt.s32.totalorder %v1651, 0
          %vm1898 = vcmp.lt.s32.totalorder %v1658, 0
          %vm1899 = vcmp.lt.s32.totalorder %v1665, 0
          %vm1900 = vcmp.lt.s32.totalorder %v1672, 0
          %vm1901 = vcmp.lt.s32.totalorder %v1679, 0
          %vm1902 = vcmp.lt.s32.totalorder %v1686, 0
          %vm1903 = vcmp.lt.s32.totalorder %v1693, 0
          %vm1904 = vcmp.lt.s32.totalorder %v1700, 0
          %vm1905 = vcmp.lt.s32.totalorder %v1707, 0
          %vm1906 = vcmp.lt.s32.totalorder %v1714, 0
          %vm1907 = vcmp.lt.s32.totalorder %v1721, 0
          %vm1908 = vcmp.lt.s32.totalorder %v1728, 0
          %vm1909 = vcmp.lt.s32.totalorder %v1735, 0
          %vm1910 = vcmp.lt.s32.totalorder %v1742, 0
          %vm1911 = vcmp.lt.s32.totalorder %v1749, 0
          %vm1912 = vcmp.lt.s32.totalorder %v1756, 0
          %vm1913 = vcmp.lt.s32.totalorder %v1763, 0
          %vm1914 = vcmp.lt.s32.totalorder %v1770, 0
          %vm1915 = vcmp.lt.s32.totalorder %v1777, 0
          %vm1916 = vcmp.lt.s32.totalorder %v1784, 0
          %vm1917 = vcmp.lt.s32.totalorder %v1791, 0
          %vm1918 = vcmp.lt.s32.totalorder %v1798, 0
          %vm1919 = vcmp.lt.s32.totalorder %v1805, 0
          %vm1920 = vcmp.lt.s32.totalorder %v1812, 0
          %vm1921 = vcmp.lt.s32.totalorder %v1819, 0
          %vm1922 = vcmp.lt.s32.totalorder %v1826, 0
          %vm1923 = vcmp.lt.s32.totalorder %v1833, 0
          %vm1924 = vcmp.lt.s32.totalorder %v1840, 0
          %vm1925 = vcmp.lt.s32.totalorder %v1847, 0
          %vm1926 = vcmp.lt.s32.totalorder %v1854, 0
          %vm1927 = vmand %vm1891, %vm1855
          %vm1928 = vmand %vm1892, %vm1856
          %vm1929 = vmand %vm1893, %vm1857
          %vm1930 = vmand %vm1894, %vm1858
          %vm1931 = vmand %vm1895, %vm1859
          %vm1932 = vmand %vm1896, %vm1860
          %vm1933 = vmand %vm1897, %vm1861
          %vm1934 = vmand %vm1898, %vm1862
          %vm1935 = vmand %vm1899, %vm1863
          %vm1936 = vmand %vm1900, %vm1864
          %vm1937 = vmand %vm1901, %vm1865
          %vm1938 = vmand %vm1902, %vm1866
          %vm1939 = vmand %vm1903, %vm1867
          %vm1940 = vmand %vm1904, %vm1868
          %vm1941 = vmand %vm1905, %vm1869
          %vm1942 = vmand %vm1906, %vm1870
          %vm1943 = vmand %vm1907, %vm1871
          %vm1944 = vmand %vm1908, %vm1872
          %vm1945 = vmand %vm1909, %vm1873
          %vm1946 = vmand %vm1910, %vm1874
          %vm1947 = vmand %vm1911, %vm1875
          %vm1948 = vmand %vm1912, %vm1876
          %vm1949 = vmand %vm1913, %vm1877
          %vm1950 = vmand %vm1914, %vm1878
          %vm1951 = vmand %vm1915, %vm1879
          %vm1952 = vmand %vm1916, %vm1880
          %vm1953 = vmand %vm1917, %vm1881
          %vm1954 = vmand %vm1918, %vm1882
          %vm1955 = vmand %vm1919, %vm1883
          %vm1956 = vmand %vm1920, %vm1884
          %vm1957 = vmand %vm1921, %vm1885
          %vm1958 = vmand %vm1922, %vm1886
          %vm1959 = vmand %vm1923, %vm1887
          %vm1960 = vmand %vm1924, %vm1888
          %vm1961 = vmand %vm1925, %vm1889
          %vm1962 = vmand %vm1926, %vm1890
          %v1963 = vadd.s32 %v1609, 16
          %v1964 = vadd.s32 %v1616, 16
          %v1965 = vadd.s32 %v1623, 16
          %v1966 = vadd.s32 %v1630, 16
          %v1967 = vadd.s32 %v1637, 16
          %v1968 = vadd.s32 %v1644, 16
          %v1969 = vadd.s32 %v1651, 16
          %v1970 = vadd.s32 %v1658, 16
          %v1971 = vadd.s32 %v1665, 16
          %v1972 = vadd.s32 %v1672, 16
          %v1973 = vadd.s32 %v1679, 16
          %v1974 = vadd.s32 %v1686, 16
          %v1975 = vadd.s32 %v1693, 16
          %v1976 = vadd.s32 %v1700, 16
          %v1977 = vadd.s32 %v1707, 16
          %v1978 = vadd.s32 %v1714, 16
          %v1979 = vadd.s32 %v1721, 16
          %v1980 = vadd.s32 %v1728, 16
          %v1981 = vadd.s32 %v1735, 16
          %v1982 = vadd.s32 %v1742, 16
          %v1983 = vadd.s32 %v1749, 16
          %v1984 = vadd.s32 %v1756, 16
          %v1985 = vadd.s32 %v1763, 16
          %v1986 = vadd.s32 %v1770, 16
          %v1987 = vadd.s32 %v1777, 16
          %v1988 = vadd.s32 %v1784, 16
          %v1989 = vadd.s32 %v1791, 16
          %v1990 = vadd.s32 %v1798, 16
          %v1991 = vadd.s32 %v1805, 16
          %v1992 = vadd.s32 %v1812, 16
          %v1993 = vadd.s32 %v1819, 16
          %v1994 = vadd.s32 %v1826, 16
          %v1995 = vadd.s32 %v1833, 16
          %v1996 = vadd.s32 %v1840, 16
          %v1997 = vadd.s32 %v1847, 16
          %v1998 = vadd.s32 %v1854, 16
          %v1999 = vsel %vm1927, %v1963, %v1609
          %v2000 = vsel %vm1928, %v1964, %v1616
          %v2001 = vsel %vm1929, %v1965, %v1623
          %v2002 = vsel %vm1930, %v1966, %v1630
          %v2003 = vsel %vm1931, %v1967, %v1637
          %v2004 = vsel %vm1932, %v1968, %v1644
          %v2005 = vsel %vm1933, %v1969, %v1651
          %v2006 = vsel %vm1934, %v1970, %v1658
          %v2007 = vsel %vm1935, %v1971, %v1665
          %v2008 = vsel %vm1936, %v1972, %v1672
          %v2009 = vsel %vm1937, %v1973, %v1679
          %v2010 = vsel %vm1938, %v1974, %v1686
          %v2011 = vsel %vm1939, %v1975, %v1693
          %v2012 = vsel %vm1940, %v1976, %v1700
          %v2013 = vsel %vm1941, %v1977, %v1707
          %v2014 = vsel %vm1942, %v1978, %v1714
          %v2015 = vsel %vm1943, %v1979, %v1721
          %v2016 = vsel %vm1944, %v1980, %v1728
          %v2017 = vsel %vm1945, %v1981, %v1735
          %v2018 = vsel %vm1946, %v1982, %v1742
          %v2019 = vsel %vm1947, %v1983, %v1749
          %v2020 = vsel %vm1948, %v1984, %v1756
          %v2021 = vsel %vm1949, %v1985, %v1763
          %v2022 = vsel %vm1950, %v1986, %v1770
          %v2023 = vsel %vm1951, %v1987, %v1777
          %v2024 = vsel %vm1952, %v1988, %v1784
          %v2025 = vsel %vm1953, %v1989, %v1791
          %v2026 = vsel %vm1954, %v1990, %v1798
          %v2027 = vsel %vm1955, %v1991, %v1805
          %v2028 = vsel %vm1956, %v1992, %v1812
          %v2029 = vsel %vm1957, %v1993, %v1819
          %v2030 = vsel %vm1958, %v1994, %v1826
          %v2031 = vsel %vm1959, %v1995, %v1833
          %v2032 = vsel %vm1960, %v1996, %v1840
          %v2033 = vsel %vm1961, %v1997, %v1847
          %v2034 = vsel %vm1962, %v1998, %v1854
          %v2035 = vrot.slane %v1534, 7
          %v2036 = vrot.slane %v1535, 7
          %v2037 = vrot.slane %v1536, 7
          %v2038 = vrot.slane %v1537, 7
          %v2039 = vrot.slane %v1538, 7
          %v2040 = vrot.slane %v1539, 7
          %v2041 = vrot.slane %v1540, 7
          %v2042 = vrot.slane %v1541, 7
          %v2043 = vrot.slane %v1542, 7
          %v2044 = vrot.slane %v1543, 7
          %v2045 = vrot.slane %v1544, 7
          %v2046 = vrot.slane %v1545, 7
          %v2047 = vrot.slane %v1546, 7
          %v2048 = vrot.slane %v1547, 7
          %v2049 = vrot.slane %v1548, 7
          %v2050 = vrot.slane %v1549, 7
          %v2051 = vrot.slane %v1550, 7
          %v2052 = vrot.slane %v1551, 7
          %v2053 = vrot.slane %v1552, 7
          %v2054 = vrot.slane %v1553, 7
          %v2055 = vrot.slane %v1554, 7
          %v2056 = vrot.slane %v1555, 7
          %v2057 = vrot.slane %v1556, 7
          %v2058 = vrot.slane %v1557, 7
          %v2059 = vrot.slane %v1558, 7
          %v2060 = vrot.slane %v1559, 7
          %v2061 = vrot.slane %v1560, 7
          %v2062 = vrot.slane %v1561, 7
          %v2063 = vrot.slane %v1562, 7
          %v2064 = vrot.slane %v1563, 7
          %v2065 = vrot.slane %v1564, 7
          %v2066 = vrot.slane %v1565, 7
          %vm2067 = vcmp.lt.s32.totalorder %v1567, 1
          %v2068 = vsel %vm2067, %v2066, 0.0
          %v2069 = vsel %vm2067, %v2065, %v2066
          %v2070 = vsel %vm2067, %v2064, %v2065
          %v2071 = vsel %vm2067, %v2063, %v2064
          %v2072 = vsel %vm2067, %v2062, %v2063
          %v2073 = vsel %vm2067, %v2061, %v2062
          %v2074 = vsel %vm2067, %v2060, %v2061
          %v2075 = vsel %vm2067, %v2059, %v2060
          %v2076 = vsel %vm2067, %v2058, %v2059
          %v2077 = vsel %vm2067, %v2057, %v2058
          %v2078 = vsel %vm2067, %v2056, %v2057
          %v2079 = vsel %vm2067, %v2055, %v2056
          %v2080 = vsel %vm2067, %v2054, %v2055
          %v2081 = vsel %vm2067, %v2053, %v2054
          %v2082 = vsel %vm2067, %v2052, %v2053
          %v2083 = vsel %vm2067, %v2051, %v2052
          %v2084 = vsel %vm2067, %v2050, %v2051
          %v2085 = vsel %vm2067, %v2049, %v2050
          %v2086 = vsel %vm2067, %v2048, %v2049
          %v2087 = vsel %vm2067, %v2047, %v2048
          %v2088 = vsel %vm2067, %v2046, %v2047
          %v2089 = vsel %vm2067, %v2045, %v2046
          %v2090 = vsel %vm2067, %v2044, %v2045
          %v2091 = vsel %vm2067, %v2043, %v2044
          %v2092 = vsel %vm2067, %v2042, %v2043
          %v2093 = vsel %vm2067, %v2041, %v2042
          %v2094 = vsel %vm2067, %v2040, %v2041
          %v2095 = vsel %vm2067, %v2039, %v2040
          %v2096 = vsel %vm2067, %v2038, %v2039
          %v2097 = vsel %vm2067, %v2037, %v2038
          %v2098 = vsel %vm2067, %v2036, %v2037
          %v2099 = vsel %vm2067, %v2035, %v2036
          %v2100 = vsel %vm2067, 0.0, %v2035
          %vm2101 = vcmp.ne.s32.totalorder %v1999, 0
          %vm2102 = vcmp.ne.s32.totalorder %v2000, 0
          %vm2103 = vcmp.ne.s32.totalorder %v2001, 0
          %vm2104 = vcmp.ne.s32.totalorder %v2002, 0
          %vm2105 = vcmp.ne.s32.totalorder %v2003, 0
          %vm2106 = vcmp.ne.s32.totalorder %v2004, 0
          %vm2107 = vcmp.ne.s32.totalorder %v2005, 0
          %vm2108 = vcmp.ne.s32.totalorder %v2006, 0
          %vm2109 = vcmp.ne.s32.totalorder %v2007, 0
          %vm2110 = vcmp.ne.s32.totalorder %v2008, 0
          %vm2111 = vcmp.ne.s32.totalorder %v2009, 0
          %vm2112 = vcmp.ne.s32.totalorder %v2010, 0
          %vm2113 = vcmp.ne.s32.totalorder %v2011, 0
          %vm2114 = vcmp.ne.s32.totalorder %v2012, 0
          %vm2115 = vcmp.ne.s32.totalorder %v2013, 0
          %vm2116 = vcmp.ne.s32.totalorder %v2014, 0
          %vm2117 = vcmp.ne.s32.totalorder %v2015, 0
          %vm2118 = vcmp.ne.s32.totalorder %v2016, 0
          %vm2119 = vcmp.ne.s32.totalorder %v2017, 0
          %vm2120 = vcmp.ne.s32.totalorder %v2018, 0
          %vm2121 = vcmp.ne.s32.totalorder %v2019, 0
          %vm2122 = vcmp.ne.s32.totalorder %v2020, 0
          %vm2123 = vcmp.ne.s32.totalorder %v2021, 0
          %vm2124 = vcmp.ne.s32.totalorder %v2022, 0
          %vm2125 = vcmp.ne.s32.totalorder %v2023, 0
          %vm2126 = vcmp.ne.s32.totalorder %v2024, 0
          %vm2127 = vcmp.ne.s32.totalorder %v2025, 0
          %vm2128 = vcmp.ne.s32.totalorder %v2026, 0
          %vm2129 = vcmp.ne.s32.totalorder %v2027, 0
          %vm2130 = vcmp.ne.s32.totalorder %v2028, 0
          %vm2131 = vcmp.ne.s32.totalorder %v2029, 0
          %vm2132 = vcmp.ne.s32.totalorder %v2030, 0
          %vm2133 = vcmp.ne.s32.totalorder %v2031, 0
          %vm2134 = vcmp.ne.s32.totalorder %v2032, 0
          %vm2135 = vcmp.ne.s32.totalorder %v2033, 0
          %vm2136 = vcmp.ne.s32.totalorder %v2034, 0
          %v2137 = vsel %vm2101, 1, 0
          %v2138 = vsel %vm2102, 1, 0
          %v2139 = vsel %vm2103, 1, 0
          %v2140 = vsel %vm2104, 1, 0
          %v2141 = vsel %vm2105, 1, 0
          %v2142 = vsel %vm2106, 1, 0
          %v2143 = vsel %vm2107, 1, 0
          %v2144 = vsel %vm2108, 1, 0
          %v2145 = vsel %vm2109, 1, 0
          %v2146 = vsel %vm2110, 1, 0
          %v2147 = vsel %vm2111, 1, 0
          %v2148 = vsel %vm2112, 1, 0
          %v2149 = vsel %vm2113, 1, 0
          %v2150 = vsel %vm2114, 1, 0
          %v2151 = vsel %vm2115, 1, 0
          %v2152 = vsel %vm2116, 1, 0
          %v2153 = vsel %vm2117, 1, 0
          %v2154 = vsel %vm2118, 1, 0
          %v2155 = vsel %vm2119, 1, 0
          %v2156 = vsel %vm2120, 1, 0
          %v2157 = vsel %vm2121, 1, 0
          %v2158 = vsel %vm2122, 1, 0
          %v2159 = vsel %vm2123, 1, 0
          %v2160 = vsel %vm2124, 1, 0
          %v2161 = vsel %vm2125, 1, 0
          %v2162 = vsel %vm2126, 1, 0
          %v2163 = vsel %vm2127, 1, 0
          %v2164 = vsel %vm2128, 1, 0
          %v2165 = vsel %vm2129, 1, 0
          %v2166 = vsel %vm2130, 1, 0
          %v2167 = vsel %vm2131, 1, 0
          %v2168 = vsel %vm2132, 1, 0
          %v2169 = vsel %vm2133, 1, 0
          %v2170 = vsel %vm2134, 1, 0
          %v2171 = vsel %vm2135, 1, 0
          %v2172 = vsel %vm2136, 1, 0
          %vm2173 = vcmp.eq.s32.totalorder %v2137, 1
          %vm2174 = vcmp.eq.s32.totalorder %v2138, 1
          %vm2175 = vcmp.eq.s32.totalorder %v2139, 1
          %vm2176 = vcmp.eq.s32.totalorder %v2140, 1
          %vm2177 = vcmp.eq.s32.totalorder %v2141, 1
          %vm2178 = vcmp.eq.s32.totalorder %v2142, 1
          %vm2179 = vcmp.eq.s32.totalorder %v2143, 1
          %vm2180 = vcmp.eq.s32.totalorder %v2144, 1
          %vm2181 = vcmp.eq.s32.totalorder %v2145, 1
          %vm2182 = vcmp.eq.s32.totalorder %v2146, 1
          %vm2183 = vcmp.eq.s32.totalorder %v2147, 1
          %vm2184 = vcmp.eq.s32.totalorder %v2148, 1
          %vm2185 = vcmp.eq.s32.totalorder %v2149, 1
          %vm2186 = vcmp.eq.s32.totalorder %v2150, 1
          %vm2187 = vcmp.eq.s32.totalorder %v2151, 1
          %vm2188 = vcmp.eq.s32.totalorder %v2152, 1
          %vm2189 = vcmp.eq.s32.totalorder %v2153, 1
          %vm2190 = vcmp.eq.s32.totalorder %v2154, 1
          %vm2191 = vcmp.eq.s32.totalorder %v2155, 1
          %vm2192 = vcmp.eq.s32.totalorder %v2156, 1
          %vm2193 = vcmp.eq.s32.totalorder %v2157, 1
          %vm2194 = vcmp.eq.s32.totalorder %v2158, 1
          %vm2195 = vcmp.eq.s32.totalorder %v2159, 1
          %vm2196 = vcmp.eq.s32.totalorder %v2160, 1
          %vm2197 = vcmp.eq.s32.totalorder %v2161, 1
          %vm2198 = vcmp.eq.s32.totalorder %v2162, 1
          %vm2199 = vcmp.eq.s32.totalorder %v2163, 1
          %vm2200 = vcmp.eq.s32.totalorder %v2164, 1
          %vm2201 = vcmp.eq.s32.totalorder %v2165, 1
          %vm2202 = vcmp.eq.s32.totalorder %v2166, 1
          %vm2203 = vcmp.eq.s32.totalorder %v2167, 1
          %vm2204 = vcmp.eq.s32.totalorder %v2168, 1
          %vm2205 = vcmp.eq.s32.totalorder %v2169, 1
          %vm2206 = vcmp.eq.s32.totalorder %v2170, 1
          %vm2207 = vcmp.eq.s32.totalorder %v2171, 1
          %vm2208 = vcmp.eq.s32.totalorder %v2172, 1
          %v2209 = vsel %vm2173, 0.0, 0.0
          %v2210 = vsel %vm2174, 0.0, 0.0
          %v2211 = vsel %vm2175, %v2100, 0.0
          %v2212 = vsel %vm2176, %v2099, 0.0
          %v2213 = vsel %vm2177, %v2098, 0.0
          %v2214 = vsel %vm2178, %v2097, 0.0
          %v2215 = vsel %vm2179, %v2096, 0.0
          %v2216 = vsel %vm2180, %v2095, 0.0
          %v2217 = vsel %vm2181, %v2094, 0.0
          %v2218 = vsel %vm2182, %v2093, 0.0
          %v2219 = vsel %vm2183, %v2092, 0.0
          %v2220 = vsel %vm2184, %v2091, 0.0
          %v2221 = vsel %vm2185, %v2090, 0.0
          %v2222 = vsel %vm2186, %v2089, 0.0
          %v2223 = vsel %vm2187, %v2088, 0.0
          %v2224 = vsel %vm2188, %v2087, 0.0
          %v2225 = vsel %vm2189, %v2086, 0.0
          %v2226 = vsel %vm2190, %v2085, 0.0
          %v2227 = vsel %vm2191, %v2084, 0.0
          %v2228 = vsel %vm2192, %v2083, 0.0
          %v2229 = vsel %vm2193, %v2082, 0.0
          %v2230 = vsel %vm2194, %v2081, 0.0
          %v2231 = vsel %vm2195, %v2080, 0.0
          %v2232 = vsel %vm2196, %v2079, 0.0
          %v2233 = vsel %vm2197, %v2078, 0.0
          %v2234 = vsel %vm2198, %v2077, 0.0
          %v2235 = vsel %vm2199, %v2076, 0.0
          %v2236 = vsel %vm2200, %v2075, 0.0
          %v2237 = vsel %vm2201, %v2074, 0.0
          %v2238 = vsel %vm2202, %v2073, 0.0
          %v2239 = vsel %vm2203, %v2072, 0.0
          %v2240 = vsel %vm2204, %v2071, 0.0
          %v2241 = vsel %vm2205, %v2070, 0.0
          %v2242 = vsel %vm2206, %v2069, 0.0
          %v2243 = vsel %vm2207, %v2068, 0.0
          %v2244 = vsel %vm2208, 0.0, 0.0
          %v2245 = vrot.slane %v1534, 1
          %v2246 = vrot.slane %v1535, 1
          %v2247 = vrot.slane %v1536, 1
          %v2248 = vrot.slane %v1537, 1
          %v2249 = vrot.slane %v1538, 1
          %v2250 = vrot.slane %v1539, 1
          %v2251 = vrot.slane %v1540, 1
          %v2252 = vrot.slane %v1541, 1
          %v2253 = vrot.slane %v1542, 1
          %v2254 = vrot.slane %v1543, 1
          %v2255 = vrot.slane %v1544, 1
          %v2256 = vrot.slane %v1545, 1
          %v2257 = vrot.slane %v1546, 1
          %v2258 = vrot.slane %v1547, 1
          %v2259 = vrot.slane %v1548, 1
          %v2260 = vrot.slane %v1549, 1
          %v2261 = vrot.slane %v1550, 1
          %v2262 = vrot.slane %v1551, 1
          %v2263 = vrot.slane %v1552, 1
          %v2264 = vrot.slane %v1553, 1
          %v2265 = vrot.slane %v1554, 1
          %v2266 = vrot.slane %v1555, 1
          %v2267 = vrot.slane %v1556, 1
          %v2268 = vrot.slane %v1557, 1
          %v2269 = vrot.slane %v1558, 1
          %v2270 = vrot.slane %v1559, 1
          %v2271 = vrot.slane %v1560, 1
          %v2272 = vrot.slane %v1561, 1
          %v2273 = vrot.slane %v1562, 1
          %v2274 = vrot.slane %v1563, 1
          %v2275 = vrot.slane %v1564, 1
          %v2276 = vrot.slane %v1565, 1
          %vm2277 = vcmp.lt.s32.totalorder %v1567, 7
          %v2278 = vsel %vm2277, %v2276, 0.0
          %v2279 = vsel %vm2277, %v2275, %v2276
          %v2280 = vsel %vm2277, %v2274, %v2275
          %v2281 = vsel %vm2277, %v2273, %v2274
          %v2282 = vsel %vm2277, %v2272, %v2273
          %v2283 = vsel %vm2277, %v2271, %v2272
          %v2284 = vsel %vm2277, %v2270, %v2271
          %v2285 = vsel %vm2277, %v2269, %v2270
          %v2286 = vsel %vm2277, %v2268, %v2269
          %v2287 = vsel %vm2277, %v2267, %v2268
          %v2288 = vsel %vm2277, %v2266, %v2267
          %v2289 = vsel %vm2277, %v2265, %v2266
          %v2290 = vsel %vm2277, %v2264, %v2265
          %v2291 = vsel %vm2277, %v2263, %v2264
          %v2292 = vsel %vm2277, %v2262, %v2263
          %v2293 = vsel %vm2277, %v2261, %v2262
          %v2294 = vsel %vm2277, %v2260, %v2261
          %v2295 = vsel %vm2277, %v2259, %v2260
          %v2296 = vsel %vm2277, %v2258, %v2259
          %v2297 = vsel %vm2277, %v2257, %v2258
          %v2298 = vsel %vm2277, %v2256, %v2257
          %v2299 = vsel %vm2277, %v2255, %v2256
          %v2300 = vsel %vm2277, %v2254, %v2255
          %v2301 = vsel %vm2277, %v2253, %v2254
          %v2302 = vsel %vm2277, %v2252, %v2253
          %v2303 = vsel %vm2277, %v2251, %v2252
          %v2304 = vsel %vm2277, %v2250, %v2251
          %v2305 = vsel %vm2277, %v2249, %v2250
          %v2306 = vsel %vm2277, %v2248, %v2249
          %v2307 = vsel %vm2277, %v2247, %v2248
          %v2308 = vsel %vm2277, %v2246, %v2247
          %v2309 = vsel %vm2277, %v2245, %v2246
          %v2310 = vsel %vm2277, 0.0, %v2245
          %vm2311 = vcmp.ne.s32.totalorder %v1999, 15
          %vm2312 = vcmp.ne.s32.totalorder %v2000, 15
          %vm2313 = vcmp.ne.s32.totalorder %v2001, 15
          %vm2314 = vcmp.ne.s32.totalorder %v2002, 15
          %vm2315 = vcmp.ne.s32.totalorder %v2003, 15
          %vm2316 = vcmp.ne.s32.totalorder %v2004, 15
          %vm2317 = vcmp.ne.s32.totalorder %v2005, 15
          %vm2318 = vcmp.ne.s32.totalorder %v2006, 15
          %vm2319 = vcmp.ne.s32.totalorder %v2007, 15
          %vm2320 = vcmp.ne.s32.totalorder %v2008, 15
          %vm2321 = vcmp.ne.s32.totalorder %v2009, 15
          %vm2322 = vcmp.ne.s32.totalorder %v2010, 15
          %vm2323 = vcmp.ne.s32.totalorder %v2011, 15
          %vm2324 = vcmp.ne.s32.totalorder %v2012, 15
          %vm2325 = vcmp.ne.s32.totalorder %v2013, 15
          %vm2326 = vcmp.ne.s32.totalorder %v2014, 15
          %vm2327 = vcmp.ne.s32.totalorder %v2015, 15
          %vm2328 = vcmp.ne.s32.totalorder %v2016, 15
          %vm2329 = vcmp.ne.s32.totalorder %v2017, 15
          %vm2330 = vcmp.ne.s32.totalorder %v2018, 15
          %vm2331 = vcmp.ne.s32.totalorder %v2019, 15
          %vm2332 = vcmp.ne.s32.totalorder %v2020, 15
          %vm2333 = vcmp.ne.s32.totalorder %v2021, 15
          %vm2334 = vcmp.ne.s32.totalorder %v2022, 15
          %vm2335 = vcmp.ne.s32.totalorder %v2023, 15
          %vm2336 = vcmp.ne.s32.totalorder %v2024, 15
          %vm2337 = vcmp.ne.s32.totalorder %v2025, 15
          %vm2338 = vcmp.ne.s32.totalorder %v2026, 15
          %vm2339 = vcmp.ne.s32.totalorder %v2027, 15
          %vm2340 = vcmp.ne.s32.totalorder %v2028, 15
          %vm2341 = vcmp.ne.s32.totalorder %v2029, 15
          %vm2342 = vcmp.ne.s32.totalorder %v2030, 15
          %vm2343 = vcmp.ne.s32.totalorder %v2031, 15
          %vm2344 = vcmp.ne.s32.totalorder %v2032, 15
          %vm2345 = vcmp.ne.s32.totalorder %v2033, 15
          %vm2346 = vcmp.ne.s32.totalorder %v2034, 15
          %v2347 = vsel %vm2311, 1, 0
          %v2348 = vsel %vm2312, 1, 0
          %v2349 = vsel %vm2313, 1, 0
          %v2350 = vsel %vm2314, 1, 0
          %v2351 = vsel %vm2315, 1, 0
          %v2352 = vsel %vm2316, 1, 0
          %v2353 = vsel %vm2317, 1, 0
          %v2354 = vsel %vm2318, 1, 0
          %v2355 = vsel %vm2319, 1, 0
          %v2356 = vsel %vm2320, 1, 0
          %v2357 = vsel %vm2321, 1, 0
          %v2358 = vsel %vm2322, 1, 0
          %v2359 = vsel %vm2323, 1, 0
          %v2360 = vsel %vm2324, 1, 0
          %v2361 = vsel %vm2325, 1, 0
          %v2362 = vsel %vm2326, 1, 0
          %v2363 = vsel %vm2327, 1, 0
          %v2364 = vsel %vm2328, 1, 0
          %v2365 = vsel %vm2329, 1, 0
          %v2366 = vsel %vm2330, 1, 0
          %v2367 = vsel %vm2331, 1, 0
          %v2368 = vsel %vm2332, 1, 0
          %v2369 = vsel %vm2333, 1, 0
          %v2370 = vsel %vm2334, 1, 0
          %v2371 = vsel %vm2335, 1, 0
          %v2372 = vsel %vm2336, 1, 0
          %v2373 = vsel %vm2337, 1, 0
          %v2374 = vsel %vm2338, 1, 0
          %v2375 = vsel %vm2339, 1, 0
          %v2376 = vsel %vm2340, 1, 0
          %v2377 = vsel %vm2341, 1, 0
          %v2378 = vsel %vm2342, 1, 0
          %v2379 = vsel %vm2343, 1, 0
          %v2380 = vsel %vm2344, 1, 0
          %v2381 = vsel %vm2345, 1, 0
          %v2382 = vsel %vm2346, 1, 0
          %vm2383 = vcmp.eq.s32.totalorder %v2347, 1
          %vm2384 = vcmp.eq.s32.totalorder %v2348, 1
          %vm2385 = vcmp.eq.s32.totalorder %v2349, 1
          %vm2386 = vcmp.eq.s32.totalorder %v2350, 1
          %vm2387 = vcmp.eq.s32.totalorder %v2351, 1
          %vm2388 = vcmp.eq.s32.totalorder %v2352, 1
          %vm2389 = vcmp.eq.s32.totalorder %v2353, 1
          %vm2390 = vcmp.eq.s32.totalorder %v2354, 1
          %vm2391 = vcmp.eq.s32.totalorder %v2355, 1
          %vm2392 = vcmp.eq.s32.totalorder %v2356, 1
          %vm2393 = vcmp.eq.s32.totalorder %v2357, 1
          %vm2394 = vcmp.eq.s32.totalorder %v2358, 1
          %vm2395 = vcmp.eq.s32.totalorder %v2359, 1
          %vm2396 = vcmp.eq.s32.totalorder %v2360, 1
          %vm2397 = vcmp.eq.s32.totalorder %v2361, 1
          %vm2398 = vcmp.eq.s32.totalorder %v2362, 1
          %vm2399 = vcmp.eq.s32.totalorder %v2363, 1
          %vm2400 = vcmp.eq.s32.totalorder %v2364, 1
          %vm2401 = vcmp.eq.s32.totalorder %v2365, 1
          %vm2402 = vcmp.eq.s32.totalorder %v2366, 1
          %vm2403 = vcmp.eq.s32.totalorder %v2367, 1
          %vm2404 = vcmp.eq.s32.totalorder %v2368, 1
          %vm2405 = vcmp.eq.s32.totalorder %v2369, 1
          %vm2406 = vcmp.eq.s32.totalorder %v2370, 1
          %vm2407 = vcmp.eq.s32.totalorder %v2371, 1
          %vm2408 = vcmp.eq.s32.totalorder %v2372, 1
          %vm2409 = vcmp.eq.s32.totalorder %v2373, 1
          %vm2410 = vcmp.eq.s32.totalorder %v2374, 1
          %vm2411 = vcmp.eq.s32.totalorder %v2375, 1
          %vm2412 = vcmp.eq.s32.totalorder %v2376, 1
          %vm2413 = vcmp.eq.s32.totalorder %v2377, 1
          %vm2414 = vcmp.eq.s32.totalorder %v2378, 1
          %vm2415 = vcmp.eq.s32.totalorder %v2379, 1
          %vm2416 = vcmp.eq.s32.totalorder %v2380, 1
          %vm2417 = vcmp.eq.s32.totalorder %v2381, 1
          %vm2418 = vcmp.eq.s32.totalorder %v2382, 1
          %v2419 = vsel %vm2383, 0.0, 0.0
          %v2420 = vsel %vm2384, %v2310, 0.0
          %v2421 = vsel %vm2385, %v2309, 0.0
          %v2422 = vsel %vm2386, %v2308, 0.0
          %v2423 = vsel %vm2387, %v2307, 0.0
          %v2424 = vsel %vm2388, %v2306, 0.0
          %v2425 = vsel %vm2389, %v2305, 0.0
          %v2426 = vsel %vm2390, %v2304, 0.0
          %v2427 = vsel %vm2391, %v2303, 0.0
          %v2428 = vsel %vm2392, %v2302, 0.0
          %v2429 = vsel %vm2393, %v2301, 0.0
          %v2430 = vsel %vm2394, %v2300, 0.0
          %v2431 = vsel %vm2395, %v2299, 0.0
          %v2432 = vsel %vm2396, %v2298, 0.0
          %v2433 = vsel %vm2397, %v2297, 0.0
          %v2434 = vsel %vm2398, %v2296, 0.0
          %v2435 = vsel %vm2399, %v2295, 0.0
          %v2436 = vsel %vm2400, %v2294, 0.0
          %v2437 = vsel %vm2401, %v2293, 0.0
          %v2438 = vsel %vm2402, %v2292, 0.0
          %v2439 = vsel %vm2403, %v2291, 0.0
          %v2440 = vsel %vm2404, %v2290, 0.0
          %v2441 = vsel %vm2405, %v2289, 0.0
          %v2442 = vsel %vm2406, %v2288, 0.0
          %v2443 = vsel %vm2407, %v2287, 0.0
          %v2444 = vsel %vm2408, %v2286, 0.0
          %v2445 = vsel %vm2409, %v2285, 0.0
          %v2446 = vsel %vm2410, %v2284, 0.0
          %v2447 = vsel %vm2411, %v2283, 0.0
          %v2448 = vsel %vm2412, %v2282, 0.0
          %v2449 = vsel %vm2413, %v2281, 0.0
          %v2450 = vsel %vm2414, %v2280, 0.0
          %v2451 = vsel %vm2415, %v2279, 0.0
          %v2452 = vsel %vm2416, %v2278, 0.0
          %v2453 = vsel %vm2417, 0.0, 0.0
          %v2454 = vsel %vm2418, 0.0, 0.0
          %2488 = vrot.lane.b32.xlu0 0.0, 64
          %v2489 = vpop.permute.xlu0 %2488
          %2490 = vrot.lane.b32.xlu0 %v1534, 64
          %v2491 = vpop.permute.xlu0 %2490
          %2492 = vrot.lane.b32.xlu0 %v1535, 64
          %v2493 = vpop.permute.xlu0 %2492
          %2494 = vrot.lane.b32.xlu0 %v1536, 64
          %v2495 = vpop.permute.xlu0 %2494
          %2496 = vrot.lane.b32.xlu0 %v1537, 64
          %v2497 = vpop.permute.xlu0 %2496
          %2498 = vrot.lane.b32.xlu0 %v1538, 64
          %v2499 = vpop.permute.xlu0 %2498
          %2500 = vrot.lane.b32.xlu0 %v1539, 64
          %v2501 = vpop.permute.xlu0 %2500
          %2502 = vrot.lane.b32.xlu0 %v1540, 64
          %v2503 = vpop.permute.xlu0 %2502
          %2504 = vrot.lane.b32.xlu0 %v1541, 64
          %v2505 = vpop.permute.xlu0 %2504
          %2506 = vrot.lane.b32.xlu0 %v1542, 64
          %v2507 = vpop.permute.xlu0 %2506
          %2508 = vrot.lane.b32.xlu0 %v1543, 64
          %v2509 = vpop.permute.xlu0 %2508
          %2510 = vrot.lane.b32.xlu0 %v1544, 64
          %v2511 = vpop.permute.xlu0 %2510
          %2512 = vrot.lane.b32.xlu0 %v1545, 64
          %v2513 = vpop.permute.xlu0 %2512
          %2514 = vrot.lane.b32.xlu0 %v1546, 64
          %v2515 = vpop.permute.xlu0 %2514
          %2516 = vrot.lane.b32.xlu0 %v1547, 64
          %v2517 = vpop.permute.xlu0 %2516
          %2518 = vrot.lane.b32.xlu0 %v1548, 64
          %v2519 = vpop.permute.xlu0 %2518
          %2520 = vrot.lane.b32.xlu0 %v1549, 64
          %v2521 = vpop.permute.xlu0 %2520
          %2522 = vrot.lane.b32.xlu0 %v1550, 64
          %v2523 = vpop.permute.xlu0 %2522
          %2524 = vrot.lane.b32.xlu0 %v1551, 64
          %v2525 = vpop.permute.xlu0 %2524
          %2526 = vrot.lane.b32.xlu0 %v1552, 64
          %v2527 = vpop.permute.xlu0 %2526
          %2528 = vrot.lane.b32.xlu0 %v1553, 64
          %v2529 = vpop.permute.xlu0 %2528
          %2530 = vrot.lane.b32.xlu0 %v1554, 64
          %v2531 = vpop.permute.xlu0 %2530
          %2532 = vrot.lane.b32.xlu0 %v1555, 64
          %v2533 = vpop.permute.xlu0 %2532
          %2534 = vrot.lane.b32.xlu0 %v1556, 64
          %v2535 = vpop.permute.xlu0 %2534
          %2536 = vrot.lane.b32.xlu0 %v1557, 64
          %v2537 = vpop.permute.xlu0 %2536
          %2538 = vrot.lane.b32.xlu0 %v1558, 64
          %v2539 = vpop.permute.xlu0 %2538
          %2540 = vrot.lane.b32.xlu0 %v1559, 64
          %v2541 = vpop.permute.xlu0 %2540
          %2542 = vrot.lane.b32.xlu0 %v1560, 64
          %v2543 = vpop.permute.xlu0 %2542
          %2544 = vrot.lane.b32.xlu0 %v1561, 64
          %v2545 = vpop.permute.xlu0 %2544
          %2546 = vrot.lane.b32.xlu0 %v1562, 64
          %v2547 = vpop.permute.xlu0 %2546
          %2548 = vrot.lane.b32.xlu0 %v1563, 64
          %v2549 = vpop.permute.xlu0 %2548
          %2550 = vrot.lane.b32.xlu0 %v1564, 64
          %v2551 = vpop.permute.xlu0 %2550
          %2552 = vrot.lane.b32.xlu0 %v1565, 64
          %v2553 = vpop.permute.xlu0 %2552
          %v2587 = vsel %vm766, %v2209, %v2489
          %v2588 = vsel %vm766, %v2210, %v2489
          %v2589 = vsel %vm766, %v2211, %v2491
          %v2590 = vsel %vm766, %v2212, %v2493
          %v2591 = vsel %vm766, %v2213, %v2495
          %v2592 = vsel %vm766, %v2214, %v2497
          %v2593 = vsel %vm766, %v2215, %v2499
          %v2594 = vsel %vm766, %v2216, %v2501
          %v2595 = vsel %vm766, %v2217, %v2503
          %v2596 = vsel %vm766, %v2218, %v2505
          %v2597 = vsel %vm766, %v2219, %v2507
          %v2598 = vsel %vm766, %v2220, %v2509
          %v2599 = vsel %vm766, %v2221, %v2511
          %v2600 = vsel %vm766, %v2222, %v2513
          %v2601 = vsel %vm766, %v2223, %v2515
          %v2602 = vsel %vm766, %v2224, %v2517
          %v2603 = vsel %vm766, %v2225, %v2519
          %v2604 = vsel %vm766, %v2226, %v2521
          %v2605 = vsel %vm766, %v2227, %v2523
          %v2606 = vsel %vm766, %v2228, %v2525
          %v2607 = vsel %vm766, %v2229, %v2527
          %v2608 = vsel %vm766, %v2230, %v2529
          %v2609 = vsel %vm766, %v2231, %v2531
          %v2610 = vsel %vm766, %v2232, %v2533
          %v2611 = vsel %vm766, %v2233, %v2535
          %v2612 = vsel %vm766, %v2234, %v2537
          %v2613 = vsel %vm766, %v2235, %v2539
          %v2614 = vsel %vm766, %v2236, %v2541
          %v2615 = vsel %vm766, %v2237, %v2543
          %v2616 = vsel %vm766, %v2238, %v2545
          %v2617 = vsel %vm766, %v2239, %v2547
          %v2618 = vsel %vm766, %v2240, %v2549
          %v2619 = vsel %vm766, %v2241, %v2551
          %v2620 = vsel %vm766, %v2242, %v2553
          %v2621 = vsel %vm766, %v2243, %v2489
          %v2622 = vsel %vm766, %v2244, %v2489
          %v2623 = vpack.c.bf16 %v2588, %v2587
          %v2624 = vpack.c.bf16 %v2420, %v2419
          %v2625 = vpack.c.bf16 %v2590, %v2589
          %v2626 = vpack.c.bf16 %v2422, %v2421
          %v2627 = vpack.c.bf16 %v2592, %v2591
          %v2628 = vpack.c.bf16 %v2424, %v2423
          %v2629 = vpack.c.bf16 %v2594, %v2593
          %v2630 = vpack.c.bf16 %v2426, %v2425
          %v2631 = vpack.c.bf16 %v2596, %v2595
          %v2632 = vpack.c.bf16 %v2428, %v2427
          %v2633 = vpack.c.bf16 %v2598, %v2597
          %v2634 = vpack.c.bf16 %v2430, %v2429
          %v2635 = vpack.c.bf16 %v2600, %v2599
          %v2636 = vpack.c.bf16 %v2432, %v2431
          %v2637 = vpack.c.bf16 %v2602, %v2601
          %v2638 = vpack.c.bf16 %v2434, %v2433
          %v2639 = vpack.c.bf16 %v2604, %v2603
          %v2640 = vpack.c.bf16 %v2436, %v2435
          %v2641 = vpack.c.bf16 %v2606, %v2605
          %v2642 = vpack.c.bf16 %v2438, %v2437
          %v2643 = vpack.c.bf16 %v2608, %v2607
          %v2644 = vpack.c.bf16 %v2440, %v2439
          %v2645 = vpack.c.bf16 %v2610, %v2609
          %v2646 = vpack.c.bf16 %v2442, %v2441
          %v2647 = vpack.c.bf16 %v2612, %v2611
          %v2648 = vpack.c.bf16 %v2444, %v2443
          %v2649 = vpack.c.bf16 %v2614, %v2613
          %v2650 = vpack.c.bf16 %v2446, %v2445
          %v2651 = vpack.c.bf16 %v2616, %v2615
          %v2652 = vpack.c.bf16 %v2448, %v2447
          %v2653 = vpack.c.bf16 %v2618, %v2617
          %v2654 = vpack.c.bf16 %v2450, %v2449
          %v2655 = vpack.c.bf16 %v2620, %v2619
          %v2656 = vpack.c.bf16 %v2452, %v2451
          %v2657 = vpack.c.bf16 %v2622, %v2621
          %v2658 = vpack.c.bf16 %v2454, %v2453
          %v2659 = vld [vmem:[#allocation11] sm:$0xff]
          %v2660 = vld [vmem:[#allocation11 + $0x8] sm:$0xff]
          %v2661 = vld [vmem:[#allocation11 + $0x10] sm:$0xff]
          %v2662 = vld [vmem:[#allocation11 + $0x18] sm:$0xff]
          %v2663 = vld [vmem:[#allocation11 + $0x20] sm:$0xff]
          %v2664 = vld [vmem:[#allocation11 + $0x28] sm:$0xff]
          %v2665 = vld [vmem:[#allocation11 + $0x30] sm:$0xff]
          %v2666 = vld [vmem:[#allocation11 + $0x38] sm:$0xff]
          %v2667 = vld [vmem:[#allocation11 + $0x40] sm:$0xff]
          %v2668 = vld [vmem:[#allocation11 + $0x48] sm:$0xff]
          %v2669 = vld [vmem:[#allocation11 + $0x50] sm:$0xff]
          %v2670 = vld [vmem:[#allocation11 + $0x58] sm:$0xff]
          %v2671 = vld [vmem:[#allocation11 + $0x60] sm:$0xff]
          %v2672 = vld [vmem:[#allocation11 + $0x68] sm:$0xff]
          %v2673 = vld [vmem:[#allocation11 + $0x70] sm:$0xff]
          %v2674 = vld [vmem:[#allocation11 + $0x78] sm:$0xff]
          %v2675 = vld [vmem:[#allocation11 + $0x80] sm:$0xff]
          %v2676 = vld [vmem:[#allocation11 + $0x88] sm:$0xff]
          %v2677 = vld [vmem:[#allocation11 + $0x90] sm:$0xff]
          %v2678 = vld [vmem:[#allocation11 + $0x98] sm:$0xff]
          %v2679 = vld [vmem:[#allocation11 + $0xa0] sm:$0xff]
          %v2680 = vld [vmem:[#allocation11 + $0xa8] sm:$0xff]
          %v2681 = vld [vmem:[#allocation11 + $0xb0] sm:$0xff]
          %v2682 = vld [vmem:[#allocation11 + $0xb8] sm:$0xff]
          %s2683 = scalar_lea.vmem [#allocation11], 192
          %v2684 = vld [vmem:[%s2683] sm:$0xff]
          %v2685 = vld [vmem:[%s2683 + $0x8] sm:$0xff]
          %v2686 = vld [vmem:[%s2683 + $0x10] sm:$0xff]
          %v2687 = vld [vmem:[%s2683 + $0x18] sm:$0xff]
          %v2688 = vld [vmem:[%s2683 + $0x20] sm:$0xff]
          %v2689 = vld [vmem:[%s2683 + $0x28] sm:$0xff]
          %v2690 = vld [vmem:[%s2683 + $0x30] sm:$0xff]
          %v2691 = vld [vmem:[%s2683 + $0x38] sm:$0xff]
          %v2692 = vld [vmem:[%s2683 + $0x40] sm:$0xff]
          %v2693 = vld [vmem:[%s2683 + $0x48] sm:$0xff]
          %v2694 = vld [vmem:[%s2683 + $0x50] sm:$0xff]
          %v2695 = vld [vmem:[%s2683 + $0x58] sm:$0xff]
          %v2696 = vld [vmem:[%s2683 + $0x60] sm:$0xff]
          %v2697 = vld [vmem:[%s2683 + $0x68] sm:$0xff]
          %v2698 = vld [vmem:[%s2683 + $0x70] sm:$0xff]
          %v2699 = vld [vmem:[%s2683 + $0x78] sm:$0xff]
          %v2700 = vld [vmem:[%s2683 + $0x80] sm:$0xff]
          %v2701 = vld [vmem:[%s2683 + $0x88] sm:$0xff]
          %v2702 = vld [vmem:[%s2683 + $0x90] sm:$0xff]
          %v2703 = vld [vmem:[%s2683 + $0x98] sm:$0xff]
          %v2704 = vld [vmem:[%s2683 + $0xa0] sm:$0xff]
          %v2705 = vld [vmem:[%s2683 + $0xa8] sm:$0xff]
          %v2706 = vld [vmem:[%s2683 + $0xb0] sm:$0xff]
          %v2707 = vld [vmem:[%s2683 + $0xb8] sm:$0xff]
          %v2732 = vunpack.c.l.b16 %v2684
          %v2733 = vunpack.c.h.b16 %v2684
          %v2734 = vunpack.c.l.b16 %v2685
          %v2735 = vunpack.c.h.b16 %v2685
          %v2736 = vunpack.c.l.b16 %v2686
          %v2737 = vunpack.c.h.b16 %v2686
          %v2738 = vunpack.c.l.b16 %v2687
          %v2739 = vunpack.c.h.b16 %v2687
          %v2740 = vunpack.c.l.b16 %v2688
          %v2741 = vunpack.c.h.b16 %v2688
          %v2742 = vunpack.c.l.b16 %v2689
          %v2743 = vunpack.c.h.b16 %v2689
          %v2744 = vunpack.c.l.b16 %v2690
          %v2745 = vunpack.c.h.b16 %v2690
          %v2746 = vunpack.c.l.b16 %v2691
          %v2747 = vunpack.c.h.b16 %v2691
          %v2748 = vunpack.c.l.b16 %v2692
          %v2749 = vunpack.c.h.b16 %v2692
          %v2750 = vunpack.c.l.b16 %v2693
          %v2751 = vunpack.c.h.b16 %v2693
          %v2752 = vunpack.c.l.b16 %v2694
          %v2753 = vunpack.c.h.b16 %v2694
          %v2754 = vunpack.c.l.b16 %v2695
          %v2755 = vunpack.c.h.b16 %v2695
          %v2756 = vunpack.c.l.b16 %v2696
          %v2757 = vunpack.c.h.b16 %v2696
          %v2758 = vunpack.c.l.b16 %v2697
          %v2759 = vunpack.c.h.b16 %v2697
          %v2760 = vunpack.c.l.b16 %v2698
          %v2761 = vunpack.c.h.b16 %v2698
          %v2762 = vunpack.c.l.b16 %v2699
          %v2763 = vunpack.c.h.b16 %v2699
          %v2764 = vunpack.c.l.b16 %v2700
          %v2765 = vunpack.c.h.b16 %v2700
          %v2766 = vunpack.c.l.b16 %v2701
          %v2767 = vunpack.c.h.b16 %v2701
          %v2768 = vunpack.c.l.b16 %v2702
          %v2769 = vunpack.c.h.b16 %v2702
          %v2770 = vunpack.c.l.b16 %v2703
          %v2771 = vunpack.c.h.b16 %v2703
          %v2772 = vunpack.c.l.b16 %v2704
          %v2773 = vunpack.c.h.b16 %v2704
          %v2774 = vunpack.c.l.b16 %v2705
          %v2775 = vunpack.c.h.b16 %v2705
          %v2776 = vunpack.c.l.b16 %v2706
          %v2777 = vunpack.c.h.b16 %v2706
          %v2778 = vunpack.c.l.b16 %v2707
          %v2779 = vunpack.c.h.b16 %v2707
          %v2780 = vpack.c.b16 %v2734, %v2732
          %v2781 = vpack.c.b16 %v2735, %v2733
          %v2782 = vpack.c.b16 %v2738, %v2736
          %v2783 = vpack.c.b16 %v2739, %v2737
          %v2784 = vpack.c.b16 %v2742, %v2740
          %v2785 = vpack.c.b16 %v2743, %v2741
          %v2786 = vpack.c.b16 %v2746, %v2744
          %v2787 = vpack.c.b16 %v2747, %v2745
          %v2788 = vpack.c.b16 %v2750, %v2748
          %v2789 = vpack.c.b16 %v2751, %v2749
          %v2790 = vpack.c.b16 %v2754, %v2752
          %v2791 = vpack.c.b16 %v2755, %v2753
          %v2792 = vpack.c.b16 %v2758, %v2756
          %v2793 = vpack.c.b16 %v2759, %v2757
          %v2794 = vpack.c.b16 %v2762, %v2760
          %v2795 = vpack.c.b16 %v2763, %v2761
          %v2796 = vpack.c.b16 %v2766, %v2764
          %v2797 = vpack.c.b16 %v2767, %v2765
          %v2798 = vpack.c.b16 %v2770, %v2768
          %v2799 = vpack.c.b16 %v2771, %v2769
          %v2800 = vpack.c.b16 %v2774, %v2772
          %v2801 = vpack.c.b16 %v2775, %v2773
          %v2802 = vpack.c.b16 %v2778, %v2776
          %v2803 = vpack.c.b16 %v2779, %v2777
          %v2829 = vsel %vm766, %v2626, 0
          %v2832 = vsel %vm766, %v2628, 0
          %v2835 = vsel %vm766, %v2630, 0
          %v2838 = vsel %vm766, %v2632, 0
          %v2841 = vsel %vm766, %v2634, 0
          %v2844 = vsel %vm766, %v2636, 0
          %v2847 = vsel %vm766, %v2638, 0
          %v2850 = vsel %vm766, %v2640, 0
          %v2853 = vsel %vm766, %v2642, 0
          %v2856 = vsel %vm766, %v2644, 0
          %v2859 = vsel %vm766, %v2646, 0
          %v2862 = vsel %vm766, %v2648, 0
          %v2865 = vsel %vm766, %v2650, 0
          %v2868 = vsel %vm766, %v2652, 0
          %v2871 = vsel %vm766, %v2654, 0
          %v2874 = vsel %vm766, %v2656, 0
          %2876 = vmatprep.subr.bf16.mxu0 %v2781
          %2877 = vmatpush1.bf16.msra.mxu0 %v2780
          %2878 = vmatprep.subr.bf16.mxu0 %v2783
          %2879 = vmatpush1.bf16.msra.mxu0 %v2782
          %2880 = vmatprep.subr.bf16.mxu0 %v2785
          %2881 = vmatpush1.bf16.msra.mxu0 %v2784
          %2882 = vmatprep.subr.bf16.mxu0 %v2787
          %2883 = vmatpush1.bf16.msra.mxu0 %v2786
          %2884 = vmatprep.subr.bf16.mxu0 %v2789
          %2885 = vmatpush1.bf16.msra.mxu0 %v2788
          %2886 = vmatprep.subr.bf16.mxu0 %v2791
          %2887 = vmatpush1.bf16.msra.mxu0 %v2790
          %2888 = vmatprep.subr.bf16.mxu0 %v2793
          %2889 = vmatpush1.bf16.msra.mxu0 %v2792
          %2890 = vmatprep.subr.bf16.mxu0 %v2795
          %2891 = vmatpush1.bf16.msra.mxu0 %v2794
          %2892 = vmatprep.subr.bf16.mxu0 %v2797
          %2893 = vmatpush1.bf16.msra.mxu0 %v2796
          %2894 = vmatprep.subr.bf16.mxu0 %v2799
          %2895 = vmatpush1.bf16.msra.mxu0 %v2798
          %2896 = vmatprep.subr.bf16.mxu0 %v2801
          %2897 = vmatpush1.bf16.msra.mxu0 %v2800
          %2898 = vmatprep.subr.bf16.mxu0 %v2803
          %2899 = vmatpush1.bf16.msra.mxu0 %v2802
          %2900 = vmatprep.subr.bf16.mxu0 0
          %2901 = vmatpush1.bf16.msra.mxu0 0
          %2902 = vmatprep.subr.bf16.mxu0 0
          %2903 = vmatpush1.bf16.msra.mxu0 0
          %2904 = vmatprep.subr.bf16.mxu0 0
          %2905 = vmatpush1.bf16.msra.mxu0 0
          %2906 = vmatprep.subr.bf16.mxu0 0
          %2907 = vmatpush1.bf16.msra.mxu0 0
          %2908 = vmatprep.mubr.bf16.mxu0 %v2829
          %2909 = vmatmul.mubr.bf16.gmra.mrb[0].mxu0 %v2625
          %v2910 = vpop.f32.mrb[0].mxu0
          %v2911 = vadd.f32 0.0, %v2910
          %v2912 = vpop.f32.mrb[0].mxu0
          %v2913 = vadd.f32 0.0, %v2912
          %v2914 = vpop.f32.mrb[0].mxu0
          %v2915 = vadd.f32 0.0, %v2914
          %v2916 = vpop.f32.mrb[0].mxu0
          %v2917 = vadd.f32 0.0, %v2916
          %2918 = vmatprep.mubr.bf16.mxu0 %v2832
          %2919 = vmatmul.mubr.bf16.gmra.mrb[0].mxu0 %v2627
          %v2920 = vpop.f32.mrb[0].mxu0
          %v2921 = vadd.f32 0.0, %v2920
          %v2922 = vpop.f32.mrb[0].mxu0
          %v2923 = vadd.f32 0.0, %v2922
          %v2924 = vpop.f32.mrb[0].mxu0
          %v2925 = vadd.f32 0.0, %v2924
          %v2926 = vpop.f32.mrb[0].mxu0
          %v2927 = vadd.f32 0.0, %v2926
          %2928 = vmatprep.mubr.bf16.mxu0 %v2835
          %2929 = vmatmul.mubr.bf16.gmra.mrb[0].mxu0 %v2629
          %v2930 = vpop.f32.mrb[0].mxu0
          %v2931 = vadd.f32 0.0, %v2930
          %v2932 = vpop.f32.mrb[0].mxu0
          %v2933 = vadd.f32 0.0, %v2932
          %v2934 = vpop.f32.mrb[0].mxu0
          %v2935 = vadd.f32 0.0, %v2934
          %v2936 = vpop.f32.mrb[0].mxu0
          %v2937 = vadd.f32 0.0, %v2936
          %2938 = vmatprep.mubr.bf16.mxu0 %v2838
          %2939 = vmatmul.mubr.bf16.gmra.mrb[0].mxu0 %v2631
          %v2940 = vpop.f32.mrb[0].mxu0
          %v2941 = vadd.f32 0.0, %v2940
          %v2942 = vpop.f32.mrb[0].mxu0
          %v2943 = vadd.f32 0.0, %v2942
          %v2944 = vpop.f32.mrb[0].mxu0
          %v2945 = vadd.f32 0.0, %v2944
          %v2946 = vpop.f32.mrb[0].mxu0
          %v2947 = vadd.f32 0.0, %v2946
          %2948 = vmatprep.mubr.bf16.mxu0 %v2841
          %2949 = vmatmul.mubr.bf16.gmra.mrb[0].mxu0 %v2633
          %v2950 = vpop.f32.mrb[0].mxu0
          %v2951 = vadd.f32 0.0, %v2950
          %v2952 = vpop.f32.mrb[0].mxu0
          %v2953 = vadd.f32 0.0, %v2952
          %v2954 = vpop.f32.mrb[0].mxu0
          %v2955 = vadd.f32 0.0, %v2954
          %v2956 = vpop.f32.mrb[0].mxu0
          %v2957 = vadd.f32 0.0, %v2956
          %2958 = vmatprep.mubr.bf16.mxu0 %v2844
          %2959 = vmatmul.mubr.bf16.gmra.mrb[0].mxu0 %v2635
          %v2960 = vpop.f32.mrb[0].mxu0
          %v2961 = vadd.f32 0.0, %v2960
          %v2962 = vpop.f32.mrb[0].mxu0
          %v2963 = vadd.f32 0.0, %v2962
          %v2964 = vpop.f32.mrb[0].mxu0
          %v2965 = vadd.f32 0.0, %v2964
          %v2966 = vpop.f32.mrb[0].mxu0
          %v2967 = vadd.f32 0.0, %v2966
          %2968 = vmatprep.mubr.bf16.mxu0 %v2847
          %2969 = vmatmul.mubr.bf16.gmra.mrb[0].mxu0 %v2637
          %v2970 = vpop.f32.mrb[0].mxu0
          %v2971 = vadd.f32 0.0, %v2970
          %v2972 = vpop.f32.mrb[0].mxu0
          %v2973 = vadd.f32 0.0, %v2972
          %v2974 = vpop.f32.mrb[0].mxu0
          %v2975 = vadd.f32 0.0, %v2974
          %v2976 = vpop.f32.mrb[0].mxu0
          %v2977 = vadd.f32 0.0, %v2976
          %2978 = vmatprep.mubr.bf16.mxu0 %v2850
          %2979 = vmatmul.mubr.bf16.gmra.mrb[0].mxu0 %v2639
          %v2980 = vpop.f32.mrb[0].mxu0
          %v2981 = vadd.f32 0.0, %v2980
          %v2982 = vpop.f32.mrb[0].mxu0
          %v2983 = vadd.f32 0.0, %v2982
          %v2984 = vpop.f32.mrb[0].mxu0
          %v2985 = vadd.f32 0.0, %v2984
          %v2986 = vpop.f32.mrb[0].mxu0
          %v2987 = vadd.f32 0.0, %v2986
          %2988 = vmatprep.mubr.bf16.mxu0 %v2853
          %2989 = vmatmul.mubr.bf16.gmra.mrb[0].mxu0 %v2641
          %v2990 = vpop.f32.mrb[0].mxu0
          %v2991 = vadd.f32 0.0, %v2990
          %v2992 = vpop.f32.mrb[0].mxu0
          %v2993 = vadd.f32 0.0, %v2992
          %v2994 = vpop.f32.mrb[0].mxu0
          %v2995 = vadd.f32 0.0, %v2994
          %v2996 = vpop.f32.mrb[0].mxu0
          %v2997 = vadd.f32 0.0, %v2996
          %2998 = vmatprep.mubr.bf16.mxu0 %v2856
          %2999 = vmatmul.mubr.bf16.gmra.mrb[0].mxu0 %v2643
          %v3000 = vpop.f32.mrb[0].mxu0
          %v3001 = vadd.f32 0.0, %v3000
          %v3002 = vpop.f32.mrb[0].mxu0
          %v3003 = vadd.f32 0.0, %v3002
          %v3004 = vpop.f32.mrb[0].mxu0
          %v3005 = vadd.f32 0.0, %v3004
          %v3006 = vpop.f32.mrb[0].mxu0
          %v3007 = vadd.f32 0.0, %v3006
          %3008 = vmatprep.mubr.bf16.mxu0 %v2859
          %3009 = vmatmul.mubr.bf16.gmra.mrb[0].mxu0 %v2645
          %v3010 = vpop.f32.mrb[0].mxu0
          %v3011 = vadd.f32 0.0, %v3010
          %v3012 = vpop.f32.mrb[0].mxu0
          %v3013 = vadd.f32 0.0, %v3012
          %v3014 = vpop.f32.mrb[0].mxu0
          %v3015 = vadd.f32 0.0, %v3014
          %v3016 = vpop.f32.mrb[0].mxu0
          %v3017 = vadd.f32 0.0, %v3016
          %3018 = vmatprep.mubr.bf16.mxu0 %v2862
          %3019 = vmatmul.mubr.bf16.gmra.mrb[0].mxu0 %v2647
          %v3020 = vpop.f32.mrb[0].mxu0
          %v3021 = vadd.f32 0.0, %v3020
          %v3022 = vpop.f32.mrb[0].mxu0
          %v3023 = vadd.f32 0.0, %v3022
          %v3024 = vpop.f32.mrb[0].mxu0
          %v3025 = vadd.f32 0.0, %v3024
          %v3026 = vpop.f32.mrb[0].mxu0
          %v3027 = vadd.f32 0.0, %v3026
          %3028 = vmatprep.mubr.bf16.mxu0 %v2865
          %3029 = vmatmul.mubr.bf16.gmra.mrb[0].mxu0 %v2649
          %v3030 = vpop.f32.mrb[0].mxu0
          %v3031 = vadd.f32 0.0, %v3030
          %v3032 = vpop.f32.mrb[0].mxu0
          %v3033 = vadd.f32 0.0, %v3032
          %v3034 = vpop.f32.mrb[0].mxu0
          %v3035 = vadd.f32 0.0, %v3034
          %v3036 = vpop.f32.mrb[0].mxu0
          %v3037 = vadd.f32 0.0, %v3036
          %3038 = vmatprep.mubr.bf16.mxu0 %v2868
          %3039 = vmatmul.mubr.bf16.gmra.mrb[0].mxu0 %v2651
          %v3040 = vpop.f32.mrb[0].mxu0
          %v3041 = vadd.f32 0.0, %v3040
          %v3042 = vpop.f32.mrb[0].mxu0
          %v3043 = vadd.f32 0.0, %v3042
          %v3044 = vpop.f32.mrb[0].mxu0
          %v3045 = vadd.f32 0.0, %v3044
          %v3046 = vpop.f32.mrb[0].mxu0
          %v3047 = vadd.f32 0.0, %v3046
          %3048 = vmatprep.mubr.bf16.mxu0 %v2871
          %3049 = vmatmul.mubr.bf16.gmra.mrb[0].mxu0 %v2653
          %v3050 = vpop.f32.mrb[0].mxu0
          %v3051 = vadd.f32 0.0, %v3050
          %v3052 = vpop.f32.mrb[0].mxu0
          %v3053 = vadd.f32 0.0, %v3052
          %v3054 = vpop.f32.mrb[0].mxu0
          %v3055 = vadd.f32 0.0, %v3054
          %v3056 = vpop.f32.mrb[0].mxu0
          %v3057 = vadd.f32 0.0, %v3056
          %3058 = vmatprep.mubr.bf16.mxu0 %v2874
          %3059 = vmatmul.mubr.bf16.gmra.mrb[0].mxu0 %v2655
          %v3060 = vpop.f32.mrb[0].mxu0
          %v3061 = vadd.f32 0.0, %v3060
          %v3062 = vpop.f32.mrb[0].mxu0
          %v3063 = vadd.f32 0.0, %v3062
          %v3064 = vpop.f32.mrb[0].mxu0
          %v3065 = vadd.f32 0.0, %v3064
          %v3066 = vpop.f32.mrb[0].mxu0
          %v3067 = vadd.f32 0.0, %v3066
          %3068 = vdwg.mxu0
          %v3093 = vunpack.c.l.b16 %v2659
          %v3094 = vunpack.c.h.b16 %v2659
          %v3095 = vunpack.c.l.b16 %v2660
          %v3096 = vunpack.c.h.b16 %v2660
          %v3097 = vunpack.c.l.b16 %v2661
          %v3098 = vunpack.c.h.b16 %v2661
          %v3099 = vunpack.c.l.b16 %v2662
          %v3100 = vunpack.c.h.b16 %v2662
          %v3101 = vunpack.c.l.b16 %v2663
          %v3102 = vunpack.c.h.b16 %v2663
          %v3103 = vunpack.c.l.b16 %v2664
          %v3104 = vunpack.c.h.b16 %v2664
          %v3105 = vunpack.c.l.b16 %v2665
          %v3106 = vunpack.c.h.b16 %v2665
          %v3107 = vunpack.c.l.b16 %v2666
          %v3108 = vunpack.c.h.b16 %v2666
          %v3109 = vunpack.c.l.b16 %v2667
          %v3110 = vunpack.c.h.b16 %v2667
          %v3111 = vunpack.c.l.b16 %v2668
          %v3112 = vunpack.c.h.b16 %v2668
          %v3113 = vunpack.c.l.b16 %v2669
          %v3114 = vunpack.c.h.b16 %v2669
          %v3115 = vunpack.c.l.b16 %v2670
          %v3116 = vunpack.c.h.b16 %v2670
          %v3117 = vunpack.c.l.b16 %v2671
          %v3118 = vunpack.c.h.b16 %v2671
          %v3119 = vunpack.c.l.b16 %v2672
          %v3120 = vunpack.c.h.b16 %v2672
          %v3121 = vunpack.c.l.b16 %v2673
          %v3122 = vunpack.c.h.b16 %v2673
          %v3123 = vunpack.c.l.b16 %v2674
          %v3124 = vunpack.c.h.b16 %v2674
          %v3125 = vunpack.c.l.b16 %v2675
          %v3126 = vunpack.c.h.b16 %v2675
          %v3127 = vunpack.c.l.b16 %v2676
          %v3128 = vunpack.c.h.b16 %v2676
          %v3129 = vunpack.c.l.b16 %v2677
          %v3130 = vunpack.c.h.b16 %v2677
          %v3131 = vunpack.c.l.b16 %v2678
          %v3132 = vunpack.c.h.b16 %v2678
          %v3133 = vunpack.c.l.b16 %v2679
          %v3134 = vunpack.c.h.b16 %v2679
          %v3135 = vunpack.c.l.b16 %v2680
          %v3136 = vunpack.c.h.b16 %v2680
          %v3137 = vunpack.c.l.b16 %v2681
          %v3138 = vunpack.c.h.b16 %v2681
          %v3139 = vunpack.c.l.b16 %v2682
          %v3140 = vunpack.c.h.b16 %v2682
          %v3141 = vpack.c.b16 %v3095, %v3093
          %v3142 = vpack.c.b16 %v3096, %v3094
          %v3143 = vpack.c.b16 %v3099, %v3097
          %v3144 = vpack.c.b16 %v3100, %v3098
          %v3145 = vpack.c.b16 %v3103, %v3101
          %v3146 = vpack.c.b16 %v3104, %v3102
          %v3147 = vpack.c.b16 %v3107, %v3105
          %v3148 = vpack.c.b16 %v3108, %v3106
          %v3149 = vpack.c.b16 %v3111, %v3109
          %v3150 = vpack.c.b16 %v3112, %v3110
          %v3151 = vpack.c.b16 %v3115, %v3113
          %v3152 = vpack.c.b16 %v3116, %v3114
          %v3153 = vpack.c.b16 %v3119, %v3117
          %v3154 = vpack.c.b16 %v3120, %v3118
          %v3155 = vpack.c.b16 %v3123, %v3121
          %v3156 = vpack.c.b16 %v3124, %v3122
          %v3157 = vpack.c.b16 %v3127, %v3125
          %v3158 = vpack.c.b16 %v3128, %v3126
          %v3159 = vpack.c.b16 %v3131, %v3129
          %v3160 = vpack.c.b16 %v3132, %v3130
          %v3161 = vpack.c.b16 %v3135, %v3133
          %v3162 = vpack.c.b16 %v3136, %v3134
          %v3163 = vpack.c.b16 %v3139, %v3137
          %v3164 = vpack.c.b16 %v3140, %v3138
          %v3190 = vsel %vm766, %v2624, 0
          %3192 = vmatprep.subr.bf16.mxu0 %v3142
          %3193 = vmatpush1.bf16.msra.mxu0 %v3141
          %3194 = vmatprep.subr.bf16.mxu0 %v3144
          %3195 = vmatpush1.bf16.msra.mxu0 %v3143
          %3196 = vmatprep.subr.bf16.mxu0 %v3146
          %3197 = vmatpush1.bf16.msra.mxu0 %v3145
          %3198 = vmatprep.subr.bf16.mxu0 %v3148
          %3199 = vmatpush1.bf16.msra.mxu0 %v3147
          %3200 = vmatprep.subr.bf16.mxu0 %v3150
          %3201 = vmatpush1.bf16.msra.mxu0 %v3149
          %3202 = vmatprep.subr.bf16.mxu0 %v3152
          %3203 = vmatpush1.bf16.msra.mxu0 %v3151
          %3204 = vmatprep.subr.bf16.mxu0 %v3154
          %3205 = vmatpush1.bf16.msra.mxu0 %v3153
          %3206 = vmatprep.subr.bf16.mxu0 %v3156
          %3207 = vmatpush1.bf16.msra.mxu0 %v3155
          %3208 = vmatprep.subr.bf16.mxu0 %v3158
          %3209 = vmatpush1.bf16.msra.mxu0 %v3157
          %3210 = vmatprep.subr.bf16.mxu0 %v3160
          %3211 = vmatpush1.bf16.msra.mxu0 %v3159
          %3212 = vmatprep.subr.bf16.mxu0 %v3162
          %3213 = vmatpush1.bf16.msra.mxu0 %v3161
          %3214 = vmatprep.subr.bf16.mxu0 %v3164
          %3215 = vmatpush1.bf16.msra.mxu0 %v3163
          %3216 = vmatprep.subr.bf16.mxu0 0
          %3217 = vmatpush1.bf16.msra.mxu0 0
          %3218 = vmatprep.subr.bf16.mxu0 0
          %3219 = vmatpush1.bf16.msra.mxu0 0
          %3220 = vmatprep.subr.bf16.mxu0 0
          %3221 = vmatpush1.bf16.msra.mxu0 0
          %3222 = vmatprep.subr.bf16.mxu0 0
          %3223 = vmatpush1.bf16.msra.mxu0 0
          %3224 = vmatprep.mubr.bf16.mxu0 %v3190
          %3225 = vmatmul.mubr.bf16.gmra.mrb[0].mxu0 %v2623
          %v3226 = vpop.f32.mrb[0].mxu0
          %v3227 = vadd.f32 %v2911, %v3226
          %v3228 = vpop.f32.mrb[0].mxu0
          %v3229 = vadd.f32 %v2913, %v3228
          %v3230 = vpop.f32.mrb[0].mxu0
          %v3231 = vadd.f32 %v2915, %v3230
          %v3232 = vpop.f32.mrb[0].mxu0
          %v3233 = vadd.f32 %v2917, %v3232
          %3234 = vmatprep.mubr.bf16.mxu0 %v2829
          %3235 = vmatmul.mubr.bf16.gmra.mrb[0].mxu0 %v2625
          %v3236 = vpop.f32.mrb[0].mxu0
          %v3237 = vadd.f32 %v2921, %v3236
          %v3238 = vpop.f32.mrb[0].mxu0
          %v3239 = vadd.f32 %v2923, %v3238
          %v3240 = vpop.f32.mrb[0].mxu0
          %v3241 = vadd.f32 %v2925, %v3240
          %v3242 = vpop.f32.mrb[0].mxu0
          %v3243 = vadd.f32 %v2927, %v3242
          %3244 = vmatprep.mubr.bf16.mxu0 %v2832
          %3245 = vmatmul.mubr.bf16.gmra.mrb[0].mxu0 %v2627
          %v3246 = vpop.f32.mrb[0].mxu0
          %v3247 = vadd.f32 %v2931, %v3246
          %v3248 = vpop.f32.mrb[0].mxu0
          %v3249 = vadd.f32 %v2933, %v3248
          %v3250 = vpop.f32.mrb[0].mxu0
          %v3251 = vadd.f32 %v2935, %v3250
          %v3252 = vpop.f32.mrb[0].mxu0
          %v3253 = vadd.f32 %v2937, %v3252
          %3254 = vmatprep.mubr.bf16.mxu0 %v2835
          %3255 = vmatmul.mubr.bf16.gmra.mrb[0].mxu0 %v2629
          %v3256 = vpop.f32.mrb[0].mxu0
          %v3257 = vadd.f32 %v2941, %v3256
          %v3258 = vpop.f32.mrb[0].mxu0
          %v3259 = vadd.f32 %v2943, %v3258
          %v3260 = vpop.f32.mrb[0].mxu0
          %v3261 = vadd.f32 %v2945, %v3260
          %v3262 = vpop.f32.mrb[0].mxu0
          %v3263 = vadd.f32 %v2947, %v3262
          %3264 = vmatprep.mubr.bf16.mxu0 %v2838
          %3265 = vmatmul.mubr.bf16.gmra.mrb[0].mxu0 %v2631
          %v3266 = vpop.f32.mrb[0].mxu0
          %v3267 = vadd.f32 %v2951, %v3266
          %v3268 = vpop.f32.mrb[0].mxu0
          %v3269 = vadd.f32 %v2953, %v3268
          %v3270 = vpop.f32.mrb[0].mxu0
          %v3271 = vadd.f32 %v2955, %v3270
          %v3272 = vpop.f32.mrb[0].mxu0
          %v3273 = vadd.f32 %v2957, %v3272
          %3274 = vmatprep.mubr.bf16.mxu0 %v2841
          %3275 = vmatmul.mubr.bf16.gmra.mrb[0].mxu0 %v2633
          %v3276 = vpop.f32.mrb[0].mxu0
          %v3277 = vadd.f32 %v2961, %v3276
          %v3278 = vpop.f32.mrb[0].mxu0
          %v3279 = vadd.f32 %v2963, %v3278
          %v3280 = vpop.f32.mrb[0].mxu0
          %v3281 = vadd.f32 %v2965, %v3280
          %v3282 = vpop.f32.mrb[0].mxu0
          %v3283 = vadd.f32 %v2967, %v3282
          %3284 = vmatprep.mubr.bf16.mxu0 %v2844
          %3285 = vmatmul.mubr.bf16.gmra.mrb[0].mxu0 %v2635
          %v3286 = vpop.f32.mrb[0].mxu0
          %v3287 = vadd.f32 %v2971, %v3286
          %v3288 = vpop.f32.mrb[0].mxu0
          %v3289 = vadd.f32 %v2973, %v3288
          %v3290 = vpop.f32.mrb[0].mxu0
          %v3291 = vadd.f32 %v2975, %v3290
          %v3292 = vpop.f32.mrb[0].mxu0
          %v3293 = vadd.f32 %v2977, %v3292
          %3294 = vmatprep.mubr.bf16.mxu0 %v2847
          %3295 = vmatmul.mubr.bf16.gmra.mrb[0].mxu0 %v2637
          %v3296 = vpop.f32.mrb[0].mxu0
          %v3297 = vadd.f32 %v2981, %v3296
          %v3298 = vpop.f32.mrb[0].mxu0
          %v3299 = vadd.f32 %v2983, %v3298
          %v3300 = vpop.f32.mrb[0].mxu0
          %v3301 = vadd.f32 %v2985, %v3300
          %v3302 = vpop.f32.mrb[0].mxu0
          %v3303 = vadd.f32 %v2987, %v3302
          %3304 = vmatprep.mubr.bf16.mxu0 %v2850
          %3305 = vmatmul.mubr.bf16.gmra.mrb[0].mxu0 %v2639
          %v3306 = vpop.f32.mrb[0].mxu0
          %v3307 = vadd.f32 %v2991, %v3306
          %v3308 = vpop.f32.mrb[0].mxu0
          %v3309 = vadd.f32 %v2993, %v3308
          %v3310 = vpop.f32.mrb[0].mxu0
          %v3311 = vadd.f32 %v2995, %v3310
          %v3312 = vpop.f32.mrb[0].mxu0
          %v3313 = vadd.f32 %v2997, %v3312
          %3314 = vmatprep.mubr.bf16.mxu0 %v2853
          %3315 = vmatmul.mubr.bf16.gmra.mrb[0].mxu0 %v2641
          %v3316 = vpop.f32.mrb[0].mxu0
          %v3317 = vadd.f32 %v3001, %v3316
          %v3318 = vpop.f32.mrb[0].mxu0
          %v3319 = vadd.f32 %v3003, %v3318
          %v3320 = vpop.f32.mrb[0].mxu0
          %v3321 = vadd.f32 %v3005, %v3320
          %v3322 = vpop.f32.mrb[0].mxu0
          %v3323 = vadd.f32 %v3007, %v3322
          %3324 = vmatprep.mubr.bf16.mxu0 %v2856
          %3325 = vmatmul.mubr.bf16.gmra.mrb[0].mxu0 %v2643
          %v3326 = vpop.f32.mrb[0].mxu0
          %v3327 = vadd.f32 %v3011, %v3326
          %v3328 = vpop.f32.mrb[0].mxu0
          %v3329 = vadd.f32 %v3013, %v3328
          %v3330 = vpop.f32.mrb[0].mxu0
          %v3331 = vadd.f32 %v3015, %v3330
          %v3332 = vpop.f32.mrb[0].mxu0
          %v3333 = vadd.f32 %v3017, %v3332
          %3334 = vmatprep.mubr.bf16.mxu0 %v2859
          %3335 = vmatmul.mubr.bf16.gmra.mrb[0].mxu0 %v2645
          %v3336 = vpop.f32.mrb[0].mxu0
          %v3337 = vadd.f32 %v3021, %v3336
          %v3338 = vpop.f32.mrb[0].mxu0
          %v3339 = vadd.f32 %v3023, %v3338
          %v3340 = vpop.f32.mrb[0].mxu0
          %v3341 = vadd.f32 %v3025, %v3340
          %v3342 = vpop.f32.mrb[0].mxu0
          %v3343 = vadd.f32 %v3027, %v3342
          %3344 = vmatprep.mubr.bf16.mxu0 %v2862
          %3345 = vmatmul.mubr.bf16.gmra.mrb[0].mxu0 %v2647
          %v3346 = vpop.f32.mrb[0].mxu0
          %v3347 = vadd.f32 %v3031, %v3346
          %v3348 = vpop.f32.mrb[0].mxu0
          %v3349 = vadd.f32 %v3033, %v3348
          %v3350 = vpop.f32.mrb[0].mxu0
          %v3351 = vadd.f32 %v3035, %v3350
          %v3352 = vpop.f32.mrb[0].mxu0
          %v3353 = vadd.f32 %v3037, %v3352
          %3354 = vmatprep.mubr.bf16.mxu0 %v2865
          %3355 = vmatmul.mubr.bf16.gmra.mrb[0].mxu0 %v2649
          %v3356 = vpop.f32.mrb[0].mxu0
          %v3357 = vadd.f32 %v3041, %v3356
          %v3358 = vpop.f32.mrb[0].mxu0
          %v3359 = vadd.f32 %v3043, %v3358
          %v3360 = vpop.f32.mrb[0].mxu0
          %v3361 = vadd.f32 %v3045, %v3360
          %v3362 = vpop.f32.mrb[0].mxu0
          %v3363 = vadd.f32 %v3047, %v3362
          %3364 = vmatprep.mubr.bf16.mxu0 %v2868
          %3365 = vmatmul.mubr.bf16.gmra.mrb[0].mxu0 %v2651
          %v3366 = vpop.f32.mrb[0].mxu0
          %v3367 = vadd.f32 %v3051, %v3366
          %v3368 = vpop.f32.mrb[0].mxu0
          %v3369 = vadd.f32 %v3053, %v3368
          %v3370 = vpop.f32.mrb[0].mxu0
          %v3371 = vadd.f32 %v3055, %v3370
          %v3372 = vpop.f32.mrb[0].mxu0
          %v3373 = vadd.f32 %v3057, %v3372
          %3374 = vmatprep.mubr.bf16.mxu0 %v2871
          %3375 = vmatmul.mubr.bf16.gmra.mrb[0].mxu0 %v2653
          %v3376 = vpop.f32.mrb[0].mxu0
          %v3377 = vadd.f32 %v3061, %v3376
          %v3378 = vpop.f32.mrb[0].mxu0
          %v3379 = vadd.f32 %v3063, %v3378
          %v3380 = vpop.f32.mrb[0].mxu0
          %v3381 = vadd.f32 %v3065, %v3380
          %v3382 = vpop.f32.mrb[0].mxu0
          %v3383 = vadd.f32 %v3067, %v3382
          %3384 = vdwg.mxu0
          %s3385 = scalar_lea.vmem [#allocation11], 384
          %v3386 = vld [vmem:[%s3385] sm:$0xff]
          %v3387 = vld [vmem:[%s3385 + $0x8] sm:$0xff]
          %v3388 = vld [vmem:[%s3385 + $0x10] sm:$0xff]
          %v3389 = vld [vmem:[%s3385 + $0x18] sm:$0xff]
          %v3390 = vld [vmem:[%s3385 + $0x20] sm:$0xff]
          %v3391 = vld [vmem:[%s3385 + $0x28] sm:$0xff]
          %v3392 = vld [vmem:[%s3385 + $0x30] sm:$0xff]
          %v3393 = vld [vmem:[%s3385 + $0x38] sm:$0xff]
          %v3394 = vld [vmem:[%s3385 + $0x40] sm:$0xff]
          %v3395 = vld [vmem:[%s3385 + $0x48] sm:$0xff]
          %v3396 = vld [vmem:[%s3385 + $0x50] sm:$0xff]
          %v3397 = vld [vmem:[%s3385 + $0x58] sm:$0xff]
          %v3398 = vld [vmem:[%s3385 + $0x60] sm:$0xff]
          %v3399 = vld [vmem:[%s3385 + $0x68] sm:$0xff]
          %v3400 = vld [vmem:[%s3385 + $0x70] sm:$0xff]
          %v3401 = vld [vmem:[%s3385 + $0x78] sm:$0xff]
          %v3402 = vld [vmem:[%s3385 + $0x80] sm:$0xff]
          %v3403 = vld [vmem:[%s3385 + $0x88] sm:$0xff]
          %v3404 = vld [vmem:[%s3385 + $0x90] sm:$0xff]
          %v3405 = vld [vmem:[%s3385 + $0x98] sm:$0xff]
          %v3406 = vld [vmem:[%s3385 + $0xa0] sm:$0xff]
          %v3407 = vld [vmem:[%s3385 + $0xa8] sm:$0xff]
          %v3408 = vld [vmem:[%s3385 + $0xb0] sm:$0xff]
          %v3409 = vld [vmem:[%s3385 + $0xb8] sm:$0xff]
          %v3434 = vunpack.c.l.b16 %v3386
          %v3435 = vunpack.c.h.b16 %v3386
          %v3436 = vunpack.c.l.b16 %v3387
          %v3437 = vunpack.c.h.b16 %v3387
          %v3438 = vunpack.c.l.b16 %v3388
          %v3439 = vunpack.c.h.b16 %v3388
          %v3440 = vunpack.c.l.b16 %v3389
          %v3441 = vunpack.c.h.b16 %v3389
          %v3442 = vunpack.c.l.b16 %v3390
          %v3443 = vunpack.c.h.b16 %v3390
          %v3444 = vunpack.c.l.b16 %v3391
          %v3445 = vunpack.c.h.b16 %v3391
          %v3446 = vunpack.c.l.b16 %v3392
          %v3447 = vunpack.c.h.b16 %v3392
          %v3448 = vunpack.c.l.b16 %v3393
          %v3449 = vunpack.c.h.b16 %v3393
          %v3450 = vunpack.c.l.b16 %v3394
          %v3451 = vunpack.c.h.b16 %v3394
          %v3452 = vunpack.c.l.b16 %v3395
          %v3453 = vunpack.c.h.b16 %v3395
          %v3454 = vunpack.c.l.b16 %v3396
          %v3455 = vunpack.c.h.b16 %v3396
          %v3456 = vunpack.c.l.b16 %v3397
          %v3457 = vunpack.c.h.b16 %v3397
          %v3458 = vunpack.c.l.b16 %v3398
          %v3459 = vunpack.c.h.b16 %v3398
          %v3460 = vunpack.c.l.b16 %v3399
          %v3461 = vunpack.c.h.b16 %v3399
          %v3462 = vunpack.c.l.b16 %v3400
          %v3463 = vunpack.c.h.b16 %v3400
          %v3464 = vunpack.c.l.b16 %v3401
          %v3465 = vunpack.c.h.b16 %v3401
          %v3466 = vunpack.c.l.b16 %v3402
          %v3467 = vunpack.c.h.b16 %v3402
          %v3468 = vunpack.c.l.b16 %v3403
          %v3469 = vunpack.c.h.b16 %v3403
          %v3470 = vunpack.c.l.b16 %v3404
          %v3471 = vunpack.c.h.b16 %v3404
          %v3472 = vunpack.c.l.b16 %v3405
          %v3473 = vunpack.c.h.b16 %v3405
          %v3474 = vunpack.c.l.b16 %v3406
          %v3475 = vunpack.c.h.b16 %v3406
          %v3476 = vunpack.c.l.b16 %v3407
          %v3477 = vunpack.c.h.b16 %v3407
          %v3478 = vunpack.c.l.b16 %v3408
          %v3479 = vunpack.c.h.b16 %v3408
          %v3480 = vunpack.c.l.b16 %v3409
          %v3481 = vunpack.c.h.b16 %v3409
          %v3482 = vpack.c.b16 %v3436, %v3434
          %v3483 = vpack.c.b16 %v3437, %v3435
          %v3484 = vpack.c.b16 %v3440, %v3438
          %v3485 = vpack.c.b16 %v3441, %v3439
          %v3486 = vpack.c.b16 %v3444, %v3442
          %v3487 = vpack.c.b16 %v3445, %v3443
          %v3488 = vpack.c.b16 %v3448, %v3446
          %v3489 = vpack.c.b16 %v3449, %v3447
          %v3490 = vpack.c.b16 %v3452, %v3450
          %v3491 = vpack.c.b16 %v3453, %v3451
          %v3492 = vpack.c.b16 %v3456, %v3454
          %v3493 = vpack.c.b16 %v3457, %v3455
          %v3494 = vpack.c.b16 %v3460, %v3458
          %v3495 = vpack.c.b16 %v3461, %v3459
          %v3496 = vpack.c.b16 %v3464, %v3462
          %v3497 = vpack.c.b16 %v3465, %v3463
          %v3498 = vpack.c.b16 %v3468, %v3466
          %v3499 = vpack.c.b16 %v3469, %v3467
          %v3500 = vpack.c.b16 %v3472, %v3470
          %v3501 = vpack.c.b16 %v3473, %v3471
          %v3502 = vpack.c.b16 %v3476, %v3474
          %v3503 = vpack.c.b16 %v3477, %v3475
          %v3504 = vpack.c.b16 %v3480, %v3478
          %v3505 = vpack.c.b16 %v3481, %v3479
          %v3531 = vsel %vm766, %v2658, 0
          %3533 = vmatprep.subr.bf16.mxu0 %v3483
          %3534 = vmatpush1.bf16.msra.mxu0 %v3482
          %3535 = vmatprep.subr.bf16.mxu0 %v3485
          %3536 = vmatpush1.bf16.msra.mxu0 %v3484
          %3537 = vmatprep.subr.bf16.mxu0 %v3487
          %3538 = vmatpush1.bf16.msra.mxu0 %v3486
          %3539 = vmatprep.subr.bf16.mxu0 %v3489
          %3540 = vmatpush1.bf16.msra.mxu0 %v3488
          %3541 = vmatprep.subr.bf16.mxu0 %v3491
          %3542 = vmatpush1.bf16.msra.mxu0 %v3490
          %3543 = vmatprep.subr.bf16.mxu0 %v3493
          %3544 = vmatpush1.bf16.msra.mxu0 %v3492
          %3545 = vmatprep.subr.bf16.mxu0 %v3495
          %3546 = vmatpush1.bf16.msra.mxu0 %v3494
          %3547 = vmatprep.subr.bf16.mxu0 %v3497
          %3548 = vmatpush1.bf16.msra.mxu0 %v3496
          %3549 = vmatprep.subr.bf16.mxu0 %v3499
          %3550 = vmatpush1.bf16.msra.mxu0 %v3498
          %3551 = vmatprep.subr.bf16.mxu0 %v3501
          %3552 = vmatpush1.bf16.msra.mxu0 %v3500
          %3553 = vmatprep.subr.bf16.mxu0 %v3503
          %3554 = vmatpush1.bf16.msra.mxu0 %v3502
          %3555 = vmatprep.subr.bf16.mxu0 %v3505
          %3556 = vmatpush1.bf16.msra.mxu0 %v3504
          %3557 = vmatprep.subr.bf16.mxu0 0
          %3558 = vmatpush1.bf16.msra.mxu0 0
          %3559 = vmatprep.subr.bf16.mxu0 0
          %3560 = vmatpush1.bf16.msra.mxu0 0
          %3561 = vmatprep.subr.bf16.mxu0 0
          %3562 = vmatpush1.bf16.msra.mxu0 0
          %3563 = vmatprep.subr.bf16.mxu0 0
          %3564 = vmatpush1.bf16.msra.mxu0 0
          %3565 = vmatprep.mubr.bf16.mxu0 %v2832
          %3566 = vmatmul.mubr.bf16.gmra.mrb[0].mxu0 %v2627
          %v3567 = vpop.f32.mrb[0].mxu0
          %v3568 = vadd.f32 0.0, %v3567
          %v3569 = vpop.f32.mrb[0].mxu0
          %v3570 = vadd.f32 0.0, %v3569
          %v3571 = vpop.f32.mrb[0].mxu0
          %v3572 = vadd.f32 0.0, %v3571
          %v3573 = vpop.f32.mrb[0].mxu0
          %v3574 = vadd.f32 0.0, %v3573
          %3575 = vmatprep.mubr.bf16.mxu0 %v2835
          %3576 = vmatmul.mubr.bf16.gmra.mrb[0].mxu0 %v2629
          %v3577 = vpop.f32.mrb[0].mxu0
          %v3578 = vadd.f32 0.0, %v3577
          %v3579 = vpop.f32.mrb[0].mxu0
          %v3580 = vadd.f32 0.0, %v3579
          %v3581 = vpop.f32.mrb[0].mxu0
          %v3582 = vadd.f32 0.0, %v3581
          %v3583 = vpop.f32.mrb[0].mxu0
          %v3584 = vadd.f32 0.0, %v3583
          %3585 = vmatprep.mubr.bf16.mxu0 %v2838
          %3586 = vmatmul.mubr.bf16.gmra.mrb[0].mxu0 %v2631
          %v3587 = vpop.f32.mrb[0].mxu0
          %v3588 = vadd.f32 0.0, %v3587
          %v3589 = vpop.f32.mrb[0].mxu0
          %v3590 = vadd.f32 0.0, %v3589
          %v3591 = vpop.f32.mrb[0].mxu0
          %v3592 = vadd.f32 0.0, %v3591
          %v3593 = vpop.f32.mrb[0].mxu0
          %v3594 = vadd.f32 0.0, %v3593
          %3595 = vmatprep.mubr.bf16.mxu0 %v2841
          %3596 = vmatmul.mubr.bf16.gmra.mrb[0].mxu0 %v2633
          %v3597 = vpop.f32.mrb[0].mxu0
          %v3598 = vadd.f32 0.0, %v3597
          %v3599 = vpop.f32.mrb[0].mxu0
          %v3600 = vadd.f32 0.0, %v3599
          %v3601 = vpop.f32.mrb[0].mxu0
          %v3602 = vadd.f32 0.0, %v3601
          %v3603 = vpop.f32.mrb[0].mxu0
          %v3604 = vadd.f32 0.0, %v3603
          %3605 = vmatprep.mubr.bf16.mxu0 %v2844
          %3606 = vmatmul.mubr.bf16.gmra.mrb[0].mxu0 %v2635
          %v3607 = vpop.f32.mrb[0].mxu0
          %v3608 = vadd.f32 0.0, %v3607
          %v3609 = vpop.f32.mrb[0].mxu0
          %v3610 = vadd.f32 0.0, %v3609
          %v3611 = vpop.f32.mrb[0].mxu0
          %v3612 = vadd.f32 0.0, %v3611
          %v3613 = vpop.f32.mrb[0].mxu0
          %v3614 = vadd.f32 0.0, %v3613
          %3615 = vmatprep.mubr.bf16.mxu0 %v2847
          %3616 = vmatmul.mubr.bf16.gmra.mrb[0].mxu0 %v2637
          %v3617 = vpop.f32.mrb[0].mxu0
          %v3618 = vadd.f32 0.0, %v3617
          %v3619 = vpop.f32.mrb[0].mxu0
          %v3620 = vadd.f32 0.0, %v3619
          %v3621 = vpop.f32.mrb[0].mxu0
          %v3622 = vadd.f32 0.0, %v3621
          %v3623 = vpop.f32.mrb[0].mxu0
          %v3624 = vadd.f32 0.0, %v3623
          %3625 = vmatprep.mubr.bf16.mxu0 %v2850
          %3626 = vmatmul.mubr.bf16.gmra.mrb[0].mxu0 %v2639
          %v3627 = vpop.f32.mrb[0].mxu0
          %v3628 = vadd.f32 0.0, %v3627
          %v3629 = vpop.f32.mrb[0].mxu0
          %v3630 = vadd.f32 0.0, %v3629
          %v3631 = vpop.f32.mrb[0].mxu0
          %v3632 = vadd.f32 0.0, %v3631
          %v3633 = vpop.f32.mrb[0].mxu0
          %v3634 = vadd.f32 0.0, %v3633
          %3635 = vmatprep.mubr.bf16.mxu0 %v2853
          %3636 = vmatmul.mubr.bf16.gmra.mrb[0].mxu0 %v2641
          %v3637 = vpop.f32.mrb[0].mxu0
          %v3638 = vadd.f32 0.0, %v3637
          %v3639 = vpop.f32.mrb[0].mxu0
          %v3640 = vadd.f32 0.0, %v3639
          %v3641 = vpop.f32.mrb[0].mxu0
          %v3642 = vadd.f32 0.0, %v3641
          %v3643 = vpop.f32.mrb[0].mxu0
          %v3644 = vadd.f32 0.0, %v3643
          %3645 = vmatprep.mubr.bf16.mxu0 %v2856
          %3646 = vmatmul.mubr.bf16.gmra.mrb[0].mxu0 %v2643
          %v3647 = vpop.f32.mrb[0].mxu0
          %v3648 = vadd.f32 0.0, %v3647
          %v3649 = vpop.f32.mrb[0].mxu0
          %v3650 = vadd.f32 0.0, %v3649
          %v3651 = vpop.f32.mrb[0].mxu0
          %v3652 = vadd.f32 0.0, %v3651
          %v3653 = vpop.f32.mrb[0].mxu0
          %v3654 = vadd.f32 0.0, %v3653
          %3655 = vmatprep.mubr.bf16.mxu0 %v2859
          %3656 = vmatmul.mubr.bf16.gmra.mrb[0].mxu0 %v2645
          %v3657 = vpop.f32.mrb[0].mxu0
          %v3658 = vadd.f32 0.0, %v3657
          %v3659 = vpop.f32.mrb[0].mxu0
          %v3660 = vadd.f32 0.0, %v3659
          %v3661 = vpop.f32.mrb[0].mxu0
          %v3662 = vadd.f32 0.0, %v3661
          %v3663 = vpop.f32.mrb[0].mxu0
          %v3664 = vadd.f32 0.0, %v3663
          %3665 = vmatprep.mubr.bf16.mxu0 %v2862
          %3666 = vmatmul.mubr.bf16.gmra.mrb[0].mxu0 %v2647
          %v3667 = vpop.f32.mrb[0].mxu0
          %v3668 = vadd.f32 0.0, %v3667
          %v3669 = vpop.f32.mrb[0].mxu0
          %v3670 = vadd.f32 0.0, %v3669
          %v3671 = vpop.f32.mrb[0].mxu0
          %v3672 = vadd.f32 0.0, %v3671
          %v3673 = vpop.f32.mrb[0].mxu0
          %v3674 = vadd.f32 0.0, %v3673
          %3675 = vmatprep.mubr.bf16.mxu0 %v2865
          %3676 = vmatmul.mubr.bf16.gmra.mrb[0].mxu0 %v2649
          %v3677 = vpop.f32.mrb[0].mxu0
          %v3678 = vadd.f32 0.0, %v3677
          %v3679 = vpop.f32.mrb[0].mxu0
          %v3680 = vadd.f32 0.0, %v3679
          %v3681 = vpop.f32.mrb[0].mxu0
          %v3682 = vadd.f32 0.0, %v3681
          %v3683 = vpop.f32.mrb[0].mxu0
          %v3684 = vadd.f32 0.0, %v3683
          %3685 = vmatprep.mubr.bf16.mxu0 %v2868
          %3686 = vmatmul.mubr.bf16.gmra.mrb[0].mxu0 %v2651
          %v3687 = vpop.f32.mrb[0].mxu0
          %v3688 = vadd.f32 0.0, %v3687
          %v3689 = vpop.f32.mrb[0].mxu0
          %v3690 = vadd.f32 0.0, %v3689
          %v3691 = vpop.f32.mrb[0].mxu0
          %v3692 = vadd.f32 0.0, %v3691
          %v3693 = vpop.f32.mrb[0].mxu0
          %v3694 = vadd.f32 0.0, %v3693
          %3695 = vmatprep.mubr.bf16.mxu0 %v2871
          %3696 = vmatmul.mubr.bf16.gmra.mrb[0].mxu0 %v2653
          %v3697 = vpop.f32.mrb[0].mxu0
          %v3698 = vadd.f32 0.0, %v3697
          %v3699 = vpop.f32.mrb[0].mxu0
          %v3700 = vadd.f32 0.0, %v3699
          %v3701 = vpop.f32.mrb[0].mxu0
          %v3702 = vadd.f32 0.0, %v3701
          %v3703 = vpop.f32.mrb[0].mxu0
          %v3704 = vadd.f32 0.0, %v3703
          %3705 = vmatprep.mubr.bf16.mxu0 %v2874
          %3706 = vmatmul.mubr.bf16.gmra.mrb[0].mxu0 %v2655
          %v3707 = vpop.f32.mrb[0].mxu0
          %v3708 = vadd.f32 0.0, %v3707
          %v3709 = vpop.f32.mrb[0].mxu0
          %v3710 = vadd.f32 0.0, %v3709
          %v3711 = vpop.f32.mrb[0].mxu0
          %v3712 = vadd.f32 0.0, %v3711
          %v3713 = vpop.f32.mrb[0].mxu0
          %v3714 = vadd.f32 0.0, %v3713
          %3715 = vmatprep.mubr.bf16.mxu0 %v3531
          %3716 = vmatmul.mubr.bf16.gmra.mrb[0].mxu0 %v2657
          %v3717 = vpop.f32.mrb[0].mxu0
          %v3718 = vadd.f32 0.0, %v3717
          %v3719 = vpop.f32.mrb[0].mxu0
          %v3720 = vadd.f32 0.0, %v3719
          %v3721 = vpop.f32.mrb[0].mxu0
          %v3722 = vadd.f32 0.0, %v3721
          %v3723 = vpop.f32.mrb[0].mxu0
          %v3724 = vadd.f32 0.0, %v3723
          %3725 = vdwg.mxu0
          %v3726 = vadd.f32 %v3227, %v3568
          %v3727 = vadd.f32 %v3229, %v3570
          %v3728 = vadd.f32 %v3231, %v3572
          %v3729 = vadd.f32 %v3233, %v3574
          %v3730 = vadd.f32 %v3237, %v3578
          %v3731 = vadd.f32 %v3239, %v3580
          %v3732 = vadd.f32 %v3241, %v3582
          %v3733 = vadd.f32 %v3243, %v3584
          %v3734 = vadd.f32 %v3247, %v3588
          %v3735 = vadd.f32 %v3249, %v3590
          %v3736 = vadd.f32 %v3251, %v3592
          %v3737 = vadd.f32 %v3253, %v3594
          %v3738 = vadd.f32 %v3257, %v3598
          %v3739 = vadd.f32 %v3259, %v3600
          %v3740 = vadd.f32 %v3261, %v3602
          %v3741 = vadd.f32 %v3263, %v3604
          %v3742 = vadd.f32 %v3267, %v3608
          %v3743 = vadd.f32 %v3269, %v3610
          %v3744 = vadd.f32 %v3271, %v3612
          %v3745 = vadd.f32 %v3273, %v3614
          %v3746 = vadd.f32 %v3277, %v3618
          %v3747 = vadd.f32 %v3279, %v3620
          %v3748 = vadd.f32 %v3281, %v3622
          %v3749 = vadd.f32 %v3283, %v3624
          %v3750 = vadd.f32 %v3287, %v3628
          %v3751 = vadd.f32 %v3289, %v3630
          %v3752 = vadd.f32 %v3291, %v3632
          %v3753 = vadd.f32 %v3293, %v3634
          %v3754 = vadd.f32 %v3297, %v3638
          %v3755 = vadd.f32 %v3299, %v3640
          %v3756 = vadd.f32 %v3301, %v3642
          %v3757 = vadd.f32 %v3303, %v3644
          %v3758 = vadd.f32 %v3307, %v3648
          %v3759 = vadd.f32 %v3309, %v3650
          %v3760 = vadd.f32 %v3311, %v3652
          %v3761 = vadd.f32 %v3313, %v3654
          %v3762 = vadd.f32 %v3317, %v3658
          %v3763 = vadd.f32 %v3319, %v3660
          %v3764 = vadd.f32 %v3321, %v3662
          %v3765 = vadd.f32 %v3323, %v3664
          %v3766 = vadd.f32 %v3327, %v3668
          %v3767 = vadd.f32 %v3329, %v3670
          %v3768 = vadd.f32 %v3331, %v3672
          %v3769 = vadd.f32 %v3333, %v3674
          %v3770 = vadd.f32 %v3337, %v3678
          %v3771 = vadd.f32 %v3339, %v3680
          %v3772 = vadd.f32 %v3341, %v3682
          %v3773 = vadd.f32 %v3343, %v3684
          %v3774 = vadd.f32 %v3347, %v3688
          %v3775 = vadd.f32 %v3349, %v3690
          %v3776 = vadd.f32 %v3351, %v3692
          %v3777 = vadd.f32 %v3353, %v3694
          %v3778 = vadd.f32 %v3357, %v3698
          %v3779 = vadd.f32 %v3359, %v3700
          %v3780 = vadd.f32 %v3361, %v3702
          %v3781 = vadd.f32 %v3363, %v3704
          %v3782 = vadd.f32 %v3367, %v3708
          %v3783 = vadd.f32 %v3369, %v3710
          %v3784 = vadd.f32 %v3371, %v3712
          %v3785 = vadd.f32 %v3373, %v3714
          %v3786 = vadd.f32 %v3377, %v3718
          %v3787 = vadd.f32 %v3379, %v3720
          %v3788 = vadd.f32 %v3381, %v3722
          %v3789 = vadd.f32 %v3383, %v3724
          %v3790 = vld [vmem:[#allocation12] sm:$0x3]
          %v3792 = vlaneseq
          %v3793 = vshrl.u32 %v3792, 7
          %v3794 = vsub.s32 0, %v3793
          %v3795 = vrot.slane %v3790, %v3794
          %v3796 = vlaneseq
          %v3797 = vshrl.u32 %v3796, 7
          %v3798 = vsub.s32 1, %v3797
          %v3799 = vrot.slane %v3790, %v3798
          %v3802 = vadd.f32 %v3726, %v3795
          %v3803 = vadd.f32 %v3727, %v3799
          %v3804 = vadd.f32 %v3728, %v3795
          %v3805 = vadd.f32 %v3729, %v3799
          %v3806 = vadd.f32 %v3730, %v3795
          %v3807 = vadd.f32 %v3731, %v3799
          %v3808 = vadd.f32 %v3732, %v3795
          %v3809 = vadd.f32 %v3733, %v3799
          %v3810 = vadd.f32 %v3734, %v3795
          %v3811 = vadd.f32 %v3735, %v3799
          %v3812 = vadd.f32 %v3736, %v3795
          %v3813 = vadd.f32 %v3737, %v3799
          %v3814 = vadd.f32 %v3738, %v3795
          %v3815 = vadd.f32 %v3739, %v3799
          %v3816 = vadd.f32 %v3740, %v3795
          %v3817 = vadd.f32 %v3741, %v3799
          %v3818 = vadd.f32 %v3742, %v3795
          %v3819 = vadd.f32 %v3743, %v3799
          %v3820 = vadd.f32 %v3744, %v3795
          %v3821 = vadd.f32 %v3745, %v3799
          %v3822 = vadd.f32 %v3746, %v3795
          %v3823 = vadd.f32 %v3747, %v3799
          %v3824 = vadd.f32 %v3748, %v3795
          %v3825 = vadd.f32 %v3749, %v3799
          %v3826 = vadd.f32 %v3750, %v3795
          %v3827 = vadd.f32 %v3751, %v3799
          %v3828 = vadd.f32 %v3752, %v3795
          %v3829 = vadd.f32 %v3753, %v3799
          %v3830 = vadd.f32 %v3754, %v3795
          %v3831 = vadd.f32 %v3755, %v3799
          %v3832 = vadd.f32 %v3756, %v3795
          %v3833 = vadd.f32 %v3757, %v3799
          %v3834 = vadd.f32 %v3758, %v3795
          %v3835 = vadd.f32 %v3759, %v3799
          %v3836 = vadd.f32 %v3760, %v3795
          %v3837 = vadd.f32 %v3761, %v3799
          %v3838 = vadd.f32 %v3762, %v3795
          %v3839 = vadd.f32 %v3763, %v3799
          %v3840 = vadd.f32 %v3764, %v3795
          %v3841 = vadd.f32 %v3765, %v3799
          %v3842 = vadd.f32 %v3766, %v3795
          %v3843 = vadd.f32 %v3767, %v3799
          %v3844 = vadd.f32 %v3768, %v3795
          %v3845 = vadd.f32 %v3769, %v3799
          %v3846 = vadd.f32 %v3770, %v3795
          %v3847 = vadd.f32 %v3771, %v3799
          %v3848 = vadd.f32 %v3772, %v3795
          %v3849 = vadd.f32 %v3773, %v3799
          %v3850 = vadd.f32 %v3774, %v3795
          %v3851 = vadd.f32 %v3775, %v3799
          %v3852 = vadd.f32 %v3776, %v3795
          %v3853 = vadd.f32 %v3777, %v3799
          %v3854 = vadd.f32 %v3778, %v3795
          %v3855 = vadd.f32 %v3779, %v3799
          %v3856 = vadd.f32 %v3780, %v3795
          %v3857 = vadd.f32 %v3781, %v3799
          %v3858 = vadd.f32 %v3782, %v3795
          %v3859 = vadd.f32 %v3783, %v3799
          %v3860 = vadd.f32 %v3784, %v3795
          %v3861 = vadd.f32 %v3785, %v3799
          %v3862 = vadd.f32 %v3786, %v3795
          %v3863 = vadd.f32 %v3787, %v3799
          %v3864 = vadd.f32 %v3788, %v3795
          %v3865 = vadd.f32 %v3789, %v3799
          %v3866 = vld [vmem:[%s9] sm:$0xff]
          %v3867 = vld [vmem:[%s9 + $0x8] sm:$0xff]
          %v3868 = vld [vmem:[%s9 + $0x10] sm:$0xff]
          %v3869 = vld [vmem:[%s9 + $0x18] sm:$0xff]
          %v3870 = vld [vmem:[%s9 + $0x20] sm:$0xff]
          %v3871 = vld [vmem:[%s9 + $0x28] sm:$0xff]
          %v3872 = vld [vmem:[%s9 + $0x30] sm:$0xff]
          %v3873 = vld [vmem:[%s9 + $0x38] sm:$0xff]
          %v3874 = vld [vmem:[%s9 + $0x40] sm:$0xff]
          %v3875 = vld [vmem:[%s9 + $0x48] sm:$0xff]
          %v3876 = vld [vmem:[%s9 + $0x50] sm:$0xff]
          %v3877 = vld [vmem:[%s9 + $0x58] sm:$0xff]
          %v3878 = vld [vmem:[%s9 + $0x60] sm:$0xff]
          %v3879 = vld [vmem:[%s9 + $0x68] sm:$0xff]
          %v3880 = vld [vmem:[%s9 + $0x70] sm:$0xff]
          %v3881 = vld [vmem:[%s9 + $0x78] sm:$0xff]
          %v3882 = vld [vmem:[%s9 + $0x80] sm:$0xff]
          %v3883 = vld [vmem:[%s9 + $0x88] sm:$0xff]
          %v3884 = vld [vmem:[%s9 + $0x90] sm:$0xff]
          %v3885 = vld [vmem:[%s9 + $0x98] sm:$0xff]
          %v3886 = vld [vmem:[%s9 + $0xa0] sm:$0xff]
          %v3887 = vld [vmem:[%s9 + $0xa8] sm:$0xff]
          %v3888 = vld [vmem:[%s9 + $0xb0] sm:$0xff]
          %v3889 = vld [vmem:[%s9 + $0xb8] sm:$0xff]
          %v3890 = vld [vmem:[%s9 + $0xc0] sm:$0xff]
          %v3891 = vld [vmem:[%s9 + $0xc8] sm:$0xff]
          %v3892 = vld [vmem:[%s9 + $0xd0] sm:$0xff]
          %v3893 = vld [vmem:[%s9 + $0xd8] sm:$0xff]
          %v3894 = vld [vmem:[%s9 + $0xe0] sm:$0xff]
          %v3895 = vld [vmem:[%s9 + $0xe8] sm:$0xff]
          %v3896 = vld [vmem:[%s9 + $0xf0] sm:$0xff]
          %v3897 = vld [vmem:[%s9 + $0xf8] sm:$0xff]
          %v3898 = vld [vmem:[#allocation17] sm:$0xff]
          %v3899 = vld [vmem:[#allocation17 + $0x8] sm:$0xff]
          %v3900 = vld [vmem:[#allocation17 + $0x10] sm:$0xff]
          %v3901 = vld [vmem:[#allocation17 + $0x18] sm:$0xff]
          %v3902 = vld [vmem:[#allocation17 + $0x20] sm:$0xff]
          %v3903 = vld [vmem:[#allocation17 + $0x28] sm:$0xff]
          %v3904 = vld [vmem:[#allocation17 + $0x30] sm:$0xff]
          %v3905 = vld [vmem:[#allocation17 + $0x38] sm:$0xff]
          %v3906 = vld [vmem:[#allocation14] sm:$0x3]
          %v3907 = vld [vmem:[#allocation15] sm:$0x3]
          %v3908 = vadd.f32 %v3802, %v3804
          %v3909 = vadd.f32 %v3908, %v3806
          %v3910 = vadd.f32 %v3909, %v3808
          %v3911 = vadd.f32 %v3910, %v3810
          %v3912 = vadd.f32 %v3911, %v3812
          %v3913 = vadd.f32 %v3912, %v3814
          %v3914 = vadd.f32 %v3913, %v3816
          %v3915 = vadd.f32 %v3914, %v3818
          %v3916 = vadd.f32 %v3915, %v3820
          %v3917 = vadd.f32 %v3916, %v3822
          %v3918 = vadd.f32 %v3917, %v3824
          %v3919 = vadd.f32 %v3918, %v3826
          %v3920 = vadd.f32 %v3919, %v3828
          %v3921 = vadd.f32 %v3920, %v3830
          %v3922 = vadd.f32 %v3921, %v3832
          %v3923 = vadd.f32 %v3922, %v3834
          %v3924 = vadd.f32 %v3923, %v3836
          %v3925 = vadd.f32 %v3924, %v3838
          %v3926 = vadd.f32 %v3925, %v3840
          %v3927 = vadd.f32 %v3926, %v3842
          %v3928 = vadd.f32 %v3927, %v3844
          %v3929 = vadd.f32 %v3928, %v3846
          %v3930 = vadd.f32 %v3929, %v3848
          %v3931 = vadd.f32 %v3930, %v3850
          %v3932 = vadd.f32 %v3931, %v3852
          %v3933 = vadd.f32 %v3932, %v3854
          %v3934 = vadd.f32 %v3933, %v3856
          %v3935 = vadd.f32 %v3934, %v3858
          %v3936 = vadd.f32 %v3935, %v3860
          %v3937 = vadd.f32 %v3936, %v3862
          %v3938 = vadd.f32 %v3937, %v3864
          %v3939 = vrot.slane %v3938, 4
          %v3940 = vadd.f32 %v3938, %v3939
          %v3941 = vrot.slane %v3940, 2
          %v3942 = vadd.f32 %v3940, %v3941
          %v3943 = vrot.slane %v3942, 1
          %v3944 = vadd.f32 %v3942, %v3943
          %v3945 = vadd.f32 %v3803, %v3805
          %v3946 = vadd.f32 %v3945, %v3807
          %v3947 = vadd.f32 %v3946, %v3809
          %v3948 = vadd.f32 %v3947, %v3811
          %v3949 = vadd.f32 %v3948, %v3813
          %v3950 = vadd.f32 %v3949, %v3815
          %v3951 = vadd.f32 %v3950, %v3817
          %v3952 = vadd.f32 %v3951, %v3819
          %v3953 = vadd.f32 %v3952, %v3821
          %v3954 = vadd.f32 %v3953, %v3823
          %v3955 = vadd.f32 %v3954, %v3825
          %v3956 = vadd.f32 %v3955, %v3827
          %v3957 = vadd.f32 %v3956, %v3829
          %v3958 = vadd.f32 %v3957, %v3831
          %v3959 = vadd.f32 %v3958, %v3833
          %v3960 = vadd.f32 %v3959, %v3835
          %v3961 = vadd.f32 %v3960, %v3837
          %v3962 = vadd.f32 %v3961, %v3839
          %v3963 = vadd.f32 %v3962, %v3841
          %v3964 = vadd.f32 %v3963, %v3843
          %v3965 = vadd.f32 %v3964, %v3845
          %v3966 = vadd.f32 %v3965, %v3847
          %v3967 = vadd.f32 %v3966, %v3849
          %v3968 = vadd.f32 %v3967, %v3851
          %v3969 = vadd.f32 %v3968, %v3853
          %v3970 = vadd.f32 %v3969, %v3855
          %v3971 = vadd.f32 %v3970, %v3857
          %v3972 = vadd.f32 %v3971, %v3859
          %v3973 = vadd.f32 %v3972, %v3861
          %v3974 = vadd.f32 %v3973, %v3863
          %v3975 = vadd.f32 %v3974, %v3865
          %v3976 = vrot.slane %v3975, 4
          %v3977 = vadd.f32 %v3975, %v3976
          %v3978 = vrot.slane %v3977, 2
          %v3979 = vadd.f32 %v3977, %v3978
          %v3980 = vrot.slane %v3979, 1
          %v3981 = vadd.f32 %v3979, %v3980
          %3982 = vmatprep.subr.mxu0 0.0
          %3983 = vmatpush1.msra.mxu0 %v3866
          %3984 = vmatprep.subr.mxu0 0.0
          %3985 = vmatpush1.msra.mxu0 %v3867
          %3986 = vmatprep.subr.mxu0 0.0
          %3987 = vmatpush1.msra.mxu0 %v3868
          %3988 = vmatprep.subr.mxu0 0.0
          %3989 = vmatpush1.msra.mxu0 %v3869
          %3990 = vmatprep.subr.mxu0 0.0
          %3991 = vmatpush1.msra.mxu0 %v3870
          %3992 = vmatprep.subr.mxu0 0.0
          %3993 = vmatpush1.msra.mxu0 %v3871
          %3994 = vmatprep.subr.mxu0 0.0
          %3995 = vmatpush1.msra.mxu0 %v3872
          %3996 = vmatprep.subr.mxu0 0.0
          %3997 = vmatpush1.msra.mxu0 %v3873
          %3998 = vmatprep.subr.mxu0 0.0
          %3999 = vmatpush1.msra.mxu0 %v3874
          %4000 = vmatprep.subr.mxu0 0.0
          %4001 = vmatpush1.msra.mxu0 %v3875
          %4002 = vmatprep.subr.mxu0 0.0
          %4003 = vmatpush1.msra.mxu0 %v3876
          %4004 = vmatprep.subr.mxu0 0.0
          %4005 = vmatpush1.msra.mxu0 %v3877
          %4006 = vmatprep.subr.mxu0 0.0
          %4007 = vmatpush1.msra.mxu0 %v3878
          %4008 = vmatprep.subr.mxu0 0.0
          %4009 = vmatpush1.msra.mxu0 %v3879
          %4010 = vmatprep.subr.mxu0 0.0
          %4011 = vmatpush1.msra.mxu0 %v3880
          %4012 = vmatprep.subr.mxu0 0.0
          %4013 = vmatpush1.msra.mxu0 %v3881
          %4014 = vmatprep.subr.mxu0 0.0
          %4015 = vmatpush1.msra.mxu0 %v3882
          %4016 = vmatprep.subr.mxu0 0.0
          %4017 = vmatpush1.msra.mxu0 %v3883
          %4018 = vmatprep.subr.mxu0 0.0
          %4019 = vmatpush1.msra.mxu0 %v3884
          %4020 = vmatprep.subr.mxu0 0.0
          %4021 = vmatpush1.msra.mxu0 %v3885
          %4022 = vmatprep.subr.mxu0 0.0
          %4023 = vmatpush1.msra.mxu0 %v3886
          %4024 = vmatprep.subr.mxu0 0.0
          %4025 = vmatpush1.msra.mxu0 %v3887
          %4026 = vmatprep.subr.mxu0 0.0
          %4027 = vmatpush1.msra.mxu0 %v3888
          %4028 = vmatprep.subr.mxu0 0.0
          %4029 = vmatpush1.msra.mxu0 %v3889
          %4030 = vmatprep.subr.mxu0 0.0
          %4031 = vmatpush1.msra.mxu0 %v3890
          %4032 = vmatprep.subr.mxu0 0.0
          %4033 = vmatpush1.msra.mxu0 %v3891
          %4034 = vmatprep.subr.mxu0 0.0
          %4035 = vmatpush1.msra.mxu0 %v3892
          %4036 = vmatprep.subr.mxu0 0.0
          %4037 = vmatpush1.msra.mxu0 %v3893
          %4038 = vmatprep.subr.mxu0 0.0
          %4039 = vmatpush1.msra.mxu0 %v3894
          %4040 = vmatprep.subr.mxu0 0.0
          %4041 = vmatpush1.msra.mxu0 %v3895
          %4042 = vmatprep.subr.mxu0 0.0
          %4043 = vmatpush1.msra.mxu0 %v3896
          %4044 = vmatprep.subr.mxu0 0.0
          %4045 = vmatpush1.msra.mxu0 %v3897
          %4046 = vmatprep.mubr.f32.mxu0 %v3981
          %4047 = vmatmul.mubr.f32.gmra.mrb[0].mxu0 %v3944
          %v4048 = vpop.f32.mrb[0].mxu0
          %v4049 = vadd.f32 0.0, %v4048
          %v4050 = vpop.f32.mrb[0].mxu0
          %4051 = vdwg.mxu0
          %v4053 = vsel %vm909, %v4049, 0
          %4055 = vmatprep.subr.mxu0 %v3899
          %4056 = vmatpush1.msra.mxu0 %v3898
          %4057 = vmatprep.subr.mxu0 %v3901
          %4058 = vmatpush1.msra.mxu0 %v3900
          %4059 = vmatprep.subr.mxu0 %v3903
          %4060 = vmatpush1.msra.mxu0 %v3902
          %4061 = vmatprep.subr.mxu0 %v3905
          %4062 = vmatpush1.msra.mxu0 %v3904
          %4063 = vmatprep.subr.mxu0 0.0
          %4064 = vmatpush1.msra.mxu0 0.0
          %4065 = vmatprep.subr.mxu0 0.0
          %4066 = vmatpush1.msra.mxu0 0.0
          %4067 = vmatprep.subr.mxu0 0.0
          %4068 = vmatpush1.msra.mxu0 0.0
          %4069 = vmatprep.subr.mxu0 0.0
          %4070 = vmatpush1.msra.mxu0 0.0
          %4071 = vmatprep.subr.mxu0 0.0
          %4072 = vmatpush1.msra.mxu0 0.0
          %4073 = vmatprep.subr.mxu0 0.0
          %4074 = vmatpush1.msra.mxu0 0.0
          %4075 = vmatprep.subr.mxu0 0.0
          %4076 = vmatpush1.msra.mxu0 0.0
          %4077 = vmatprep.subr.mxu0 0.0
          %4078 = vmatpush1.msra.mxu0 0.0
          %4079 = vmatprep.subr.mxu0 0.0
          %4080 = vmatpush1.msra.mxu0 0.0
          %4081 = vmatprep.subr.mxu0 0.0
          %4082 = vmatpush1.msra.mxu0 0.0
          %4083 = vmatprep.subr.mxu0 0.0
          %4084 = vmatpush1.msra.mxu0 0.0
          %4085 = vmatprep.subr.mxu0 0.0
          %4086 = vmatpush1.msra.mxu0 0.0
          %4087 = vmatprep.subr.mxu0 0.0
          %4088 = vmatpush1.msra.mxu0 0.0
          %4089 = vmatprep.subr.mxu0 0.0
          %4090 = vmatpush1.msra.mxu0 0.0
          %4091 = vmatprep.subr.mxu0 0.0
          %4092 = vmatpush1.msra.mxu0 0.0
          %4093 = vmatprep.subr.mxu0 0.0
          %4094 = vmatpush1.msra.mxu0 0.0
          %4095 = vmatprep.subr.mxu0 0.0
          %4096 = vmatpush1.msra.mxu0 0.0
          %4097 = vmatprep.subr.mxu0 0.0
          %4098 = vmatpush1.msra.mxu0 0.0
          %4099 = vmatprep.subr.mxu0 0.0
          %4100 = vmatpush1.msra.mxu0 0.0
          %4101 = vmatprep.subr.mxu0 0.0
          %4102 = vmatpush1.msra.mxu0 0.0
          %4103 = vmatprep.subr.mxu0 0.0
          %4104 = vmatpush1.msra.mxu0 0.0
          %4105 = vmatprep.subr.mxu0 0.0
          %4106 = vmatpush1.msra.mxu0 0.0
          %4107 = vmatprep.subr.mxu0 0.0
          %4108 = vmatpush1.msra.mxu0 0.0
          %4109 = vmatprep.subr.mxu0 0.0
          %4110 = vmatpush1.msra.mxu0 0.0
          %4111 = vmatprep.subr.mxu0 0.0
          %4112 = vmatpush1.msra.mxu0 0.0
          %4113 = vmatprep.subr.mxu0 0.0
          %4114 = vmatpush1.msra.mxu0 0.0
          %4115 = vmatprep.subr.mxu0 0.0
          %4116 = vmatpush1.msra.mxu0 0.0
          %4117 = vmatprep.subr.mxu0 0.0
          %4118 = vmatpush1.msra.mxu0 0.0
          %4119 = vmatprep.mubr.f32.mxu0 0.0
          %4120 = vmatmul.mubr.f32.gmra.mrb[0].mxu0 %v4053
          %v4121 = vpop.f32.mrb[0].mxu0
          %v4122 = vadd.f32 0.0, %v4121
          %v4123 = vpop.f32.mrb[0].mxu0
          %v4124 = vadd.f32 0.0, %v4123
          %4125 = vdwg.mxu0
          %v4126 = vlaneseq
          %v4127 = vshrl.u32 %v4126, 7
          %v4128 = vsub.s32 0, %v4127
          %v4129 = vrot.slane %v4122, %v4128
          %v4130 = vlaneseq
          %v4131 = vshrl.u32 %v4130, 7
          %v4132 = vsub.s32 0, %v4131
          %v4133 = vrot.slane %v4124, %v4132
          %v4134 = vsub.f32 %v3802, %v4129
          %v4135 = vsub.f32 %v3803, %v4133
          %v4136 = vsub.f32 %v3804, %v4129
          %v4137 = vsub.f32 %v3805, %v4133
          %v4138 = vsub.f32 %v3806, %v4129
          %v4139 = vsub.f32 %v3807, %v4133
          %v4140 = vsub.f32 %v3808, %v4129
          %v4141 = vsub.f32 %v3809, %v4133
          %v4142 = vsub.f32 %v3810, %v4129
          %v4143 = vsub.f32 %v3811, %v4133
          %v4144 = vsub.f32 %v3812, %v4129
          %v4145 = vsub.f32 %v3813, %v4133
          %v4146 = vsub.f32 %v3814, %v4129
          %v4147 = vsub.f32 %v3815, %v4133
          %v4148 = vsub.f32 %v3816, %v4129
          %v4149 = vsub.f32 %v3817, %v4133
          %v4150 = vsub.f32 %v3818, %v4129
          %v4151 = vsub.f32 %v3819, %v4133
          %v4152 = vsub.f32 %v3820, %v4129
          %v4153 = vsub.f32 %v3821, %v4133
          %v4154 = vsub.f32 %v3822, %v4129
          %v4155 = vsub.f32 %v3823, %v4133
          %v4156 = vsub.f32 %v3824, %v4129
          %v4157 = vsub.f32 %v3825, %v4133
          %v4158 = vsub.f32 %v3826, %v4129
          %v4159 = vsub.f32 %v3827, %v4133
          %v4160 = vsub.f32 %v3828, %v4129
          %v4161 = vsub.f32 %v3829, %v4133
          %v4162 = vsub.f32 %v3830, %v4129
          %v4163 = vsub.f32 %v3831, %v4133
          %v4164 = vsub.f32 %v3832, %v4129
          %v4165 = vsub.f32 %v3833, %v4133
          %v4166 = vsub.f32 %v3834, %v4129
          %v4167 = vsub.f32 %v3835, %v4133
          %v4168 = vsub.f32 %v3836, %v4129
          %v4169 = vsub.f32 %v3837, %v4133
          %v4170 = vsub.f32 %v3838, %v4129
          %v4171 = vsub.f32 %v3839, %v4133
          %v4172 = vsub.f32 %v3840, %v4129
          %v4173 = vsub.f32 %v3841, %v4133
          %v4174 = vsub.f32 %v3842, %v4129
          %v4175 = vsub.f32 %v3843, %v4133
          %v4176 = vsub.f32 %v3844, %v4129
          %v4177 = vsub.f32 %v3845, %v4133
          %v4178 = vsub.f32 %v3846, %v4129
          %v4179 = vsub.f32 %v3847, %v4133
          %v4180 = vsub.f32 %v3848, %v4129
          %v4181 = vsub.f32 %v3849, %v4133
          %v4182 = vsub.f32 %v3850, %v4129
          %v4183 = vsub.f32 %v3851, %v4133
          %v4184 = vsub.f32 %v3852, %v4129
          %v4185 = vsub.f32 %v3853, %v4133
          %v4186 = vsub.f32 %v3854, %v4129
          %v4187 = vsub.f32 %v3855, %v4133
          %v4188 = vsub.f32 %v3856, %v4129
          %v4189 = vsub.f32 %v3857, %v4133
          %v4190 = vsub.f32 %v3858, %v4129
          %v4191 = vsub.f32 %v3859, %v4133
          %v4192 = vsub.f32 %v3860, %v4129
          %v4193 = vsub.f32 %v3861, %v4133
          %v4194 = vsub.f32 %v3862, %v4129
          %v4195 = vsub.f32 %v3863, %v4133
          %v4196 = vsub.f32 %v3864, %v4129
          %v4197 = vsub.f32 %v3865, %v4133
          %v4198 = vmul.f32 %v4134, %v4134
          %v4199 = vmul.f32 %v4135, %v4135
          %v4200 = vmul.f32 %v4136, %v4136
          %v4201 = vmul.f32 %v4137, %v4137
          %v4202 = vmul.f32 %v4138, %v4138
          %v4203 = vmul.f32 %v4139, %v4139
          %v4204 = vmul.f32 %v4140, %v4140
          %v4205 = vmul.f32 %v4141, %v4141
          %v4206 = vmul.f32 %v4142, %v4142
          %v4207 = vmul.f32 %v4143, %v4143
          %v4208 = vmul.f32 %v4144, %v4144
          %v4209 = vmul.f32 %v4145, %v4145
          %v4210 = vmul.f32 %v4146, %v4146
          %v4211 = vmul.f32 %v4147, %v4147
          %v4212 = vmul.f32 %v4148, %v4148
          %v4213 = vmul.f32 %v4149, %v4149
          %v4214 = vmul.f32 %v4150, %v4150
          %v4215 = vmul.f32 %v4151, %v4151
          %v4216 = vmul.f32 %v4152, %v4152
          %v4217 = vmul.f32 %v4153, %v4153
          %v4218 = vmul.f32 %v4154, %v4154
          %v4219 = vmul.f32 %v4155, %v4155
          %v4220 = vmul.f32 %v4156, %v4156
          %v4221 = vmul.f32 %v4157, %v4157
          %v4222 = vmul.f32 %v4158, %v4158
          %v4223 = vmul.f32 %v4159, %v4159
          %v4224 = vmul.f32 %v4160, %v4160
          %v4225 = vmul.f32 %v4161, %v4161
          %v4226 = vmul.f32 %v4162, %v4162
          %v4227 = vmul.f32 %v4163, %v4163
          %v4228 = vmul.f32 %v4164, %v4164
          %v4229 = vmul.f32 %v4165, %v4165
          %v4230 = vmul.f32 %v4166, %v4166
          %v4231 = vmul.f32 %v4167, %v4167
          %v4232 = vmul.f32 %v4168, %v4168
          %v4233 = vmul.f32 %v4169, %v4169
          %v4234 = vmul.f32 %v4170, %v4170
          %v4235 = vmul.f32 %v4171, %v4171
          %v4236 = vmul.f32 %v4172, %v4172
          %v4237 = vmul.f32 %v4173, %v4173
          %v4238 = vmul.f32 %v4174, %v4174
          %v4239 = vmul.f32 %v4175, %v4175
          %v4240 = vmul.f32 %v4176, %v4176
          %v4241 = vmul.f32 %v4177, %v4177
          %v4242 = vmul.f32 %v4178, %v4178
          %v4243 = vmul.f32 %v4179, %v4179
          %v4244 = vmul.f32 %v4180, %v4180
          %v4245 = vmul.f32 %v4181, %v4181
          %v4246 = vmul.f32 %v4182, %v4182
          %v4247 = vmul.f32 %v4183, %v4183
          %v4248 = vmul.f32 %v4184, %v4184
          %v4249 = vmul.f32 %v4185, %v4185
          %v4250 = vmul.f32 %v4186, %v4186
          %v4251 = vmul.f32 %v4187, %v4187
          %v4252 = vmul.f32 %v4188, %v4188
          %v4253 = vmul.f32 %v4189, %v4189
          %v4254 = vmul.f32 %v4190, %v4190
          %v4255 = vmul.f32 %v4191, %v4191
          %v4256 = vmul.f32 %v4192, %v4192
          %v4257 = vmul.f32 %v4193, %v4193
          %v4258 = vmul.f32 %v4194, %v4194
          %v4259 = vmul.f32 %v4195, %v4195
          %v4260 = vmul.f32 %v4196, %v4196
          %v4261 = vmul.f32 %v4197, %v4197
          %v4262 = vadd.f32 %v4198, %v4200
          %v4263 = vadd.f32 %v4262, %v4202
          %v4264 = vadd.f32 %v4263, %v4204
          %v4265 = vadd.f32 %v4264, %v4206
          %v4266 = vadd.f32 %v4265, %v4208
          %v4267 = vadd.f32 %v4266, %v4210
          %v4268 = vadd.f32 %v4267, %v4212
          %v4269 = vadd.f32 %v4268, %v4214
          %v4270 = vadd.f32 %v4269, %v4216
          %v4271 = vadd.f32 %v4270, %v4218
          %v4272 = vadd.f32 %v4271, %v4220
          %v4273 = vadd.f32 %v4272, %v4222
          %v4274 = vadd.f32 %v4273, %v4224
          %v4275 = vadd.f32 %v4274, %v4226
          %v4276 = vadd.f32 %v4275, %v4228
          %v4277 = vadd.f32 %v4276, %v4230
          %v4278 = vadd.f32 %v4277, %v4232
          %v4279 = vadd.f32 %v4278, %v4234
          %v4280 = vadd.f32 %v4279, %v4236
          %v4281 = vadd.f32 %v4280, %v4238
          %v4282 = vadd.f32 %v4281, %v4240
          %v4283 = vadd.f32 %v4282, %v4242
          %v4284 = vadd.f32 %v4283, %v4244
          %v4285 = vadd.f32 %v4284, %v4246
          %v4286 = vadd.f32 %v4285, %v4248
          %v4287 = vadd.f32 %v4286, %v4250
          %v4288 = vadd.f32 %v4287, %v4252
          %v4289 = vadd.f32 %v4288, %v4254
          %v4290 = vadd.f32 %v4289, %v4256
          %v4291 = vadd.f32 %v4290, %v4258
          %v4292 = vadd.f32 %v4291, %v4260
          %v4293 = vrot.slane %v4292, 4
          %v4294 = vadd.f32 %v4292, %v4293
          %v4295 = vrot.slane %v4294, 2
          %v4296 = vadd.f32 %v4294, %v4295
          %v4297 = vrot.slane %v4296, 1
          %v4298 = vadd.f32 %v4296, %v4297
          %v4299 = vadd.f32 %v4199, %v4201
          %v4300 = vadd.f32 %v4299, %v4203
          %v4301 = vadd.f32 %v4300, %v4205
          %v4302 = vadd.f32 %v4301, %v4207
          %v4303 = vadd.f32 %v4302, %v4209
          %v4304 = vadd.f32 %v4303, %v4211
          %v4305 = vadd.f32 %v4304, %v4213
          %v4306 = vadd.f32 %v4305, %v4215
          %v4307 = vadd.f32 %v4306, %v4217
          %v4308 = vadd.f32 %v4307, %v4219
          %v4309 = vadd.f32 %v4308, %v4221
          %v4310 = vadd.f32 %v4309, %v4223
          %v4311 = vadd.f32 %v4310, %v4225
          %v4312 = vadd.f32 %v4311, %v4227
          %v4313 = vadd.f32 %v4312, %v4229
          %v4314 = vadd.f32 %v4313, %v4231
          %v4315 = vadd.f32 %v4314, %v4233
          %v4316 = vadd.f32 %v4315, %v4235
          %v4317 = vadd.f32 %v4316, %v4237
          %v4318 = vadd.f32 %v4317, %v4239
          %v4319 = vadd.f32 %v4318, %v4241
          %v4320 = vadd.f32 %v4319, %v4243
          %v4321 = vadd.f32 %v4320, %v4245
          %v4322 = vadd.f32 %v4321, %v4247
          %v4323 = vadd.f32 %v4322, %v4249
          %v4324 = vadd.f32 %v4323, %v4251
          %v4325 = vadd.f32 %v4324, %v4253
          %v4326 = vadd.f32 %v4325, %v4255
          %v4327 = vadd.f32 %v4326, %v4257
          %v4328 = vadd.f32 %v4327, %v4259
          %v4329 = vadd.f32 %v4328, %v4261
          %v4330 = vrot.slane %v4329, 4
          %v4331 = vadd.f32 %v4329, %v4330
          %v4332 = vrot.slane %v4331, 2
          %v4333 = vadd.f32 %v4331, %v4332
          %v4334 = vrot.slane %v4333, 1
          %v4335 = vadd.f32 %v4333, %v4334
          %4336 = vmatprep.subr.mxu0 0.0
          %4337 = vmatpush1.msra.mxu0 %v3866
          %4338 = vmatprep.subr.mxu0 0.0
          %4339 = vmatpush1.msra.mxu0 %v3867
          %4340 = vmatprep.subr.mxu0 0.0
          %4341 = vmatpush1.msra.mxu0 %v3868
          %4342 = vmatprep.subr.mxu0 0.0
          %4343 = vmatpush1.msra.mxu0 %v3869
          %4344 = vmatprep.subr.mxu0 0.0
          %4345 = vmatpush1.msra.mxu0 %v3870
          %4346 = vmatprep.subr.mxu0 0.0
          %4347 = vmatpush1.msra.mxu0 %v3871
          %4348 = vmatprep.subr.mxu0 0.0
          %4349 = vmatpush1.msra.mxu0 %v3872
          %4350 = vmatprep.subr.mxu0 0.0
          %4351 = vmatpush1.msra.mxu0 %v3873
          %4352 = vmatprep.subr.mxu0 0.0
          %4353 = vmatpush1.msra.mxu0 %v3874
          %4354 = vmatprep.subr.mxu0 0.0
          %4355 = vmatpush1.msra.mxu0 %v3875
          %4356 = vmatprep.subr.mxu0 0.0
          %4357 = vmatpush1.msra.mxu0 %v3876
          %4358 = vmatprep.subr.mxu0 0.0
          %4359 = vmatpush1.msra.mxu0 %v3877
          %4360 = vmatprep.subr.mxu0 0.0
          %4361 = vmatpush1.msra.mxu0 %v3878
          %4362 = vmatprep.subr.mxu0 0.0
          %4363 = vmatpush1.msra.mxu0 %v3879
          %4364 = vmatprep.subr.mxu0 0.0
          %4365 = vmatpush1.msra.mxu0 %v3880
          %4366 = vmatprep.subr.mxu0 0.0
          %4367 = vmatpush1.msra.mxu0 %v3881
          %4368 = vmatprep.subr.mxu0 0.0
          %4369 = vmatpush1.msra.mxu0 %v3882
          %4370 = vmatprep.subr.mxu0 0.0
          %4371 = vmatpush1.msra.mxu0 %v3883
          %4372 = vmatprep.subr.mxu0 0.0
          %4373 = vmatpush1.msra.mxu0 %v3884
          %4374 = vmatprep.subr.mxu0 0.0
          %4375 = vmatpush1.msra.mxu0 %v3885
          %4376 = vmatprep.subr.mxu0 0.0
          %4377 = vmatpush1.msra.mxu0 %v3886
          %4378 = vmatprep.subr.mxu0 0.0
          %4379 = vmatpush1.msra.mxu0 %v3887
          %4380 = vmatprep.subr.mxu0 0.0
          %4381 = vmatpush1.msra.mxu0 %v3888
          %4382 = vmatprep.subr.mxu0 0.0
          %4383 = vmatpush1.msra.mxu0 %v3889
          %4384 = vmatprep.subr.mxu0 0.0
          %4385 = vmatpush1.msra.mxu0 %v3890
          %4386 = vmatprep.subr.mxu0 0.0
          %4387 = vmatpush1.msra.mxu0 %v3891
          %4388 = vmatprep.subr.mxu0 0.0
          %4389 = vmatpush1.msra.mxu0 %v3892
          %4390 = vmatprep.subr.mxu0 0.0
          %4391 = vmatpush1.msra.mxu0 %v3893
          %4392 = vmatprep.subr.mxu0 0.0
          %4393 = vmatpush1.msra.mxu0 %v3894
          %4394 = vmatprep.subr.mxu0 0.0
          %4395 = vmatpush1.msra.mxu0 %v3895
          %4396 = vmatprep.subr.mxu0 0.0
          %4397 = vmatpush1.msra.mxu0 %v3896
          %4398 = vmatprep.subr.mxu0 0.0
          %4399 = vmatpush1.msra.mxu0 %v3897
          %4400 = vmatprep.mubr.f32.mxu0 %v4335
          %4401 = vmatmul.mubr.f32.gmra.mrb[0].mxu0 %v4298
          %v4402 = vpop.f32.mrb[0].mxu0
          %v4403 = vadd.f32 1e-05, %v4402
          %v4404 = vpop.f32.mrb[0].mxu0
          %4405 = vdwg.mxu0
          %v4406 = vrsqrt.pop %v4403
          %v4408 = vsel %vm909, %v4406, 0
          %4410 = vmatprep.subr.mxu0 %v3899
          %4411 = vmatpush1.msra.mxu0 %v3898
          %4412 = vmatprep.subr.mxu0 %v3901
          %4413 = vmatpush1.msra.mxu0 %v3900
          %4414 = vmatprep.subr.mxu0 %v3903
          %4415 = vmatpush1.msra.mxu0 %v3902
          %4416 = vmatprep.subr.mxu0 %v3905
          %4417 = vmatpush1.msra.mxu0 %v3904
          %4418 = vmatprep.subr.mxu0 0.0
          %4419 = vmatpush1.msra.mxu0 0.0
          %4420 = vmatprep.subr.mxu0 0.0
          %4421 = vmatpush1.msra.mxu0 0.0
          %4422 = vmatprep.subr.mxu0 0.0
          %4423 = vmatpush1.msra.mxu0 0.0
          %4424 = vmatprep.subr.mxu0 0.0
          %4425 = vmatpush1.msra.mxu0 0.0
          %4426 = vmatprep.subr.mxu0 0.0
          %4427 = vmatpush1.msra.mxu0 0.0
          %4428 = vmatprep.subr.mxu0 0.0
          %4429 = vmatpush1.msra.mxu0 0.0
          %4430 = vmatprep.subr.mxu0 0.0
          %4431 = vmatpush1.msra.mxu0 0.0
          %4432 = vmatprep.subr.mxu0 0.0
          %4433 = vmatpush1.msra.mxu0 0.0
          %4434 = vmatprep.subr.mxu0 0.0
          %4435 = vmatpush1.msra.mxu0 0.0
          %4436 = vmatprep.subr.mxu0 0.0
          %4437 = vmatpush1.msra.mxu0 0.0
          %4438 = vmatprep.subr.mxu0 0.0
          %4439 = vmatpush1.msra.mxu0 0.0
          %4440 = vmatprep.subr.mxu0 0.0
          %4441 = vmatpush1.msra.mxu0 0.0
          %4442 = vmatprep.subr.mxu0 0.0
          %4443 = vmatpush1.msra.mxu0 0.0
          %4444 = vmatprep.subr.mxu0 0.0
          %4445 = vmatpush1.msra.mxu0 0.0
          %4446 = vmatprep.subr.mxu0 0.0
          %4447 = vmatpush1.msra.mxu0 0.0
          %4448 = vmatprep.subr.mxu0 0.0
          %4449 = vmatpush1.msra.mxu0 0.0
          %4450 = vmatprep.subr.mxu0 0.0
          %4451 = vmatpush1.msra.mxu0 0.0
          %4452 = vmatprep.subr.mxu0 0.0
          %4453 = vmatpush1.msra.mxu0 0.0
          %4454 = vmatprep.subr.mxu0 0.0
          %4455 = vmatpush1.msra.mxu0 0.0
          %4456 = vmatprep.subr.mxu0 0.0
          %4457 = vmatpush1.msra.mxu0 0.0
          %4458 = vmatprep.subr.mxu0 0.0
          %4459 = vmatpush1.msra.mxu0 0.0
          %4460 = vmatprep.subr.mxu0 0.0
          %4461 = vmatpush1.msra.mxu0 0.0
          %4462 = vmatprep.subr.mxu0 0.0
          %4463 = vmatpush1.msra.mxu0 0.0
          %4464 = vmatprep.subr.mxu0 0.0
          %4465 = vmatpush1.msra.mxu0 0.0
          %4466 = vmatprep.subr.mxu0 0.0
          %4467 = vmatpush1.msra.mxu0 0.0
          %4468 = vmatprep.subr.mxu0 0.0
          %4469 = vmatpush1.msra.mxu0 0.0
          %4470 = vmatprep.subr.mxu0 0.0
          %4471 = vmatpush1.msra.mxu0 0.0
          %4472 = vmatprep.subr.mxu0 0.0
          %4473 = vmatpush1.msra.mxu0 0.0
          %4474 = vmatprep.mubr.f32.mxu0 0.0
          %4475 = vmatmul.mubr.f32.gmra.mrb[0].mxu0 %v4408
          %v4476 = vpop.f32.mrb[0].mxu0
          %v4477 = vadd.f32 0.0, %v4476
          %v4478 = vpop.f32.mrb[0].mxu0
          %v4479 = vadd.f32 0.0, %v4478
          %4480 = vdwg.mxu0
          %v4482 = vlaneseq
          %v4483 = vshrl.u32 %v4482, 7
          %v4484 = vsub.s32 0, %v4483
          %v4485 = vrot.slane %v3906, %v4484
          %v4486 = vlaneseq
          %v4487 = vshrl.u32 %v4486, 7
          %v4488 = vsub.s32 1, %v4487
          %v4489 = vrot.slane %v3906, %v4488
          %v4492 = vmul.f32 %v4477, %v4485
          %v4493 = vmul.f32 %v4479, %v4489
          %v4494 = vlaneseq
          %v4495 = vshrl.u32 %v4494, 7
          %v4496 = vsub.s32 0, %v4495
          %v4497 = vrot.slane %v4492, %v4496
          %v4498 = vlaneseq
          %v4499 = vshrl.u32 %v4498, 7
          %v4500 = vsub.s32 0, %v4499
          %v4501 = vrot.slane %v4493, %v4500
          %v4502 = vmul.f32 %v4134, %v4497
          %v4503 = vmul.f32 %v4135, %v4501
          %v4504 = vmul.f32 %v4136, %v4497
          %v4505 = vmul.f32 %v4137, %v4501
          %v4506 = vmul.f32 %v4138, %v4497
          %v4507 = vmul.f32 %v4139, %v4501
          %v4508 = vmul.f32 %v4140, %v4497
          %v4509 = vmul.f32 %v4141, %v4501
          %v4510 = vmul.f32 %v4142, %v4497
          %v4511 = vmul.f32 %v4143, %v4501
          %v4512 = vmul.f32 %v4144, %v4497
          %v4513 = vmul.f32 %v4145, %v4501
          %v4514 = vmul.f32 %v4146, %v4497
          %v4515 = vmul.f32 %v4147, %v4501
          %v4516 = vmul.f32 %v4148, %v4497
          %v4517 = vmul.f32 %v4149, %v4501
          %v4518 = vmul.f32 %v4150, %v4497
          %v4519 = vmul.f32 %v4151, %v4501
          %v4520 = vmul.f32 %v4152, %v4497
          %v4521 = vmul.f32 %v4153, %v4501
          %v4522 = vmul.f32 %v4154, %v4497
          %v4523 = vmul.f32 %v4155, %v4501
          %v4524 = vmul.f32 %v4156, %v4497
          %v4525 = vmul.f32 %v4157, %v4501
          %v4526 = vmul.f32 %v4158, %v4497
          %v4527 = vmul.f32 %v4159, %v4501
          %v4528 = vmul.f32 %v4160, %v4497
          %v4529 = vmul.f32 %v4161, %v4501
          %v4530 = vmul.f32 %v4162, %v4497
          %v4531 = vmul.f32 %v4163, %v4501
          %v4532 = vmul.f32 %v4164, %v4497
          %v4533 = vmul.f32 %v4165, %v4501
          %v4534 = vmul.f32 %v4166, %v4497
          %v4535 = vmul.f32 %v4167, %v4501
          %v4536 = vmul.f32 %v4168, %v4497
          %v4537 = vmul.f32 %v4169, %v4501
          %v4538 = vmul.f32 %v4170, %v4497
          %v4539 = vmul.f32 %v4171, %v4501
          %v4540 = vmul.f32 %v4172, %v4497
          %v4541 = vmul.f32 %v4173, %v4501
          %v4542 = vmul.f32 %v4174, %v4497
          %v4543 = vmul.f32 %v4175, %v4501
          %v4544 = vmul.f32 %v4176, %v4497
          %v4545 = vmul.f32 %v4177, %v4501
          %v4546 = vmul.f32 %v4178, %v4497
          %v4547 = vmul.f32 %v4179, %v4501
          %v4548 = vmul.f32 %v4180, %v4497
          %v4549 = vmul.f32 %v4181, %v4501
          %v4550 = vmul.f32 %v4182, %v4497
          %v4551 = vmul.f32 %v4183, %v4501
          %v4552 = vmul.f32 %v4184, %v4497
          %v4553 = vmul.f32 %v4185, %v4501
          %v4554 = vmul.f32 %v4186, %v4497
          %v4555 = vmul.f32 %v4187, %v4501
          %v4556 = vmul.f32 %v4188, %v4497
          %v4557 = vmul.f32 %v4189, %v4501
          %v4558 = vmul.f32 %v4190, %v4497
          %v4559 = vmul.f32 %v4191, %v4501
          %v4560 = vmul.f32 %v4192, %v4497
          %v4561 = vmul.f32 %v4193, %v4501
          %v4562 = vmul.f32 %v4194, %v4497
          %v4563 = vmul.f32 %v4195, %v4501
          %v4564 = vmul.f32 %v4196, %v4497
          %v4565 = vmul.f32 %v4197, %v4501
          %v4567 = vlaneseq
          %v4568 = vshrl.u32 %v4567, 7
          %v4569 = vsub.s32 0, %v4568
          %v4570 = vrot.slane %v3907, %v4569
          %v4571 = vlaneseq
          %v4572 = vshrl.u32 %v4571, 7
          %v4573 = vsub.s32 1, %v4572
          %v4574 = vrot.slane %v3907, %v4573
          %v4577 = vadd.f32 %v4502, %v4570
          %v4578 = vadd.f32 %v4503, %v4574
          %v4579 = vadd.f32 %v4504, %v4570
          %v4580 = vadd.f32 %v4505, %v4574
          %v4581 = vadd.f32 %v4506, %v4570
          %v4582 = vadd.f32 %v4507, %v4574
          %v4583 = vadd.f32 %v4508, %v4570
          %v4584 = vadd.f32 %v4509, %v4574
          %v4585 = vadd.f32 %v4510, %v4570
          %v4586 = vadd.f32 %v4511, %v4574
          %v4587 = vadd.f32 %v4512, %v4570
          %v4588 = vadd.f32 %v4513, %v4574
          %v4589 = vadd.f32 %v4514, %v4570
          %v4590 = vadd.f32 %v4515, %v4574
          %v4591 = vadd.f32 %v4516, %v4570
          %v4592 = vadd.f32 %v4517, %v4574
          %v4593 = vadd.f32 %v4518, %v4570
          %v4594 = vadd.f32 %v4519, %v4574
          %v4595 = vadd.f32 %v4520, %v4570
          %v4596 = vadd.f32 %v4521, %v4574
          %v4597 = vadd.f32 %v4522, %v4570
          %v4598 = vadd.f32 %v4523, %v4574
          %v4599 = vadd.f32 %v4524, %v4570
          %v4600 = vadd.f32 %v4525, %v4574
          %v4601 = vadd.f32 %v4526, %v4570
          %v4602 = vadd.f32 %v4527, %v4574
          %v4603 = vadd.f32 %v4528, %v4570
          %v4604 = vadd.f32 %v4529, %v4574
          %v4605 = vadd.f32 %v4530, %v4570
          %v4606 = vadd.f32 %v4531, %v4574
          %v4607 = vadd.f32 %v4532, %v4570
          %v4608 = vadd.f32 %v4533, %v4574
          %v4609 = vadd.f32 %v4534, %v4570
          %v4610 = vadd.f32 %v4535, %v4574
          %v4611 = vadd.f32 %v4536, %v4570
          %v4612 = vadd.f32 %v4537, %v4574
          %v4613 = vadd.f32 %v4538, %v4570
          %v4614 = vadd.f32 %v4539, %v4574
          %v4615 = vadd.f32 %v4540, %v4570
          %v4616 = vadd.f32 %v4541, %v4574
          %v4617 = vadd.f32 %v4542, %v4570
          %v4618 = vadd.f32 %v4543, %v4574
          %v4619 = vadd.f32 %v4544, %v4570
          %v4620 = vadd.f32 %v4545, %v4574
          %v4621 = vadd.f32 %v4546, %v4570
          %v4622 = vadd.f32 %v4547, %v4574
          %v4623 = vadd.f32 %v4548, %v4570
          %v4624 = vadd.f32 %v4549, %v4574
          %v4625 = vadd.f32 %v4550, %v4570
          %v4626 = vadd.f32 %v4551, %v4574
          %v4627 = vadd.f32 %v4552, %v4570
          %v4628 = vadd.f32 %v4553, %v4574
          %v4629 = vadd.f32 %v4554, %v4570
          %v4630 = vadd.f32 %v4555, %v4574
          %v4631 = vadd.f32 %v4556, %v4570
          %v4632 = vadd.f32 %v4557, %v4574
          %v4633 = vadd.f32 %v4558, %v4570
          %v4634 = vadd.f32 %v4559, %v4574
          %v4635 = vadd.f32 %v4560, %v4570
          %v4636 = vadd.f32 %v4561, %v4574
          %v4637 = vadd.f32 %v4562, %v4570
          %v4638 = vadd.f32 %v4563, %v4574
          %v4639 = vadd.f32 %v4564, %v4570
          %v4640 = vadd.f32 %v4565, %v4574
          %v4641 = vxor.u32 %v4577, 2147483648
          %v4642 = vxor.u32 %v4578, 2147483648
          %v4643 = vxor.u32 %v4579, 2147483648
          %v4644 = vxor.u32 %v4580, 2147483648
          %v4645 = vxor.u32 %v4581, 2147483648
          %v4646 = vxor.u32 %v4582, 2147483648
          %v4647 = vxor.u32 %v4583, 2147483648
          %v4648 = vxor.u32 %v4584, 2147483648
          %v4649 = vxor.u32 %v4585, 2147483648
          %v4650 = vxor.u32 %v4586, 2147483648
          %v4651 = vxor.u32 %v4587, 2147483648
          %v4652 = vxor.u32 %v4588, 2147483648
          %v4653 = vxor.u32 %v4589, 2147483648
          %v4654 = vxor.u32 %v4590, 2147483648
          %v4655 = vxor.u32 %v4591, 2147483648
          %v4656 = vxor.u32 %v4592, 2147483648
          %v4657 = vxor.u32 %v4593, 2147483648
          %v4658 = vxor.u32 %v4594, 2147483648
          %v4659 = vxor.u32 %v4595, 2147483648
          %v4660 = vxor.u32 %v4596, 2147483648
          %v4661 = vxor.u32 %v4597, 2147483648
          %v4662 = vxor.u32 %v4598, 2147483648
          %v4663 = vxor.u32 %v4599, 2147483648
          %v4664 = vxor.u32 %v4600, 2147483648
          %v4665 = vxor.u32 %v4601, 2147483648
          %v4666 = vxor.u32 %v4602, 2147483648
          %v4667 = vxor.u32 %v4603, 2147483648
          %v4668 = vxor.u32 %v4604, 2147483648
          %v4669 = vxor.u32 %v4605, 2147483648
          %v4670 = vxor.u32 %v4606, 2147483648
          %v4671 = vxor.u32 %v4607, 2147483648
          %v4672 = vxor.u32 %v4608, 2147483648
          %v4673 = vxor.u32 %v4609, 2147483648
          %v4674 = vxor.u32 %v4610, 2147483648
          %v4675 = vxor.u32 %v4611, 2147483648
          %v4676 = vxor.u32 %v4612, 2147483648
          %v4677 = vxor.u32 %v4613, 2147483648
          %v4678 = vxor.u32 %v4614, 2147483648
          %v4679 = vxor.u32 %v4615, 2147483648
          %v4680 = vxor.u32 %v4616, 2147483648
          %v4681 = vxor.u32 %v4617, 2147483648
          %v4682 = vxor.u32 %v4618, 2147483648
          %v4683 = vxor.u32 %v4619, 2147483648
          %v4684 = vxor.u32 %v4620, 2147483648
          %v4685 = vxor.u32 %v4621, 2147483648
          %v4686 = vxor.u32 %v4622, 2147483648
          %v4687 = vxor.u32 %v4623, 2147483648
          %v4688 = vxor.u32 %v4624, 2147483648
          %v4689 = vxor.u32 %v4625, 2147483648
          %v4690 = vxor.u32 %v4626, 2147483648
          %v4691 = vxor.u32 %v4627, 2147483648
          %v4692 = vxor.u32 %v4628, 2147483648
          %v4693 = vxor.u32 %v4629, 2147483648
          %v4694 = vxor.u32 %v4630, 2147483648
          %v4695 = vxor.u32 %v4631, 2147483648
          %v4696 = vxor.u32 %v4632, 2147483648
          %v4697 = vxor.u32 %v4633, 2147483648
          %v4698 = vxor.u32 %v4634, 2147483648
          %v4699 = vxor.u32 %v4635, 2147483648
          %v4700 = vxor.u32 %v4636, 2147483648
          %v4701 = vxor.u32 %v4637, 2147483648
          %v4702 = vxor.u32 %v4638, 2147483648
          %v4703 = vxor.u32 %v4639, 2147483648
          %v4704 = vxor.u32 %v4640, 2147483648
          %v4705 = vmul.f32 %v4641, 1.442695
          %v4706 = vpow.pop %v4705
          %v4707 = vmul.f32 %v4642, 1.442695
          %v4708 = vpow.pop %v4707
          %v4709 = vmul.f32 %v4643, 1.442695
          %v4710 = vpow.pop %v4709
          %v4711 = vmul.f32 %v4644, 1.442695
          %v4712 = vpow.pop %v4711
          %v4713 = vmul.f32 %v4645, 1.442695
          %v4714 = vpow.pop %v4713
          %v4715 = vmul.f32 %v4646, 1.442695
          %v4716 = vpow.pop %v4715
          %v4717 = vmul.f32 %v4647, 1.442695
          %v4718 = vpow.pop %v4717
          %v4719 = vmul.f32 %v4648, 1.442695
          %v4720 = vpow.pop %v4719
          %v4721 = vmul.f32 %v4649, 1.442695
          %v4722 = vpow.pop %v4721
          %v4723 = vmul.f32 %v4650, 1.442695
          %v4724 = vpow.pop %v4723
          %v4725 = vmul.f32 %v4651, 1.442695
          %v4726 = vpow.pop %v4725
          %v4727 = vmul.f32 %v4652, 1.442695
          %v4728 = vpow.pop %v4727
          %v4729 = vmul.f32 %v4653, 1.442695
          %v4730 = vpow.pop %v4729
          %v4731 = vmul.f32 %v4654, 1.442695
          %v4732 = vpow.pop %v4731
          %v4733 = vmul.f32 %v4655, 1.442695
          %v4734 = vpow.pop %v4733
          %v4735 = vmul.f32 %v4656, 1.442695
          %v4736 = vpow.pop %v4735
          %v4737 = vmul.f32 %v4657, 1.442695
          %v4738 = vpow.pop %v4737
          %v4739 = vmul.f32 %v4658, 1.442695
          %v4740 = vpow.pop %v4739
          %v4741 = vmul.f32 %v4659, 1.442695
          %v4742 = vpow.pop %v4741
          %v4743 = vmul.f32 %v4660, 1.442695
          %v4744 = vpow.pop %v4743
          %v4745 = vmul.f32 %v4661, 1.442695
          %v4746 = vpow.pop %v4745
          %v4747 = vmul.f32 %v4662, 1.442695
          %v4748 = vpow.pop %v4747
          %v4749 = vmul.f32 %v4663, 1.442695
          %v4750 = vpow.pop %v4749
          %v4751 = vmul.f32 %v4664, 1.442695
          %v4752 = vpow.pop %v4751
          %v4753 = vmul.f32 %v4665, 1.442695
          %v4754 = vpow.pop %v4753
          %v4755 = vmul.f32 %v4666, 1.442695
          %v4756 = vpow.pop %v4755
          %v4757 = vmul.f32 %v4667, 1.442695
          %v4758 = vpow.pop %v4757
          %v4759 = vmul.f32 %v4668, 1.442695
          %v4760 = vpow.pop %v4759
          %v4761 = vmul.f32 %v4669, 1.442695
          %v4762 = vpow.pop %v4761
          %v4763 = vmul.f32 %v4670, 1.442695
          %v4764 = vpow.pop %v4763
          %v4765 = vmul.f32 %v4671, 1.442695
          %v4766 = vpow.pop %v4765
          %v4767 = vmul.f32 %v4672, 1.442695
          %v4768 = vpow.pop %v4767
          %v4769 = vmul.f32 %v4673, 1.442695
          %v4770 = vpow.pop %v4769
          %v4771 = vmul.f32 %v4674, 1.442695
          %v4772 = vpow.pop %v4771
          %v4773 = vmul.f32 %v4675, 1.442695
          %v4774 = vpow.pop %v4773
          %v4775 = vmul.f32 %v4676, 1.442695
          %v4776 = vpow.pop %v4775
          %v4777 = vmul.f32 %v4677, 1.442695
          %v4778 = vpow.pop %v4777
          %v4779 = vmul.f32 %v4678, 1.442695
          %v4780 = vpow.pop %v4779
          %v4781 = vmul.f32 %v4679, 1.442695
          %v4782 = vpow.pop %v4781
          %v4783 = vmul.f32 %v4680, 1.442695
          %v4784 = vpow.pop %v4783
          %v4785 = vmul.f32 %v4681, 1.442695
          %v4786 = vpow.pop %v4785
          %v4787 = vmul.f32 %v4682, 1.442695
          %v4788 = vpow.pop %v4787
          %v4789 = vmul.f32 %v4683, 1.442695
          %v4790 = vpow.pop %v4789
          %v4791 = vmul.f32 %v4684, 1.442695
          %v4792 = vpow.pop %v4791
          %v4793 = vmul.f32 %v4685, 1.442695
          %v4794 = vpow.pop %v4793
          %v4795 = vmul.f32 %v4686, 1.442695
          %v4796 = vpow.pop %v4795
          %v4797 = vmul.f32 %v4687, 1.442695
          %v4798 = vpow.pop %v4797
          %v4799 = vmul.f32 %v4688, 1.442695
          %v4800 = vpow.pop %v4799
          %v4801 = vmul.f32 %v4689, 1.442695
          %v4802 = vpow.pop %v4801
          %v4803 = vmul.f32 %v4690, 1.442695
          %v4804 = vpow.pop %v4803
          %v4805 = vmul.f32 %v4691, 1.442695
          %v4806 = vpow.pop %v4805
          %v4807 = vmul.f32 %v4692, 1.442695
          %v4808 = vpow.pop %v4807
          %v4809 = vmul.f32 %v4693, 1.442695
          %v4810 = vpow.pop %v4809
          %v4811 = vmul.f32 %v4694, 1.442695
          %v4812 = vpow.pop %v4811
          %v4813 = vmul.f32 %v4695, 1.442695
          %v4814 = vpow.pop %v4813
          %v4815 = vmul.f32 %v4696, 1.442695
          %v4816 = vpow.pop %v4815
          %v4817 = vmul.f32 %v4697, 1.442695
          %v4818 = vpow.pop %v4817
          %v4819 = vmul.f32 %v4698, 1.442695
          %v4820 = vpow.pop %v4819
          %v4821 = vmul.f32 %v4699, 1.442695
          %v4822 = vpow.pop %v4821
          %v4823 = vmul.f32 %v4700, 1.442695
          %v4824 = vpow.pop %v4823
          %v4825 = vmul.f32 %v4701, 1.442695
          %v4826 = vpow.pop %v4825
          %v4827 = vmul.f32 %v4702, 1.442695
          %v4828 = vpow.pop %v4827
          %v4829 = vmul.f32 %v4703, 1.442695
          %v4830 = vpow.pop %v4829
          %v4831 = vmul.f32 %v4704, 1.442695
          %v4832 = vpow.pop %v4831
          %v4833 = vadd.f32 %v4706, 1.0
          %v4834 = vadd.f32 %v4708, 1.0
          %v4835 = vadd.f32 %v4710, 1.0
          %v4836 = vadd.f32 %v4712, 1.0
          %v4837 = vadd.f32 %v4714, 1.0
          %v4838 = vadd.f32 %v4716, 1.0
          %v4839 = vadd.f32 %v4718, 1.0
          %v4840 = vadd.f32 %v4720, 1.0
          %v4841 = vadd.f32 %v4722, 1.0
          %v4842 = vadd.f32 %v4724, 1.0
          %v4843 = vadd.f32 %v4726, 1.0
          %v4844 = vadd.f32 %v4728, 1.0
          %v4845 = vadd.f32 %v4730, 1.0
          %v4846 = vadd.f32 %v4732, 1.0
          %v4847 = vadd.f32 %v4734, 1.0
          %v4848 = vadd.f32 %v4736, 1.0
          %v4849 = vadd.f32 %v4738, 1.0
          %v4850 = vadd.f32 %v4740, 1.0
          %v4851 = vadd.f32 %v4742, 1.0
          %v4852 = vadd.f32 %v4744, 1.0
          %v4853 = vadd.f32 %v4746, 1.0
          %v4854 = vadd.f32 %v4748, 1.0
          %v4855 = vadd.f32 %v4750, 1.0
          %v4856 = vadd.f32 %v4752, 1.0
          %v4857 = vadd.f32 %v4754, 1.0
          %v4858 = vadd.f32 %v4756, 1.0
          %v4859 = vadd.f32 %v4758, 1.0
          %v4860 = vadd.f32 %v4760, 1.0
          %v4861 = vadd.f32 %v4762, 1.0
          %v4862 = vadd.f32 %v4764, 1.0
          %v4863 = vadd.f32 %v4766, 1.0
          %v4864 = vadd.f32 %v4768, 1.0
          %v4865 = vadd.f32 %v4770, 1.0
          %v4866 = vadd.f32 %v4772, 1.0
          %v4867 = vadd.f32 %v4774, 1.0
          %v4868 = vadd.f32 %v4776, 1.0
          %v4869 = vadd.f32 %v4778, 1.0
          %v4870 = vadd.f32 %v4780, 1.0
          %v4871 = vadd.f32 %v4782, 1.0
          %v4872 = vadd.f32 %v4784, 1.0
          %v4873 = vadd.f32 %v4786, 1.0
          %v4874 = vadd.f32 %v4788, 1.0
          %v4875 = vadd.f32 %v4790, 1.0
          %v4876 = vadd.f32 %v4792, 1.0
          %v4877 = vadd.f32 %v4794, 1.0
          %v4878 = vadd.f32 %v4796, 1.0
          %v4879 = vadd.f32 %v4798, 1.0
          %v4880 = vadd.f32 %v4800, 1.0
          %v4881 = vadd.f32 %v4802, 1.0
          %v4882 = vadd.f32 %v4804, 1.0
          %v4883 = vadd.f32 %v4806, 1.0
          %v4884 = vadd.f32 %v4808, 1.0
          %v4885 = vadd.f32 %v4810, 1.0
          %v4886 = vadd.f32 %v4812, 1.0
          %v4887 = vadd.f32 %v4814, 1.0
          %v4888 = vadd.f32 %v4816, 1.0
          %v4889 = vadd.f32 %v4818, 1.0
          %v4890 = vadd.f32 %v4820, 1.0
          %v4891 = vadd.f32 %v4822, 1.0
          %v4892 = vadd.f32 %v4824, 1.0
          %v4893 = vadd.f32 %v4826, 1.0
          %v4894 = vadd.f32 %v4828, 1.0
          %v4895 = vadd.f32 %v4830, 1.0
          %v4896 = vadd.f32 %v4832, 1.0
          %v4897 = vrcp.pop %v4833
          %v4898 = vmul.f32 1.0, %v4897
          %v4899 = vrcp.pop %v4834
          %v4900 = vmul.f32 1.0, %v4899
          %v4901 = vrcp.pop %v4835
          %v4902 = vmul.f32 1.0, %v4901
          %v4903 = vrcp.pop %v4836
          %v4904 = vmul.f32 1.0, %v4903
          %v4905 = vrcp.pop %v4837
          %v4906 = vmul.f32 1.0, %v4905
          %v4907 = vrcp.pop %v4838
          %v4908 = vmul.f32 1.0, %v4907
          %v4909 = vrcp.pop %v4839
          %v4910 = vmul.f32 1.0, %v4909
          %v4911 = vrcp.pop %v4840
          %v4912 = vmul.f32 1.0, %v4911
          %v4913 = vrcp.pop %v4841
          %v4914 = vmul.f32 1.0, %v4913
          %v4915 = vrcp.pop %v4842
          %v4916 = vmul.f32 1.0, %v4915
          %v4917 = vrcp.pop %v4843
          %v4918 = vmul.f32 1.0, %v4917
          %v4919 = vrcp.pop %v4844
          %v4920 = vmul.f32 1.0, %v4919
          %v4921 = vrcp.pop %v4845
          %v4922 = vmul.f32 1.0, %v4921
          %v4923 = vrcp.pop %v4846
          %v4924 = vmul.f32 1.0, %v4923
          %v4925 = vrcp.pop %v4847
          %v4926 = vmul.f32 1.0, %v4925
          %v4927 = vrcp.pop %v4848
          %v4928 = vmul.f32 1.0, %v4927
          %v4929 = vrcp.pop %v4849
          %v4930 = vmul.f32 1.0, %v4929
          %v4931 = vrcp.pop %v4850
          %v4932 = vmul.f32 1.0, %v4931
          %v4933 = vrcp.pop %v4851
          %v4934 = vmul.f32 1.0, %v4933
          %v4935 = vrcp.pop %v4852
          %v4936 = vmul.f32 1.0, %v4935
          %v4937 = vrcp.pop %v4853
          %v4938 = vmul.f32 1.0, %v4937
          %v4939 = vrcp.pop %v4854
          %v4940 = vmul.f32 1.0, %v4939
          %v4941 = vrcp.pop %v4855
          %v4942 = vmul.f32 1.0, %v4941
          %v4943 = vrcp.pop %v4856
          %v4944 = vmul.f32 1.0, %v4943
          %v4945 = vrcp.pop %v4857
          %v4946 = vmul.f32 1.0, %v4945
          %v4947 = vrcp.pop %v4858
          %v4948 = vmul.f32 1.0, %v4947
          %v4949 = vrcp.pop %v4859
          %v4950 = vmul.f32 1.0, %v4949
          %v4951 = vrcp.pop %v4860
          %v4952 = vmul.f32 1.0, %v4951
          %v4953 = vrcp.pop %v4861
          %v4954 = vmul.f32 1.0, %v4953
          %v4955 = vrcp.pop %v4862
          %v4956 = vmul.f32 1.0, %v4955
          %v4957 = vrcp.pop %v4863
          %v4958 = vmul.f32 1.0, %v4957
          %v4959 = vrcp.pop %v4864
          %v4960 = vmul.f32 1.0, %v4959
          %v4961 = vrcp.pop %v4865
          %v4962 = vmul.f32 1.0, %v4961
          %v4963 = vrcp.pop %v4866
          %v4964 = vmul.f32 1.0, %v4963
          %v4965 = vrcp.pop %v4867
          %v4966 = vmul.f32 1.0, %v4965
          %v4967 = vrcp.pop %v4868
          %v4968 = vmul.f32 1.0, %v4967
          %v4969 = vrcp.pop %v4869
          %v4970 = vmul.f32 1.0, %v4969
          %v4971 = vrcp.pop %v4870
          %v4972 = vmul.f32 1.0, %v4971
          %v4973 = vrcp.pop %v4871
          %v4974 = vmul.f32 1.0, %v4973
          %v4975 = vrcp.pop %v4872
          %v4976 = vmul.f32 1.0, %v4975
          %v4977 = vrcp.pop %v4873
          %v4978 = vmul.f32 1.0, %v4977
          %v4979 = vrcp.pop %v4874
          %v4980 = vmul.f32 1.0, %v4979
          %v4981 = vrcp.pop %v4875
          %v4982 = vmul.f32 1.0, %v4981
          %v4983 = vrcp.pop %v4876
          %v4984 = vmul.f32 1.0, %v4983
          %v4985 = vrcp.pop %v4877
          %v4986 = vmul.f32 1.0, %v4985
          %v4987 = vrcp.pop %v4878
          %v4988 = vmul.f32 1.0, %v4987
          %v4989 = vrcp.pop %v4879
          %v4990 = vmul.f32 1.0, %v4989
          %v4991 = vrcp.pop %v4880
          %v4992 = vmul.f32 1.0, %v4991
          %v4993 = vrcp.pop %v4881
          %v4994 = vmul.f32 1.0, %v4993
          %v4995 = vrcp.pop %v4882
          %v4996 = vmul.f32 1.0, %v4995
          %v4997 = vrcp.pop %v4883
          %v4998 = vmul.f32 1.0, %v4997
          %v4999 = vrcp.pop %v4884
          %v5000 = vmul.f32 1.0, %v4999
          %v5001 = vrcp.pop %v4885
          %v5002 = vmul.f32 1.0, %v5001
          %v5003 = vrcp.pop %v4886
          %v5004 = vmul.f32 1.0, %v5003
          %v5005 = vrcp.pop %v4887
          %v5006 = vmul.f32 1.0, %v5005
          %v5007 = vrcp.pop %v4888
          %v5008 = vmul.f32 1.0, %v5007
          %v5009 = vrcp.pop %v4889
          %v5010 = vmul.f32 1.0, %v5009
          %v5011 = vrcp.pop %v4890
          %v5012 = vmul.f32 1.0, %v5011
          %v5013 = vrcp.pop %v4891
          %v5014 = vmul.f32 1.0, %v5013
          %v5015 = vrcp.pop %v4892
          %v5016 = vmul.f32 1.0, %v5015
          %v5017 = vrcp.pop %v4893
          %v5018 = vmul.f32 1.0, %v5017
          %v5019 = vrcp.pop %v4894
          %v5020 = vmul.f32 1.0, %v5019
          %v5021 = vrcp.pop %v4895
          %v5022 = vmul.f32 1.0, %v5021
          %v5023 = vrcp.pop %v4896
          %v5024 = vmul.f32 1.0, %v5023
          %v5025 = vmul.f32 %v4577, %v4898
          %v5026 = vmul.f32 %v4578, %v4900
          %v5027 = vmul.f32 %v4579, %v4902
          %v5028 = vmul.f32 %v4580, %v4904
          %v5029 = vmul.f32 %v4581, %v4906
          %v5030 = vmul.f32 %v4582, %v4908
          %v5031 = vmul.f32 %v4583, %v4910
          %v5032 = vmul.f32 %v4584, %v4912
          %v5033 = vmul.f32 %v4585, %v4914
          %v5034 = vmul.f32 %v4586, %v4916
          %v5035 = vmul.f32 %v4587, %v4918
          %v5036 = vmul.f32 %v4588, %v4920
          %v5037 = vmul.f32 %v4589, %v4922
          %v5038 = vmul.f32 %v4590, %v4924
          %v5039 = vmul.f32 %v4591, %v4926
          %v5040 = vmul.f32 %v4592, %v4928
          %v5041 = vmul.f32 %v4593, %v4930
          %v5042 = vmul.f32 %v4594, %v4932
          %v5043 = vmul.f32 %v4595, %v4934
          %v5044 = vmul.f32 %v4596, %v4936
          %v5045 = vmul.f32 %v4597, %v4938
          %v5046 = vmul.f32 %v4598, %v4940
          %v5047 = vmul.f32 %v4599, %v4942
          %v5048 = vmul.f32 %v4600, %v4944
          %v5049 = vmul.f32 %v4601, %v4946
          %v5050 = vmul.f32 %v4602, %v4948
          %v5051 = vmul.f32 %v4603, %v4950
          %v5052 = vmul.f32 %v4604, %v4952
          %v5053 = vmul.f32 %v4605, %v4954
          %v5054 = vmul.f32 %v4606, %v4956
          %v5055 = vmul.f32 %v4607, %v4958
          %v5056 = vmul.f32 %v4608, %v4960
          %v5057 = vmul.f32 %v4609, %v4962
          %v5058 = vmul.f32 %v4610, %v4964
          %v5059 = vmul.f32 %v4611, %v4966
          %v5060 = vmul.f32 %v4612, %v4968
          %v5061 = vmul.f32 %v4613, %v4970
          %v5062 = vmul.f32 %v4614, %v4972
          %v5063 = vmul.f32 %v4615, %v4974
          %v5064 = vmul.f32 %v4616, %v4976
          %v5065 = vmul.f32 %v4617, %v4978
          %v5066 = vmul.f32 %v4618, %v4980
          %v5067 = vmul.f32 %v4619, %v4982
          %v5068 = vmul.f32 %v4620, %v4984
          %v5069 = vmul.f32 %v4621, %v4986
          %v5070 = vmul.f32 %v4622, %v4988
          %v5071 = vmul.f32 %v4623, %v4990
          %v5072 = vmul.f32 %v4624, %v4992
          %v5073 = vmul.f32 %v4625, %v4994
          %v5074 = vmul.f32 %v4626, %v4996
          %v5075 = vmul.f32 %v4627, %v4998
          %v5076 = vmul.f32 %v4628, %v5000
          %v5077 = vmul.f32 %v4629, %v5002
          %v5078 = vmul.f32 %v4630, %v5004
          %v5079 = vmul.f32 %v4631, %v5006
          %v5080 = vmul.f32 %v4632, %v5008
          %v5081 = vmul.f32 %v4633, %v5010
          %v5082 = vmul.f32 %v4634, %v5012
          %v5083 = vmul.f32 %v4635, %v5014
          %v5084 = vmul.f32 %v4636, %v5016
          %v5085 = vmul.f32 %v4637, %v5018
          %v5086 = vmul.f32 %v4638, %v5020
          %v5087 = vmul.f32 %v4639, %v5022
          %v5088 = vmul.f32 %v4640, %v5024
          %v5089 = vrot.slane %v5025, 7
          %v5090 = vrot.slane %v5026, 7
          %v5091 = vrot.slane %v5027, 7
          %v5092 = vrot.slane %v5028, 7
          %v5093 = vrot.slane %v5029, 7
          %v5094 = vrot.slane %v5030, 7
          %v5095 = vrot.slane %v5031, 7
          %v5096 = vrot.slane %v5032, 7
          %v5097 = vrot.slane %v5033, 7
          %v5098 = vrot.slane %v5034, 7
          %v5099 = vrot.slane %v5035, 7
          %v5100 = vrot.slane %v5036, 7
          %v5101 = vrot.slane %v5037, 7
          %v5102 = vrot.slane %v5038, 7
          %v5103 = vrot.slane %v5039, 7
          %v5104 = vrot.slane %v5040, 7
          %v5105 = vrot.slane %v5041, 7
          %v5106 = vrot.slane %v5042, 7
          %v5107 = vrot.slane %v5043, 7
          %v5108 = vrot.slane %v5044, 7
          %v5109 = vrot.slane %v5045, 7
          %v5110 = vrot.slane %v5046, 7
          %v5111 = vrot.slane %v5047, 7
          %v5112 = vrot.slane %v5048, 7
          %v5113 = vrot.slane %v5049, 7
          %v5114 = vrot.slane %v5050, 7
          %v5115 = vrot.slane %v5051, 7
          %v5116 = vrot.slane %v5052, 7
          %v5117 = vrot.slane %v5053, 7
          %v5118 = vrot.slane %v5054, 7
          %v5119 = vrot.slane %v5055, 7
          %v5120 = vrot.slane %v5056, 7
          %v5121 = vrot.slane %v5057, 7
          %v5122 = vrot.slane %v5058, 7
          %v5123 = vrot.slane %v5059, 7
          %v5124 = vrot.slane %v5060, 7
          %v5125 = vrot.slane %v5061, 7
          %v5126 = vrot.slane %v5062, 7
          %v5127 = vrot.slane %v5063, 7
          %v5128 = vrot.slane %v5064, 7
          %v5129 = vrot.slane %v5065, 7
          %v5130 = vrot.slane %v5066, 7
          %v5131 = vrot.slane %v5067, 7
          %v5132 = vrot.slane %v5068, 7
          %v5133 = vrot.slane %v5069, 7
          %v5134 = vrot.slane %v5070, 7
          %v5135 = vrot.slane %v5071, 7
          %v5136 = vrot.slane %v5072, 7
          %v5137 = vrot.slane %v5073, 7
          %v5138 = vrot.slane %v5074, 7
          %v5139 = vrot.slane %v5075, 7
          %v5140 = vrot.slane %v5076, 7
          %v5141 = vrot.slane %v5077, 7
          %v5142 = vrot.slane %v5078, 7
          %v5143 = vrot.slane %v5079, 7
          %v5144 = vrot.slane %v5080, 7
          %v5145 = vrot.slane %v5081, 7
          %v5146 = vrot.slane %v5082, 7
          %v5147 = vrot.slane %v5083, 7
          %v5148 = vrot.slane %v5084, 7
          %v5149 = vrot.slane %v5085, 7
          %v5150 = vrot.slane %v5086, 7
          %v5151 = vrot.slane %v5087, 7
          %v5152 = vrot.slane %v5088, 7
          %v5153 = vsel %vm2067, %v5151, 0.0
          %v5154 = vsel %vm2067, %v5152, 0.0
          %v5155 = vsel %vm2067, %v5149, %v5151
          %v5156 = vsel %vm2067, %v5150, %v5152
          %v5157 = vsel %vm2067, %v5147, %v5149
          %v5158 = vsel %vm2067, %v5148, %v5150
          %v5159 = vsel %vm2067, %v5145, %v5147
          %v5160 = vsel %vm2067, %v5146, %v5148
          %v5161 = vsel %vm2067, %v5143, %v5145
          %v5162 = vsel %vm2067, %v5144, %v5146
          %v5163 = vsel %vm2067, %v5141, %v5143
          %v5164 = vsel %vm2067, %v5142, %v5144
          %v5165 = vsel %vm2067, %v5139, %v5141
          %v5166 = vsel %vm2067, %v5140, %v5142
          %v5167 = vsel %vm2067, %v5137, %v5139
          %v5168 = vsel %vm2067, %v5138, %v5140
          %v5169 = vsel %vm2067, %v5135, %v5137
          %v5170 = vsel %vm2067, %v5136, %v5138
          %v5171 = vsel %vm2067, %v5133, %v5135
          %v5172 = vsel %vm2067, %v5134, %v5136
          %v5173 = vsel %vm2067, %v5131, %v5133
          %v5174 = vsel %vm2067, %v5132, %v5134
          %v5175 = vsel %vm2067, %v5129, %v5131
          %v5176 = vsel %vm2067, %v5130, %v5132
          %v5177 = vsel %vm2067, %v5127, %v5129
          %v5178 = vsel %vm2067, %v5128, %v5130
          %v5179 = vsel %vm2067, %v5125, %v5127
          %v5180 = vsel %vm2067, %v5126, %v5128
          %v5181 = vsel %vm2067, %v5123, %v5125
          %v5182 = vsel %vm2067, %v5124, %v5126
          %v5183 = vsel %vm2067, %v5121, %v5123
          %v5184 = vsel %vm2067, %v5122, %v5124
          %v5185 = vsel %vm2067, %v5119, %v5121
          %v5186 = vsel %vm2067, %v5120, %v5122
          %v5187 = vsel %vm2067, %v5117, %v5119
          %v5188 = vsel %vm2067, %v5118, %v5120
          %v5189 = vsel %vm2067, %v5115, %v5117
          %v5190 = vsel %vm2067, %v5116, %v5118
          %v5191 = vsel %vm2067, %v5113, %v5115
          %v5192 = vsel %vm2067, %v5114, %v5116
          %v5193 = vsel %vm2067, %v5111, %v5113
          %v5194 = vsel %vm2067, %v5112, %v5114
          %v5195 = vsel %vm2067, %v5109, %v5111
          %v5196 = vsel %vm2067, %v5110, %v5112
          %v5197 = vsel %vm2067, %v5107, %v5109
          %v5198 = vsel %vm2067, %v5108, %v5110
          %v5199 = vsel %vm2067, %v5105, %v5107
          %v5200 = vsel %vm2067, %v5106, %v5108
          %v5201 = vsel %vm2067, %v5103, %v5105
          %v5202 = vsel %vm2067, %v5104, %v5106
          %v5203 = vsel %vm2067, %v5101, %v5103
          %v5204 = vsel %vm2067, %v5102, %v5104
          %v5205 = vsel %vm2067, %v5099, %v5101
          %v5206 = vsel %vm2067, %v5100, %v5102
          %v5207 = vsel %vm2067, %v5097, %v5099
          %v5208 = vsel %vm2067, %v5098, %v5100
          %v5209 = vsel %vm2067, %v5095, %v5097
          %v5210 = vsel %vm2067, %v5096, %v5098
          %v5211 = vsel %vm2067, %v5093, %v5095
          %v5212 = vsel %vm2067, %v5094, %v5096
          %v5213 = vsel %vm2067, %v5091, %v5093
          %v5214 = vsel %vm2067, %v5092, %v5094
          %v5215 = vsel %vm2067, %v5089, %v5091
          %v5216 = vsel %vm2067, %v5090, %v5092
          %v5217 = vsel %vm2067, 0.0, %v5089
          %v5218 = vsel %vm2067, 0.0, %v5090
          %v5219 = vsel %vm2175, %v5217, 0.0
          %v5220 = vsel %vm2175, %v5218, 0.0
          %v5221 = vsel %vm2176, %v5215, 0.0
          %v5222 = vsel %vm2176, %v5216, 0.0
          %v5223 = vsel %vm2177, %v5213, 0.0
          %v5224 = vsel %vm2177, %v5214, 0.0
          %v5225 = vsel %vm2178, %v5211, 0.0
          %v5226 = vsel %vm2178, %v5212, 0.0
          %v5227 = vsel %vm2179, %v5209, 0.0
          %v5228 = vsel %vm2179, %v5210, 0.0
          %v5229 = vsel %vm2180, %v5207, 0.0
          %v5230 = vsel %vm2180, %v5208, 0.0
          %v5231 = vsel %vm2181, %v5205, 0.0
          %v5232 = vsel %vm2181, %v5206, 0.0
          %v5233 = vsel %vm2182, %v5203, 0.0
          %v5234 = vsel %vm2182, %v5204, 0.0
          %v5235 = vsel %vm2183, %v5201, 0.0
          %v5236 = vsel %vm2183, %v5202, 0.0
          %v5237 = vsel %vm2184, %v5199, 0.0
          %v5238 = vsel %vm2184, %v5200, 0.0
          %v5239 = vsel %vm2185, %v5197, 0.0
          %v5240 = vsel %vm2185, %v5198, 0.0
          %v5241 = vsel %vm2186, %v5195, 0.0
          %v5242 = vsel %vm2186, %v5196, 0.0
          %v5243 = vsel %vm2187, %v5193, 0.0
          %v5244 = vsel %vm2187, %v5194, 0.0
          %v5245 = vsel %vm2188, %v5191, 0.0
          %v5246 = vsel %vm2188, %v5192, 0.0
          %v5247 = vsel %vm2189, %v5189, 0.0
          %v5248 = vsel %vm2189, %v5190, 0.0
          %v5249 = vsel %vm2190, %v5187, 0.0
          %v5250 = vsel %vm2190, %v5188, 0.0
          %v5251 = vsel %vm2191, %v5185, 0.0
          %v5252 = vsel %vm2191, %v5186, 0.0
          %v5253 = vsel %vm2192, %v5183, 0.0
          %v5254 = vsel %vm2192, %v5184, 0.0
          %v5255 = vsel %vm2193, %v5181, 0.0
          %v5256 = vsel %vm2193, %v5182, 0.0
          %v5257 = vsel %vm2194, %v5179, 0.0
          %v5258 = vsel %vm2194, %v5180, 0.0
          %v5259 = vsel %vm2195, %v5177, 0.0
          %v5260 = vsel %vm2195, %v5178, 0.0
          %v5261 = vsel %vm2196, %v5175, 0.0
          %v5262 = vsel %vm2196, %v5176, 0.0
          %v5263 = vsel %vm2197, %v5173, 0.0
          %v5264 = vsel %vm2197, %v5174, 0.0
          %v5265 = vsel %vm2198, %v5171, 0.0
          %v5266 = vsel %vm2198, %v5172, 0.0
          %v5267 = vsel %vm2199, %v5169, 0.0
          %v5268 = vsel %vm2199, %v5170, 0.0
          %v5269 = vsel %vm2200, %v5167, 0.0
          %v5270 = vsel %vm2200, %v5168, 0.0
          %v5271 = vsel %vm2201, %v5165, 0.0
          %v5272 = vsel %vm2201, %v5166, 0.0
          %v5273 = vsel %vm2202, %v5163, 0.0
          %v5274 = vsel %vm2202, %v5164, 0.0
          %v5275 = vsel %vm2203, %v5161, 0.0
          %v5276 = vsel %vm2203, %v5162, 0.0
          %v5277 = vsel %vm2204, %v5159, 0.0
          %v5278 = vsel %vm2204, %v5160, 0.0
          %v5279 = vsel %vm2205, %v5157, 0.0
          %v5280 = vsel %vm2205, %v5158, 0.0
          %v5281 = vsel %vm2206, %v5155, 0.0
          %v5282 = vsel %vm2206, %v5156, 0.0
          %v5283 = vsel %vm2207, %v5153, 0.0
          %v5284 = vsel %vm2207, %v5154, 0.0
          %v5285 = vrot.slane %v5025, 1
          %v5286 = vrot.slane %v5026, 1
          %v5287 = vrot.slane %v5027, 1
          %v5288 = vrot.slane %v5028, 1
          %v5289 = vrot.slane %v5029, 1
          %v5290 = vrot.slane %v5030, 1
          %v5291 = vrot.slane %v5031, 1
          %v5292 = vrot.slane %v5032, 1
          %v5293 = vrot.slane %v5033, 1
          %v5294 = vrot.slane %v5034, 1
          %v5295 = vrot.slane %v5035, 1
          %v5296 = vrot.slane %v5036, 1
          %v5297 = vrot.slane %v5037, 1
          %v5298 = vrot.slane %v5038, 1
          %v5299 = vrot.slane %v5039, 1
          %v5300 = vrot.slane %v5040, 1
          %v5301 = vrot.slane %v5041, 1
          %v5302 = vrot.slane %v5042, 1
          %v5303 = vrot.slane %v5043, 1
          %v5304 = vrot.slane %v5044, 1
          %v5305 = vrot.slane %v5045, 1
          %v5306 = vrot.slane %v5046, 1
          %v5307 = vrot.slane %v5047, 1
          %v5308 = vrot.slane %v5048, 1
          %v5309 = vrot.slane %v5049, 1
          %v5310 = vrot.slane %v5050, 1
          %v5311 = vrot.slane %v5051, 1
          %v5312 = vrot.slane %v5052, 1
          %v5313 = vrot.slane %v5053, 1
          %v5314 = vrot.slane %v5054, 1
          %v5315 = vrot.slane %v5055, 1
          %v5316 = vrot.slane %v5056, 1
          %v5317 = vrot.slane %v5057, 1
          %v5318 = vrot.slane %v5058, 1
          %v5319 = vrot.slane %v5059, 1
          %v5320 = vrot.slane %v5060, 1
          %v5321 = vrot.slane %v5061, 1
          %v5322 = vrot.slane %v5062, 1
          %v5323 = vrot.slane %v5063, 1
          %v5324 = vrot.slane %v5064, 1
          %v5325 = vrot.slane %v5065, 1
          %v5326 = vrot.slane %v5066, 1
          %v5327 = vrot.slane %v5067, 1
          %v5328 = vrot.slane %v5068, 1
          %v5329 = vrot.slane %v5069, 1
          %v5330 = vrot.slane %v5070, 1
          %v5331 = vrot.slane %v5071, 1
          %v5332 = vrot.slane %v5072, 1
          %v5333 = vrot.slane %v5073, 1
          %v5334 = vrot.slane %v5074, 1
          %v5335 = vrot.slane %v5075, 1
          %v5336 = vrot.slane %v5076, 1
          %v5337 = vrot.slane %v5077, 1
          %v5338 = vrot.slane %v5078, 1
          %v5339 = vrot.slane %v5079, 1
          %v5340 = vrot.slane %v5080, 1
          %v5341 = vrot.slane %v5081, 1
          %v5342 = vrot.slane %v5082, 1
          %v5343 = vrot.slane %v5083, 1
          %v5344 = vrot.slane %v5084, 1
          %v5345 = vrot.slane %v5085, 1
          %v5346 = vrot.slane %v5086, 1
          %v5347 = vrot.slane %v5087, 1
          %v5348 = vrot.slane %v5088, 1
          %v5349 = vsel %vm2277, %v5347, 0.0
          %v5350 = vsel %vm2277, %v5348, 0.0
          %v5351 = vsel %vm2277, %v5345, %v5347
          %v5352 = vsel %vm2277, %v5346, %v5348
          %v5353 = vsel %vm2277, %v5343, %v5345
          %v5354 = vsel %vm2277, %v5344, %v5346
          %v5355 = vsel %vm2277, %v5341, %v5343
          %v5356 = vsel %vm2277, %v5342, %v5344
          %v5357 = vsel %vm2277, %v5339, %v5341
          %v5358 = vsel %vm2277, %v5340, %v5342
          %v5359 = vsel %vm2277, %v5337, %v5339
          %v5360 = vsel %vm2277, %v5338, %v5340
          %v5361 = vsel %vm2277, %v5335, %v5337
          %v5362 = vsel %vm2277, %v5336, %v5338
          %v5363 = vsel %vm2277, %v5333, %v5335
          %v5364 = vsel %vm2277, %v5334, %v5336
          %v5365 = vsel %vm2277, %v5331, %v5333
          %v5366 = vsel %vm2277, %v5332, %v5334
          %v5367 = vsel %vm2277, %v5329, %v5331
          %v5368 = vsel %vm2277, %v5330, %v5332
          %v5369 = vsel %vm2277, %v5327, %v5329
          %v5370 = vsel %vm2277, %v5328, %v5330
          %v5371 = vsel %vm2277, %v5325, %v5327
          %v5372 = vsel %vm2277, %v5326, %v5328
          %v5373 = vsel %vm2277, %v5323, %v5325
          %v5374 = vsel %vm2277, %v5324, %v5326
          %v5375 = vsel %vm2277, %v5321, %v5323
          %v5376 = vsel %vm2277, %v5322, %v5324
          %v5377 = vsel %vm2277, %v5319, %v5321
          %v5378 = vsel %vm2277, %v5320, %v5322
          %v5379 = vsel %vm2277, %v5317, %v5319
          %v5380 = vsel %vm2277, %v5318, %v5320
          %v5381 = vsel %vm2277, %v5315, %v5317
          %v5382 = vsel %vm2277, %v5316, %v5318
          %v5383 = vsel %vm2277, %v5313, %v5315
          %v5384 = vsel %vm2277, %v5314, %v5316
          %v5385 = vsel %vm2277, %v5311, %v5313
          %v5386 = vsel %vm2277, %v5312, %v5314
          %v5387 = vsel %vm2277, %v5309, %v5311
          %v5388 = vsel %vm2277, %v5310, %v5312
          %v5389 = vsel %vm2277, %v5307, %v5309
          %v5390 = vsel %vm2277, %v5308, %v5310
          %v5391 = vsel %vm2277, %v5305, %v5307
          %v5392 = vsel %vm2277, %v5306, %v5308
          %v5393 = vsel %vm2277, %v5303, %v5305
          %v5394 = vsel %vm2277, %v5304, %v5306
          %v5395 = vsel %vm2277, %v5301, %v5303
          %v5396 = vsel %vm2277, %v5302, %v5304
          %v5397 = vsel %vm2277, %v5299, %v5301
          %v5398 = vsel %vm2277, %v5300, %v5302
          %v5399 = vsel %vm2277, %v5297, %v5299
          %v5400 = vsel %vm2277, %v5298, %v5300
          %v5401 = vsel %vm2277, %v5295, %v5297
          %v5402 = vsel %vm2277, %v5296, %v5298
          %v5403 = vsel %vm2277, %v5293, %v5295
          %v5404 = vsel %vm2277, %v5294, %v5296
          %v5405 = vsel %vm2277, %v5291, %v5293
          %v5406 = vsel %vm2277, %v5292, %v5294
          %v5407 = vsel %vm2277, %v5289, %v5291
          %v5408 = vsel %vm2277, %v5290, %v5292
          %v5409 = vsel %vm2277, %v5287, %v5289
          %v5410 = vsel %vm2277, %v5288, %v5290
          %v5411 = vsel %vm2277, %v5285, %v5287
          %v5412 = vsel %vm2277, %v5286, %v5288
          %v5413 = vsel %vm2277, 0.0, %v5285
          %v5414 = vsel %vm2277, 0.0, %v5286
          %v5415 = vsel %vm2384, %v5413, 0.0
          %v5416 = vsel %vm2384, %v5414, 0.0
          %v5417 = vsel %vm2385, %v5411, 0.0
          %v5418 = vsel %vm2385, %v5412, 0.0
          %v5419 = vsel %vm2386, %v5409, 0.0
          %v5420 = vsel %vm2386, %v5410, 0.0
          %v5421 = vsel %vm2387, %v5407, 0.0
          %v5422 = vsel %vm2387, %v5408, 0.0
          %v5423 = vsel %vm2388, %v5405, 0.0
          %v5424 = vsel %vm2388, %v5406, 0.0
          %v5425 = vsel %vm2389, %v5403, 0.0
          %v5426 = vsel %vm2389, %v5404, 0.0
          %v5427 = vsel %vm2390, %v5401, 0.0
          %v5428 = vsel %vm2390, %v5402, 0.0
          %v5429 = vsel %vm2391, %v5399, 0.0
          %v5430 = vsel %vm2391, %v5400, 0.0
          %v5431 = vsel %vm2392, %v5397, 0.0
          %v5432 = vsel %vm2392, %v5398, 0.0
          %v5433 = vsel %vm2393, %v5395, 0.0
          %v5434 = vsel %vm2393, %v5396, 0.0
          %v5435 = vsel %vm2394, %v5393, 0.0
          %v5436 = vsel %vm2394, %v5394, 0.0
          %v5437 = vsel %vm2395, %v5391, 0.0
          %v5438 = vsel %vm2395, %v5392, 0.0
          %v5439 = vsel %vm2396, %v5389, 0.0
          %v5440 = vsel %vm2396, %v5390, 0.0
          %v5441 = vsel %vm2397, %v5387, 0.0
          %v5442 = vsel %vm2397, %v5388, 0.0
          %v5443 = vsel %vm2398, %v5385, 0.0
          %v5444 = vsel %vm2398, %v5386, 0.0
          %v5445 = vsel %vm2399, %v5383, 0.0
          %v5446 = vsel %vm2399, %v5384, 0.0
          %v5447 = vsel %vm2400, %v5381, 0.0
          %v5448 = vsel %vm2400, %v5382, 0.0
          %v5449 = vsel %vm2401, %v5379, 0.0
          %v5450 = vsel %vm2401, %v5380, 0.0
          %v5451 = vsel %vm2402, %v5377, 0.0
          %v5452 = vsel %vm2402, %v5378, 0.0
          %v5453 = vsel %vm2403, %v5375, 0.0
          %v5454 = vsel %vm2403, %v5376, 0.0
          %v5455 = vsel %vm2404, %v5373, 0.0
          %v5456 = vsel %vm2404, %v5374, 0.0
          %v5457 = vsel %vm2405, %v5371, 0.0
          %v5458 = vsel %vm2405, %v5372, 0.0
          %v5459 = vsel %vm2406, %v5369, 0.0
          %v5460 = vsel %vm2406, %v5370, 0.0
          %v5461 = vsel %vm2407, %v5367, 0.0
          %v5462 = vsel %vm2407, %v5368, 0.0
          %v5463 = vsel %vm2408, %v5365, 0.0
          %v5464 = vsel %vm2408, %v5366, 0.0
          %v5465 = vsel %vm2409, %v5363, 0.0
          %v5466 = vsel %vm2409, %v5364, 0.0
          %v5467 = vsel %vm2410, %v5361, 0.0
          %v5468 = vsel %vm2410, %v5362, 0.0
          %v5469 = vsel %vm2411, %v5359, 0.0
          %v5470 = vsel %vm2411, %v5360, 0.0
          %v5471 = vsel %vm2412, %v5357, 0.0
          %v5472 = vsel %vm2412, %v5358, 0.0
          %v5473 = vsel %vm2413, %v5355, 0.0
          %v5474 = vsel %vm2413, %v5356, 0.0
          %v5475 = vsel %vm2414, %v5353, 0.0
          %v5476 = vsel %vm2414, %v5354, 0.0
          %v5477 = vsel %vm2415, %v5351, 0.0
          %v5478 = vsel %vm2415, %v5352, 0.0
          %v5479 = vsel %vm2416, %v5349, 0.0
          %v5480 = vsel %vm2416, %v5350, 0.0
          %v5481 = vpack.c.bf16 %v2210, %v2209
          %v5482 = vpack.c.bf16 0.0, 0.0
          %v5483 = vpack.c.bf16 %v5415, %v2419
          %v5484 = vpack.c.bf16 %v5416, %v2419
          %v5485 = vpack.c.bf16 %v5221, %v5219
          %v5486 = vpack.c.bf16 %v5222, %v5220
          %v5487 = vpack.c.bf16 %v5027, %v5025
          %v5488 = vpack.c.bf16 %v5028, %v5026
          %v5489 = vpack.c.bf16 %v5419, %v5417
          %v5490 = vpack.c.bf16 %v5420, %v5418
          %v5491 = vpack.c.bf16 %v5225, %v5223
          %v5492 = vpack.c.bf16 %v5226, %v5224
          %v5493 = vpack.c.bf16 %v5031, %v5029
          %v5494 = vpack.c.bf16 %v5032, %v5030
          %v5495 = vpack.c.bf16 %v5423, %v5421
          %v5496 = vpack.c.bf16 %v5424, %v5422
          %v5497 = vpack.c.bf16 %v5229, %v5227
          %v5498 = vpack.c.bf16 %v5230, %v5228
          %v5499 = vpack.c.bf16 %v5035, %v5033
          %v5500 = vpack.c.bf16 %v5036, %v5034
          %v5501 = vpack.c.bf16 %v5427, %v5425
          %v5502 = vpack.c.bf16 %v5428, %v5426
          %v5503 = vpack.c.bf16 %v5233, %v5231
          %v5504 = vpack.c.bf16 %v5234, %v5232
          %v5505 = vpack.c.bf16 %v5039, %v5037
          %v5506 = vpack.c.bf16 %v5040, %v5038
          %v5507 = vpack.c.bf16 %v5431, %v5429
          %v5508 = vpack.c.bf16 %v5432, %v5430
          %v5509 = vpack.c.bf16 %v5237, %v5235
          %v5510 = vpack.c.bf16 %v5238, %v5236
          %v5511 = vpack.c.bf16 %v5043, %v5041
          %v5512 = vpack.c.bf16 %v5044, %v5042
          %v5513 = vpack.c.bf16 %v5435, %v5433
          %v5514 = vpack.c.bf16 %v5436, %v5434
          %v5515 = vpack.c.bf16 %v5241, %v5239
          %v5516 = vpack.c.bf16 %v5242, %v5240
          %v5517 = vpack.c.bf16 %v5047, %v5045
          %v5518 = vpack.c.bf16 %v5048, %v5046
          %v5519 = vpack.c.bf16 %v5439, %v5437
          %v5520 = vpack.c.bf16 %v5440, %v5438
          %v5521 = vpack.c.bf16 %v5245, %v5243
          %v5522 = vpack.c.bf16 %v5246, %v5244
          %v5523 = vpack.c.bf16 %v5051, %v5049
          %v5524 = vpack.c.bf16 %v5052, %v5050
          %v5525 = vpack.c.bf16 %v5443, %v5441
          %v5526 = vpack.c.bf16 %v5444, %v5442
          %v5527 = vpack.c.bf16 %v5249, %v5247
          %v5528 = vpack.c.bf16 %v5250, %v5248
          %v5529 = vpack.c.bf16 %v5055, %v5053
          %v5530 = vpack.c.bf16 %v5056, %v5054
          %v5531 = vpack.c.bf16 %v5447, %v5445
          %v5532 = vpack.c.bf16 %v5448, %v5446
          %v5533 = vpack.c.bf16 %v5253, %v5251
          %v5534 = vpack.c.bf16 %v5254, %v5252
          %v5535 = vpack.c.bf16 %v5059, %v5057
          %v5536 = vpack.c.bf16 %v5060, %v5058
          %v5537 = vpack.c.bf16 %v5451, %v5449
          %v5538 = vpack.c.bf16 %v5452, %v5450
          %v5539 = vpack.c.bf16 %v5257, %v5255
          %v5540 = vpack.c.bf16 %v5258, %v5256
          %v5541 = vpack.c.bf16 %v5063, %v5061
          %v5542 = vpack.c.bf16 %v5064, %v5062
          %v5543 = vpack.c.bf16 %v5455, %v5453
          %v5544 = vpack.c.bf16 %v5456, %v5454
          %v5545 = vpack.c.bf16 %v5261, %v5259
          %v5546 = vpack.c.bf16 %v5262, %v5260
          %v5547 = vpack.c.bf16 %v5067, %v5065
          %v5548 = vpack.c.bf16 %v5068, %v5066
          %v5549 = vpack.c.bf16 %v5459, %v5457
          %v5550 = vpack.c.bf16 %v5460, %v5458
          %v5551 = vpack.c.bf16 %v5265, %v5263
          %v5552 = vpack.c.bf16 %v5266, %v5264
          %v5553 = vpack.c.bf16 %v5071, %v5069
          %v5554 = vpack.c.bf16 %v5072, %v5070
          %v5555 = vpack.c.bf16 %v5463, %v5461
          %v5556 = vpack.c.bf16 %v5464, %v5462
          %v5557 = vpack.c.bf16 %v5269, %v5267
          %v5558 = vpack.c.bf16 %v5270, %v5268
          %v5559 = vpack.c.bf16 %v5075, %v5073
          %v5560 = vpack.c.bf16 %v5076, %v5074
          %v5561 = vpack.c.bf16 %v5467, %v5465
          %v5562 = vpack.c.bf16 %v5468, %v5466
          %v5563 = vpack.c.bf16 %v5273, %v5271
          %v5564 = vpack.c.bf16 %v5274, %v5272
          %v5565 = vpack.c.bf16 %v5079, %v5077
          %v5566 = vpack.c.bf16 %v5080, %v5078
          %v5567 = vpack.c.bf16 %v5471, %v5469
          %v5568 = vpack.c.bf16 %v5472, %v5470
          %v5569 = vpack.c.bf16 %v5277, %v5275
          %v5570 = vpack.c.bf16 %v5278, %v5276
          %v5571 = vpack.c.bf16 %v5083, %v5081
          %v5572 = vpack.c.bf16 %v5084, %v5082
          %v5573 = vpack.c.bf16 %v5475, %v5473
          %v5574 = vpack.c.bf16 %v5476, %v5474
          %v5575 = vpack.c.bf16 %v5281, %v5279
          %v5576 = vpack.c.bf16 %v5282, %v5280
          %v5577 = vpack.c.bf16 %v5087, %v5085
          %v5578 = vpack.c.bf16 %v5088, %v5086
          %v5579 = vpack.c.bf16 %v5479, %v5477
          %v5580 = vpack.c.bf16 %v5480, %v5478
          %v5581 = vpack.c.bf16 %v2244, %v5283
          %v5582 = vpack.c.bf16 %v2244, %v5284
          %5583 = vst [vmem:[#allocation2] sm:$0xff] %v5481
          %5584 = vst [vmem:[#allocation2 + $0x8] sm:$0xff] %v5481
          %5585 = vst [vmem:[#allocation2 + $0x10] sm:$0xff] %v5482
          %5586 = vst [vmem:[#allocation2 + $0x18] sm:$0xff] %v5482
          %5587 = vst [vmem:[#allocation2 + $0x20] sm:$0xff] %v5483
          %5588 = vst [vmem:[#allocation2 + $0x28] sm:$0xff] %v5484
          %5589 = vst [vmem:[#allocation2 + $0x30] sm:$0xff] %v5485
          %5590 = vst [vmem:[#allocation2 + $0x38] sm:$0xff] %v5486
          %5591 = vst [vmem:[#allocation2 + $0x40] sm:$0xff] %v5487
          %5592 = vst [vmem:[#allocation2 + $0x48] sm:$0xff] %v5488
          %5593 = vst [vmem:[#allocation2 + $0x50] sm:$0xff] %v5489
          %5594 = vst [vmem:[#allocation2 + $0x58] sm:$0xff] %v5490
          %5595 = vst [vmem:[#allocation2 + $0x60] sm:$0xff] %v5491
          %5596 = vst [vmem:[#allocation2 + $0x68] sm:$0xff] %v5492
          %5597 = vst [vmem:[#allocation2 + $0x70] sm:$0xff] %v5493
          %5598 = vst [vmem:[#allocation2 + $0x78] sm:$0xff] %v5494
          %5599 = vst [vmem:[#allocation2 + $0x80] sm:$0xff] %v5495
          %5600 = vst [vmem:[#allocation2 + $0x88] sm:$0xff] %v5496
          %5601 = vst [vmem:[#allocation2 + $0x90] sm:$0xff] %v5497
          %5602 = vst [vmem:[#allocation2 + $0x98] sm:$0xff] %v5498
          %5603 = vst [vmem:[#allocation2 + $0xa0] sm:$0xff] %v5499
          %5604 = vst [vmem:[#allocation2 + $0xa8] sm:$0xff] %v5500
          %5605 = vst [vmem:[#allocation2 + $0xb0] sm:$0xff] %v5501
          %5606 = vst [vmem:[#allocation2 + $0xb8] sm:$0xff] %v5502
          %5607 = vst [vmem:[#allocation2 + $0xc0] sm:$0xff] %v5503
          %5608 = vst [vmem:[#allocation2 + $0xc8] sm:$0xff] %v5504
          %5609 = vst [vmem:[#allocation2 + $0xd0] sm:$0xff] %v5505
          %5610 = vst [vmem:[#allocation2 + $0xd8] sm:$0xff] %v5506
          %5611 = vst [vmem:[#allocation2 + $0xe0] sm:$0xff] %v5507
          %5612 = vst [vmem:[#allocation2 + $0xe8] sm:$0xff] %v5508
          %5613 = vst [vmem:[#allocation2 + $0xf0] sm:$0xff] %v5509
          %5614 = vst [vmem:[#allocation2 + $0xf8] sm:$0xff] %v5510
          %5615 = vst [vmem:[#allocation2 + $0x100] sm:$0xff] %v5511
          %5616 = vst [vmem:[#allocation2 + $0x108] sm:$0xff] %v5512
          %5617 = vst [vmem:[#allocation2 + $0x110] sm:$0xff] %v5513
          %5618 = vst [vmem:[#allocation2 + $0x118] sm:$0xff] %v5514
          %5619 = vst [vmem:[#allocation2 + $0x120] sm:$0xff] %v5515
          %5620 = vst [vmem:[#allocation2 + $0x128] sm:$0xff] %v5516
          %5621 = vst [vmem:[#allocation2 + $0x130] sm:$0xff] %v5517
          %5622 = vst [vmem:[#allocation2 + $0x138] sm:$0xff] %v5518
          %5623 = vst [vmem:[#allocation2 + $0x140] sm:$0xff] %v5519
          %5624 = vst [vmem:[#allocation2 + $0x148] sm:$0xff] %v5520
          %5625 = vst [vmem:[#allocation2 + $0x150] sm:$0xff] %v5521
          %5626 = vst [vmem:[#allocation2 + $0x158] sm:$0xff] %v5522
          %5627 = vst [vmem:[#allocation2 + $0x160] sm:$0xff] %v5523
          %5628 = vst [vmem:[#allocation2 + $0x168] sm:$0xff] %v5524
          %5629 = vst [vmem:[#allocation2 + $0x170] sm:$0xff] %v5525
          %5630 = vst [vmem:[#allocation2 + $0x178] sm:$0xff] %v5526
          %5631 = vst [vmem:[#allocation2 + $0x180] sm:$0xff] %v5527
          %5632 = vst [vmem:[#allocation2 + $0x188] sm:$0xff] %v5528
          %5633 = vst [vmem:[#allocation2 + $0x190] sm:$0xff] %v5529
          %5634 = vst [vmem:[#allocation2 + $0x198] sm:$0xff] %v5530
          %5635 = vst [vmem:[#allocation2 + $0x1a0] sm:$0xff] %v5531
          %5636 = vst [vmem:[#allocation2 + $0x1a8] sm:$0xff] %v5532
          %5637 = vst [vmem:[#allocation2 + $0x1b0] sm:$0xff] %v5533
          %5638 = vst [vmem:[#allocation2 + $0x1b8] sm:$0xff] %v5534
          %5639 = vst [vmem:[#allocation2 + $0x1c0] sm:$0xff] %v5535
          %5640 = vst [vmem:[#allocation2 + $0x1c8] sm:$0xff] %v5536
          %5641 = vst [vmem:[#allocation2 + $0x1d0] sm:$0xff] %v5537
          %5642 = vst [vmem:[#allocation2 + $0x1d8] sm:$0xff] %v5538
          %5643 = vst [vmem:[#allocation2 + $0x1e0] sm:$0xff] %v5539
          %5644 = vst [vmem:[#allocation2 + $0x1e8] sm:$0xff] %v5540
          %5645 = vst [vmem:[#allocation2 + $0x1f0] sm:$0xff] %v5541
          %5646 = vst [vmem:[#allocation2 + $0x1f8] sm:$0xff] %v5542
          %5647 = vst [vmem:[#allocation2 + $0x200] sm:$0xff] %v5543
          %5648 = vst [vmem:[#allocation2 + $0x208] sm:$0xff] %v5544
          %5649 = vst [vmem:[#allocation2 + $0x210] sm:$0xff] %v5545
          %5650 = vst [vmem:[#allocation2 + $0x218] sm:$0xff] %v5546
          %5651 = vst [vmem:[#allocation2 + $0x220] sm:$0xff] %v5547
          %5652 = vst [vmem:[#allocation2 + $0x228] sm:$0xff] %v5548
          %5653 = vst [vmem:[#allocation2 + $0x230] sm:$0xff] %v5549
          %5654 = vst [vmem:[#allocation2 + $0x238] sm:$0xff] %v5550
          %5655 = vst [vmem:[#allocation2 + $0x240] sm:$0xff] %v5551
          %5656 = vst [vmem:[#allocation2 + $0x248] sm:$0xff] %v5552
          %5657 = vst [vmem:[#allocation2 + $0x250] sm:$0xff] %v5553
          %5658 = vst [vmem:[#allocation2 + $0x258] sm:$0xff] %v5554
          %5659 = vst [vmem:[#allocation2 + $0x260] sm:$0xff] %v5555
          %5660 = vst [vmem:[#allocation2 + $0x268] sm:$0xff] %v5556
          %5661 = vst [vmem:[#allocation2 + $0x270] sm:$0xff] %v5557
          %5662 = vst [vmem:[#allocation2 + $0x278] sm:$0xff] %v5558
          %5663 = vst [vmem:[#allocation2 + $0x280] sm:$0xff] %v5559
          %5664 = vst [vmem:[#allocation2 + $0x288] sm:$0xff] %v5560
          %5665 = vst [vmem:[#allocation2 + $0x290] sm:$0xff] %v5561
          %5666 = vst [vmem:[#allocation2 + $0x298] sm:$0xff] %v5562
          %5667 = vst [vmem:[#allocation2 + $0x2a0] sm:$0xff] %v5563
          %5668 = vst [vmem:[#allocation2 + $0x2a8] sm:$0xff] %v5564
          %5669 = vst [vmem:[#allocation2 + $0x2b0] sm:$0xff] %v5565
          %5670 = vst [vmem:[#allocation2 + $0x2b8] sm:$0xff] %v5566
          %5671 = vst [vmem:[#allocation2 + $0x2c0] sm:$0xff] %v5567
          %5672 = vst [vmem:[#allocation2 + $0x2c8] sm:$0xff] %v5568
          %5673 = vst [vmem:[#allocation2 + $0x2d0] sm:$0xff] %v5569
          %5674 = vst [vmem:[#allocation2 + $0x2d8] sm:$0xff] %v5570
          %5675 = vst [vmem:[#allocation2 + $0x2e0] sm:$0xff] %v5571
          %5676 = vst [vmem:[#allocation2 + $0x2e8] sm:$0xff] %v5572
          %5677 = vst [vmem:[#allocation2 + $0x2f0] sm:$0xff] %v5573
          %5678 = vst [vmem:[#allocation2 + $0x2f8] sm:$0xff] %v5574
          %5679 = vst [vmem:[#allocation2 + $0x300] sm:$0xff] %v5575
          %5680 = vst [vmem:[#allocation2 + $0x308] sm:$0xff] %v5576
          %5681 = vst [vmem:[#allocation2 + $0x310] sm:$0xff] %v5577
          %5682 = vst [vmem:[#allocation2 + $0x318] sm:$0xff] %v5578
          %5683 = vst [vmem:[#allocation2 + $0x320] sm:$0xff] %v5579
          %5684 = vst [vmem:[#allocation2 + $0x328] sm:$0xff] %v5580
          %5685 = vst [vmem:[#allocation2 + $0x330] sm:$0xff] %v5581
          %5686 = vst [vmem:[#allocation2 + $0x338] sm:$0xff] %v5582
          %5687 = vst [vmem:[#allocation2 + $0x340] sm:$0xff] %v5482
          %5688 = vst [vmem:[#allocation2 + $0x348] sm:$0xff] %v5482
          %5689 = vst [vmem:[#allocation2 + $0x350] sm:$0xff] %v2658
          %5690 = vst [vmem:[#allocation2 + $0x358] sm:$0xff] %v2658
        $region128: #{tpu_custom_call.1} parent=75 // pred_fallthru
          _
        %v5691 = vld [vmem:[#allocation2] sm:$0xff]
        %v5692 = vld [vmem:[#allocation2 + $0x8] sm:$0xff]
        %v5693 = vld [vmem:[#allocation2 + $0x10] sm:$0xff]
        %v5694 = vld [vmem:[#allocation2 + $0x18] sm:$0xff]
        %v5695 = vld [vmem:[#allocation2 + $0x20] sm:$0xff]
        %v5696 = vld [vmem:[#allocation2 + $0x28] sm:$0xff]
        %v5697 = vld [vmem:[#allocation2 + $0x30] sm:$0xff]
        %v5698 = vld [vmem:[#allocation2 + $0x38] sm:$0xff]
        %v5699 = vld [vmem:[#allocation2 + $0x40] sm:$0xff]
        %v5700 = vld [vmem:[#allocation2 + $0x48] sm:$0xff]
        %v5701 = vld [vmem:[#allocation2 + $0x50] sm:$0xff]
        %v5702 = vld [vmem:[#allocation2 + $0x58] sm:$0xff]
        %v5703 = vld [vmem:[#allocation2 + $0x60] sm:$0xff]
        %v5704 = vld [vmem:[#allocation2 + $0x68] sm:$0xff]
        %v5705 = vld [vmem:[#allocation2 + $0x70] sm:$0xff]
        %v5706 = vld [vmem:[#allocation2 + $0x78] sm:$0xff]
        %v5707 = vld [vmem:[#allocation2 + $0x80] sm:$0xff]
        %v5708 = vld [vmem:[#allocation2 + $0x88] sm:$0xff]
        %v5709 = vld [vmem:[#allocation2 + $0x90] sm:$0xff]
        %v5710 = vld [vmem:[#allocation2 + $0x98] sm:$0xff]
        %v5711 = vld [vmem:[#allocation2 + $0xa0] sm:$0xff]
        %v5712 = vld [vmem:[#allocation2 + $0xa8] sm:$0xff]
        %v5713 = vld [vmem:[#allocation2 + $0xb0] sm:$0xff]
        %v5714 = vld [vmem:[#allocation2 + $0xb8] sm:$0xff]
        %v5715 = vld [vmem:[#allocation2 + $0xc0] sm:$0xff]
        %v5716 = vld [vmem:[#allocation2 + $0xc8] sm:$0xff]
        %v5717 = vld [vmem:[#allocation2 + $0xd0] sm:$0xff]
        %v5718 = vld [vmem:[#allocation2 + $0xd8] sm:$0xff]
        %v5719 = vld [vmem:[#allocation2 + $0xe0] sm:$0xff]
        %v5720 = vld [vmem:[#allocation2 + $0xe8] sm:$0xff]
        %v5721 = vld [vmem:[#allocation2 + $0xf0] sm:$0xff]
        %v5722 = vld [vmem:[#allocation2 + $0xf8] sm:$0xff]
        %v5723 = vld [vmem:[#allocation2 + $0x100] sm:$0xff]
        %v5724 = vld [vmem:[#allocation2 + $0x108] sm:$0xff]
        %v5725 = vld [vmem:[#allocation2 + $0x110] sm:$0xff]
        %v5726 = vld [vmem:[#allocation2 + $0x118] sm:$0xff]
        %v5727 = vld [vmem:[#allocation2 + $0x120] sm:$0xff]
        %v5728 = vld [vmem:[#allocation2 + $0x128] sm:$0xff]
        %v5729 = vld [vmem:[#allocation2 + $0x130] sm:$0xff]
        %v5730 = vld [vmem:[#allocation2 + $0x138] sm:$0xff]
        %v5731 = vld [vmem:[#allocation2 + $0x140] sm:$0xff]
        %v5732 = vld [vmem:[#allocation2 + $0x148] sm:$0xff]
        %v5733 = vld [vmem:[#allocation2 + $0x150] sm:$0xff]
        %v5734 = vld [vmem:[#allocation2 + $0x158] sm:$0xff]
        %v5735 = vld [vmem:[#allocation2 + $0x160] sm:$0xff]
        %v5736 = vld [vmem:[#allocation2 + $0x168] sm:$0xff]
        %v5737 = vld [vmem:[#allocation2 + $0x170] sm:$0xff]
        %v5738 = vld [vmem:[#allocation2 + $0x178] sm:$0xff]
        %v5739 = vld [vmem:[#allocation2 + $0x180] sm:$0xff]
        %v5740 = vld [vmem:[#allocation2 + $0x188] sm:$0xff]
        %v5741 = vld [vmem:[#allocation2 + $0x190] sm:$0xff]
        %v5742 = vld [vmem:[#allocation2 + $0x198] sm:$0xff]
        %v5743 = vld [vmem:[#allocation2 + $0x1a0] sm:$0xff]
        %v5744 = vld [vmem:[#allocation2 + $0x1a8] sm:$0xff]
        %v5745 = vld [vmem:[#allocation2 + $0x1b0] sm:$0xff]
        %v5746 = vld [vmem:[#allocation2 + $0x1b8] sm:$0xff]
        %v5747 = vld [vmem:[#allocation2 + $0x1c0] sm:$0xff]
        %v5748 = vld [vmem:[#allocation2 + $0x1c8] sm:$0xff]
        %v5749 = vld [vmem:[#allocation2 + $0x1d0] sm:$0xff]
        %v5750 = vld [vmem:[#allocation2 + $0x1d8] sm:$0xff]
        %v5751 = vld [vmem:[#allocation2 + $0x1e0] sm:$0xff]
        %v5752 = vld [vmem:[#allocation2 + $0x1e8] sm:$0xff]
        %v5753 = vld [vmem:[#allocation2 + $0x1f0] sm:$0xff]
        %v5754 = vld [vmem:[#allocation2 + $0x1f8] sm:$0xff]
        %v5755 = vld [vmem:[#allocation2 + $0x200] sm:$0xff]
        %v5756 = vld [vmem:[#allocation2 + $0x208] sm:$0xff]
        %v5757 = vld [vmem:[#allocation2 + $0x210] sm:$0xff]
        %v5758 = vld [vmem:[#allocation2 + $0x218] sm:$0xff]
        %v5759 = vld [vmem:[#allocation2 + $0x220] sm:$0xff]
        %v5760 = vld [vmem:[#allocation2 + $0x228] sm:$0xff]
        %v5761 = vld [vmem:[#allocation2 + $0x230] sm:$0xff]
        %v5762 = vld [vmem:[#allocation2 + $0x238] sm:$0xff]
        %v5763 = vld [vmem:[#allocation2 + $0x240] sm:$0xff]
        %v5764 = vld [vmem:[#allocation2 + $0x248] sm:$0xff]
        %v5765 = vld [vmem:[#allocation2 + $0x250] sm:$0xff]
        %v5766 = vld [vmem:[#allocation2 + $0x258] sm:$0xff]
        %v5767 = vld [vmem:[#allocation2 + $0x260] sm:$0xff]
        %v5768 = vld [vmem:[#allocation2 + $0x268] sm:$0xff]
        %v5769 = vld [vmem:[#allocation2 + $0x270] sm:$0xff]
        %v5770 = vld [vmem:[#allocation2 + $0x278] sm:$0xff]
        %v5771 = vld [vmem:[#allocation2 + $0x280] sm:$0xff]
        %v5772 = vld [vmem:[#allocation2 + $0x288] sm:$0xff]
        %v5773 = vld [vmem:[#allocation2 + $0x290] sm:$0xff]
        %v5774 = vld [vmem:[#allocation2 + $0x298] sm:$0xff]
        %v5775 = vld [vmem:[#allocation2 + $0x2a0] sm:$0xff]
        %v5776 = vld [vmem:[#allocation2 + $0x2a8] sm:$0xff]
        %v5777 = vld [vmem:[#allocation2 + $0x2b0] sm:$0xff]
        %v5778 = vld [vmem:[#allocation2 + $0x2b8] sm:$0xff]
        %v5779 = vld [vmem:[#allocation2 + $0x2c0] sm:$0xff]
        %v5780 = vld [vmem:[#allocation2 + $0x2c8] sm:$0xff]
        %v5781 = vld [vmem:[#allocation2 + $0x2d0] sm:$0xff]
        %v5782 = vld [vmem:[#allocation2 + $0x2d8] sm:$0xff]
        %v5783 = vld [vmem:[#allocation2 + $0x2e0] sm:$0xff]
        %v5784 = vld [vmem:[#allocation2 + $0x2e8] sm:$0xff]
        %v5785 = vld [vmem:[#allocation2 + $0x2f0] sm:$0xff]
        %v5786 = vld [vmem:[#allocation2 + $0x2f8] sm:$0xff]
        %v5787 = vld [vmem:[#allocation2 + $0x300] sm:$0xff]
        %v5788 = vld [vmem:[#allocation2 + $0x308] sm:$0xff]
        %v5789 = vld [vmem:[#allocation2 + $0x310] sm:$0xff]
        %v5790 = vld [vmem:[#allocation2 + $0x318] sm:$0xff]
        %v5791 = vld [vmem:[#allocation2 + $0x320] sm:$0xff]
        %v5792 = vld [vmem:[#allocation2 + $0x328] sm:$0xff]
        %v5793 = vld [vmem:[#allocation2 + $0x330] sm:$0xff]
        %v5794 = vld [vmem:[#allocation2 + $0x338] sm:$0xff]
        %v5795 = vld [vmem:[#allocation2 + $0x340] sm:$0xff]
        %v5796 = vld [vmem:[#allocation2 + $0x348] sm:$0xff]
        %v5797 = vld [vmem:[#allocation2 + $0x350] sm:$0xff]
        %v5798 = vld [vmem:[#allocation2 + $0x358] sm:$0xff]
        %v5799 = vld [vmem:[%s639] sm:$0xf]
        %v5800 = vld [vmem:[%s639 + $0x4] sm:$0xf]
        %v5801 = vld [vmem:[%s639 + $0x8] sm:$0xf]
        %v5802 = vld [vmem:[%s639 + $0xc] sm:$0xf]
        %v5803 = vld [vmem:[%s639 + $0x10] sm:$0xf]
        %v5804 = vld [vmem:[%s639 + $0x14] sm:$0xf]
        %v5805 = vld [vmem:[%s639 + $0x18] sm:$0xf]
        %v5806 = vld [vmem:[%s639 + $0x1c] sm:$0xf]
        %v5807 = vld [vmem:[%s639 + $0x20] sm:$0xf]
        %v5808 = vld [vmem:[%s639 + $0x24] sm:$0xf]
        %v5809 = vld [vmem:[%s639 + $0x28] sm:$0xf]
        %v5810 = vld [vmem:[%s639 + $0x2c] sm:$0xf]
        %v5811 = vld [vmem:[%s639 + $0x30] sm:$0xf]
        %v5812 = vld [vmem:[%s639 + $0x34] sm:$0xf]
        %v5813 = vld [vmem:[%s639 + $0x38] sm:$0xf]
        %v5814 = vld [vmem:[%s639 + $0x3c] sm:$0xf]
        %v5815 = vld [vmem:[%s639 + $0x40] sm:$0xf]
        %v5816 = vld [vmem:[%s639 + $0x44] sm:$0xf]
        %v5817 = vld [vmem:[%s639 + $0x48] sm:$0xf]
        %v5818 = vld [vmem:[%s639 + $0x4c] sm:$0xf]
        %v5819 = vld [vmem:[%s639 + $0x50] sm:$0xf]
        %v5820 = vld [vmem:[%s639 + $0x54] sm:$0xf]
        %v5821 = vld [vmem:[%s639 + $0x58] sm:$0xf]
        %v5822 = vld [vmem:[%s639 + $0x5c] sm:$0xf]
        %v5823 = vld [vmem:[%s639 + $0x60] sm:$0xf]
        %v5824 = vld [vmem:[%s639 + $0x64] sm:$0xf]
        %v5825 = vld [vmem:[%s639 + $0x68] sm:$0xf]
        %v5826 = vld [vmem:[%s639 + $0x6c] sm:$0xf]
        %v5827 = vld [vmem:[%s639 + $0x70] sm:$0xf]
        %v5828 = vld [vmem:[%s639 + $0x74] sm:$0xf]
        %v5829 = vld [vmem:[%s639 + $0x78] sm:$0xf]
        %v5830 = vld [vmem:[%s639 + $0x7c] sm:$0xf]
        %v5831 = vld [vmem:[%s639 + $0x80] sm:$0xf]
        %v5832 = vld [vmem:[%s639 + $0x84] sm:$0xf]
        %v5833 = vld [vmem:[%s639 + $0x88] sm:$0xf]
        %v5834 = vld [vmem:[%s639 + $0x8c] sm:$0xf]
        %v5835 = vld [vmem:[%s639 + $0x90] sm:$0xf]
        %v5836 = vld [vmem:[%s639 + $0x94] sm:$0xf]
        %v5837 = vld [vmem:[%s639 + $0x98] sm:$0xf]
        %v5838 = vld [vmem:[%s639 + $0x9c] sm:$0xf]
        %v5839 = vld [vmem:[%s639 + $0xa0] sm:$0xf]
        %v5840 = vld [vmem:[%s639 + $0xa4] sm:$0xf]
        %v5841 = vld [vmem:[%s639 + $0xa8] sm:$0xf]
        %v5842 = vld [vmem:[%s639 + $0xac] sm:$0xf]
        %v5843 = vld [vmem:[%s639 + $0xb0] sm:$0xf]
        %v5844 = vld [vmem:[%s639 + $0xb4] sm:$0xf]
        %v5845 = vld [vmem:[%s639 + $0xb8] sm:$0xf]
        %v5846 = vld [vmem:[%s639 + $0xbc] sm:$0xf]
        %v5847 = vld [vmem:[%s639 + $0xc0] sm:$0xf]
        %v5848 = vld [vmem:[%s639 + $0xc4] sm:$0xf]
        %v5849 = vld [vmem:[%s639 + $0xc8] sm:$0xf]
        %v5850 = vld [vmem:[%s639 + $0xcc] sm:$0xf]
        %v5851 = vld [vmem:[%s639 + $0xd0] sm:$0xf]
        %v5852 = vld [vmem:[%s639 + $0xd4] sm:$0xf]
        %v5853 = vld [vmem:[%s639 + $0xd8] sm:$0xf]
        %v5854 = vld [vmem:[%s639 + $0xdc] sm:$0xf]
        %v5855 = vld [vmem:[%s639 + $0xe0] sm:$0xf]
        %v5856 = vld [vmem:[%s639 + $0xe4] sm:$0xf]
        %v5857 = vld [vmem:[%s639 + $0xe8] sm:$0xf]
        %v5858 = vld [vmem:[%s639 + $0xec] sm:$0xf]
        %v5859 = vld [vmem:[%s639 + $0xf0] sm:$0xf]
        %v5860 = vld [vmem:[%s639 + $0xf4] sm:$0xf]
        %v5861 = vld [vmem:[%s639 + $0xf8] sm:$0xf]
        %v5862 = vld [vmem:[%s639 + $0xfc] sm:$0xf]
        %v5863 = vld [vmem:[%s639 + $0x100] sm:$0xf]
        %v5864 = vld [vmem:[%s639 + $0x104] sm:$0xf]
        %v5865 = vld [vmem:[%s639 + $0x108] sm:$0xf]
        %v5866 = vld [vmem:[%s639 + $0x10c] sm:$0xf]
        %v5867 = vld [vmem:[%s639 + $0x110] sm:$0xf]
        %v5868 = vld [vmem:[%s639 + $0x114] sm:$0xf]
        %v5869 = vld [vmem:[%s639 + $0x118] sm:$0xf]
        %v5870 = vld [vmem:[%s639 + $0x11c] sm:$0xf]
        %v5871 = vld [vmem:[%s639 + $0x120] sm:$0xf]
        %v5872 = vld [vmem:[%s639 + $0x124] sm:$0xf]
        %v5873 = vld [vmem:[%s639 + $0x128] sm:$0xf]
        %v5874 = vld [vmem:[%s639 + $0x12c] sm:$0xf]
        %v5875 = vld [vmem:[%s639 + $0x130] sm:$0xf]
        %v5876 = vld [vmem:[%s639 + $0x134] sm:$0xf]
        %v5877 = vld [vmem:[%s639 + $0x138] sm:$0xf]
        %v5878 = vld [vmem:[%s639 + $0x13c] sm:$0xf]
        %v5879 = vld [vmem:[%s639 + $0x140] sm:$0xf]
        %v5880 = vld [vmem:[%s639 + $0x144] sm:$0xf]
        %v5881 = vld [vmem:[%s639 + $0x148] sm:$0xf]
        %v5882 = vld [vmem:[%s639 + $0x14c] sm:$0xf]
        %v5883 = vld [vmem:[%s639 + $0x150] sm:$0xf]
        %v5884 = vld [vmem:[%s639 + $0x154] sm:$0xf]
        %v5885 = vld [vmem:[%s639 + $0x158] sm:$0xf]
        %v5886 = vld [vmem:[%s639 + $0x15c] sm:$0xf]
        %v5887 = vld [vmem:[%s639 + $0x160] sm:$0xf]
        %v5888 = vld [vmem:[%s639 + $0x164] sm:$0xf]
        %v5889 = vld [vmem:[%s639 + $0x168] sm:$0xf]
        %v5890 = vld [vmem:[%s639 + $0x16c] sm:$0xf]
        %v5891 = vld [vmem:[%s639 + $0x170] sm:$0xf]
        %v5892 = vld [vmem:[%s639 + $0x174] sm:$0xf]
        %v5893 = vld [vmem:[%s639 + $0x178] sm:$0xf]
        %v5894 = vld [vmem:[%s639 + $0x17c] sm:$0xf]
        %s5895 = scalar_lea.vmem %s639, 384 [#allocation18]
        %v5896 = vld [vmem:[%s5895] sm:$0xf]
        %v5897 = vld [vmem:[%s5895 + $0x4] sm:$0xf]
        %v5898 = vld [vmem:[%s5895 + $0x8] sm:$0xf]
        %v5899 = vld [vmem:[%s5895 + $0xc] sm:$0xf]
        %v5900 = vld [vmem:[%s5895 + $0x10] sm:$0xf]
        %v5901 = vld [vmem:[%s5895 + $0x14] sm:$0xf]
        %v5902 = vld [vmem:[%s5895 + $0x18] sm:$0xf]
        %v5903 = vld [vmem:[%s5895 + $0x1c] sm:$0xf]
        %v5904 = vld [vmem:[%s5895 + $0x20] sm:$0xf]
        %v5905 = vld [vmem:[%s5895 + $0x24] sm:$0xf]
        %v5906 = vld [vmem:[%s5895 + $0x28] sm:$0xf]
        %v5907 = vld [vmem:[%s5895 + $0x2c] sm:$0xf]
        %v5908 = vld [vmem:[%s5895 + $0x30] sm:$0xf]
        %v5909 = vld [vmem:[%s5895 + $0x34] sm:$0xf]
        %v5910 = vld [vmem:[%s5895 + $0x38] sm:$0xf]
        %v5911 = vld [vmem:[%s5895 + $0x3c] sm:$0xf]
        %v5912 = vld [vmem:[%s5895 + $0x40] sm:$0xf]
        %v5913 = vld [vmem:[%s5895 + $0x44] sm:$0xf]
        %v5914 = vld [vmem:[%s5895 + $0x48] sm:$0xf]
        %v5915 = vld [vmem:[%s5895 + $0x4c] sm:$0xf]
        %v5916 = vld [vmem:[%s5895 + $0x50] sm:$0xf]
        %v5917 = vld [vmem:[%s5895 + $0x54] sm:$0xf]
        %v5918 = vld [vmem:[%s5895 + $0x58] sm:$0xf]
        %v5919 = vld [vmem:[%s5895 + $0x5c] sm:$0xf]
        %v5920 = vld [vmem:[%s5895 + $0x60] sm:$0xf]
        %v5921 = vld [vmem:[%s5895 + $0x64] sm:$0xf]
        %v5922 = vld [vmem:[%s5895 + $0x68] sm:$0xf]
        %v5923 = vld [vmem:[%s5895 + $0x6c] sm:$0xf]
        %v5924 = vld [vmem:[%s5895 + $0x70] sm:$0xf]
        %v5925 = vld [vmem:[%s5895 + $0x74] sm:$0xf]
        %v5926 = vld [vmem:[%s5895 + $0x78] sm:$0xf]
        %v5927 = vld [vmem:[%s5895 + $0x7c] sm:$0xf]
        %v5928 = vld [vmem:[%s5895 + $0x80] sm:$0xf]
        %v5929 = vld [vmem:[%s5895 + $0x84] sm:$0xf]
        %v5930 = vld [vmem:[%s5895 + $0x88] sm:$0xf]
        %v5931 = vld [vmem:[%s5895 + $0x8c] sm:$0xf]
        %v5932 = vld [vmem:[%s5895 + $0x90] sm:$0xf]
        %v5933 = vld [vmem:[%s5895 + $0x94] sm:$0xf]
        %v5934 = vld [vmem:[%s5895 + $0x98] sm:$0xf]
        %v5935 = vld [vmem:[%s5895 + $0x9c] sm:$0xf]
        %v5936 = vld [vmem:[%s5895 + $0xa0] sm:$0xf]
        %v5937 = vld [vmem:[%s5895 + $0xa4] sm:$0xf]
        %v5938 = vld [vmem:[%s5895 + $0xa8] sm:$0xf]
        %v5939 = vld [vmem:[%s5895 + $0xac] sm:$0xf]
        %v5940 = vld [vmem:[%s5895 + $0xb0] sm:$0xf]
        %v5941 = vld [vmem:[%s5895 + $0xb4] sm:$0xf]
        %v5942 = vld [vmem:[%s5895 + $0xb8] sm:$0xf]
        %v5943 = vld [vmem:[%s5895 + $0xbc] sm:$0xf]
        %v5944 = vld [vmem:[%s5895 + $0xc0] sm:$0xf]
        %v5945 = vld [vmem:[%s5895 + $0xc4] sm:$0xf]
        %v5946 = vld [vmem:[%s5895 + $0xc8] sm:$0xf]
        %v5947 = vld [vmem:[%s5895 + $0xcc] sm:$0xf]
        %v5948 = vld [vmem:[%s5895 + $0xd0] sm:$0xf]
        %v5949 = vld [vmem:[%s5895 + $0xd4] sm:$0xf]
        %v5950 = vld [vmem:[%s5895 + $0xd8] sm:$0xf]
        %v5951 = vld [vmem:[%s5895 + $0xdc] sm:$0xf]
        %v5952 = vld [vmem:[%s5895 + $0xe0] sm:$0xf]
        %v5953 = vld [vmem:[%s5895 + $0xe4] sm:$0xf]
        %v5954 = vld [vmem:[%s5895 + $0xe8] sm:$0xf]
        %v5955 = vld [vmem:[%s5895 + $0xec] sm:$0xf]
        %v5956 = vld [vmem:[%s5895 + $0xf0] sm:$0xf]
        %v5957 = vld [vmem:[%s5895 + $0xf4] sm:$0xf]
        %v5958 = vld [vmem:[%s5895 + $0xf8] sm:$0xf]
        %v5959 = vld [vmem:[%s5895 + $0xfc] sm:$0xf]
        %v5960 = vld [vmem:[%s5895 + $0x100] sm:$0xf]
        %v5961 = vld [vmem:[%s5895 + $0x104] sm:$0xf]
        %v5962 = vld [vmem:[%s5895 + $0x108] sm:$0xf]
        %v5963 = vld [vmem:[%s5895 + $0x10c] sm:$0xf]
        %v5964 = vld [vmem:[%s5895 + $0x110] sm:$0xf]
        %v5965 = vld [vmem:[%s5895 + $0x114] sm:$0xf]
        %v5966 = vld [vmem:[%s5895 + $0x118] sm:$0xf]
        %v5967 = vld [vmem:[%s5895 + $0x11c] sm:$0xf]
        %v5968 = vld [vmem:[%s5895 + $0x120] sm:$0xf]
        %v5969 = vld [vmem:[%s5895 + $0x124] sm:$0xf]
        %v5970 = vld [vmem:[%s5895 + $0x128] sm:$0xf]
        %v5971 = vld [vmem:[%s5895 + $0x12c] sm:$0xf]
        %v5972 = vld [vmem:[%s5895 + $0x130] sm:$0xf]
        %v5973 = vld [vmem:[%s5895 + $0x134] sm:$0xf]
        %v5974 = vld [vmem:[%s5895 + $0x138] sm:$0xf]
        %v5975 = vld [vmem:[%s5895 + $0x13c] sm:$0xf]
        %v5976 = vld [vmem:[%s5895 + $0x140] sm:$0xf]
        %v5977 = vld [vmem:[%s5895 + $0x144] sm:$0xf]
        %v5978 = vld [vmem:[%s5895 + $0x148] sm:$0xf]
        %v5979 = vld [vmem:[%s5895 + $0x14c] sm:$0xf]
        %v5980 = vld [vmem:[%s5895 + $0x150] sm:$0xf]
        %v5981 = vld [vmem:[%s5895 + $0x154] sm:$0xf]
        %v5982 = vld [vmem:[%s5895 + $0x158] sm:$0xf]
        %v5983 = vld [vmem:[%s5895 + $0x15c] sm:$0xf]
        %v5984 = vld [vmem:[%s5895 + $0x160] sm:$0xf]
        %v5985 = vld [vmem:[%s5895 + $0x164] sm:$0xf]
        %v5986 = vld [vmem:[%s5895 + $0x168] sm:$0xf]
        %v5987 = vld [vmem:[%s5895 + $0x16c] sm:$0xf]
        %v5988 = vld [vmem:[%s5895 + $0x170] sm:$0xf]
        %v5989 = vld [vmem:[%s5895 + $0x174] sm:$0xf]
        %v5990 = vld [vmem:[%s5895 + $0x178] sm:$0xf]
        %v5991 = vld [vmem:[%s5895 + $0x17c] sm:$0xf]
        %v6088 = vunpack.c.l.b16 %v5896
        %v6089 = vunpack.c.l.b16 %v5897
        %v6090 = vunpack.c.l.b16 %v5898
        %v6091 = vunpack.c.l.b16 %v5899
        %v6092 = vunpack.c.l.b16 %v5900
        %v6093 = vunpack.c.l.b16 %v5901
        %v6094 = vunpack.c.l.b16 %v5902
        %v6095 = vunpack.c.l.b16 %v5903
        %v6096 = vunpack.c.l.b16 %v5904
        %v6097 = vunpack.c.l.b16 %v5905
        %v6098 = vunpack.c.l.b16 %v5906
        %v6099 = vunpack.c.l.b16 %v5907
        %v6100 = vunpack.c.l.b16 %v5908
        %v6101 = vunpack.c.l.b16 %v5909
        %v6102 = vunpack.c.l.b16 %v5910
        %v6103 = vunpack.c.l.b16 %v5911
        %v6104 = vunpack.c.l.b16 %v5912
        %v6105 = vunpack.c.l.b16 %v5913
        %v6106 = vunpack.c.l.b16 %v5914
        %v6107 = vunpack.c.l.b16 %v5915
        %v6108 = vunpack.c.l.b16 %v5916
        %v6109 = vunpack.c.l.b16 %v5917
        %v6110 = vunpack.c.l.b16 %v5918
        %v6111 = vunpack.c.l.b16 %v5919
        %v6112 = vunpack.c.l.b16 %v5920
        %v6113 = vunpack.c.l.b16 %v5921
        %v6114 = vunpack.c.l.b16 %v5922
        %v6115 = vunpack.c.l.b16 %v5923
        %v6116 = vunpack.c.l.b16 %v5924
        %v6117 = vunpack.c.l.b16 %v5925
        %v6118 = vunpack.c.l.b16 %v5926
        %v6119 = vunpack.c.l.b16 %v5927
        %v6120 = vunpack.c.l.b16 %v5928
        %v6121 = vunpack.c.l.b16 %v5929
        %v6122 = vunpack.c.l.b16 %v5930
        %v6123 = vunpack.c.l.b16 %v5931
        %v6124 = vunpack.c.l.b16 %v5932
        %v6125 = vunpack.c.l.b16 %v5933
        %v6126 = vunpack.c.l.b16 %v5934
        %v6127 = vunpack.c.l.b16 %v5935
        %v6128 = vunpack.c.l.b16 %v5936
        %v6129 = vunpack.c.l.b16 %v5937
        %v6130 = vunpack.c.l.b16 %v5938
        %v6131 = vunpack.c.l.b16 %v5939
        %v6132 = vunpack.c.l.b16 %v5940
        %v6133 = vunpack.c.l.b16 %v5941
        %v6134 = vunpack.c.l.b16 %v5942
        %v6135 = vunpack.c.l.b16 %v5943
        %v6136 = vunpack.c.l.b16 %v5944
        %v6137 = vunpack.c.l.b16 %v5945
        %v6138 = vunpack.c.l.b16 %v5946
        %v6139 = vunpack.c.l.b16 %v5947
        %v6140 = vunpack.c.l.b16 %v5948
        %v6141 = vunpack.c.l.b16 %v5949
        %v6142 = vunpack.c.l.b16 %v5950
        %v6143 = vunpack.c.l.b16 %v5951
        %v6144 = vunpack.c.l.b16 %v5952
        %v6145 = vunpack.c.l.b16 %v5953
        %v6146 = vunpack.c.l.b16 %v5954
        %v6147 = vunpack.c.l.b16 %v5955
        %v6148 = vunpack.c.l.b16 %v5956
        %v6149 = vunpack.c.l.b16 %v5957
        %v6150 = vunpack.c.l.b16 %v5958
        %v6151 = vunpack.c.l.b16 %v5959
        %v6152 = vunpack.c.l.b16 %v5960
        %v6153 = vunpack.c.l.b16 %v5961
        %v6154 = vunpack.c.l.b16 %v5962
        %v6155 = vunpack.c.l.b16 %v5963
        %v6156 = vunpack.c.l.b16 %v5964
        %v6157 = vunpack.c.l.b16 %v5965
        %v6158 = vunpack.c.l.b16 %v5966
        %v6159 = vunpack.c.l.b16 %v5967
        %v6160 = vunpack.c.l.b16 %v5968
        %v6161 = vunpack.c.l.b16 %v5969
        %v6162 = vunpack.c.l.b16 %v5970
        %v6163 = vunpack.c.l.b16 %v5971
        %v6164 = vunpack.c.l.b16 %v5972
        %v6165 = vunpack.c.l.b16 %v5973
        %v6166 = vunpack.c.l.b16 %v5974
        %v6167 = vunpack.c.l.b16 %v5975
        %v6168 = vunpack.c.l.b16 %v5976
        %v6169 = vunpack.c.l.b16 %v5977
        %v6170 = vunpack.c.l.b16 %v5978
        %v6171 = vunpack.c.l.b16 %v5979
        %v6172 = vunpack.c.l.b16 %v5980
        %v6173 = vunpack.c.l.b16 %v5981
        %v6174 = vunpack.c.l.b16 %v5982
        %v6175 = vunpack.c.l.b16 %v5983
        %v6176 = vunpack.c.l.b16 %v5984
        %v6177 = vunpack.c.l.b16 %v5985
        %v6178 = vunpack.c.l.b16 %v5986
        %v6179 = vunpack.c.l.b16 %v5987
        %v6180 = vunpack.c.l.b16 %v5988
        %v6181 = vunpack.c.l.b16 %v5989
        %v6182 = vunpack.c.l.b16 %v5990
        %v6183 = vunpack.c.l.b16 %v5991
        %v6184 = vpack.c.b16 %v6089, %v6088
        %v6185 = vpack.c.b16 %v6091, %v6090
        %v6186 = vpack.c.b16 %v6093, %v6092
        %v6187 = vpack.c.b16 %v6095, %v6094
        %v6188 = vpack.c.b16 %v6097, %v6096
        %v6189 = vpack.c.b16 %v6099, %v6098
        %v6190 = vpack.c.b16 %v6101, %v6100
        %v6191 = vpack.c.b16 %v6103, %v6102
        %v6192 = vpack.c.b16 %v6105, %v6104
        %v6193 = vpack.c.b16 %v6107, %v6106
        %v6194 = vpack.c.b16 %v6109, %v6108
        %v6195 = vpack.c.b16 %v6111, %v6110
        %v6196 = vpack.c.b16 %v6113, %v6112
        %v6197 = vpack.c.b16 %v6115, %v6114
        %v6198 = vpack.c.b16 %v6117, %v6116
        %v6199 = vpack.c.b16 %v6119, %v6118
        %v6200 = vpack.c.b16 %v6121, %v6120
        %v6201 = vpack.c.b16 %v6123, %v6122
        %v6202 = vpack.c.b16 %v6125, %v6124
        %v6203 = vpack.c.b16 %v6127, %v6126
        %v6204 = vpack.c.b16 %v6129, %v6128
        %v6205 = vpack.c.b16 %v6131, %v6130
        %v6206 = vpack.c.b16 %v6133, %v6132
        %v6207 = vpack.c.b16 %v6135, %v6134
        %v6208 = vpack.c.b16 %v6137, %v6136
        %v6209 = vpack.c.b16 %v6139, %v6138
        %v6210 = vpack.c.b16 %v6141, %v6140
        %v6211 = vpack.c.b16 %v6143, %v6142
        %v6212 = vpack.c.b16 %v6145, %v6144
        %v6213 = vpack.c.b16 %v6147, %v6146
        %v6214 = vpack.c.b16 %v6149, %v6148
        %v6215 = vpack.c.b16 %v6151, %v6150
        %v6216 = vpack.c.b16 %v6153, %v6152
        %v6217 = vpack.c.b16 %v6155, %v6154
        %v6218 = vpack.c.b16 %v6157, %v6156
        %v6219 = vpack.c.b16 %v6159, %v6158
        %v6220 = vpack.c.b16 %v6161, %v6160
        %v6221 = vpack.c.b16 %v6163, %v6162
        %v6222 = vpack.c.b16 %v6165, %v6164
        %v6223 = vpack.c.b16 %v6167, %v6166
        %v6224 = vpack.c.b16 %v6169, %v6168
        %v6225 = vpack.c.b16 %v6171, %v6170
        %v6226 = vpack.c.b16 %v6173, %v6172
        %v6227 = vpack.c.b16 %v6175, %v6174
        %v6228 = vpack.c.b16 %v6177, %v6176
        %v6229 = vpack.c.b16 %v6179, %v6178
        %v6230 = vpack.c.b16 %v6181, %v6180
        %v6231 = vpack.c.b16 %v6183, %v6182
        %6280 = vmatprep.subr.bf16.mxu0 0
        %6281 = vmatpush1.bf16.msra.mxu0 %v6184
        %6282 = vmatprep.subr.bf16.mxu0 0
        %6283 = vmatpush1.bf16.msra.mxu0 %v6185
        %6284 = vmatprep.subr.bf16.mxu0 0
        %6285 = vmatpush1.bf16.msra.mxu0 %v6186
        %6286 = vmatprep.subr.bf16.mxu0 0
        %6287 = vmatpush1.bf16.msra.mxu0 %v6187
        %6288 = vmatprep.subr.bf16.mxu0 0
        %6289 = vmatpush1.bf16.msra.mxu0 %v6188
        %6290 = vmatprep.subr.bf16.mxu0 0
        %6291 = vmatpush1.bf16.msra.mxu0 %v6189
        %6292 = vmatprep.subr.bf16.mxu0 0
        %6293 = vmatpush1.bf16.msra.mxu0 %v6190
        %6294 = vmatprep.subr.bf16.mxu0 0
        %6295 = vmatpush1.bf16.msra.mxu0 %v6191
        %6296 = vmatprep.subr.bf16.mxu0 0
        %6297 = vmatpush1.bf16.msra.mxu0 %v6192
        %6298 = vmatprep.subr.bf16.mxu0 0
        %6299 = vmatpush1.bf16.msra.mxu0 %v6193
        %6300 = vmatprep.subr.bf16.mxu0 0
        %6301 = vmatpush1.bf16.msra.mxu0 %v6194
        %6302 = vmatprep.subr.bf16.mxu0 0
        %6303 = vmatpush1.bf16.msra.mxu0 %v6195
        %6304 = vmatprep.subr.bf16.mxu0 0
        %6305 = vmatpush1.bf16.msra.mxu0 %v6196
        %6306 = vmatprep.subr.bf16.mxu0 0
        %6307 = vmatpush1.bf16.msra.mxu0 %v6197
        %6308 = vmatprep.subr.bf16.mxu0 0
        %6309 = vmatpush1.bf16.msra.mxu0 %v6198
        %6310 = vmatprep.subr.bf16.mxu0 0
        %6311 = vmatpush1.bf16.msra.mxu0 %v6199
        %6312 = vmatprep.mubr.bf16.mxu0 %v5698
        %6313 = vmatmul.mubr.bf16.gmra.mrb[0].mxu0 %v5697
        %v6314 = vpop.f32.mrb[0].mxu0
        %v6315 = vadd.f32 0.0, %v6314
        %v6316 = vpop.f32.mrb[0].mxu0
        %v6317 = vpop.f32.mrb[0].mxu0
        %v6318 = vadd.f32 0.0, %v6317
        %v6319 = vpop.f32.mrb[0].mxu0
        %6320 = vmatprep.mubr.bf16.mxu0 %v5704
        %6321 = vmatmul.mubr.bf16.gmra.mrb[0].mxu0 %v5703
        %v6322 = vpop.f32.mrb[0].mxu0
        %v6323 = vadd.f32 0.0, %v6322
        %v6324 = vpop.f32.mrb[0].mxu0
        %v6325 = vpop.f32.mrb[0].mxu0
        %v6326 = vadd.f32 0.0, %v6325
        %v6327 = vpop.f32.mrb[0].mxu0
        %6328 = vmatprep.mubr.bf16.mxu0 %v5710
        %6329 = vmatmul.mubr.bf16.gmra.mrb[0].mxu0 %v5709
        %v6330 = vpop.f32.mrb[0].mxu0
        %v6331 = vadd.f32 0.0, %v6330
        %v6332 = vpop.f32.mrb[0].mxu0
        %v6333 = vpop.f32.mrb[0].mxu0
        %v6334 = vadd.f32 0.0, %v6333
        %v6335 = vpop.f32.mrb[0].mxu0
        %6336 = vmatprep.mubr.bf16.mxu0 %v5716
        %6337 = vmatmul.mubr.bf16.gmra.mrb[0].mxu0 %v5715
        %v6338 = vpop.f32.mrb[0].mxu0
        %v6339 = vadd.f32 0.0, %v6338
        %v6340 = vpop.f32.mrb[0].mxu0
        %v6341 = vpop.f32.mrb[0].mxu0
        %v6342 = vadd.f32 0.0, %v6341
        %v6343 = vpop.f32.mrb[0].mxu0
        %6344 = vmatprep.mubr.bf16.mxu0 %v5722
        %6345 = vmatmul.mubr.bf16.gmra.mrb[0].mxu0 %v5721
        %v6346 = vpop.f32.mrb[0].mxu0
        %v6347 = vadd.f32 0.0, %v6346
        %v6348 = vpop.f32.mrb[0].mxu0
        %v6349 = vpop.f32.mrb[0].mxu0
        %v6350 = vadd.f32 0.0, %v6349
        %v6351 = vpop.f32.mrb[0].mxu0
        %6352 = vmatprep.mubr.bf16.mxu0 %v5728
        %6353 = vmatmul.mubr.bf16.gmra.mrb[0].mxu0 %v5727
        %v6354 = vpop.f32.mrb[0].mxu0
        %v6355 = vadd.f32 0.0, %v6354
        %v6356 = vpop.f32.mrb[0].mxu0
        %v6357 = vpop.f32.mrb[0].mxu0
        %v6358 = vadd.f32 0.0, %v6357
        %v6359 = vpop.f32.mrb[0].mxu0
        %6360 = vmatprep.mubr.bf16.mxu0 %v5734
        %6361 = vmatmul.mubr.bf16.gmra.mrb[0].mxu0 %v5733
        %v6362 = vpop.f32.mrb[0].mxu0
        %v6363 = vadd.f32 0.0, %v6362
        %v6364 = vpop.f32.mrb[0].mxu0
        %v6365 = vpop.f32.mrb[0].mxu0
        %v6366 = vadd.f32 0.0, %v6365
        %v6367 = vpop.f32.mrb[0].mxu0
        %6368 = vmatprep.mubr.bf16.mxu0 %v5740
        %6369 = vmatmul.mubr.bf16.gmra.mrb[0].mxu0 %v5739
        %v6370 = vpop.f32.mrb[0].mxu0
        %v6371 = vadd.f32 0.0, %v6370
        %v6372 = vpop.f32.mrb[0].mxu0
        %v6373 = vpop.f32.mrb[0].mxu0
        %v6374 = vadd.f32 0.0, %v6373
        %v6375 = vpop.f32.mrb[0].mxu0
        %6376 = vmatprep.mubr.bf16.mxu0 %v5746
        %6377 = vmatmul.mubr.bf16.gmra.mrb[0].mxu0 %v5745
        %v6378 = vpop.f32.mrb[0].mxu0
        %v6379 = vadd.f32 0.0, %v6378
        %v6380 = vpop.f32.mrb[0].mxu0
        %v6381 = vpop.f32.mrb[0].mxu0
        %v6382 = vadd.f32 0.0, %v6381
        %v6383 = vpop.f32.mrb[0].mxu0
        %6384 = vmatprep.mubr.bf16.mxu0 %v5752
        %6385 = vmatmul.mubr.bf16.gmra.mrb[0].mxu0 %v5751
        %v6386 = vpop.f32.mrb[0].mxu0
        %v6387 = vadd.f32 0.0, %v6386
        %v6388 = vpop.f32.mrb[0].mxu0
        %v6389 = vpop.f32.mrb[0].mxu0
        %v6390 = vadd.f32 0.0, %v6389
        %v6391 = vpop.f32.mrb[0].mxu0
        %6392 = vmatprep.mubr.bf16.mxu0 %v5758
        %6393 = vmatmul.mubr.bf16.gmra.mrb[0].mxu0 %v5757
        %v6394 = vpop.f32.mrb[0].mxu0
        %v6395 = vadd.f32 0.0, %v6394
        %v6396 = vpop.f32.mrb[0].mxu0
        %v6397 = vpop.f32.mrb[0].mxu0
        %v6398 = vadd.f32 0.0, %v6397
        %v6399 = vpop.f32.mrb[0].mxu0
        %6400 = vmatprep.mubr.bf16.mxu0 %v5764
        %6401 = vmatmul.mubr.bf16.gmra.mrb[0].mxu0 %v5763
        %v6402 = vpop.f32.mrb[0].mxu0
        %v6403 = vadd.f32 0.0, %v6402
        %v6404 = vpop.f32.mrb[0].mxu0
        %v6405 = vpop.f32.mrb[0].mxu0
        %v6406 = vadd.f32 0.0, %v6405
        %v6407 = vpop.f32.mrb[0].mxu0
        %6408 = vmatprep.mubr.bf16.mxu0 %v5770
        %6409 = vmatmul.mubr.bf16.gmra.mrb[0].mxu0 %v5769
        %v6410 = vpop.f32.mrb[0].mxu0
        %v6411 = vadd.f32 0.0, %v6410
        %v6412 = vpop.f32.mrb[0].mxu0
        %v6413 = vpop.f32.mrb[0].mxu0
        %v6414 = vadd.f32 0.0, %v6413
        %v6415 = vpop.f32.mrb[0].mxu0
        %6416 = vmatprep.mubr.bf16.mxu0 %v5776
        %6417 = vmatmul.mubr.bf16.gmra.mrb[0].mxu0 %v5775
        %v6418 = vpop.f32.mrb[0].mxu0
        %v6419 = vadd.f32 0.0, %v6418
        %v6420 = vpop.f32.mrb[0].mxu0
        %v6421 = vpop.f32.mrb[0].mxu0
        %v6422 = vadd.f32 0.0, %v6421
        %v6423 = vpop.f32.mrb[0].mxu0
        %6424 = vmatprep.mubr.bf16.mxu0 %v5782
        %6425 = vmatmul.mubr.bf16.gmra.mrb[0].mxu0 %v5781
        %v6426 = vpop.f32.mrb[0].mxu0
        %v6427 = vadd.f32 0.0, %v6426
        %v6428 = vpop.f32.mrb[0].mxu0
        %v6429 = vpop.f32.mrb[0].mxu0
        %v6430 = vadd.f32 0.0, %v6429
        %v6431 = vpop.f32.mrb[0].mxu0
        %6432 = vmatprep.mubr.bf16.mxu0 %v5788
        %6433 = vmatmul.mubr.bf16.gmra.mrb[0].mxu0 %v5787
        %v6434 = vpop.f32.mrb[0].mxu0
        %v6435 = vadd.f32 0.0, %v6434
        %v6436 = vpop.f32.mrb[0].mxu0
        %v6437 = vpop.f32.mrb[0].mxu0
        %v6438 = vadd.f32 0.0, %v6437
        %v6439 = vpop.f32.mrb[0].mxu0
        %6440 = vdwg.mxu0
        %6441 = vmatprep.subr.bf16.mxu0 0
        %6442 = vmatpush1.bf16.msra.mxu0 %v6200
        %6443 = vmatprep.subr.bf16.mxu0 0
        %6444 = vmatpush1.bf16.msra.mxu0 %v6201
        %6445 = vmatprep.subr.bf16.mxu0 0
        %6446 = vmatpush1.bf16.msra.mxu0 %v6202
        %6447 = vmatprep.subr.bf16.mxu0 0
        %6448 = vmatpush1.bf16.msra.mxu0 %v6203
        %6449 = vmatprep.subr.bf16.mxu0 0
        %6450 = vmatpush1.bf16.msra.mxu0 %v6204
        %6451 = vmatprep.subr.bf16.mxu0 0
        %6452 = vmatpush1.bf16.msra.mxu0 %v6205
        %6453 = vmatprep.subr.bf16.mxu0 0
        %6454 = vmatpush1.bf16.msra.mxu0 %v6206
        %6455 = vmatprep.subr.bf16.mxu0 0
        %6456 = vmatpush1.bf16.msra.mxu0 %v6207
        %6457 = vmatprep.subr.bf16.mxu0 0
        %6458 = vmatpush1.bf16.msra.mxu0 %v6208
        %6459 = vmatprep.subr.bf16.mxu0 0
        %6460 = vmatpush1.bf16.msra.mxu0 %v6209
        %6461 = vmatprep.subr.bf16.mxu0 0
        %6462 = vmatpush1.bf16.msra.mxu0 %v6210
        %6463 = vmatprep.subr.bf16.mxu0 0
        %6464 = vmatpush1.bf16.msra.mxu0 %v6211
        %6465 = vmatprep.subr.bf16.mxu0 0
        %6466 = vmatpush1.bf16.msra.mxu0 %v6212
        %6467 = vmatprep.subr.bf16.mxu0 0
        %6468 = vmatpush1.bf16.msra.mxu0 %v6213
        %6469 = vmatprep.subr.bf16.mxu0 0
        %6470 = vmatpush1.bf16.msra.mxu0 %v6214
        %6471 = vmatprep.subr.bf16.mxu0 0
        %6472 = vmatpush1.bf16.msra.mxu0 %v6215
        %6473 = vmatprep.mubr.bf16.mxu0 %v5700
        %6474 = vmatmul.mubr.bf16.gmra.mrb[0].mxu0 %v5699
        %v6475 = vpop.f32.mrb[0].mxu0
        %v6476 = vadd.f32 %v6315, %v6475
        %v6477 = vpop.f32.mrb[0].mxu0
        %v6478 = vpop.f32.mrb[0].mxu0
        %v6479 = vadd.f32 %v6318, %v6478
        %v6480 = vpop.f32.mrb[0].mxu0
        %6481 = vmatprep.mubr.bf16.mxu0 %v5706
        %6482 = vmatmul.mubr.bf16.gmra.mrb[0].mxu0 %v5705
        %v6483 = vpop.f32.mrb[0].mxu0
        %v6484 = vadd.f32 %v6323, %v6483
        %v6485 = vpop.f32.mrb[0].mxu0
        %v6486 = vpop.f32.mrb[0].mxu0
        %v6487 = vadd.f32 %v6326, %v6486
        %v6488 = vpop.f32.mrb[0].mxu0
        %6489 = vmatprep.mubr.bf16.mxu0 %v5712
        %6490 = vmatmul.mubr.bf16.gmra.mrb[0].mxu0 %v5711
        %v6491 = vpop.f32.mrb[0].mxu0
        %v6492 = vadd.f32 %v6331, %v6491
        %v6493 = vpop.f32.mrb[0].mxu0
        %v6494 = vpop.f32.mrb[0].mxu0
        %v6495 = vadd.f32 %v6334, %v6494
        %v6496 = vpop.f32.mrb[0].mxu0
        %6497 = vmatprep.mubr.bf16.mxu0 %v5718
        %6498 = vmatmul.mubr.bf16.gmra.mrb[0].mxu0 %v5717
        %v6499 = vpop.f32.mrb[0].mxu0
        %v6500 = vadd.f32 %v6339, %v6499
        %v6501 = vpop.f32.mrb[0].mxu0
        %v6502 = vpop.f32.mrb[0].mxu0
        %v6503 = vadd.f32 %v6342, %v6502
        %v6504 = vpop.f32.mrb[0].mxu0
        %6505 = vmatprep.mubr.bf16.mxu0 %v5724
        %6506 = vmatmul.mubr.bf16.gmra.mrb[0].mxu0 %v5723
        %v6507 = vpop.f32.mrb[0].mxu0
        %v6508 = vadd.f32 %v6347, %v6507
        %v6509 = vpop.f32.mrb[0].mxu0
        %v6510 = vpop.f32.mrb[0].mxu0
        %v6511 = vadd.f32 %v6350, %v6510
        %v6512 = vpop.f32.mrb[0].mxu0
        %6513 = vmatprep.mubr.bf16.mxu0 %v5730
        %6514 = vmatmul.mubr.bf16.gmra.mrb[0].mxu0 %v5729
        %v6515 = vpop.f32.mrb[0].mxu0
        %v6516 = vadd.f32 %v6355, %v6515
        %v6517 = vpop.f32.mrb[0].mxu0
        %v6518 = vpop.f32.mrb[0].mxu0
        %v6519 = vadd.f32 %v6358, %v6518
        %v6520 = vpop.f32.mrb[0].mxu0
        %6521 = vmatprep.mubr.bf16.mxu0 %v5736
        %6522 = vmatmul.mubr.bf16.gmra.mrb[0].mxu0 %v5735
        %v6523 = vpop.f32.mrb[0].mxu0
        %v6524 = vadd.f32 %v6363, %v6523
        %v6525 = vpop.f32.mrb[0].mxu0
        %v6526 = vpop.f32.mrb[0].mxu0
        %v6527 = vadd.f32 %v6366, %v6526
        %v6528 = vpop.f32.mrb[0].mxu0
        %6529 = vmatprep.mubr.bf16.mxu0 %v5742
        %6530 = vmatmul.mubr.bf16.gmra.mrb[0].mxu0 %v5741
        %v6531 = vpop.f32.mrb[0].mxu0
        %v6532 = vadd.f32 %v6371, %v6531
        %v6533 = vpop.f32.mrb[0].mxu0
        %v6534 = vpop.f32.mrb[0].mxu0
        %v6535 = vadd.f32 %v6374, %v6534
        %v6536 = vpop.f32.mrb[0].mxu0
        %6537 = vmatprep.mubr.bf16.mxu0 %v5748
        %6538 = vmatmul.mubr.bf16.gmra.mrb[0].mxu0 %v5747
        %v6539 = vpop.f32.mrb[0].mxu0
        %v6540 = vadd.f32 %v6379, %v6539
        %v6541 = vpop.f32.mrb[0].mxu0
        %v6542 = vpop.f32.mrb[0].mxu0
        %v6543 = vadd.f32 %v6382, %v6542
        %v6544 = vpop.f32.mrb[0].mxu0
        %6545 = vmatprep.mubr.bf16.mxu0 %v5754
        %6546 = vmatmul.mubr.bf16.gmra.mrb[0].mxu0 %v5753
        %v6547 = vpop.f32.mrb[0].mxu0
        %v6548 = vadd.f32 %v6387, %v6547
        %v6549 = vpop.f32.mrb[0].mxu0
        %v6550 = vpop.f32.mrb[0].mxu0
        %v6551 = vadd.f32 %v6390, %v6550
        %v6552 = vpop.f32.mrb[0].mxu0
        %6553 = vmatprep.mubr.bf16.mxu0 %v5760
        %6554 = vmatmul.mubr.bf16.gmra.mrb[0].mxu0 %v5759
        %v6555 = vpop.f32.mrb[0].mxu0
        %v6556 = vadd.f32 %v6395, %v6555
        %v6557 = vpop.f32.mrb[0].mxu0
        %v6558 = vpop.f32.mrb[0].mxu0
        %v6559 = vadd.f32 %v6398, %v6558
        %v6560 = vpop.f32.mrb[0].mxu0
        %6561 = vmatprep.mubr.bf16.mxu0 %v5766
        %6562 = vmatmul.mubr.bf16.gmra.mrb[0].mxu0 %v5765
        %v6563 = vpop.f32.mrb[0].mxu0
        %v6564 = vadd.f32 %v6403, %v6563
        %v6565 = vpop.f32.mrb[0].mxu0
        %v6566 = vpop.f32.mrb[0].mxu0
        %v6567 = vadd.f32 %v6406, %v6566
        %v6568 = vpop.f32.mrb[0].mxu0
        %6569 = vmatprep.mubr.bf16.mxu0 %v5772
        %6570 = vmatmul.mubr.bf16.gmra.mrb[0].mxu0 %v5771
        %v6571 = vpop.f32.mrb[0].mxu0
        %v6572 = vadd.f32 %v6411, %v6571
        %v6573 = vpop.f32.mrb[0].mxu0
        %v6574 = vpop.f32.mrb[0].mxu0
        %v6575 = vadd.f32 %v6414, %v6574
        %v6576 = vpop.f32.mrb[0].mxu0
        %6577 = vmatprep.mubr.bf16.mxu0 %v5778
        %6578 = vmatmul.mubr.bf16.gmra.mrb[0].mxu0 %v5777
        %v6579 = vpop.f32.mrb[0].mxu0
        %v6580 = vadd.f32 %v6419, %v6579
        %v6581 = vpop.f32.mrb[0].mxu0
        %v6582 = vpop.f32.mrb[0].mxu0
        %v6583 = vadd.f32 %v6422, %v6582
        %v6584 = vpop.f32.mrb[0].mxu0
        %6585 = vmatprep.mubr.bf16.mxu0 %v5784
        %6586 = vmatmul.mubr.bf16.gmra.mrb[0].mxu0 %v5783
        %v6587 = vpop.f32.mrb[0].mxu0
        %v6588 = vadd.f32 %v6427, %v6587
        %v6589 = vpop.f32.mrb[0].mxu0
        %v6590 = vpop.f32.mrb[0].mxu0
        %v6591 = vadd.f32 %v6430, %v6590
        %v6592 = vpop.f32.mrb[0].mxu0
        %6593 = vmatprep.mubr.bf16.mxu0 %v5790
        %6594 = vmatmul.mubr.bf16.gmra.mrb[0].mxu0 %v5789
        %v6595 = vpop.f32.mrb[0].mxu0
        %v6596 = vadd.f32 %v6435, %v6595
        %v6597 = vpop.f32.mrb[0].mxu0
        %v6598 = vpop.f32.mrb[0].mxu0
        %v6599 = vadd.f32 %v6438, %v6598
        %v6600 = vpop.f32.mrb[0].mxu0
        %6601 = vdwg.mxu0
        %6602 = vmatprep.subr.bf16.mxu0 0
        %6603 = vmatpush1.bf16.msra.mxu0 %v6216
        %6604 = vmatprep.subr.bf16.mxu0 0
        %6605 = vmatpush1.bf16.msra.mxu0 %v6217
        %6606 = vmatprep.subr.bf16.mxu0 0
        %6607 = vmatpush1.bf16.msra.mxu0 %v6218
        %6608 = vmatprep.subr.bf16.mxu0 0
        %6609 = vmatpush1.bf16.msra.mxu0 %v6219
        %6610 = vmatprep.subr.bf16.mxu0 0
        %6611 = vmatpush1.bf16.msra.mxu0 %v6220
        %6612 = vmatprep.subr.bf16.mxu0 0
        %6613 = vmatpush1.bf16.msra.mxu0 %v6221
        %6614 = vmatprep.subr.bf16.mxu0 0
        %6615 = vmatpush1.bf16.msra.mxu0 %v6222
        %6616 = vmatprep.subr.bf16.mxu0 0
        %6617 = vmatpush1.bf16.msra.mxu0 %v6223
        %6618 = vmatprep.subr.bf16.mxu0 0
        %6619 = vmatpush1.bf16.msra.mxu0 %v6224
        %6620 = vmatprep.subr.bf16.mxu0 0
        %6621 = vmatpush1.bf16.msra.mxu0 %v6225
        %6622 = vmatprep.subr.bf16.mxu0 0
        %6623 = vmatpush1.bf16.msra.mxu0 %v6226
        %6624 = vmatprep.subr.bf16.mxu0 0
        %6625 = vmatpush1.bf16.msra.mxu0 %v6227
        %6626 = vmatprep.subr.bf16.mxu0 0
        %6627 = vmatpush1.bf16.msra.mxu0 %v6228
        %6628 = vmatprep.subr.bf16.mxu0 0
        %6629 = vmatpush1.bf16.msra.mxu0 %v6229
        %6630 = vmatprep.subr.bf16.mxu0 0
        %6631 = vmatpush1.bf16.msra.mxu0 %v6230
        %6632 = vmatprep.subr.bf16.mxu0 0
        %6633 = vmatpush1.bf16.msra.mxu0 %v6231
        %6634 = vmatprep.mubr.bf16.mxu0 %v5702
        %6635 = vmatmul.mubr.bf16.gmra.mrb[0].mxu0 %v5701
        %v6636 = vpop.f32.mrb[0].mxu0
        %v6637 = vadd.f32 %v6476, %v6636
        %v6638 = vpop.f32.mrb[0].mxu0
        %v6639 = vpop.f32.mrb[0].mxu0
        %v6640 = vadd.f32 %v6479, %v6639
        %v6641 = vpop.f32.mrb[0].mxu0
        %6642 = vmatprep.mubr.bf16.mxu0 %v5708
        %6643 = vmatmul.mubr.bf16.gmra.mrb[0].mxu0 %v5707
        %v6644 = vpop.f32.mrb[0].mxu0
        %v6645 = vadd.f32 %v6484, %v6644
        %v6646 = vpop.f32.mrb[0].mxu0
        %v6647 = vpop.f32.mrb[0].mxu0
        %v6648 = vadd.f32 %v6487, %v6647
        %v6649 = vpop.f32.mrb[0].mxu0
        %6650 = vmatprep.mubr.bf16.mxu0 %v5714
        %6651 = vmatmul.mubr.bf16.gmra.mrb[0].mxu0 %v5713
        %v6652 = vpop.f32.mrb[0].mxu0
        %v6653 = vadd.f32 %v6492, %v6652
        %v6654 = vpop.f32.mrb[0].mxu0
        %v6655 = vpop.f32.mrb[0].mxu0
        %v6656 = vadd.f32 %v6495, %v6655
        %v6657 = vpop.f32.mrb[0].mxu0
        %6658 = vmatprep.mubr.bf16.mxu0 %v5720
        %6659 = vmatmul.mubr.bf16.gmra.mrb[0].mxu0 %v5719
        %v6660 = vpop.f32.mrb[0].mxu0
        %v6661 = vadd.f32 %v6500, %v6660
        %v6662 = vpop.f32.mrb[0].mxu0
        %v6663 = vpop.f32.mrb[0].mxu0
        %v6664 = vadd.f32 %v6503, %v6663
        %v6665 = vpop.f32.mrb[0].mxu0
        %6666 = vmatprep.mubr.bf16.mxu0 %v5726
        %6667 = vmatmul.mubr.bf16.gmra.mrb[0].mxu0 %v5725
        %v6668 = vpop.f32.mrb[0].mxu0
        %v6669 = vadd.f32 %v6508, %v6668
        %v6670 = vpop.f32.mrb[0].mxu0
        %v6671 = vpop.f32.mrb[0].mxu0
        %v6672 = vadd.f32 %v6511, %v6671
        %v6673 = vpop.f32.mrb[0].mxu0
        %6674 = vmatprep.mubr.bf16.mxu0 %v5732
        %6675 = vmatmul.mubr.bf16.gmra.mrb[0].mxu0 %v5731
        %v6676 = vpop.f32.mrb[0].mxu0
        %v6677 = vadd.f32 %v6516, %v6676
        %v6678 = vpop.f32.mrb[0].mxu0
        %v6679 = vpop.f32.mrb[0].mxu0
        %v6680 = vadd.f32 %v6519, %v6679
        %v6681 = vpop.f32.mrb[0].mxu0
        %6682 = vmatprep.mubr.bf16.mxu0 %v5738
        %6683 = vmatmul.mubr.bf16.gmra.mrb[0].mxu0 %v5737
        %v6684 = vpop.f32.mrb[0].mxu0
        %v6685 = vadd.f32 %v6524, %v6684
        %v6686 = vpop.f32.mrb[0].mxu0
        %v6687 = vpop.f32.mrb[0].mxu0
        %v6688 = vadd.f32 %v6527, %v6687
        %v6689 = vpop.f32.mrb[0].mxu0
        %6690 = vmatprep.mubr.bf16.mxu0 %v5744
        %6691 = vmatmul.mubr.bf16.gmra.mrb[0].mxu0 %v5743
        %v6692 = vpop.f32.mrb[0].mxu0
        %v6693 = vadd.f32 %v6532, %v6692
        %v6694 = vpop.f32.mrb[0].mxu0
        %v6695 = vpop.f32.mrb[0].mxu0
        %v6696 = vadd.f32 %v6535, %v6695
        %v6697 = vpop.f32.mrb[0].mxu0
        %6698 = vmatprep.mubr.bf16.mxu0 %v5750
        %6699 = vmatmul.mubr.bf16.gmra.mrb[0].mxu0 %v5749
        %v6700 = vpop.f32.mrb[0].mxu0
        %v6701 = vadd.f32 %v6540, %v6700
        %v6702 = vpop.f32.mrb[0].mxu0
        %v6703 = vpop.f32.mrb[0].mxu0
        %v6704 = vadd.f32 %v6543, %v6703
        %v6705 = vpop.f32.mrb[0].mxu0
        %6706 = vmatprep.mubr.bf16.mxu0 %v5756
        %6707 = vmatmul.mubr.bf16.gmra.mrb[0].mxu0 %v5755
        %v6708 = vpop.f32.mrb[0].mxu0
        %v6709 = vadd.f32 %v6548, %v6708
        %v6710 = vpop.f32.mrb[0].mxu0
        %v6711 = vpop.f32.mrb[0].mxu0
        %v6712 = vadd.f32 %v6551, %v6711
        %v6713 = vpop.f32.mrb[0].mxu0
        %6714 = vmatprep.mubr.bf16.mxu0 %v5762
        %6715 = vmatmul.mubr.bf16.gmra.mrb[0].mxu0 %v5761
        %v6716 = vpop.f32.mrb[0].mxu0
        %v6717 = vadd.f32 %v6556, %v6716
        %v6718 = vpop.f32.mrb[0].mxu0
        %v6719 = vpop.f32.mrb[0].mxu0
        %v6720 = vadd.f32 %v6559, %v6719
        %v6721 = vpop.f32.mrb[0].mxu0
        %6722 = vmatprep.mubr.bf16.mxu0 %v5768
        %6723 = vmatmul.mubr.bf16.gmra.mrb[0].mxu0 %v5767
        %v6724 = vpop.f32.mrb[0].mxu0
        %v6725 = vadd.f32 %v6564, %v6724
        %v6726 = vpop.f32.mrb[0].mxu0
        %v6727 = vpop.f32.mrb[0].mxu0
        %v6728 = vadd.f32 %v6567, %v6727
        %v6729 = vpop.f32.mrb[0].mxu0
        %6730 = vmatprep.mubr.bf16.mxu0 %v5774
        %6731 = vmatmul.mubr.bf16.gmra.mrb[0].mxu0 %v5773
        %v6732 = vpop.f32.mrb[0].mxu0
        %v6733 = vadd.f32 %v6572, %v6732
        %v6734 = vpop.f32.mrb[0].mxu0
        %v6735 = vpop.f32.mrb[0].mxu0
        %v6736 = vadd.f32 %v6575, %v6735
        %v6737 = vpop.f32.mrb[0].mxu0
        %6738 = vmatprep.mubr.bf16.mxu0 %v5780
        %6739 = vmatmul.mubr.bf16.gmra.mrb[0].mxu0 %v5779
        %v6740 = vpop.f32.mrb[0].mxu0
        %v6741 = vadd.f32 %v6580, %v6740
        %v6742 = vpop.f32.mrb[0].mxu0
        %v6743 = vpop.f32.mrb[0].mxu0
        %v6744 = vadd.f32 %v6583, %v6743
        %v6745 = vpop.f32.mrb[0].mxu0
        %6746 = vmatprep.mubr.bf16.mxu0 %v5786
        %6747 = vmatmul.mubr.bf16.gmra.mrb[0].mxu0 %v5785
        %v6748 = vpop.f32.mrb[0].mxu0
        %v6749 = vadd.f32 %v6588, %v6748
        %v6750 = vpop.f32.mrb[0].mxu0
        %v6751 = vpop.f32.mrb[0].mxu0
        %v6752 = vadd.f32 %v6591, %v6751
        %v6753 = vpop.f32.mrb[0].mxu0
        %6754 = vmatprep.mubr.bf16.mxu0 %v5792
        %6755 = vmatmul.mubr.bf16.gmra.mrb[0].mxu0 %v5791
        %v6756 = vpop.f32.mrb[0].mxu0
        %v6757 = vadd.f32 %v6596, %v6756
        %v6758 = vpop.f32.mrb[0].mxu0
        %v6759 = vpop.f32.mrb[0].mxu0
        %v6760 = vadd.f32 %v6599, %v6759
        %v6761 = vpop.f32.mrb[0].mxu0
        %6762 = vdwg.mxu0
        %v6859 = vunpack.c.l.b16 %v5799
        %v6860 = vunpack.c.l.b16 %v5800
        %v6861 = vunpack.c.l.b16 %v5801
        %v6862 = vunpack.c.l.b16 %v5802
        %v6863 = vunpack.c.l.b16 %v5803
        %v6864 = vunpack.c.l.b16 %v5804
        %v6865 = vunpack.c.l.b16 %v5805
        %v6866 = vunpack.c.l.b16 %v5806
        %v6867 = vunpack.c.l.b16 %v5807
        %v6868 = vunpack.c.l.b16 %v5808
        %v6869 = vunpack.c.l.b16 %v5809
        %v6870 = vunpack.c.l.b16 %v5810
        %v6871 = vunpack.c.l.b16 %v5811
        %v6872 = vunpack.c.l.b16 %v5812
        %v6873 = vunpack.c.l.b16 %v5813
        %v6874 = vunpack.c.l.b16 %v5814
        %v6875 = vunpack.c.l.b16 %v5815
        %v6876 = vunpack.c.l.b16 %v5816
        %v6877 = vunpack.c.l.b16 %v5817
        %v6878 = vunpack.c.l.b16 %v5818
        %v6879 = vunpack.c.l.b16 %v5819
        %v6880 = vunpack.c.l.b16 %v5820
        %v6881 = vunpack.c.l.b16 %v5821
        %v6882 = vunpack.c.l.b16 %v5822
        %v6883 = vunpack.c.l.b16 %v5823
        %v6884 = vunpack.c.l.b16 %v5824
        %v6885 = vunpack.c.l.b16 %v5825
        %v6886 = vunpack.c.l.b16 %v5826
        %v6887 = vunpack.c.l.b16 %v5827
        %v6888 = vunpack.c.l.b16 %v5828
        %v6889 = vunpack.c.l.b16 %v5829
        %v6890 = vunpack.c.l.b16 %v5830
        %v6891 = vunpack.c.l.b16 %v5831
        %v6892 = vunpack.c.l.b16 %v5832
        %v6893 = vunpack.c.l.b16 %v5833
        %v6894 = vunpack.c.l.b16 %v5834
        %v6895 = vunpack.c.l.b16 %v5835
        %v6896 = vunpack.c.l.b16 %v5836
        %v6897 = vunpack.c.l.b16 %v5837
        %v6898 = vunpack.c.l.b16 %v5838
        %v6899 = vunpack.c.l.b16 %v5839
        %v6900 = vunpack.c.l.b16 %v5840
        %v6901 = vunpack.c.l.b16 %v5841
        %v6902 = vunpack.c.l.b16 %v5842
        %v6903 = vunpack.c.l.b16 %v5843
        %v6904 = vunpack.c.l.b16 %v5844
        %v6905 = vunpack.c.l.b16 %v5845
        %v6906 = vunpack.c.l.b16 %v5846
        %v6907 = vunpack.c.l.b16 %v5847
        %v6908 = vunpack.c.l.b16 %v5848
        %v6909 = vunpack.c.l.b16 %v5849
        %v6910 = vunpack.c.l.b16 %v5850
        %v6911 = vunpack.c.l.b16 %v5851
        %v6912 = vunpack.c.l.b16 %v5852
        %v6913 = vunpack.c.l.b16 %v5853
        %v6914 = vunpack.c.l.b16 %v5854
        %v6915 = vunpack.c.l.b16 %v5855
        %v6916 = vunpack.c.l.b16 %v5856
        %v6917 = vunpack.c.l.b16 %v5857
        %v6918 = vunpack.c.l.b16 %v5858
        %v6919 = vunpack.c.l.b16 %v5859
        %v6920 = vunpack.c.l.b16 %v5860
        %v6921 = vunpack.c.l.b16 %v5861
        %v6922 = vunpack.c.l.b16 %v5862
        %v6923 = vunpack.c.l.b16 %v5863
        %v6924 = vunpack.c.l.b16 %v5864
        %v6925 = vunpack.c.l.b16 %v5865
        %v6926 = vunpack.c.l.b16 %v5866
        %v6927 = vunpack.c.l.b16 %v5867
        %v6928 = vunpack.c.l.b16 %v5868
        %v6929 = vunpack.c.l.b16 %v5869
        %v6930 = vunpack.c.l.b16 %v5870
        %v6931 = vunpack.c.l.b16 %v5871
        %v6932 = vunpack.c.l.b16 %v5872
        %v6933 = vunpack.c.l.b16 %v5873
        %v6934 = vunpack.c.l.b16 %v5874
        %v6935 = vunpack.c.l.b16 %v5875
        %v6936 = vunpack.c.l.b16 %v5876
        %v6937 = vunpack.c.l.b16 %v5877
        %v6938 = vunpack.c.l.b16 %v5878
        %v6939 = vunpack.c.l.b16 %v5879
        %v6940 = vunpack.c.l.b16 %v5880
        %v6941 = vunpack.c.l.b16 %v5881
        %v6942 = vunpack.c.l.b16 %v5882
        %v6943 = vunpack.c.l.b16 %v5883
        %v6944 = vunpack.c.l.b16 %v5884
        %v6945 = vunpack.c.l.b16 %v5885
        %v6946 = vunpack.c.l.b16 %v5886
        %v6947 = vunpack.c.l.b16 %v5887
        %v6948 = vunpack.c.l.b16 %v5888
        %v6949 = vunpack.c.l.b16 %v5889
        %v6950 = vunpack.c.l.b16 %v5890
        %v6951 = vunpack.c.l.b16 %v5891
        %v6952 = vunpack.c.l.b16 %v5892
        %v6953 = vunpack.c.l.b16 %v5893
        %v6954 = vunpack.c.l.b16 %v5894
        %v6955 = vpack.c.b16 %v6860, %v6859
        %v6956 = vpack.c.b16 %v6862, %v6861
        %v6957 = vpack.c.b16 %v6864, %v6863
        %v6958 = vpack.c.b16 %v6866, %v6865
        %v6959 = vpack.c.b16 %v6868, %v6867
        %v6960 = vpack.c.b16 %v6870, %v6869
        %v6961 = vpack.c.b16 %v6872, %v6871
        %v6962 = vpack.c.b16 %v6874, %v6873
        %v6963 = vpack.c.b16 %v6876, %v6875
        %v6964 = vpack.c.b16 %v6878, %v6877
        %v6965 = vpack.c.b16 %v6880, %v6879
        %v6966 = vpack.c.b16 %v6882, %v6881
        %v6967 = vpack.c.b16 %v6884, %v6883
        %v6968 = vpack.c.b16 %v6886, %v6885
        %v6969 = vpack.c.b16 %v6888, %v6887
        %v6970 = vpack.c.b16 %v6890, %v6889
        %v6971 = vpack.c.b16 %v6892, %v6891
        %v6972 = vpack.c.b16 %v6894, %v6893
        %v6973 = vpack.c.b16 %v6896, %v6895
        %v6974 = vpack.c.b16 %v6898, %v6897
        %v6975 = vpack.c.b16 %v6900, %v6899
        %v6976 = vpack.c.b16 %v6902, %v6901
        %v6977 = vpack.c.b16 %v6904, %v6903
        %v6978 = vpack.c.b16 %v6906, %v6905
        %v6979 = vpack.c.b16 %v6908, %v6907
        %v6980 = vpack.c.b16 %v6910, %v6909
        %v6981 = vpack.c.b16 %v6912, %v6911
        %v6982 = vpack.c.b16 %v6914, %v6913
        %v6983 = vpack.c.b16 %v6916, %v6915
        %v6984 = vpack.c.b16 %v6918, %v6917
        %v6985 = vpack.c.b16 %v6920, %v6919
        %v6986 = vpack.c.b16 %v6922, %v6921
        %v6987 = vpack.c.b16 %v6924, %v6923
        %v6988 = vpack.c.b16 %v6926, %v6925
        %v6989 = vpack.c.b16 %v6928, %v6927
        %v6990 = vpack.c.b16 %v6930, %v6929
        %v6991 = vpack.c.b16 %v6932, %v6931
        %v6992 = vpack.c.b16 %v6934, %v6933
        %v6993 = vpack.c.b16 %v6936, %v6935
        %v6994 = vpack.c.b16 %v6938, %v6937
        %v6995 = vpack.c.b16 %v6940, %v6939
        %v6996 = vpack.c.b16 %v6942, %v6941
        %v6997 = vpack.c.b16 %v6944, %v6943
        %v6998 = vpack.c.b16 %v6946, %v6945
        %v6999 = vpack.c.b16 %v6948, %v6947
        %v7000 = vpack.c.b16 %v6950, %v6949
        %v7001 = vpack.c.b16 %v6952, %v6951
        %v7002 = vpack.c.b16 %v6954, %v6953
        %7051 = vmatprep.subr.bf16.mxu0 0
        %7052 = vmatpush1.bf16.msra.mxu0 %v6955
        %7053 = vmatprep.subr.bf16.mxu0 0
        %7054 = vmatpush1.bf16.msra.mxu0 %v6956
        %7055 = vmatprep.subr.bf16.mxu0 0
        %7056 = vmatpush1.bf16.msra.mxu0 %v6957
        %7057 = vmatprep.subr.bf16.mxu0 0
        %7058 = vmatpush1.bf16.msra.mxu0 %v6958
        %7059 = vmatprep.subr.bf16.mxu0 0
        %7060 = vmatpush1.bf16.msra.mxu0 %v6959
        %7061 = vmatprep.subr.bf16.mxu0 0
        %7062 = vmatpush1.bf16.msra.mxu0 %v6960
        %7063 = vmatprep.subr.bf16.mxu0 0
        %7064 = vmatpush1.bf16.msra.mxu0 %v6961
        %7065 = vmatprep.subr.bf16.mxu0 0
        %7066 = vmatpush1.bf16.msra.mxu0 %v6962
        %7067 = vmatprep.subr.bf16.mxu0 0
        %7068 = vmatpush1.bf16.msra.mxu0 %v6963
        %7069 = vmatprep.subr.bf16.mxu0 0
        %7070 = vmatpush1.bf16.msra.mxu0 %v6964
        %7071 = vmatprep.subr.bf16.mxu0 0
        %7072 = vmatpush1.bf16.msra.mxu0 %v6965
        %7073 = vmatprep.subr.bf16.mxu0 0
        %7074 = vmatpush1.bf16.msra.mxu0 %v6966
        %7075 = vmatprep.subr.bf16.mxu0 0
        %7076 = vmatpush1.bf16.msra.mxu0 %v6967
        %7077 = vmatprep.subr.bf16.mxu0 0
        %7078 = vmatpush1.bf16.msra.mxu0 %v6968
        %7079 = vmatprep.subr.bf16.mxu0 0
        %7080 = vmatpush1.bf16.msra.mxu0 %v6969
        %7081 = vmatprep.subr.bf16.mxu0 0
        %7082 = vmatpush1.bf16.msra.mxu0 %v6970
        %7083 = vmatprep.mubr.bf16.mxu0 %v5692
        %7084 = vmatmul.mubr.bf16.gmra.mrb[0].mxu0 %v5691
        %v7085 = vpop.f32.mrb[0].mxu0
        %v7086 = vadd.f32 %v6637, %v7085
        %v7087 = vpop.f32.mrb[0].mxu0
        %v7088 = vpop.f32.mrb[0].mxu0
        %v7089 = vadd.f32 %v6640, %v7088
        %v7090 = vpop.f32.mrb[0].mxu0
        %7091 = vmatprep.mubr.bf16.mxu0 %v5698
        %7092 = vmatmul.mubr.bf16.gmra.mrb[0].mxu0 %v5697
        %v7093 = vpop.f32.mrb[0].mxu0
        %v7094 = vadd.f32 %v6645, %v7093
        %v7095 = vpop.f32.mrb[0].mxu0
        %v7096 = vpop.f32.mrb[0].mxu0
        %v7097 = vadd.f32 %v6648, %v7096
        %v7098 = vpop.f32.mrb[0].mxu0
        %7099 = vmatprep.mubr.bf16.mxu0 %v5704
        %7100 = vmatmul.mubr.bf16.gmra.mrb[0].mxu0 %v5703
        %v7101 = vpop.f32.mrb[0].mxu0
        %v7102 = vadd.f32 %v6653, %v7101
        %v7103 = vpop.f32.mrb[0].mxu0
        %v7104 = vpop.f32.mrb[0].mxu0
        %v7105 = vadd.f32 %v6656, %v7104
        %v7106 = vpop.f32.mrb[0].mxu0
        %7107 = vmatprep.mubr.bf16.mxu0 %v5710
        %7108 = vmatmul.mubr.bf16.gmra.mrb[0].mxu0 %v5709
        %v7109 = vpop.f32.mrb[0].mxu0
        %v7110 = vadd.f32 %v6661, %v7109
        %v7111 = vpop.f32.mrb[0].mxu0
        %v7112 = vpop.f32.mrb[0].mxu0
        %v7113 = vadd.f32 %v6664, %v7112
        %v7114 = vpop.f32.mrb[0].mxu0
        %7115 = vmatprep.mubr.bf16.mxu0 %v5716
        %7116 = vmatmul.mubr.bf16.gmra.mrb[0].mxu0 %v5715
        %v7117 = vpop.f32.mrb[0].mxu0
        %v7118 = vadd.f32 %v6669, %v7117
        %v7119 = vpop.f32.mrb[0].mxu0
        %v7120 = vpop.f32.mrb[0].mxu0
        %v7121 = vadd.f32 %v6672, %v7120
        %v7122 = vpop.f32.mrb[0].mxu0
        %7123 = vmatprep.mubr.bf16.mxu0 %v5722
        %7124 = vmatmul.mubr.bf16.gmra.mrb[0].mxu0 %v5721
        %v7125 = vpop.f32.mrb[0].mxu0
        %v7126 = vadd.f32 %v6677, %v7125
        %v7127 = vpop.f32.mrb[0].mxu0
        %v7128 = vpop.f32.mrb[0].mxu0
        %v7129 = vadd.f32 %v6680, %v7128
        %v7130 = vpop.f32.mrb[0].mxu0
        %7131 = vmatprep.mubr.bf16.mxu0 %v5728
        %7132 = vmatmul.mubr.bf16.gmra.mrb[0].mxu0 %v5727
        %v7133 = vpop.f32.mrb[0].mxu0
        %v7134 = vadd.f32 %v6685, %v7133
        %v7135 = vpop.f32.mrb[0].mxu0
        %v7136 = vpop.f32.mrb[0].mxu0
        %v7137 = vadd.f32 %v6688, %v7136
        %v7138 = vpop.f32.mrb[0].mxu0
        %7139 = vmatprep.mubr.bf16.mxu0 %v5734
        %7140 = vmatmul.mubr.bf16.gmra.mrb[0].mxu0 %v5733
        %v7141 = vpop.f32.mrb[0].mxu0
        %v7142 = vadd.f32 %v6693, %v7141
        %v7143 = vpop.f32.mrb[0].mxu0
        %v7144 = vpop.f32.mrb[0].mxu0
        %v7145 = vadd.f32 %v6696, %v7144
        %v7146 = vpop.f32.mrb[0].mxu0
        %7147 = vmatprep.mubr.bf16.mxu0 %v5740
        %7148 = vmatmul.mubr.bf16.gmra.mrb[0].mxu0 %v5739
        %v7149 = vpop.f32.mrb[0].mxu0
        %v7150 = vadd.f32 %v6701, %v7149
        %v7151 = vpop.f32.mrb[0].mxu0
        %v7152 = vpop.f32.mrb[0].mxu0
        %v7153 = vadd.f32 %v6704, %v7152
        %v7154 = vpop.f32.mrb[0].mxu0
        %7155 = vmatprep.mubr.bf16.mxu0 %v5746
        %7156 = vmatmul.mubr.bf16.gmra.mrb[0].mxu0 %v5745
        %v7157 = vpop.f32.mrb[0].mxu0
        %v7158 = vadd.f32 %v6709, %v7157
        %v7159 = vpop.f32.mrb[0].mxu0
        %v7160 = vpop.f32.mrb[0].mxu0
        %v7161 = vadd.f32 %v6712, %v7160
        %v7162 = vpop.f32.mrb[0].mxu0
        %7163 = vmatprep.mubr.bf16.mxu0 %v5752
        %7164 = vmatmul.mubr.bf16.gmra.mrb[0].mxu0 %v5751
        %v7165 = vpop.f32.mrb[0].mxu0
        %v7166 = vadd.f32 %v6717, %v7165
        %v7167 = vpop.f32.mrb[0].mxu0
        %v7168 = vpop.f32.mrb[0].mxu0
        %v7169 = vadd.f32 %v6720, %v7168
        %v7170 = vpop.f32.mrb[0].mxu0
        %7171 = vmatprep.mubr.bf16.mxu0 %v5758
        %7172 = vmatmul.mubr.bf16.gmra.mrb[0].mxu0 %v5757
        %v7173 = vpop.f32.mrb[0].mxu0
        %v7174 = vadd.f32 %v6725, %v7173
        %v7175 = vpop.f32.mrb[0].mxu0
        %v7176 = vpop.f32.mrb[0].mxu0
        %v7177 = vadd.f32 %v6728, %v7176
        %v7178 = vpop.f32.mrb[0].mxu0
        %7179 = vmatprep.mubr.bf16.mxu0 %v5764
        %7180 = vmatmul.mubr.bf16.gmra.mrb[0].mxu0 %v5763
        %v7181 = vpop.f32.mrb[0].mxu0
        %v7182 = vadd.f32 %v6733, %v7181
        %v7183 = vpop.f32.mrb[0].mxu0
        %v7184 = vpop.f32.mrb[0].mxu0
        %v7185 = vadd.f32 %v6736, %v7184
        %v7186 = vpop.f32.mrb[0].mxu0
        %7187 = vmatprep.mubr.bf16.mxu0 %v5770
        %7188 = vmatmul.mubr.bf16.gmra.mrb[0].mxu0 %v5769
        %v7189 = vpop.f32.mrb[0].mxu0
        %v7190 = vadd.f32 %v6741, %v7189
        %v7191 = vpop.f32.mrb[0].mxu0
        %v7192 = vpop.f32.mrb[0].mxu0
        %v7193 = vadd.f32 %v6744, %v7192
        %v7194 = vpop.f32.mrb[0].mxu0
        %7195 = vmatprep.mubr.bf16.mxu0 %v5776
        %7196 = vmatmul.mubr.bf16.gmra.mrb[0].mxu0 %v5775
        %v7197 = vpop.f32.mrb[0].mxu0
        %v7198 = vadd.f32 %v6749, %v7197
        %v7199 = vpop.f32.mrb[0].mxu0
        %v7200 = vpop.f32.mrb[0].mxu0
        %v7201 = vadd.f32 %v6752, %v7200
        %v7202 = vpop.f32.mrb[0].mxu0
        %7203 = vmatprep.mubr.bf16.mxu0 %v5782
        %7204 = vmatmul.mubr.bf16.gmra.mrb[0].mxu0 %v5781
        %v7205 = vpop.f32.mrb[0].mxu0
        %v7206 = vadd.f32 %v6757, %v7205
        %v7207 = vpop.f32.mrb[0].mxu0
        %v7208 = vpop.f32.mrb[0].mxu0
        %v7209 = vadd.f32 %v6760, %v7208
        %v7210 = vpop.f32.mrb[0].mxu0
        %7211 = vdwg.mxu0
        %7212 = vmatprep.subr.bf16.mxu0 0
        %7213 = vmatpush1.bf16.msra.mxu0 %v6971
        %7214 = vmatprep.subr.bf16.mxu0 0
        %7215 = vmatpush1.bf16.msra.mxu0 %v6972
        %7216 = vmatprep.subr.bf16.mxu0 0
        %7217 = vmatpush1.bf16.msra.mxu0 %v6973
        %7218 = vmatprep.subr.bf16.mxu0 0
        %7219 = vmatpush1.bf16.msra.mxu0 %v6974
        %7220 = vmatprep.subr.bf16.mxu0 0
        %7221 = vmatpush1.bf16.msra.mxu0 %v6975
        %7222 = vmatprep.subr.bf16.mxu0 0
        %7223 = vmatpush1.bf16.msra.mxu0 %v6976
        %7224 = vmatprep.subr.bf16.mxu0 0
        %7225 = vmatpush1.bf16.msra.mxu0 %v6977
        %7226 = vmatprep.subr.bf16.mxu0 0
        %7227 = vmatpush1.bf16.msra.mxu0 %v6978
        %7228 = vmatprep.subr.bf16.mxu0 0
        %7229 = vmatpush1.bf16.msra.mxu0 %v6979
        %7230 = vmatprep.subr.bf16.mxu0 0
        %7231 = vmatpush1.bf16.msra.mxu0 %v6980
        %7232 = vmatprep.subr.bf16.mxu0 0
        %7233 = vmatpush1.bf16.msra.mxu0 %v6981
        %7234 = vmatprep.subr.bf16.mxu0 0
        %7235 = vmatpush1.bf16.msra.mxu0 %v6982
        %7236 = vmatprep.subr.bf16.mxu0 0
        %7237 = vmatpush1.bf16.msra.mxu0 %v6983
        %7238 = vmatprep.subr.bf16.mxu0 0
        %7239 = vmatpush1.bf16.msra.mxu0 %v6984
        %7240 = vmatprep.subr.bf16.mxu0 0
        %7241 = vmatpush1.bf16.msra.mxu0 %v6985
        %7242 = vmatprep.subr.bf16.mxu0 0
        %7243 = vmatpush1.bf16.msra.mxu0 %v6986
        %7244 = vmatprep.mubr.bf16.mxu0 %v5694
        %7245 = vmatmul.mubr.bf16.gmra.mrb[0].mxu0 %v5693
        %v7246 = vpop.f32.mrb[0].mxu0
        %v7247 = vadd.f32 %v7086, %v7246
        %v7248 = vpop.f32.mrb[0].mxu0
        %v7249 = vpop.f32.mrb[0].mxu0
        %v7250 = vadd.f32 %v7089, %v7249
        %v7251 = vpop.f32.mrb[0].mxu0
        %7252 = vmatprep.mubr.bf16.mxu0 %v5700
        %7253 = vmatmul.mubr.bf16.gmra.mrb[0].mxu0 %v5699
        %v7254 = vpop.f32.mrb[0].mxu0
        %v7255 = vadd.f32 %v7094, %v7254
        %v7256 = vpop.f32.mrb[0].mxu0
        %v7257 = vpop.f32.mrb[0].mxu0
        %v7258 = vadd.f32 %v7097, %v7257
        %v7259 = vpop.f32.mrb[0].mxu0
        %7260 = vmatprep.mubr.bf16.mxu0 %v5706
        %7261 = vmatmul.mubr.bf16.gmra.mrb[0].mxu0 %v5705
        %v7262 = vpop.f32.mrb[0].mxu0
        %v7263 = vadd.f32 %v7102, %v7262
        %v7264 = vpop.f32.mrb[0].mxu0
        %v7265 = vpop.f32.mrb[0].mxu0
        %v7266 = vadd.f32 %v7105, %v7265
        %v7267 = vpop.f32.mrb[0].mxu0
        %7268 = vmatprep.mubr.bf16.mxu0 %v5712
        %7269 = vmatmul.mubr.bf16.gmra.mrb[0].mxu0 %v5711
        %v7270 = vpop.f32.mrb[0].mxu0
        %v7271 = vadd.f32 %v7110, %v7270
        %v7272 = vpop.f32.mrb[0].mxu0
        %v7273 = vpop.f32.mrb[0].mxu0
        %v7274 = vadd.f32 %v7113, %v7273
        %v7275 = vpop.f32.mrb[0].mxu0
        %7276 = vmatprep.mubr.bf16.mxu0 %v5718
        %7277 = vmatmul.mubr.bf16.gmra.mrb[0].mxu0 %v5717
        %v7278 = vpop.f32.mrb[0].mxu0
        %v7279 = vadd.f32 %v7118, %v7278
        %v7280 = vpop.f32.mrb[0].mxu0
        %v7281 = vpop.f32.mrb[0].mxu0
        %v7282 = vadd.f32 %v7121, %v7281
        %v7283 = vpop.f32.mrb[0].mxu0
        %7284 = vmatprep.mubr.bf16.mxu0 %v5724
        %7285 = vmatmul.mubr.bf16.gmra.mrb[0].mxu0 %v5723
        %v7286 = vpop.f32.mrb[0].mxu0
        %v7287 = vadd.f32 %v7126, %v7286
        %v7288 = vpop.f32.mrb[0].mxu0
        %v7289 = vpop.f32.mrb[0].mxu0
        %v7290 = vadd.f32 %v7129, %v7289
        %v7291 = vpop.f32.mrb[0].mxu0
        %7292 = vmatprep.mubr.bf16.mxu0 %v5730
        %7293 = vmatmul.mubr.bf16.gmra.mrb[0].mxu0 %v5729
        %v7294 = vpop.f32.mrb[0].mxu0
        %v7295 = vadd.f32 %v7134, %v7294
        %v7296 = vpop.f32.mrb[0].mxu0
        %v7297 = vpop.f32.mrb[0].mxu0
        %v7298 = vadd.f32 %v7137, %v7297
        %v7299 = vpop.f32.mrb[0].mxu0
        %7300 = vmatprep.mubr.bf16.mxu0 %v5736
        %7301 = vmatmul.mubr.bf16.gmra.mrb[0].mxu0 %v5735
        %v7302 = vpop.f32.mrb[0].mxu0
        %v7303 = vadd.f32 %v7142, %v7302
        %v7304 = vpop.f32.mrb[0].mxu0
        %v7305 = vpop.f32.mrb[0].mxu0
        %v7306 = vadd.f32 %v7145, %v7305
        %v7307 = vpop.f32.mrb[0].mxu0
        %7308 = vmatprep.mubr.bf16.mxu0 %v5742
        %7309 = vmatmul.mubr.bf16.gmra.mrb[0].mxu0 %v5741
        %v7310 = vpop.f32.mrb[0].mxu0
        %v7311 = vadd.f32 %v7150, %v7310
        %v7312 = vpop.f32.mrb[0].mxu0
        %v7313 = vpop.f32.mrb[0].mxu0
        %v7314 = vadd.f32 %v7153, %v7313
        %v7315 = vpop.f32.mrb[0].mxu0
        %7316 = vmatprep.mubr.bf16.mxu0 %v5748
        %7317 = vmatmul.mubr.bf16.gmra.mrb[0].mxu0 %v5747
        %v7318 = vpop.f32.mrb[0].mxu0
        %v7319 = vadd.f32 %v7158, %v7318
        %v7320 = vpop.f32.mrb[0].mxu0
        %v7321 = vpop.f32.mrb[0].mxu0
        %v7322 = vadd.f32 %v7161, %v7321
        %v7323 = vpop.f32.mrb[0].mxu0
        %7324 = vmatprep.mubr.bf16.mxu0 %v5754
        %7325 = vmatmul.mubr.bf16.gmra.mrb[0].mxu0 %v5753
        %v7326 = vpop.f32.mrb[0].mxu0
        %v7327 = vadd.f32 %v7166, %v7326
        %v7328 = vpop.f32.mrb[0].mxu0
        %v7329 = vpop.f32.mrb[0].mxu0
        %v7330 = vadd.f32 %v7169, %v7329
        %v7331 = vpop.f32.mrb[0].mxu0
        %7332 = vmatprep.mubr.bf16.mxu0 %v5760
        %7333 = vmatmul.mubr.bf16.gmra.mrb[0].mxu0 %v5759
        %v7334 = vpop.f32.mrb[0].mxu0
        %v7335 = vadd.f32 %v7174, %v7334
        %v7336 = vpop.f32.mrb[0].mxu0
        %v7337 = vpop.f32.mrb[0].mxu0
        %v7338 = vadd.f32 %v7177, %v7337
        %v7339 = vpop.f32.mrb[0].mxu0
        %7340 = vmatprep.mubr.bf16.mxu0 %v5766
        %7341 = vmatmul.mubr.bf16.gmra.mrb[0].mxu0 %v5765
        %v7342 = vpop.f32.mrb[0].mxu0
        %v7343 = vadd.f32 %v7182, %v7342
        %v7344 = vpop.f32.mrb[0].mxu0
        %v7345 = vpop.f32.mrb[0].mxu0
        %v7346 = vadd.f32 %v7185, %v7345
        %v7347 = vpop.f32.mrb[0].mxu0
        %7348 = vmatprep.mubr.bf16.mxu0 %v5772
        %7349 = vmatmul.mubr.bf16.gmra.mrb[0].mxu0 %v5771
        %v7350 = vpop.f32.mrb[0].mxu0
        %v7351 = vadd.f32 %v7190, %v7350
        %v7352 = vpop.f32.mrb[0].mxu0
        %v7353 = vpop.f32.mrb[0].mxu0
        %v7354 = vadd.f32 %v7193, %v7353
        %v7355 = vpop.f32.mrb[0].mxu0
        %7356 = vmatprep.mubr.bf16.mxu0 %v5778
        %7357 = vmatmul.mubr.bf16.gmra.mrb[0].mxu0 %v5777
        %v7358 = vpop.f32.mrb[0].mxu0
        %v7359 = vadd.f32 %v7198, %v7358
        %v7360 = vpop.f32.mrb[0].mxu0
        %v7361 = vpop.f32.mrb[0].mxu0
        %v7362 = vadd.f32 %v7201, %v7361
        %v7363 = vpop.f32.mrb[0].mxu0
        %7364 = vmatprep.mubr.bf16.mxu0 %v5784
        %7365 = vmatmul.mubr.bf16.gmra.mrb[0].mxu0 %v5783
        %v7366 = vpop.f32.mrb[0].mxu0
        %v7367 = vadd.f32 %v7206, %v7366
        %v7368 = vpop.f32.mrb[0].mxu0
        %v7369 = vpop.f32.mrb[0].mxu0
        %v7370 = vadd.f32 %v7209, %v7369
        %v7371 = vpop.f32.mrb[0].mxu0
        %7372 = vdwg.mxu0
        %7373 = vmatprep.subr.bf16.mxu0 0
        %7374 = vmatpush1.bf16.msra.mxu0 %v6987
        %7375 = vmatprep.subr.bf16.mxu0 0
        %7376 = vmatpush1.bf16.msra.mxu0 %v6988
        %7377 = vmatprep.subr.bf16.mxu0 0
        %7378 = vmatpush1.bf16.msra.mxu0 %v6989
        %7379 = vmatprep.subr.bf16.mxu0 0
        %7380 = vmatpush1.bf16.msra.mxu0 %v6990
        %7381 = vmatprep.subr.bf16.mxu0 0
        %7382 = vmatpush1.bf16.msra.mxu0 %v6991
        %7383 = vmatprep.subr.bf16.mxu0 0
        %7384 = vmatpush1.bf16.msra.mxu0 %v6992
        %7385 = vmatprep.subr.bf16.mxu0 0
        %7386 = vmatpush1.bf16.msra.mxu0 %v6993
        %7387 = vmatprep.subr.bf16.mxu0 0
        %7388 = vmatpush1.bf16.msra.mxu0 %v6994
        %7389 = vmatprep.subr.bf16.mxu0 0
        %7390 = vmatpush1.bf16.msra.mxu0 %v6995
        %7391 = vmatprep.subr.bf16.mxu0 0
        %7392 = vmatpush1.bf16.msra.mxu0 %v6996
        %7393 = vmatprep.subr.bf16.mxu0 0
        %7394 = vmatpush1.bf16.msra.mxu0 %v6997
        %7395 = vmatprep.subr.bf16.mxu0 0
        %7396 = vmatpush1.bf16.msra.mxu0 %v6998
        %7397 = vmatprep.subr.bf16.mxu0 0
        %7398 = vmatpush1.bf16.msra.mxu0 %v6999
        %7399 = vmatprep.subr.bf16.mxu0 0
        %7400 = vmatpush1.bf16.msra.mxu0 %v7000
        %7401 = vmatprep.subr.bf16.mxu0 0
        %7402 = vmatpush1.bf16.msra.mxu0 %v7001
        %7403 = vmatprep.subr.bf16.mxu0 0
        %7404 = vmatpush1.bf16.msra.mxu0 %v7002
        %7405 = vmatprep.mubr.bf16.mxu0 %v5696
        %7406 = vmatmul.mubr.bf16.gmra.mrb[0].mxu0 %v5695
        %v7407 = vpop.f32.mrb[0].mxu0
        %v7408 = vadd.f32 %v7247, %v7407
        %v7409 = vpop.f32.mrb[0].mxu0
        %v7410 = vpop.f32.mrb[0].mxu0
        %v7411 = vadd.f32 %v7250, %v7410
        %v7412 = vpop.f32.mrb[0].mxu0
        %7413 = vmatprep.mubr.bf16.mxu0 %v5702
        %7414 = vmatmul.mubr.bf16.gmra.mrb[0].mxu0 %v5701
        %v7415 = vpop.f32.mrb[0].mxu0
        %v7416 = vadd.f32 %v7255, %v7415
        %v7417 = vpop.f32.mrb[0].mxu0
        %v7418 = vpop.f32.mrb[0].mxu0
        %v7419 = vadd.f32 %v7258, %v7418
        %v7420 = vpop.f32.mrb[0].mxu0
        %7421 = vmatprep.mubr.bf16.mxu0 %v5708
        %7422 = vmatmul.mubr.bf16.gmra.mrb[0].mxu0 %v5707
        %v7423 = vpop.f32.mrb[0].mxu0
        %v7424 = vadd.f32 %v7263, %v7423
        %v7425 = vpop.f32.mrb[0].mxu0
        %v7426 = vpop.f32.mrb[0].mxu0
        %v7427 = vadd.f32 %v7266, %v7426
        %v7428 = vpop.f32.mrb[0].mxu0
        %7429 = vmatprep.mubr.bf16.mxu0 %v5714
        %7430 = vmatmul.mubr.bf16.gmra.mrb[0].mxu0 %v5713
        %v7431 = vpop.f32.mrb[0].mxu0
        %v7432 = vadd.f32 %v7271, %v7431
        %v7433 = vpop.f32.mrb[0].mxu0
        %v7434 = vpop.f32.mrb[0].mxu0
        %v7435 = vadd.f32 %v7274, %v7434
        %v7436 = vpop.f32.mrb[0].mxu0
        %7437 = vmatprep.mubr.bf16.mxu0 %v5720
        %7438 = vmatmul.mubr.bf16.gmra.mrb[0].mxu0 %v5719
        %v7439 = vpop.f32.mrb[0].mxu0
        %v7440 = vadd.f32 %v7279, %v7439
        %v7441 = vpop.f32.mrb[0].mxu0
        %v7442 = vpop.f32.mrb[0].mxu0
        %v7443 = vadd.f32 %v7282, %v7442
        %v7444 = vpop.f32.mrb[0].mxu0
        %7445 = vmatprep.mubr.bf16.mxu0 %v5726
        %7446 = vmatmul.mubr.bf16.gmra.mrb[0].mxu0 %v5725
        %v7447 = vpop.f32.mrb[0].mxu0
        %v7448 = vadd.f32 %v7287, %v7447
        %v7449 = vpop.f32.mrb[0].mxu0
        %v7450 = vpop.f32.mrb[0].mxu0
        %v7451 = vadd.f32 %v7290, %v7450
        %v7452 = vpop.f32.mrb[0].mxu0
        %7453 = vmatprep.mubr.bf16.mxu0 %v5732
        %7454 = vmatmul.mubr.bf16.gmra.mrb[0].mxu0 %v5731
        %v7455 = vpop.f32.mrb[0].mxu0
        %v7456 = vadd.f32 %v7295, %v7455
        %v7457 = vpop.f32.mrb[0].mxu0
        %v7458 = vpop.f32.mrb[0].mxu0
        %v7459 = vadd.f32 %v7298, %v7458
        %v7460 = vpop.f32.mrb[0].mxu0
        %7461 = vmatprep.mubr.bf16.mxu0 %v5738
        %7462 = vmatmul.mubr.bf16.gmra.mrb[0].mxu0 %v5737
        %v7463 = vpop.f32.mrb[0].mxu0
        %v7464 = vadd.f32 %v7303, %v7463
        %v7465 = vpop.f32.mrb[0].mxu0
        %v7466 = vpop.f32.mrb[0].mxu0
        %v7467 = vadd.f32 %v7306, %v7466
        %v7468 = vpop.f32.mrb[0].mxu0
        %7469 = vmatprep.mubr.bf16.mxu0 %v5744
        %7470 = vmatmul.mubr.bf16.gmra.mrb[0].mxu0 %v5743
        %v7471 = vpop.f32.mrb[0].mxu0
        %v7472 = vadd.f32 %v7311, %v7471
        %v7473 = vpop.f32.mrb[0].mxu0
        %v7474 = vpop.f32.mrb[0].mxu0
        %v7475 = vadd.f32 %v7314, %v7474
        %v7476 = vpop.f32.mrb[0].mxu0
        %7477 = vmatprep.mubr.bf16.mxu0 %v5750
        %7478 = vmatmul.mubr.bf16.gmra.mrb[0].mxu0 %v5749
        %v7479 = vpop.f32.mrb[0].mxu0
        %v7480 = vadd.f32 %v7319, %v7479
        %v7481 = vpop.f32.mrb[0].mxu0
        %v7482 = vpop.f32.mrb[0].mxu0
        %v7483 = vadd.f32 %v7322, %v7482
        %v7484 = vpop.f32.mrb[0].mxu0
        %7485 = vmatprep.mubr.bf16.mxu0 %v5756
        %7486 = vmatmul.mubr.bf16.gmra.mrb[0].mxu0 %v5755
        %v7487 = vpop.f32.mrb[0].mxu0
        %v7488 = vadd.f32 %v7327, %v7487
        %v7489 = vpop.f32.mrb[0].mxu0
        %v7490 = vpop.f32.mrb[0].mxu0
        %v7491 = vadd.f32 %v7330, %v7490
        %v7492 = vpop.f32.mrb[0].mxu0
        %7493 = vmatprep.mubr.bf16.mxu0 %v5762
        %7494 = vmatmul.mubr.bf16.gmra.mrb[0].mxu0 %v5761
        %v7495 = vpop.f32.mrb[0].mxu0
        %v7496 = vadd.f32 %v7335, %v7495
        %v7497 = vpop.f32.mrb[0].mxu0
        %v7498 = vpop.f32.mrb[0].mxu0
        %v7499 = vadd.f32 %v7338, %v7498
        %v7500 = vpop.f32.mrb[0].mxu0
        %7501 = vmatprep.mubr.bf16.mxu0 %v5768
        %7502 = vmatmul.mubr.bf16.gmra.mrb[0].mxu0 %v5767
        %v7503 = vpop.f32.mrb[0].mxu0
        %v7504 = vadd.f32 %v7343, %v7503
        %v7505 = vpop.f32.mrb[0].mxu0
        %v7506 = vpop.f32.mrb[0].mxu0
        %v7507 = vadd.f32 %v7346, %v7506
        %v7508 = vpop.f32.mrb[0].mxu0
        %7509 = vmatprep.mubr.bf16.mxu0 %v5774
        %7510 = vmatmul.mubr.bf16.gmra.mrb[0].mxu0 %v5773
        %v7511 = vpop.f32.mrb[0].mxu0
        %v7512 = vadd.f32 %v7351, %v7511
        %v7513 = vpop.f32.mrb[0].mxu0
        %v7514 = vpop.f32.mrb[0].mxu0
        %v7515 = vadd.f32 %v7354, %v7514
        %v7516 = vpop.f32.mrb[0].mxu0
        %7517 = vmatprep.mubr.bf16.mxu0 %v5780
        %7518 = vmatmul.mubr.bf16.gmra.mrb[0].mxu0 %v5779
        %v7519 = vpop.f32.mrb[0].mxu0
        %v7520 = vadd.f32 %v7359, %v7519
        %v7521 = vpop.f32.mrb[0].mxu0
        %v7522 = vpop.f32.mrb[0].mxu0
        %v7523 = vadd.f32 %v7362, %v7522
        %v7524 = vpop.f32.mrb[0].mxu0
        %7525 = vmatprep.mubr.bf16.mxu0 %v5786
        %7526 = vmatmul.mubr.bf16.gmra.mrb[0].mxu0 %v5785
        %v7527 = vpop.f32.mrb[0].mxu0
        %v7528 = vadd.f32 %v7367, %v7527
        %v7529 = vpop.f32.mrb[0].mxu0
        %v7530 = vpop.f32.mrb[0].mxu0
        %v7531 = vadd.f32 %v7370, %v7530
        %v7532 = vpop.f32.mrb[0].mxu0
        %7533 = vdwg.mxu0
        %s7534 = scalar_lea.vmem %s639, 768 [#allocation18]
        %v7535 = vld [vmem:[%s7534] sm:$0xf]
        %v7536 = vld [vmem:[%s7534 + $0x4] sm:$0xf]
        %v7537 = vld [vmem:[%s7534 + $0x8] sm:$0xf]
        %v7538 = vld [vmem:[%s7534 + $0xc] sm:$0xf]
        %v7539 = vld [vmem:[%s7534 + $0x10] sm:$0xf]
        %v7540 = vld [vmem:[%s7534 + $0x14] sm:$0xf]
        %v7541 = vld [vmem:[%s7534 + $0x18] sm:$0xf]
        %v7542 = vld [vmem:[%s7534 + $0x1c] sm:$0xf]
        %v7543 = vld [vmem:[%s7534 + $0x20] sm:$0xf]
        %v7544 = vld [vmem:[%s7534 + $0x24] sm:$0xf]
        %v7545 = vld [vmem:[%s7534 + $0x28] sm:$0xf]
        %v7546 = vld [vmem:[%s7534 + $0x2c] sm:$0xf]
        %v7547 = vld [vmem:[%s7534 + $0x30] sm:$0xf]
        %v7548 = vld [vmem:[%s7534 + $0x34] sm:$0xf]
        %v7549 = vld [vmem:[%s7534 + $0x38] sm:$0xf]
        %v7550 = vld [vmem:[%s7534 + $0x3c] sm:$0xf]
        %v7551 = vld [vmem:[%s7534 + $0x40] sm:$0xf]
        %v7552 = vld [vmem:[%s7534 + $0x44] sm:$0xf]
        %v7553 = vld [vmem:[%s7534 + $0x48] sm:$0xf]
        %v7554 = vld [vmem:[%s7534 + $0x4c] sm:$0xf]
        %v7555 = vld [vmem:[%s7534 + $0x50] sm:$0xf]
        %v7556 = vld [vmem:[%s7534 + $0x54] sm:$0xf]
        %v7557 = vld [vmem:[%s7534 + $0x58] sm:$0xf]
        %v7558 = vld [vmem:[%s7534 + $0x5c] sm:$0xf]
        %v7559 = vld [vmem:[%s7534 + $0x60] sm:$0xf]
        %v7560 = vld [vmem:[%s7534 + $0x64] sm:$0xf]
        %v7561 = vld [vmem:[%s7534 + $0x68] sm:$0xf]
        %v7562 = vld [vmem:[%s7534 + $0x6c] sm:$0xf]
        %v7563 = vld [vmem:[%s7534 + $0x70] sm:$0xf]
        %v7564 = vld [vmem:[%s7534 + $0x74] sm:$0xf]
        %v7565 = vld [vmem:[%s7534 + $0x78] sm:$0xf]
        %v7566 = vld [vmem:[%s7534 + $0x7c] sm:$0xf]
        %v7567 = vld [vmem:[%s7534 + $0x80] sm:$0xf]
        %v7568 = vld [vmem:[%s7534 + $0x84] sm:$0xf]
        %v7569 = vld [vmem:[%s7534 + $0x88] sm:$0xf]
        %v7570 = vld [vmem:[%s7534 + $0x8c] sm:$0xf]
        %v7571 = vld [vmem:[%s7534 + $0x90] sm:$0xf]
        %v7572 = vld [vmem:[%s7534 + $0x94] sm:$0xf]
        %v7573 = vld [vmem:[%s7534 + $0x98] sm:$0xf]
        %v7574 = vld [vmem:[%s7534 + $0x9c] sm:$0xf]
        %v7575 = vld [vmem:[%s7534 + $0xa0] sm:$0xf]
        %v7576 = vld [vmem:[%s7534 + $0xa4] sm:$0xf]
        %v7577 = vld [vmem:[%s7534 + $0xa8] sm:$0xf]
        %v7578 = vld [vmem:[%s7534 + $0xac] sm:$0xf]
        %v7579 = vld [vmem:[%s7534 + $0xb0] sm:$0xf]
        %v7580 = vld [vmem:[%s7534 + $0xb4] sm:$0xf]
        %v7581 = vld [vmem:[%s7534 + $0xb8] sm:$0xf]
        %v7582 = vld [vmem:[%s7534 + $0xbc] sm:$0xf]
        %v7583 = vld [vmem:[%s7534 + $0xc0] sm:$0xf]
        %v7584 = vld [vmem:[%s7534 + $0xc4] sm:$0xf]
        %v7585 = vld [vmem:[%s7534 + $0xc8] sm:$0xf]
        %v7586 = vld [vmem:[%s7534 + $0xcc] sm:$0xf]
        %v7587 = vld [vmem:[%s7534 + $0xd0] sm:$0xf]
        %v7588 = vld [vmem:[%s7534 + $0xd4] sm:$0xf]
        %v7589 = vld [vmem:[%s7534 + $0xd8] sm:$0xf]
        %v7590 = vld [vmem:[%s7534 + $0xdc] sm:$0xf]
        %v7591 = vld [vmem:[%s7534 + $0xe0] sm:$0xf]
        %v7592 = vld [vmem:[%s7534 + $0xe4] sm:$0xf]
        %v7593 = vld [vmem:[%s7534 + $0xe8] sm:$0xf]
        %v7594 = vld [vmem:[%s7534 + $0xec] sm:$0xf]
        %v7595 = vld [vmem:[%s7534 + $0xf0] sm:$0xf]
        %v7596 = vld [vmem:[%s7534 + $0xf4] sm:$0xf]
        %v7597 = vld [vmem:[%s7534 + $0xf8] sm:$0xf]
        %v7598 = vld [vmem:[%s7534 + $0xfc] sm:$0xf]
        %v7599 = vld [vmem:[%s7534 + $0x100] sm:$0xf]
        %v7600 = vld [vmem:[%s7534 + $0x104] sm:$0xf]
        %v7601 = vld [vmem:[%s7534 + $0x108] sm:$0xf]
        %v7602 = vld [vmem:[%s7534 + $0x10c] sm:$0xf]
        %v7603 = vld [vmem:[%s7534 + $0x110] sm:$0xf]
        %v7604 = vld [vmem:[%s7534 + $0x114] sm:$0xf]
        %v7605 = vld [vmem:[%s7534 + $0x118] sm:$0xf]
        %v7606 = vld [vmem:[%s7534 + $0x11c] sm:$0xf]
        %v7607 = vld [vmem:[%s7534 + $0x120] sm:$0xf]
        %v7608 = vld [vmem:[%s7534 + $0x124] sm:$0xf]
        %v7609 = vld [vmem:[%s7534 + $0x128] sm:$0xf]
        %v7610 = vld [vmem:[%s7534 + $0x12c] sm:$0xf]
        %v7611 = vld [vmem:[%s7534 + $0x130] sm:$0xf]
        %v7612 = vld [vmem:[%s7534 + $0x134] sm:$0xf]
        %v7613 = vld [vmem:[%s7534 + $0x138] sm:$0xf]
        %v7614 = vld [vmem:[%s7534 + $0x13c] sm:$0xf]
        %v7615 = vld [vmem:[%s7534 + $0x140] sm:$0xf]
        %v7616 = vld [vmem:[%s7534 + $0x144] sm:$0xf]
        %v7617 = vld [vmem:[%s7534 + $0x148] sm:$0xf]
        %v7618 = vld [vmem:[%s7534 + $0x14c] sm:$0xf]
        %v7619 = vld [vmem:[%s7534 + $0x150] sm:$0xf]
        %v7620 = vld [vmem:[%s7534 + $0x154] sm:$0xf]
        %v7621 = vld [vmem:[%s7534 + $0x158] sm:$0xf]
        %v7622 = vld [vmem:[%s7534 + $0x15c] sm:$0xf]
        %v7623 = vld [vmem:[%s7534 + $0x160] sm:$0xf]
        %v7624 = vld [vmem:[%s7534 + $0x164] sm:$0xf]
        %v7625 = vld [vmem:[%s7534 + $0x168] sm:$0xf]
        %v7626 = vld [vmem:[%s7534 + $0x16c] sm:$0xf]
        %v7627 = vld [vmem:[%s7534 + $0x170] sm:$0xf]
        %v7628 = vld [vmem:[%s7534 + $0x174] sm:$0xf]
        %v7629 = vld [vmem:[%s7534 + $0x178] sm:$0xf]
        %v7630 = vld [vmem:[%s7534 + $0x17c] sm:$0xf]
        %v7727 = vunpack.c.l.b16 %v7535
        %v7728 = vunpack.c.l.b16 %v7536
        %v7729 = vunpack.c.l.b16 %v7537
        %v7730 = vunpack.c.l.b16 %v7538
        %v7731 = vunpack.c.l.b16 %v7539
        %v7732 = vunpack.c.l.b16 %v7540
        %v7733 = vunpack.c.l.b16 %v7541
        %v7734 = vunpack.c.l.b16 %v7542
        %v7735 = vunpack.c.l.b16 %v7543
        %v7736 = vunpack.c.l.b16 %v7544
        %v7737 = vunpack.c.l.b16 %v7545
        %v7738 = vunpack.c.l.b16 %v7546
        %v7739 = vunpack.c.l.b16 %v7547
        %v7740 = vunpack.c.l.b16 %v7548
        %v7741 = vunpack.c.l.b16 %v7549
        %v7742 = vunpack.c.l.b16 %v7550
        %v7743 = vunpack.c.l.b16 %v7551
        %v7744 = vunpack.c.l.b16 %v7552
        %v7745 = vunpack.c.l.b16 %v7553
        %v7746 = vunpack.c.l.b16 %v7554
        %v7747 = vunpack.c.l.b16 %v7555
        %v7748 = vunpack.c.l.b16 %v7556
        %v7749 = vunpack.c.l.b16 %v7557
        %v7750 = vunpack.c.l.b16 %v7558
        %v7751 = vunpack.c.l.b16 %v7559
        %v7752 = vunpack.c.l.b16 %v7560
        %v7753 = vunpack.c.l.b16 %v7561
        %v7754 = vunpack.c.l.b16 %v7562
        %v7755 = vunpack.c.l.b16 %v7563
        %v7756 = vunpack.c.l.b16 %v7564
        %v7757 = vunpack.c.l.b16 %v7565
        %v7758 = vunpack.c.l.b16 %v7566
        %v7759 = vunpack.c.l.b16 %v7567
        %v7760 = vunpack.c.l.b16 %v7568
        %v7761 = vunpack.c.l.b16 %v7569
        %v7762 = vunpack.c.l.b16 %v7570
        %v7763 = vunpack.c.l.b16 %v7571
        %v7764 = vunpack.c.l.b16 %v7572
        %v7765 = vunpack.c.l.b16 %v7573
        %v7766 = vunpack.c.l.b16 %v7574
        %v7767 = vunpack.c.l.b16 %v7575
        %v7768 = vunpack.c.l.b16 %v7576
        %v7769 = vunpack.c.l.b16 %v7577
        %v7770 = vunpack.c.l.b16 %v7578
        %v7771 = vunpack.c.l.b16 %v7579
        %v7772 = vunpack.c.l.b16 %v7580
        %v7773 = vunpack.c.l.b16 %v7581
        %v7774 = vunpack.c.l.b16 %v7582
        %v7775 = vunpack.c.l.b16 %v7583
        %v7776 = vunpack.c.l.b16 %v7584
        %v7777 = vunpack.c.l.b16 %v7585
        %v7778 = vunpack.c.l.b16 %v7586
        %v7779 = vunpack.c.l.b16 %v7587
        %v7780 = vunpack.c.l.b16 %v7588
        %v7781 = vunpack.c.l.b16 %v7589
        %v7782 = vunpack.c.l.b16 %v7590
        %v7783 = vunpack.c.l.b16 %v7591
        %v7784 = vunpack.c.l.b16 %v7592
        %v7785 = vunpack.c.l.b16 %v7593
        %v7786 = vunpack.c.l.b16 %v7594
        %v7787 = vunpack.c.l.b16 %v7595
        %v7788 = vunpack.c.l.b16 %v7596
        %v7789 = vunpack.c.l.b16 %v7597
        %v7790 = vunpack.c.l.b16 %v7598
        %v7791 = vunpack.c.l.b16 %v7599
        %v7792 = vunpack.c.l.b16 %v7600
        %v7793 = vunpack.c.l.b16 %v7601
        %v7794 = vunpack.c.l.b16 %v7602
        %v7795 = vunpack.c.l.b16 %v7603
        %v7796 = vunpack.c.l.b16 %v7604
        %v7797 = vunpack.c.l.b16 %v7605
        %v7798 = vunpack.c.l.b16 %v7606
        %v7799 = vunpack.c.l.b16 %v7607
        %v7800 = vunpack.c.l.b16 %v7608
        %v7801 = vunpack.c.l.b16 %v7609
        %v7802 = vunpack.c.l.b16 %v7610
        %v7803 = vunpack.c.l.b16 %v7611
        %v7804 = vunpack.c.l.b16 %v7612
        %v7805 = vunpack.c.l.b16 %v7613
        %v7806 = vunpack.c.l.b16 %v7614
        %v7807 = vunpack.c.l.b16 %v7615
        %v7808 = vunpack.c.l.b16 %v7616
        %v7809 = vunpack.c.l.b16 %v7617
        %v7810 = vunpack.c.l.b16 %v7618
        %v7811 = vunpack.c.l.b16 %v7619
        %v7812 = vunpack.c.l.b16 %v7620
        %v7813 = vunpack.c.l.b16 %v7621
        %v7814 = vunpack.c.l.b16 %v7622
        %v7815 = vunpack.c.l.b16 %v7623
        %v7816 = vunpack.c.l.b16 %v7624
        %v7817 = vunpack.c.l.b16 %v7625
        %v7818 = vunpack.c.l.b16 %v7626
        %v7819 = vunpack.c.l.b16 %v7627
        %v7820 = vunpack.c.l.b16 %v7628
        %v7821 = vunpack.c.l.b16 %v7629
        %v7822 = vunpack.c.l.b16 %v7630
        %v7823 = vpack.c.b16 %v7728, %v7727
        %v7824 = vpack.c.b16 %v7730, %v7729
        %v7825 = vpack.c.b16 %v7732, %v7731
        %v7826 = vpack.c.b16 %v7734, %v7733
        %v7827 = vpack.c.b16 %v7736, %v7735
        %v7828 = vpack.c.b16 %v7738, %v7737
        %v7829 = vpack.c.b16 %v7740, %v7739
        %v7830 = vpack.c.b16 %v7742, %v7741
        %v7831 = vpack.c.b16 %v7744, %v7743
        %v7832 = vpack.c.b16 %v7746, %v7745
        %v7833 = vpack.c.b16 %v7748, %v7747
        %v7834 = vpack.c.b16 %v7750, %v7749
        %v7835 = vpack.c.b16 %v7752, %v7751
        %v7836 = vpack.c.b16 %v7754, %v7753
        %v7837 = vpack.c.b16 %v7756, %v7755
        %v7838 = vpack.c.b16 %v7758, %v7757
        %v7839 = vpack.c.b16 %v7760, %v7759
        %v7840 = vpack.c.b16 %v7762, %v7761
        %v7841 = vpack.c.b16 %v7764, %v7763
        %v7842 = vpack.c.b16 %v7766, %v7765
        %v7843 = vpack.c.b16 %v7768, %v7767
        %v7844 = vpack.c.b16 %v7770, %v7769
        %v7845 = vpack.c.b16 %v7772, %v7771
        %v7846 = vpack.c.b16 %v7774, %v7773
        %v7847 = vpack.c.b16 %v7776, %v7775
        %v7848 = vpack.c.b16 %v7778, %v7777
        %v7849 = vpack.c.b16 %v7780, %v7779
        %v7850 = vpack.c.b16 %v7782, %v7781
        %v7851 = vpack.c.b16 %v7784, %v7783
        %v7852 = vpack.c.b16 %v7786, %v7785
        %v7853 = vpack.c.b16 %v7788, %v7787
        %v7854 = vpack.c.b16 %v7790, %v7789
        %v7855 = vpack.c.b16 %v7792, %v7791
        %v7856 = vpack.c.b16 %v7794, %v7793
        %v7857 = vpack.c.b16 %v7796, %v7795
        %v7858 = vpack.c.b16 %v7798, %v7797
        %v7859 = vpack.c.b16 %v7800, %v7799
        %v7860 = vpack.c.b16 %v7802, %v7801
        %v7861 = vpack.c.b16 %v7804, %v7803
        %v7862 = vpack.c.b16 %v7806, %v7805
        %v7863 = vpack.c.b16 %v7808, %v7807
        %v7864 = vpack.c.b16 %v7810, %v7809
        %v7865 = vpack.c.b16 %v7812, %v7811
        %v7866 = vpack.c.b16 %v7814, %v7813
        %v7867 = vpack.c.b16 %v7816, %v7815
        %v7868 = vpack.c.b16 %v7818, %v7817
        %v7869 = vpack.c.b16 %v7820, %v7819
        %v7870 = vpack.c.b16 %v7822, %v7821
        %7919 = vmatprep.subr.bf16.mxu0 0
        %7920 = vmatpush1.bf16.msra.mxu0 %v7823
        %7921 = vmatprep.subr.bf16.mxu0 0
        %7922 = vmatpush1.bf16.msra.mxu0 %v7824
        %7923 = vmatprep.subr.bf16.mxu0 0
        %7924 = vmatpush1.bf16.msra.mxu0 %v7825
        %7925 = vmatprep.subr.bf16.mxu0 0
        %7926 = vmatpush1.bf16.msra.mxu0 %v7826
        %7927 = vmatprep.subr.bf16.mxu0 0
        %7928 = vmatpush1.bf16.msra.mxu0 %v7827
        %7929 = vmatprep.subr.bf16.mxu0 0
        %7930 = vmatpush1.bf16.msra.mxu0 %v7828
        %7931 = vmatprep.subr.bf16.mxu0 0
        %7932 = vmatpush1.bf16.msra.mxu0 %v7829
        %7933 = vmatprep.subr.bf16.mxu0 0
        %7934 = vmatpush1.bf16.msra.mxu0 %v7830
        %7935 = vmatprep.subr.bf16.mxu0 0
        %7936 = vmatpush1.bf16.msra.mxu0 %v7831
        %7937 = vmatprep.subr.bf16.mxu0 0
        %7938 = vmatpush1.bf16.msra.mxu0 %v7832
        %7939 = vmatprep.subr.bf16.mxu0 0
        %7940 = vmatpush1.bf16.msra.mxu0 %v7833
        %7941 = vmatprep.subr.bf16.mxu0 0
        %7942 = vmatpush1.bf16.msra.mxu0 %v7834
        %7943 = vmatprep.subr.bf16.mxu0 0
        %7944 = vmatpush1.bf16.msra.mxu0 %v7835
        %7945 = vmatprep.subr.bf16.mxu0 0
        %7946 = vmatpush1.bf16.msra.mxu0 %v7836
        %7947 = vmatprep.subr.bf16.mxu0 0
        %7948 = vmatpush1.bf16.msra.mxu0 %v7837
        %7949 = vmatprep.subr.bf16.mxu0 0
        %7950 = vmatpush1.bf16.msra.mxu0 %v7838
        %7951 = vmatprep.mubr.bf16.mxu0 %v5704
        %7952 = vmatmul.mubr.bf16.gmra.mrb[0].mxu0 %v5703
        %v7953 = vpop.f32.mrb[0].mxu0
        %v7954 = vadd.f32 0.0, %v7953
        %v7955 = vpop.f32.mrb[0].mxu0
        %v7956 = vpop.f32.mrb[0].mxu0
        %v7957 = vadd.f32 0.0, %v7956
        %v7958 = vpop.f32.mrb[0].mxu0
        %7959 = vmatprep.mubr.bf16.mxu0 %v5710
        %7960 = vmatmul.mubr.bf16.gmra.mrb[0].mxu0 %v5709
        %v7961 = vpop.f32.mrb[0].mxu0
        %v7962 = vadd.f32 0.0, %v7961
        %v7963 = vpop.f32.mrb[0].mxu0
        %v7964 = vpop.f32.mrb[0].mxu0
        %v7965 = vadd.f32 0.0, %v7964
        %v7966 = vpop.f32.mrb[0].mxu0
        %7967 = vmatprep.mubr.bf16.mxu0 %v5716
        %7968 = vmatmul.mubr.bf16.gmra.mrb[0].mxu0 %v5715
        %v7969 = vpop.f32.mrb[0].mxu0
        %v7970 = vadd.f32 0.0, %v7969
        %v7971 = vpop.f32.mrb[0].mxu0
        %v7972 = vpop.f32.mrb[0].mxu0
        %v7973 = vadd.f32 0.0, %v7972
        %v7974 = vpop.f32.mrb[0].mxu0
        %7975 = vmatprep.mubr.bf16.mxu0 %v5722
        %7976 = vmatmul.mubr.bf16.gmra.mrb[0].mxu0 %v5721
        %v7977 = vpop.f32.mrb[0].mxu0
        %v7978 = vadd.f32 0.0, %v7977
        %v7979 = vpop.f32.mrb[0].mxu0
        %v7980 = vpop.f32.mrb[0].mxu0
        %v7981 = vadd.f32 0.0, %v7980
        %v7982 = vpop.f32.mrb[0].mxu0
        %7983 = vmatprep.mubr.bf16.mxu0 %v5728
        %7984 = vmatmul.mubr.bf16.gmra.mrb[0].mxu0 %v5727
        %v7985 = vpop.f32.mrb[0].mxu0
        %v7986 = vadd.f32 0.0, %v7985
        %v7987 = vpop.f32.mrb[0].mxu0
        %v7988 = vpop.f32.mrb[0].mxu0
        %v7989 = vadd.f32 0.0, %v7988
        %v7990 = vpop.f32.mrb[0].mxu0
        %7991 = vmatprep.mubr.bf16.mxu0 %v5734
        %7992 = vmatmul.mubr.bf16.gmra.mrb[0].mxu0 %v5733
        %v7993 = vpop.f32.mrb[0].mxu0
        %v7994 = vadd.f32 0.0, %v7993
        %v7995 = vpop.f32.mrb[0].mxu0
        %v7996 = vpop.f32.mrb[0].mxu0
        %v7997 = vadd.f32 0.0, %v7996
        %v7998 = vpop.f32.mrb[0].mxu0
        %7999 = vmatprep.mubr.bf16.mxu0 %v5740
        %8000 = vmatmul.mubr.bf16.gmra.mrb[0].mxu0 %v5739
        %v8001 = vpop.f32.mrb[0].mxu0
        %v8002 = vadd.f32 0.0, %v8001
        %v8003 = vpop.f32.mrb[0].mxu0
        %v8004 = vpop.f32.mrb[0].mxu0
        %v8005 = vadd.f32 0.0, %v8004
        %v8006 = vpop.f32.mrb[0].mxu0
        %8007 = vmatprep.mubr.bf16.mxu0 %v5746
        %8008 = vmatmul.mubr.bf16.gmra.mrb[0].mxu0 %v5745
        %v8009 = vpop.f32.mrb[0].mxu0
        %v8010 = vadd.f32 0.0, %v8009
        %v8011 = vpop.f32.mrb[0].mxu0
        %v8012 = vpop.f32.mrb[0].mxu0
        %v8013 = vadd.f32 0.0, %v8012
        %v8014 = vpop.f32.mrb[0].mxu0
        %8015 = vmatprep.mubr.bf16.mxu0 %v5752
        %8016 = vmatmul.mubr.bf16.gmra.mrb[0].mxu0 %v5751
        %v8017 = vpop.f32.mrb[0].mxu0
        %v8018 = vadd.f32 0.0, %v8017
        %v8019 = vpop.f32.mrb[0].mxu0
        %v8020 = vpop.f32.mrb[0].mxu0
        %v8021 = vadd.f32 0.0, %v8020
        %v8022 = vpop.f32.mrb[0].mxu0
        %8023 = vmatprep.mubr.bf16.mxu0 %v5758
        %8024 = vmatmul.mubr.bf16.gmra.mrb[0].mxu0 %v5757
        %v8025 = vpop.f32.mrb[0].mxu0
        %v8026 = vadd.f32 0.0, %v8025
        %v8027 = vpop.f32.mrb[0].mxu0
        %v8028 = vpop.f32.mrb[0].mxu0
        %v8029 = vadd.f32 0.0, %v8028
        %v8030 = vpop.f32.mrb[0].mxu0
        %8031 = vmatprep.mubr.bf16.mxu0 %v5764
        %8032 = vmatmul.mubr.bf16.gmra.mrb[0].mxu0 %v5763
        %v8033 = vpop.f32.mrb[0].mxu0
        %v8034 = vadd.f32 0.0, %v8033
        %v8035 = vpop.f32.mrb[0].mxu0
        %v8036 = vpop.f32.mrb[0].mxu0
        %v8037 = vadd.f32 0.0, %v8036
        %v8038 = vpop.f32.mrb[0].mxu0
        %8039 = vmatprep.mubr.bf16.mxu0 %v5770
        %8040 = vmatmul.mubr.bf16.gmra.mrb[0].mxu0 %v5769
        %v8041 = vpop.f32.mrb[0].mxu0
        %v8042 = vadd.f32 0.0, %v8041
        %v8043 = vpop.f32.mrb[0].mxu0
        %v8044 = vpop.f32.mrb[0].mxu0
        %v8045 = vadd.f32 0.0, %v8044
        %v8046 = vpop.f32.mrb[0].mxu0
        %8047 = vmatprep.mubr.bf16.mxu0 %v5776
        %8048 = vmatmul.mubr.bf16.gmra.mrb[0].mxu0 %v5775
        %v8049 = vpop.f32.mrb[0].mxu0
        %v8050 = vadd.f32 0.0, %v8049
        %v8051 = vpop.f32.mrb[0].mxu0
        %v8052 = vpop.f32.mrb[0].mxu0
        %v8053 = vadd.f32 0.0, %v8052
        %v8054 = vpop.f32.mrb[0].mxu0
        %8055 = vmatprep.mubr.bf16.mxu0 %v5782
        %8056 = vmatmul.mubr.bf16.gmra.mrb[0].mxu0 %v5781
        %v8057 = vpop.f32.mrb[0].mxu0
        %v8058 = vadd.f32 0.0, %v8057
        %v8059 = vpop.f32.mrb[0].mxu0
        %v8060 = vpop.f32.mrb[0].mxu0
        %v8061 = vadd.f32 0.0, %v8060
        %v8062 = vpop.f32.mrb[0].mxu0
        %8063 = vmatprep.mubr.bf16.mxu0 %v5788
        %8064 = vmatmul.mubr.bf16.gmra.mrb[0].mxu0 %v5787
        %v8065 = vpop.f32.mrb[0].mxu0
        %v8066 = vadd.f32 0.0, %v8065
        %v8067 = vpop.f32.mrb[0].mxu0
        %v8068 = vpop.f32.mrb[0].mxu0
        %v8069 = vadd.f32 0.0, %v8068
        %v8070 = vpop.f32.mrb[0].mxu0
        %8071 = vmatprep.mubr.bf16.mxu0 %v5794
        %8072 = vmatmul.mubr.bf16.gmra.mrb[0].mxu0 %v5793
        %v8073 = vpop.f32.mrb[0].mxu0
        %v8074 = vadd.f32 0.0, %v8073
        %v8075 = vpop.f32.mrb[0].mxu0
        %v8076 = vpop.f32.mrb[0].mxu0
        %v8077 = vadd.f32 0.0, %v8076
        %v8078 = vpop.f32.mrb[0].mxu0
        %8079 = vdwg.mxu0
        %8080 = vmatprep.subr.bf16.mxu0 0
        %8081 = vmatpush1.bf16.msra.mxu0 %v7839
        %8082 = vmatprep.subr.bf16.mxu0 0
        %8083 = vmatpush1.bf16.msra.mxu0 %v7840
        %8084 = vmatprep.subr.bf16.mxu0 0
        %8085 = vmatpush1.bf16.msra.mxu0 %v7841
        %8086 = vmatprep.subr.bf16.mxu0 0
        %8087 = vmatpush1.bf16.msra.mxu0 %v7842
        %8088 = vmatprep.subr.bf16.mxu0 0
        %8089 = vmatpush1.bf16.msra.mxu0 %v7843
        %8090 = vmatprep.subr.bf16.mxu0 0
        %8091 = vmatpush1.bf16.msra.mxu0 %v7844
        %8092 = vmatprep.subr.bf16.mxu0 0
        %8093 = vmatpush1.bf16.msra.mxu0 %v7845
        %8094 = vmatprep.subr.bf16.mxu0 0
        %8095 = vmatpush1.bf16.msra.mxu0 %v7846
        %8096 = vmatprep.subr.bf16.mxu0 0
        %8097 = vmatpush1.bf16.msra.mxu0 %v7847
        %8098 = vmatprep.subr.bf16.mxu0 0
        %8099 = vmatpush1.bf16.msra.mxu0 %v7848
        %8100 = vmatprep.subr.bf16.mxu0 0
        %8101 = vmatpush1.bf16.msra.mxu0 %v7849
        %8102 = vmatprep.subr.bf16.mxu0 0
        %8103 = vmatpush1.bf16.msra.mxu0 %v7850
        %8104 = vmatprep.subr.bf16.mxu0 0
        %8105 = vmatpush1.bf16.msra.mxu0 %v7851
        %8106 = vmatprep.subr.bf16.mxu0 0
        %8107 = vmatpush1.bf16.msra.mxu0 %v7852
        %8108 = vmatprep.subr.bf16.mxu0 0
        %8109 = vmatpush1.bf16.msra.mxu0 %v7853
        %8110 = vmatprep.subr.bf16.mxu0 0
        %8111 = vmatpush1.bf16.msra.mxu0 %v7854
        %8112 = vmatprep.mubr.bf16.mxu0 %v5706
        %8113 = vmatmul.mubr.bf16.gmra.mrb[0].mxu0 %v5705
        %v8114 = vpop.f32.mrb[0].mxu0
        %v8115 = vadd.f32 %v7954, %v8114
        %v8116 = vpop.f32.mrb[0].mxu0
        %v8117 = vpop.f32.mrb[0].mxu0
        %v8118 = vadd.f32 %v7957, %v8117
        %v8119 = vpop.f32.mrb[0].mxu0
        %8120 = vmatprep.mubr.bf16.mxu0 %v5712
        %8121 = vmatmul.mubr.bf16.gmra.mrb[0].mxu0 %v5711
        %v8122 = vpop.f32.mrb[0].mxu0
        %v8123 = vadd.f32 %v7962, %v8122
        %v8124 = vpop.f32.mrb[0].mxu0
        %v8125 = vpop.f32.mrb[0].mxu0
        %v8126 = vadd.f32 %v7965, %v8125
        %v8127 = vpop.f32.mrb[0].mxu0
        %8128 = vmatprep.mubr.bf16.mxu0 %v5718
        %8129 = vmatmul.mubr.bf16.gmra.mrb[0].mxu0 %v5717
        %v8130 = vpop.f32.mrb[0].mxu0
        %v8131 = vadd.f32 %v7970, %v8130
        %v8132 = vpop.f32.mrb[0].mxu0
        %v8133 = vpop.f32.mrb[0].mxu0
        %v8134 = vadd.f32 %v7973, %v8133
        %v8135 = vpop.f32.mrb[0].mxu0
        %8136 = vmatprep.mubr.bf16.mxu0 %v5724
        %8137 = vmatmul.mubr.bf16.gmra.mrb[0].mxu0 %v5723
        %v8138 = vpop.f32.mrb[0].mxu0
        %v8139 = vadd.f32 %v7978, %v8138
        %v8140 = vpop.f32.mrb[0].mxu0
        %v8141 = vpop.f32.mrb[0].mxu0
        %v8142 = vadd.f32 %v7981, %v8141
        %v8143 = vpop.f32.mrb[0].mxu0
        %8144 = vmatprep.mubr.bf16.mxu0 %v5730
        %8145 = vmatmul.mubr.bf16.gmra.mrb[0].mxu0 %v5729
        %v8146 = vpop.f32.mrb[0].mxu0
        %v8147 = vadd.f32 %v7986, %v8146
        %v8148 = vpop.f32.mrb[0].mxu0
        %v8149 = vpop.f32.mrb[0].mxu0
        %v8150 = vadd.f32 %v7989, %v8149
        %v8151 = vpop.f32.mrb[0].mxu0
        %8152 = vmatprep.mubr.bf16.mxu0 %v5736
        %8153 = vmatmul.mubr.bf16.gmra.mrb[0].mxu0 %v5735
        %v8154 = vpop.f32.mrb[0].mxu0
        %v8155 = vadd.f32 %v7994, %v8154
        %v8156 = vpop.f32.mrb[0].mxu0
        %v8157 = vpop.f32.mrb[0].mxu0
        %v8158 = vadd.f32 %v7997, %v8157
        %v8159 = vpop.f32.mrb[0].mxu0
        %8160 = vmatprep.mubr.bf16.mxu0 %v5742
        %8161 = vmatmul.mubr.bf16.gmra.mrb[0].mxu0 %v5741
        %v8162 = vpop.f32.mrb[0].mxu0
        %v8163 = vadd.f32 %v8002, %v8162
        %v8164 = vpop.f32.mrb[0].mxu0
        %v8165 = vpop.f32.mrb[0].mxu0
        %v8166 = vadd.f32 %v8005, %v8165
        %v8167 = vpop.f32.mrb[0].mxu0
        %8168 = vmatprep.mubr.bf16.mxu0 %v5748
        %8169 = vmatmul.mubr.bf16.gmra.mrb[0].mxu0 %v5747
        %v8170 = vpop.f32.mrb[0].mxu0
        %v8171 = vadd.f32 %v8010, %v8170
        %v8172 = vpop.f32.mrb[0].mxu0
        %v8173 = vpop.f32.mrb[0].mxu0
        %v8174 = vadd.f32 %v8013, %v8173
        %v8175 = vpop.f32.mrb[0].mxu0
        %8176 = vmatprep.mubr.bf16.mxu0 %v5754
        %8177 = vmatmul.mubr.bf16.gmra.mrb[0].mxu0 %v5753
        %v8178 = vpop.f32.mrb[0].mxu0
        %v8179 = vadd.f32 %v8018, %v8178
        %v8180 = vpop.f32.mrb[0].mxu0
        %v8181 = vpop.f32.mrb[0].mxu0
        %v8182 = vadd.f32 %v8021, %v8181
        %v8183 = vpop.f32.mrb[0].mxu0
        %8184 = vmatprep.mubr.bf16.mxu0 %v5760
        %8185 = vmatmul.mubr.bf16.gmra.mrb[0].mxu0 %v5759
        %v8186 = vpop.f32.mrb[0].mxu0
        %v8187 = vadd.f32 %v8026, %v8186
        %v8188 = vpop.f32.mrb[0].mxu0
        %v8189 = vpop.f32.mrb[0].mxu0
        %v8190 = vadd.f32 %v8029, %v8189
        %v8191 = vpop.f32.mrb[0].mxu0
        %8192 = vmatprep.mubr.bf16.mxu0 %v5766
        %8193 = vmatmul.mubr.bf16.gmra.mrb[0].mxu0 %v5765
        %v8194 = vpop.f32.mrb[0].mxu0
        %v8195 = vadd.f32 %v8034, %v8194
        %v8196 = vpop.f32.mrb[0].mxu0
        %v8197 = vpop.f32.mrb[0].mxu0
        %v8198 = vadd.f32 %v8037, %v8197
        %v8199 = vpop.f32.mrb[0].mxu0
        %8200 = vmatprep.mubr.bf16.mxu0 %v5772
        %8201 = vmatmul.mubr.bf16.gmra.mrb[0].mxu0 %v5771
        %v8202 = vpop.f32.mrb[0].mxu0
        %v8203 = vadd.f32 %v8042, %v8202
        %v8204 = vpop.f32.mrb[0].mxu0
        %v8205 = vpop.f32.mrb[0].mxu0
        %v8206 = vadd.f32 %v8045, %v8205
        %v8207 = vpop.f32.mrb[0].mxu0
        %8208 = vmatprep.mubr.bf16.mxu0 %v5778
        %8209 = vmatmul.mubr.bf16.gmra.mrb[0].mxu0 %v5777
        %v8210 = vpop.f32.mrb[0].mxu0
        %v8211 = vadd.f32 %v8050, %v8210
        %v8212 = vpop.f32.mrb[0].mxu0
        %v8213 = vpop.f32.mrb[0].mxu0
        %v8214 = vadd.f32 %v8053, %v8213
        %v8215 = vpop.f32.mrb[0].mxu0
        %8216 = vmatprep.mubr.bf16.mxu0 %v5784
        %8217 = vmatmul.mubr.bf16.gmra.mrb[0].mxu0 %v5783
        %v8218 = vpop.f32.mrb[0].mxu0
        %v8219 = vadd.f32 %v8058, %v8218
        %v8220 = vpop.f32.mrb[0].mxu0
        %v8221 = vpop.f32.mrb[0].mxu0
        %v8222 = vadd.f32 %v8061, %v8221
        %v8223 = vpop.f32.mrb[0].mxu0
        %8224 = vmatprep.mubr.bf16.mxu0 %v5790
        %8225 = vmatmul.mubr.bf16.gmra.mrb[0].mxu0 %v5789
        %v8226 = vpop.f32.mrb[0].mxu0
        %v8227 = vadd.f32 %v8066, %v8226
        %v8228 = vpop.f32.mrb[0].mxu0
        %v8229 = vpop.f32.mrb[0].mxu0
        %v8230 = vadd.f32 %v8069, %v8229
        %v8231 = vpop.f32.mrb[0].mxu0
        %8232 = vmatprep.mubr.bf16.mxu0 %v5796
        %8233 = vmatmul.mubr.bf16.gmra.mrb[0].mxu0 %v5795
        %v8234 = vpop.f32.mrb[0].mxu0
        %v8235 = vadd.f32 %v8074, %v8234
        %v8236 = vpop.f32.mrb[0].mxu0
        %v8237 = vpop.f32.mrb[0].mxu0
        %v8238 = vadd.f32 %v8077, %v8237
        %v8239 = vpop.f32.mrb[0].mxu0
        %8240 = vdwg.mxu0
        %8241 = vmatprep.subr.bf16.mxu0 0
        %8242 = vmatpush1.bf16.msra.mxu0 %v7855
        %8243 = vmatprep.subr.bf16.mxu0 0
        %8244 = vmatpush1.bf16.msra.mxu0 %v7856
        %8245 = vmatprep.subr.bf16.mxu0 0
        %8246 = vmatpush1.bf16.msra.mxu0 %v7857
        %8247 = vmatprep.subr.bf16.mxu0 0
        %8248 = vmatpush1.bf16.msra.mxu0 %v7858
        %8249 = vmatprep.subr.bf16.mxu0 0
        %8250 = vmatpush1.bf16.msra.mxu0 %v7859
        %8251 = vmatprep.subr.bf16.mxu0 0
        %8252 = vmatpush1.bf16.msra.mxu0 %v7860
        %8253 = vmatprep.subr.bf16.mxu0 0
        %8254 = vmatpush1.bf16.msra.mxu0 %v7861
        %8255 = vmatprep.subr.bf16.mxu0 0
        %8256 = vmatpush1.bf16.msra.mxu0 %v7862
        %8257 = vmatprep.subr.bf16.mxu0 0
        %8258 = vmatpush1.bf16.msra.mxu0 %v7863
        %8259 = vmatprep.subr.bf16.mxu0 0
        %8260 = vmatpush1.bf16.msra.mxu0 %v7864
        %8261 = vmatprep.subr.bf16.mxu0 0
        %8262 = vmatpush1.bf16.msra.mxu0 %v7865
        %8263 = vmatprep.subr.bf16.mxu0 0
        %8264 = vmatpush1.bf16.msra.mxu0 %v7866
        %8265 = vmatprep.subr.bf16.mxu0 0
        %8266 = vmatpush1.bf16.msra.mxu0 %v7867
        %8267 = vmatprep.subr.bf16.mxu0 0
        %8268 = vmatpush1.bf16.msra.mxu0 %v7868
        %8269 = vmatprep.subr.bf16.mxu0 0
        %8270 = vmatpush1.bf16.msra.mxu0 %v7869
        %8271 = vmatprep.subr.bf16.mxu0 0
        %8272 = vmatpush1.bf16.msra.mxu0 %v7870
        %8273 = vmatprep.mubr.bf16.mxu0 %v5708
        %8274 = vmatmul.mubr.bf16.gmra.mrb[0].mxu0 %v5707
        %v8275 = vpop.f32.mrb[0].mxu0
        %v8276 = vadd.f32 %v8115, %v8275
        %v8277 = vpop.f32.mrb[0].mxu0
        %v8278 = vpop.f32.mrb[0].mxu0
        %v8279 = vadd.f32 %v8118, %v8278
        %v8280 = vpop.f32.mrb[0].mxu0
        %8281 = vmatprep.mubr.bf16.mxu0 %v5714
        %8282 = vmatmul.mubr.bf16.gmra.mrb[0].mxu0 %v5713
        %v8283 = vpop.f32.mrb[0].mxu0
        %v8284 = vadd.f32 %v8123, %v8283
        %v8285 = vpop.f32.mrb[0].mxu0
        %v8286 = vpop.f32.mrb[0].mxu0
        %v8287 = vadd.f32 %v8126, %v8286
        %v8288 = vpop.f32.mrb[0].mxu0
        %8289 = vmatprep.mubr.bf16.mxu0 %v5720
        %8290 = vmatmul.mubr.bf16.gmra.mrb[0].mxu0 %v5719
        %v8291 = vpop.f32.mrb[0].mxu0
        %v8292 = vadd.f32 %v8131, %v8291
        %v8293 = vpop.f32.mrb[0].mxu0
        %v8294 = vpop.f32.mrb[0].mxu0
        %v8295 = vadd.f32 %v8134, %v8294
        %v8296 = vpop.f32.mrb[0].mxu0
        %8297 = vmatprep.mubr.bf16.mxu0 %v5726
        %8298 = vmatmul.mubr.bf16.gmra.mrb[0].mxu0 %v5725
        %v8299 = vpop.f32.mrb[0].mxu0
        %v8300 = vadd.f32 %v8139, %v8299
        %v8301 = vpop.f32.mrb[0].mxu0
        %v8302 = vpop.f32.mrb[0].mxu0
        %v8303 = vadd.f32 %v8142, %v8302
        %v8304 = vpop.f32.mrb[0].mxu0
        %8305 = vmatprep.mubr.bf16.mxu0 %v5732
        %8306 = vmatmul.mubr.bf16.gmra.mrb[0].mxu0 %v5731
        %v8307 = vpop.f32.mrb[0].mxu0
        %v8308 = vadd.f32 %v8147, %v8307
        %v8309 = vpop.f32.mrb[0].mxu0
        %v8310 = vpop.f32.mrb[0].mxu0
        %v8311 = vadd.f32 %v8150, %v8310
        %v8312 = vpop.f32.mrb[0].mxu0
        %8313 = vmatprep.mubr.bf16.mxu0 %v5738
        %8314 = vmatmul.mubr.bf16.gmra.mrb[0].mxu0 %v5737
        %v8315 = vpop.f32.mrb[0].mxu0
        %v8316 = vadd.f32 %v8155, %v8315
        %v8317 = vpop.f32.mrb[0].mxu0
        %v8318 = vpop.f32.mrb[0].mxu0
        %v8319 = vadd.f32 %v8158, %v8318
        %v8320 = vpop.f32.mrb[0].mxu0
        %8321 = vmatprep.mubr.bf16.mxu0 %v5744
        %8322 = vmatmul.mubr.bf16.gmra.mrb[0].mxu0 %v5743
        %v8323 = vpop.f32.mrb[0].mxu0
        %v8324 = vadd.f32 %v8163, %v8323
        %v8325 = vpop.f32.mrb[0].mxu0
        %v8326 = vpop.f32.mrb[0].mxu0
        %v8327 = vadd.f32 %v8166, %v8326
        %v8328 = vpop.f32.mrb[0].mxu0
        %8329 = vmatprep.mubr.bf16.mxu0 %v5750
        %8330 = vmatmul.mubr.bf16.gmra.mrb[0].mxu0 %v5749
        %v8331 = vpop.f32.mrb[0].mxu0
        %v8332 = vadd.f32 %v8171, %v8331
        %v8333 = vpop.f32.mrb[0].mxu0
        %v8334 = vpop.f32.mrb[0].mxu0
        %v8335 = vadd.f32 %v8174, %v8334
        %v8336 = vpop.f32.mrb[0].mxu0
        %8337 = vmatprep.mubr.bf16.mxu0 %v5756
        %8338 = vmatmul.mubr.bf16.gmra.mrb[0].mxu0 %v5755
        %v8339 = vpop.f32.mrb[0].mxu0
        %v8340 = vadd.f32 %v8179, %v8339
        %v8341 = vpop.f32.mrb[0].mxu0
        %v8342 = vpop.f32.mrb[0].mxu0
        %v8343 = vadd.f32 %v8182, %v8342
        %v8344 = vpop.f32.mrb[0].mxu0
        %8345 = vmatprep.mubr.bf16.mxu0 %v5762
        %8346 = vmatmul.mubr.bf16.gmra.mrb[0].mxu0 %v5761
        %v8347 = vpop.f32.mrb[0].mxu0
        %v8348 = vadd.f32 %v8187, %v8347
        %v8349 = vpop.f32.mrb[0].mxu0
        %v8350 = vpop.f32.mrb[0].mxu0
        %v8351 = vadd.f32 %v8190, %v8350
        %v8352 = vpop.f32.mrb[0].mxu0
        %8353 = vmatprep.mubr.bf16.mxu0 %v5768
        %8354 = vmatmul.mubr.bf16.gmra.mrb[0].mxu0 %v5767
        %v8355 = vpop.f32.mrb[0].mxu0
        %v8356 = vadd.f32 %v8195, %v8355
        %v8357 = vpop.f32.mrb[0].mxu0
        %v8358 = vpop.f32.mrb[0].mxu0
        %v8359 = vadd.f32 %v8198, %v8358
        %v8360 = vpop.f32.mrb[0].mxu0
        %8361 = vmatprep.mubr.bf16.mxu0 %v5774
        %8362 = vmatmul.mubr.bf16.gmra.mrb[0].mxu0 %v5773
        %v8363 = vpop.f32.mrb[0].mxu0
        %v8364 = vadd.f32 %v8203, %v8363
        %v8365 = vpop.f32.mrb[0].mxu0
        %v8366 = vpop.f32.mrb[0].mxu0
        %v8367 = vadd.f32 %v8206, %v8366
        %v8368 = vpop.f32.mrb[0].mxu0
        %8369 = vmatprep.mubr.bf16.mxu0 %v5780
        %8370 = vmatmul.mubr.bf16.gmra.mrb[0].mxu0 %v5779
        %v8371 = vpop.f32.mrb[0].mxu0
        %v8372 = vadd.f32 %v8211, %v8371
        %v8373 = vpop.f32.mrb[0].mxu0
        %v8374 = vpop.f32.mrb[0].mxu0
        %v8375 = vadd.f32 %v8214, %v8374
        %v8376 = vpop.f32.mrb[0].mxu0
        %8377 = vmatprep.mubr.bf16.mxu0 %v5786
        %8378 = vmatmul.mubr.bf16.gmra.mrb[0].mxu0 %v5785
        %v8379 = vpop.f32.mrb[0].mxu0
        %v8380 = vadd.f32 %v8219, %v8379
        %v8381 = vpop.f32.mrb[0].mxu0
        %v8382 = vpop.f32.mrb[0].mxu0
        %v8383 = vadd.f32 %v8222, %v8382
        %v8384 = vpop.f32.mrb[0].mxu0
        %8385 = vmatprep.mubr.bf16.mxu0 %v5792
        %8386 = vmatmul.mubr.bf16.gmra.mrb[0].mxu0 %v5791
        %v8387 = vpop.f32.mrb[0].mxu0
        %v8388 = vadd.f32 %v8227, %v8387
        %v8389 = vpop.f32.mrb[0].mxu0
        %v8390 = vpop.f32.mrb[0].mxu0
        %v8391 = vadd.f32 %v8230, %v8390
        %v8392 = vpop.f32.mrb[0].mxu0
        %8393 = vmatprep.mubr.bf16.mxu0 %v5798
        %8394 = vmatmul.mubr.bf16.gmra.mrb[0].mxu0 %v5797
        %v8395 = vpop.f32.mrb[0].mxu0
        %v8396 = vadd.f32 %v8235, %v8395
        %v8397 = vpop.f32.mrb[0].mxu0
        %v8398 = vpop.f32.mrb[0].mxu0
        %v8399 = vadd.f32 %v8238, %v8398
        %v8400 = vpop.f32.mrb[0].mxu0
        %8401 = vdwg.mxu0
        %v8402 = vadd.f32 %v7408, %v8276
        %v8403 = vadd.f32 %v7411, %v8279
        %v8404 = vadd.f32 %v7416, %v8284
        %v8405 = vadd.f32 %v7419, %v8287
        %v8406 = vadd.f32 %v7424, %v8292
        %v8407 = vadd.f32 %v7427, %v8295
        %v8408 = vadd.f32 %v7432, %v8300
        %v8409 = vadd.f32 %v7435, %v8303
        %v8410 = vadd.f32 %v7440, %v8308
        %v8411 = vadd.f32 %v7443, %v8311
        %v8412 = vadd.f32 %v7448, %v8316
        %v8413 = vadd.f32 %v7451, %v8319
        %v8414 = vadd.f32 %v7456, %v8324
        %v8415 = vadd.f32 %v7459, %v8327
        %v8416 = vadd.f32 %v7464, %v8332
        %v8417 = vadd.f32 %v7467, %v8335
        %v8418 = vadd.f32 %v7472, %v8340
        %v8419 = vadd.f32 %v7475, %v8343
        %v8420 = vadd.f32 %v7480, %v8348
        %v8421 = vadd.f32 %v7483, %v8351
        %v8422 = vadd.f32 %v7488, %v8356
        %v8423 = vadd.f32 %v7491, %v8359
        %v8424 = vadd.f32 %v7496, %v8364
        %v8425 = vadd.f32 %v7499, %v8367
        %v8426 = vadd.f32 %v7504, %v8372
        %v8427 = vadd.f32 %v7507, %v8375
        %v8428 = vadd.f32 %v7512, %v8380
        %v8429 = vadd.f32 %v7515, %v8383
        %v8430 = vadd.f32 %v7520, %v8388
        %v8431 = vadd.f32 %v7523, %v8391
        %v8432 = vadd.f32 %v7528, %v8396
        %v8433 = vadd.f32 %v7531, %v8399
        %v8434 = vld [vmem:[%s598] sm:$0xff]
        %v8435 = vld [vmem:[%s598 + $0x8] sm:$0xff]
        %v8436 = vld [vmem:[%s598 + $0x10] sm:$0xff]
        %v8437 = vld [vmem:[%s598 + $0x18] sm:$0xff]
        %v8438 = vld [vmem:[%s598 + $0x20] sm:$0xff]
        %v8439 = vld [vmem:[%s598 + $0x28] sm:$0xff]
        %v8440 = vld [vmem:[%s598 + $0x30] sm:$0xff]
        %v8441 = vld [vmem:[%s598 + $0x38] sm:$0xff]
        %v8442 = vld [vmem:[%s598 + $0x40] sm:$0xff]
        %v8443 = vld [vmem:[%s598 + $0x48] sm:$0xff]
        %v8444 = vld [vmem:[%s598 + $0x50] sm:$0xff]
        %v8445 = vld [vmem:[%s598 + $0x58] sm:$0xff]
        %v8446 = vld [vmem:[%s598 + $0x60] sm:$0xff]
        %v8447 = vld [vmem:[%s598 + $0x68] sm:$0xff]
        %v8448 = vld [vmem:[%s598 + $0x70] sm:$0xff]
        %v8449 = vld [vmem:[%s598 + $0x78] sm:$0xff]
        %v8450 = vld [vmem:[%s598 + $0x80] sm:$0xff]
        %v8451 = vld [vmem:[%s598 + $0x88] sm:$0xff]
        %v8452 = vld [vmem:[%s598 + $0x90] sm:$0xff]
        %v8453 = vld [vmem:[%s598 + $0x98] sm:$0xff]
        %v8454 = vld [vmem:[%s598 + $0xa0] sm:$0xff]
        %v8455 = vld [vmem:[%s598 + $0xa8] sm:$0xff]
        %v8456 = vld [vmem:[%s598 + $0xb0] sm:$0xff]
        %v8457 = vld [vmem:[%s598 + $0xb8] sm:$0xff]
        %v8458 = vld [vmem:[%s598 + $0xc0] sm:$0xff]
        %v8459 = vld [vmem:[%s598 + $0xc8] sm:$0xff]
        %v8460 = vld [vmem:[%s598 + $0xd0] sm:$0xff]
        %v8461 = vld [vmem:[%s598 + $0xd8] sm:$0xff]
        %v8462 = vld [vmem:[%s598 + $0xe0] sm:$0xff]
        %v8463 = vld [vmem:[%s598 + $0xe8] sm:$0xff]
        %v8464 = vld [vmem:[%s598 + $0xf0] sm:$0xff]
        %v8465 = vld [vmem:[%s598 + $0xf8] sm:$0xff]
        %v8466 = vpack.c.bf16 %v8435, %v8434
        %v8467 = vpack.c.bf16 %v8437, %v8436
        %v8468 = vpack.c.bf16 %v8439, %v8438
        %v8469 = vpack.c.bf16 %v8441, %v8440
        %v8470 = vpack.c.bf16 %v8443, %v8442
        %v8471 = vpack.c.bf16 %v8445, %v8444
        %v8472 = vpack.c.bf16 %v8447, %v8446
        %v8473 = vpack.c.bf16 %v8449, %v8448
        %v8474 = vpack.c.bf16 %v8451, %v8450
        %v8475 = vpack.c.bf16 %v8453, %v8452
        %v8476 = vpack.c.bf16 %v8455, %v8454
        %v8477 = vpack.c.bf16 %v8457, %v8456
        %v8478 = vpack.c.bf16 %v8459, %v8458
        %v8479 = vpack.c.bf16 %v8461, %v8460
        %v8480 = vpack.c.bf16 %v8463, %v8462
        %v8481 = vpack.c.bf16 %v8465, %v8464
        %v8482 = vld [vmem:[%s648] sm:$0xf]
        %v8483 = vld [vmem:[%s648 + $0x4] sm:$0xf]
        %v8484 = vld [vmem:[%s648 + $0x8] sm:$0xf]
        %v8485 = vld [vmem:[%s648 + $0xc] sm:$0xf]
        %v8486 = vld [vmem:[%s648 + $0x10] sm:$0xf]
        %v8487 = vld [vmem:[%s648 + $0x14] sm:$0xf]
        %v8488 = vld [vmem:[%s648 + $0x18] sm:$0xf]
        %v8489 = vld [vmem:[%s648 + $0x1c] sm:$0xf]
        %v8498 = vunpack.c.l.b16 %v8482
        %v8499 = vunpack.c.l.b16 %v8483
        %v8500 = vunpack.c.l.b16 %v8484
        %v8501 = vunpack.c.l.b16 %v8485
        %v8502 = vunpack.c.l.b16 %v8486
        %v8503 = vunpack.c.l.b16 %v8487
        %v8504 = vunpack.c.l.b16 %v8488
        %v8505 = vunpack.c.l.b16 %v8489
        %v8506 = vpack.c.b16 %v8499, %v8498
        %v8507 = vpack.c.b16 %v8501, %v8500
        %v8508 = vpack.c.b16 %v8503, %v8502
        %v8509 = vpack.c.b16 %v8505, %v8504
        %vm8514 = vcmask 523264
        %v8516 = vsel %vm8514, %v8466, 0
        %v8519 = vsel %vm8514, %v8467, 0
        %v8522 = vsel %vm8514, %v8468, 0
        %v8525 = vsel %vm8514, %v8469, 0
        %v8528 = vsel %vm8514, %v8470, 0
        %v8531 = vsel %vm8514, %v8471, 0
        %v8534 = vsel %vm8514, %v8472, 0
        %v8537 = vsel %vm8514, %v8473, 0
        %v8540 = vsel %vm8514, %v8474, 0
        %v8543 = vsel %vm8514, %v8475, 0
        %v8546 = vsel %vm8514, %v8476, 0
        %v8549 = vsel %vm8514, %v8477, 0
        %v8552 = vsel %vm8514, %v8478, 0
        %v8555 = vsel %vm8514, %v8479, 0
        %v8558 = vsel %vm8514, %v8480, 0
        %v8561 = vsel %vm8514, %v8481, 0
        %8563 = vmatprep.subr.bf16.mxu0 0
        %8564 = vmatpush1.bf16.msra.mxu0 %v8506
        %8565 = vmatprep.subr.bf16.mxu0 0
        %8566 = vmatpush1.bf16.msra.mxu0 %v8507
        %8567 = vmatprep.subr.bf16.mxu0 0
        %8568 = vmatpush1.bf16.msra.mxu0 %v8508
        %8569 = vmatprep.subr.bf16.mxu0 0
        %8570 = vmatpush1.bf16.msra.mxu0 %v8509
        %8571 = vmatprep.subr.bf16.mxu0 0
        %8572 = vmatpush1.bf16.msra.mxu0 0
        %8573 = vmatprep.subr.bf16.mxu0 0
        %8574 = vmatpush1.bf16.msra.mxu0 0
        %8575 = vmatprep.subr.bf16.mxu0 0
        %8576 = vmatpush1.bf16.msra.mxu0 0
        %8577 = vmatprep.subr.bf16.mxu0 0
        %8578 = vmatpush1.bf16.msra.mxu0 0
        %8579 = vmatprep.subr.bf16.mxu0 0
        %8580 = vmatpush1.bf16.msra.mxu0 0
        %8581 = vmatprep.subr.bf16.mxu0 0
        %8582 = vmatpush1.bf16.msra.mxu0 0
        %8583 = vmatprep.subr.bf16.mxu0 0
        %8584 = vmatpush1.bf16.msra.mxu0 0
        %8585 = vmatprep.subr.bf16.mxu0 0
        %8586 = vmatpush1.bf16.msra.mxu0 0
        %8587 = vmatprep.subr.bf16.mxu0 0
        %8588 = vmatpush1.bf16.msra.mxu0 0
        %8589 = vmatprep.subr.bf16.mxu0 0
        %8590 = vmatpush1.bf16.msra.mxu0 0
        %8591 = vmatprep.subr.bf16.mxu0 0
        %8592 = vmatpush1.bf16.msra.mxu0 0
        %8593 = vmatprep.subr.bf16.mxu0 0
        %8594 = vmatpush1.bf16.msra.mxu0 0
        %8595 = vmatprep.mubr.bf16.mxu0 0
        %8596 = vmatmul.mubr.bf16.gmra.mrb[0].mxu0 %v8516
        %v8597 = vpop.f32.mrb[0].mxu0
        %v8598 = vadd.f32 0.0, %v8597
        %v8599 = vpop.f32.mrb[0].mxu0
        %v8600 = vpop.f32.mrb[0].mxu0
        %v8601 = vadd.f32 0.0, %v8600
        %v8602 = vpop.f32.mrb[0].mxu0
        %8603 = vmatprep.mubr.bf16.mxu0 0
        %8604 = vmatmul.mubr.bf16.gmra.mrb[0].mxu0 %v8519
        %v8605 = vpop.f32.mrb[0].mxu0
        %v8606 = vadd.f32 0.0, %v8605
        %v8607 = vpop.f32.mrb[0].mxu0
        %v8608 = vpop.f32.mrb[0].mxu0
        %v8609 = vadd.f32 0.0, %v8608
        %v8610 = vpop.f32.mrb[0].mxu0
        %8611 = vmatprep.mubr.bf16.mxu0 0
        %8612 = vmatmul.mubr.bf16.gmra.mrb[0].mxu0 %v8522
        %v8613 = vpop.f32.mrb[0].mxu0
        %v8614 = vadd.f32 0.0, %v8613
        %v8615 = vpop.f32.mrb[0].mxu0
        %v8616 = vpop.f32.mrb[0].mxu0
        %v8617 = vadd.f32 0.0, %v8616
        %v8618 = vpop.f32.mrb[0].mxu0
        %8619 = vmatprep.mubr.bf16.mxu0 0
        %8620 = vmatmul.mubr.bf16.gmra.mrb[0].mxu0 %v8525
        %v8621 = vpop.f32.mrb[0].mxu0
        %v8622 = vadd.f32 0.0, %v8621
        %v8623 = vpop.f32.mrb[0].mxu0
        %v8624 = vpop.f32.mrb[0].mxu0
        %v8625 = vadd.f32 0.0, %v8624
        %v8626 = vpop.f32.mrb[0].mxu0
        %8627 = vmatprep.mubr.bf16.mxu0 0
        %8628 = vmatmul.mubr.bf16.gmra.mrb[0].mxu0 %v8528
        %v8629 = vpop.f32.mrb[0].mxu0
        %v8630 = vadd.f32 0.0, %v8629
        %v8631 = vpop.f32.mrb[0].mxu0
        %v8632 = vpop.f32.mrb[0].mxu0
        %v8633 = vadd.f32 0.0, %v8632
        %v8634 = vpop.f32.mrb[0].mxu0
        %8635 = vmatprep.mubr.bf16.mxu0 0
        %8636 = vmatmul.mubr.bf16.gmra.mrb[0].mxu0 %v8531
        %v8637 = vpop.f32.mrb[0].mxu0
        %v8638 = vadd.f32 0.0, %v8637
        %v8639 = vpop.f32.mrb[0].mxu0
        %v8640 = vpop.f32.mrb[0].mxu0
        %v8641 = vadd.f32 0.0, %v8640
        %v8642 = vpop.f32.mrb[0].mxu0
        %8643 = vmatprep.mubr.bf16.mxu0 0
        %8644 = vmatmul.mubr.bf16.gmra.mrb[0].mxu0 %v8534
        %v8645 = vpop.f32.mrb[0].mxu0
        %v8646 = vadd.f32 0.0, %v8645
        %v8647 = vpop.f32.mrb[0].mxu0
        %v8648 = vpop.f32.mrb[0].mxu0
        %v8649 = vadd.f32 0.0, %v8648
        %v8650 = vpop.f32.mrb[0].mxu0
        %8651 = vmatprep.mubr.bf16.mxu0 0
        %8652 = vmatmul.mubr.bf16.gmra.mrb[0].mxu0 %v8537
        %v8653 = vpop.f32.mrb[0].mxu0
        %v8654 = vadd.f32 0.0, %v8653
        %v8655 = vpop.f32.mrb[0].mxu0
        %v8656 = vpop.f32.mrb[0].mxu0
        %v8657 = vadd.f32 0.0, %v8656
        %v8658 = vpop.f32.mrb[0].mxu0
        %8659 = vmatprep.mubr.bf16.mxu0 0
        %8660 = vmatmul.mubr.bf16.gmra.mrb[0].mxu0 %v8540
        %v8661 = vpop.f32.mrb[0].mxu0
        %v8662 = vadd.f32 0.0, %v8661
        %v8663 = vpop.f32.mrb[0].mxu0
        %v8664 = vpop.f32.mrb[0].mxu0
        %v8665 = vadd.f32 0.0, %v8664
        %v8666 = vpop.f32.mrb[0].mxu0
        %8667 = vmatprep.mubr.bf16.mxu0 0
        %8668 = vmatmul.mubr.bf16.gmra.mrb[0].mxu0 %v8543
        %v8669 = vpop.f32.mrb[0].mxu0
        %v8670 = vadd.f32 0.0, %v8669
        %v8671 = vpop.f32.mrb[0].mxu0
        %v8672 = vpop.f32.mrb[0].mxu0
        %v8673 = vadd.f32 0.0, %v8672
        %v8674 = vpop.f32.mrb[0].mxu0
        %8675 = vmatprep.mubr.bf16.mxu0 0
        %8676 = vmatmul.mubr.bf16.gmra.mrb[0].mxu0 %v8546
        %v8677 = vpop.f32.mrb[0].mxu0
        %v8678 = vadd.f32 0.0, %v8677
        %v8679 = vpop.f32.mrb[0].mxu0
        %v8680 = vpop.f32.mrb[0].mxu0
        %v8681 = vadd.f32 0.0, %v8680
        %v8682 = vpop.f32.mrb[0].mxu0
        %8683 = vmatprep.mubr.bf16.mxu0 0
        %8684 = vmatmul.mubr.bf16.gmra.mrb[0].mxu0 %v8549
        %v8685 = vpop.f32.mrb[0].mxu0
        %v8686 = vadd.f32 0.0, %v8685
        %v8687 = vpop.f32.mrb[0].mxu0
        %v8688 = vpop.f32.mrb[0].mxu0
        %v8689 = vadd.f32 0.0, %v8688
        %v8690 = vpop.f32.mrb[0].mxu0
        %8691 = vmatprep.mubr.bf16.mxu0 0
        %8692 = vmatmul.mubr.bf16.gmra.mrb[0].mxu0 %v8552
        %v8693 = vpop.f32.mrb[0].mxu0
        %v8694 = vadd.f32 0.0, %v8693
        %v8695 = vpop.f32.mrb[0].mxu0
        %v8696 = vpop.f32.mrb[0].mxu0
        %v8697 = vadd.f32 0.0, %v8696
        %v8698 = vpop.f32.mrb[0].mxu0
        %8699 = vmatprep.mubr.bf16.mxu0 0
        %8700 = vmatmul.mubr.bf16.gmra.mrb[0].mxu0 %v8555
        %v8701 = vpop.f32.mrb[0].mxu0
        %v8702 = vadd.f32 0.0, %v8701
        %v8703 = vpop.f32.mrb[0].mxu0
        %v8704 = vpop.f32.mrb[0].mxu0
        %v8705 = vadd.f32 0.0, %v8704
        %v8706 = vpop.f32.mrb[0].mxu0
        %8707 = vmatprep.mubr.bf16.mxu0 0
        %8708 = vmatmul.mubr.bf16.gmra.mrb[0].mxu0 %v8558
        %v8709 = vpop.f32.mrb[0].mxu0
        %v8710 = vadd.f32 0.0, %v8709
        %v8711 = vpop.f32.mrb[0].mxu0
        %v8712 = vpop.f32.mrb[0].mxu0
        %v8713 = vadd.f32 0.0, %v8712
        %v8714 = vpop.f32.mrb[0].mxu0
        %8715 = vmatprep.mubr.bf16.mxu0 0
        %8716 = vmatmul.mubr.bf16.gmra.mrb[0].mxu0 %v8561
        %v8717 = vpop.f32.mrb[0].mxu0
        %v8718 = vadd.f32 0.0, %v8717
        %v8719 = vpop.f32.mrb[0].mxu0
        %v8720 = vpop.f32.mrb[0].mxu0
        %v8721 = vadd.f32 0.0, %v8720
        %v8722 = vpop.f32.mrb[0].mxu0
        %8723 = vdwg.mxu0
        %v8724 = vadd.f32 %v8402, %v8598
        %v8725 = vadd.f32 %v8403, %v8601
        %v8726 = vadd.f32 %v8404, %v8606
        %v8727 = vadd.f32 %v8405, %v8609
        %v8728 = vadd.f32 %v8406, %v8614
        %v8729 = vadd.f32 %v8407, %v8617
        %v8730 = vadd.f32 %v8408, %v8622
        %v8731 = vadd.f32 %v8409, %v8625
        %v8732 = vadd.f32 %v8410, %v8630
        %v8733 = vadd.f32 %v8411, %v8633
        %v8734 = vadd.f32 %v8412, %v8638
        %v8735 = vadd.f32 %v8413, %v8641
        %v8736 = vadd.f32 %v8414, %v8646
        %v8737 = vadd.f32 %v8415, %v8649
        %v8738 = vadd.f32 %v8416, %v8654
        %v8739 = vadd.f32 %v8417, %v8657
        %v8740 = vadd.f32 %v8418, %v8662
        %v8741 = vadd.f32 %v8419, %v8665
        %v8742 = vadd.f32 %v8420, %v8670
        %v8743 = vadd.f32 %v8421, %v8673
        %v8744 = vadd.f32 %v8422, %v8678
        %v8745 = vadd.f32 %v8423, %v8681
        %v8746 = vadd.f32 %v8424, %v8686
        %v8747 = vadd.f32 %v8425, %v8689
        %v8748 = vadd.f32 %v8426, %v8694
        %v8749 = vadd.f32 %v8427, %v8697
        %v8750 = vadd.f32 %v8428, %v8702
        %v8751 = vadd.f32 %v8429, %v8705
        %v8752 = vadd.f32 %v8430, %v8710
        %v8753 = vadd.f32 %v8431, %v8713
        %v8754 = vadd.f32 %v8432, %v8718
        %v8755 = vadd.f32 %v8433, %v8721
        %v8756 = vld [vmem:[%s656] sm:$0x1]
        %v8758 = vlaneseq
        %v8759 = vshrl.u32 %v8758, 7
        %v8760 = vsub.s32 0, %v8759
        %v8761 = vrot.slane %v8756, %v8760
        %v8763 = vadd.f32 %v8724, %v8761
        %v8764 = vadd.f32 %v8725, %v8761
        %v8765 = vadd.f32 %v8726, %v8761
        %v8766 = vadd.f32 %v8727, %v8761
        %v8767 = vadd.f32 %v8728, %v8761
        %v8768 = vadd.f32 %v8729, %v8761
        %v8769 = vadd.f32 %v8730, %v8761
        %v8770 = vadd.f32 %v8731, %v8761
        %v8771 = vadd.f32 %v8732, %v8761
        %v8772 = vadd.f32 %v8733, %v8761
        %v8773 = vadd.f32 %v8734, %v8761
        %v8774 = vadd.f32 %v8735, %v8761
        %v8775 = vadd.f32 %v8736, %v8761
        %v8776 = vadd.f32 %v8737, %v8761
        %v8777 = vadd.f32 %v8738, %v8761
        %v8778 = vadd.f32 %v8739, %v8761
        %v8779 = vadd.f32 %v8740, %v8761
        %v8780 = vadd.f32 %v8741, %v8761
        %v8781 = vadd.f32 %v8742, %v8761
        %v8782 = vadd.f32 %v8743, %v8761
        %v8783 = vadd.f32 %v8744, %v8761
        %v8784 = vadd.f32 %v8745, %v8761
        %v8785 = vadd.f32 %v8746, %v8761
        %v8786 = vadd.f32 %v8747, %v8761
        %v8787 = vadd.f32 %v8748, %v8761
        %v8788 = vadd.f32 %v8749, %v8761
        %v8789 = vadd.f32 %v8750, %v8761
        %v8790 = vadd.f32 %v8751, %v8761
        %v8791 = vadd.f32 %v8752, %v8761
        %v8792 = vadd.f32 %v8753, %v8761
        %v8793 = vadd.f32 %v8754, %v8761
        %v8794 = vadd.f32 %v8755, %v8761
        %8795 = vst [vmem:[%s714] sm:$0xff] %v8763
        %8796 = vst [vmem:[%s714 + $0x8] sm:$0xff] %v8764
        %8797 = vst [vmem:[%s714 + $0x10] sm:$0xff] %v8765
        %8798 = vst [vmem:[%s714 + $0x18] sm:$0xff] %v8766
        %8799 = vst [vmem:[%s714 + $0x20] sm:$0xff] %v8767
        %8800 = vst [vmem:[%s714 + $0x28] sm:$0xff] %v8768
        %8801 = vst [vmem:[%s714 + $0x30] sm:$0xff] %v8769
        %8802 = vst [vmem:[%s714 + $0x38] sm:$0xff] %v8770
        %8803 = vst [vmem:[%s714 + $0x40] sm:$0xff] %v8771
        %8804 = vst [vmem:[%s714 + $0x48] sm:$0xff] %v8772
        %8805 = vst [vmem:[%s714 + $0x50] sm:$0xff] %v8773
        %8806 = vst [vmem:[%s714 + $0x58] sm:$0xff] %v8774
        %8807 = vst [vmem:[%s714 + $0x60] sm:$0xff] %v8775
        %8808 = vst [vmem:[%s714 + $0x68] sm:$0xff] %v8776
        %8809 = vst [vmem:[%s714 + $0x70] sm:$0xff] %v8777
        %8810 = vst [vmem:[%s714 + $0x78] sm:$0xff] %v8778
        %8811 = vst [vmem:[%s714 + $0x80] sm:$0xff] %v8779
        %8812 = vst [vmem:[%s714 + $0x88] sm:$0xff] %v8780
        %8813 = vst [vmem:[%s714 + $0x90] sm:$0xff] %v8781
        %8814 = vst [vmem:[%s714 + $0x98] sm:$0xff] %v8782
        %8815 = vst [vmem:[%s714 + $0xa0] sm:$0xff] %v8783
        %8816 = vst [vmem:[%s714 + $0xa8] sm:$0xff] %v8784
        %8817 = vst [vmem:[%s714 + $0xb0] sm:$0xff] %v8785
        %8818 = vst [vmem:[%s714 + $0xb8] sm:$0xff] %v8786
        %8819 = vst [vmem:[%s714 + $0xc0] sm:$0xff] %v8787
        %8820 = vst [vmem:[%s714 + $0xc8] sm:$0xff] %v8788
        %8821 = vst [vmem:[%s714 + $0xd0] sm:$0xff] %v8789
        %8822 = vst [vmem:[%s714 + $0xd8] sm:$0xff] %v8790
        %8823 = vst [vmem:[%s714 + $0xe0] sm:$0xff] %v8791
        %8824 = vst [vmem:[%s714 + $0xe8] sm:$0xff] %v8792
        %8825 = vst [vmem:[%s714 + $0xf0] sm:$0xff] %v8793
        %8826 = vst [vmem:[%s714 + $0xf8] sm:$0xff] %v8794
        %s8827 = sand.u32 %s377, 1
        %s8828 = scalar_lea.sflag [#allocation5], %s8827
        %s8829 = sand.u32 %s377, 1
        %s8830 = smul.addr %s8829, 256
        %s8831 = scalar_lea.vmem [#allocation23], %s8830
        // Predicated region
        $region129: #{tpu_custom_call.1} parent=75 // pred_check
          %p8832 = pneg %p387
        $region130: #{tpu_custom_call.1} parent=75 // pred_check_branch
          %8834 = sbr.rel (%p8832) target = $region132
        $region131: #{tpu_custom_call.1} parent=75 // pred_region
          %s8836 = ssub.s32 4096, 4096
          %8837 = vsyncadd %s8828, %s8836
          %s8838 = smul.addr %s45, 64
          %s8839 = sadd.s32 %s46, %s8838
          %s8840 = smul.addr %s8839, 128
          %s8841 = scalar_lea.hbm %s14, %s8840
          %s8842 = sshll.u32 %s8831, 4
          %s8843 = int_to_ptr.vmem [resolvable:$true] %s8842
          %8848 = dma.vmem_to_hbm [thread:$0]  %s8843, 4096, %s8841, %s8828, 128, 256, 8
        $region132: #{tpu_custom_call.1} parent=75 // pred_fallthru
          _
      $region76: #{tpu_custom_call.1} parent=5 // pred_fallthru
        _
      %p8849 = scmp.le.s32.totalorder 2, %s36
      // Predicated region
      $region133: #{tpu_custom_call.1} parent=5 // pred_check
        %p8850 = pneg %p8849
      $region134: #{tpu_custom_call.1} parent=5 // pred_check_branch
        %8852 = sbr.rel (%p8850) target = $region136
      $region135: #{tpu_custom_call.1} parent=5 // pred_region
        %s8853 = ssub.s32 %s36, 2
        // Predicated region
        $region137: #{tpu_custom_call.1} parent=135 // pred_check
          %p8854 = pneg %p393
        $region138: #{tpu_custom_call.1} parent=135 // pred_check_branch
          %8856 = sbr.rel (%p8854) target = $region140
        $region139: #{tpu_custom_call.1} parent=135 // pred_region
          %s8857 = sand.u32 %s378, 1
          %s8858 = scalar_lea.sflag [#allocation5], %s8857
          %s8859 = sand.u32 %s378, 1
          %s8860 = smul.addr %s8859, 256
          %s8861 = scalar_lea.vmem [#allocation23], %s8860
          %8862 = dma.done %s8858, 4096
        $region140: #{tpu_custom_call.1} parent=135 // pred_fallthru
          _
      $region136: #{tpu_custom_call.1} parent=5 // pred_fallthru
        _
    $region6: #{tpu_custom_call.1} parent=1 // loop_footer
      %s40 = sadd.s32 1, %s36
    $region7: #{tpu_custom_call.1} parent=1 // loop_footer_branch
      %35 = sbr.rel target = $region3
    $region8: #{tpu_custom_call.1} parent=1 // loop_exit
      _
    %8863 = vsyncpa [#allocation4], 1
    %s8864 = scalar_lea.sflag [#allocation4], 1
    %8865 = vsyncpa %s8864, 1
    %8866 = vsyncpa [#allocation7], 1
    %8867 = vsyncpa [#allocation10], 1
    %8868 = vsyncpa [#allocation13], 1
    %8869 = vsyncpa [#allocation16], 1
    %8870 = vsyncpa [#allocation19], 1
    %s8871 = scalar_lea.sflag [#allocation19], 1
    %8872 = vsyncpa %s8871, 1
    %8873 = vsyncpa [#allocation22], 1
    %s8874 = scalar_lea.sflag [#allocation22], 1
    %8875 = vsyncpa %s8874, 1
    %8876 = vsyncpa [#allocation5], 1
    %s8877 = scalar_lea.sflag [#allocation5], 1
    %8878 = vsyncpa %s8877, 1

</llo_original>
